<compile_context>
chip_gen: v7x
topology: tpu7x:2x2x1
jax: 0.10.0
libtpu: 0.0.40
codegen_flags: <defaults>
</compile_context>

<pallas_src>
import math

import jax
import jax.numpy as jnp
from jax import lax
from jax.experimental import pallas as pl
from jax.experimental.pallas import tpu as pltpu


# ----------------------------- config --------------------------------------

CFG = dict(
    vocab=50, max_pos=16, type_vocab=2,
    hidden=32, heads=2, intermediate=64, enc_layers=2,
    lstm_layers=5, lstm_hidden=32,
    fc_dim=16, num_classes=6,
)


# ----------------------------- small helpers -------------------------------

def _ln(x, g, b):
    mu = jnp.mean(x, axis=-1, keepdims=True)
    xc = x - mu
    var = jnp.mean(xc * xc, axis=-1, keepdims=True)
    return xc * lax.rsqrt(var + 1e-12) * g + b


# --------------------------- the fused kernel ------------------------------

def _make_fused_kernel(S, B, H, nh, LH, n_enc, n_lstm):
    R = S * B
    dh = H // nh
    scale = 1.0 / math.sqrt(dh)
    f32 = jnp.float32
    bf16 = jnp.bfloat16
    TRANS_B = (((1,), (1,)), ((), ()))   # contract last dim of both: q @ k^T

    def kernel(emb_ref, qid_ref, kid_ref, embg_ref, embb_ref,
               wqkv_ref, bqkv_ref, wo_ref, bo_ref,
               ln1g_ref, ln1b_ref, w1_ref, b1_ref, w2_ref, b2_ref,
               ln2g_ref, ln2b_ref,
               sel8_ref, sel2_ref,
               wih0_ref, wih_ref, lb_ref, whh_ref,
               fcw_ref, fcb_ref, clsw_ref, clsb_ref,
               o_ref):
        # ---------------- embedding LayerNorm ----------------
        x = _ln(emb_ref[...].astype(f32), embg_ref[...], embb_ref[...])

        # ---- additive attention mask built in-kernel from O(R) inputs ----
        # query row r attends key column c iff same batch element and the key
        # is not padding (padded keys carry id -1 so they never match).
        allowed = qid_ref[...] == kid_ref[...]          # (R,1)==(1,R) -> (R,R)
        mask = jnp.where(allowed, 0.0, -1e9)

        # ---------------- encoder layers (fully unrolled) ----------------
        for l in range(n_enc):
            qkv = jnp.dot(x.astype(bf16), wqkv_ref[l],
                          preferred_element_type=f32) + bqkv_ref[l]
            heads = []
            for h in range(nh):
                q = qkv[:, h * dh:(h + 1) * dh]
                k = qkv[:, H + h * dh:H + (h + 1) * dh]
                v = qkv[:, 2 * H + h * dh:2 * H + (h + 1) * dh]
                s = lax.dot_general(q, k, TRANS_B,
                                    preferred_element_type=f32) * scale + mask
                s = s - jnp.max(s, axis=-1, keepdims=True)
                p = jnp.exp(s)
                p = p * pl.reciprocal(jnp.sum(p, axis=-1, keepdims=True),
                                      approx=True)
                heads.append(jnp.dot(p, v, preferred_element_type=f32))
            ctx = jnp.concatenate(heads, axis=-1)
            attn = jnp.dot(ctx.astype(bf16), wo_ref[l],
                           preferred_element_type=f32) + bo_ref[l]
            h1 = _ln(x + attn, ln1g_ref[l], ln1b_ref[l])
            # TODO(synk): BERT/ERNIE use exact-erf GELU; tanh approximation here.
            ff = jax.nn.gelu(jnp.dot(h1.astype(bf16), w1_ref[l],
                                     preferred_element_type=f32) + b1_ref[l])
            ff2 = jnp.dot(ff.astype(bf16), w2_ref[l],
                          preferred_element_type=f32) + b2_ref[l]
            x = _ln(h1 + ff2, ln2g_ref[l], ln2b_ref[l])

        # ---------------- BiLSTM stack (fwd/bwd fused, fully unrolled) -------
        sel8 = sel8_ref[...] > 0.0   # (1, 8LH): True on fwd-direction columns
        sel2 = sel2_ref[...] > 0.0   # (1, 2LH): True on the fwd half
        h_cat = jnp.zeros((B, 2 * LH), f32)
        for l in range(n_lstm):
            w_ih = wih0_ref[...] if l == 0 else wih_ref[l - 1]
            # Both directions' input-gate pre-projection in ONE bf16 matmul,
            # folded bias; combined gate column order
            # [i_f,i_b,f_f,f_b,o_f,o_b,g_f,g_b].
            gx = jnp.dot(x.astype(bf16), w_ih,
                         preferred_element_type=f32) + lb_ref[l]     # (R, 8LH)
            gx_blk = [gx[t * B:(t + 1) * B, :] for t in range(S)]
            whh = whh_ref[l]                                         # (2LH, 8LH)
            h_cat = jnp.zeros((B, 2 * LH), f32)
            c_cat = jnp.zeros((B, 2 * LH), f32)
            hs = []
            for k in range(S):                                       # unrolled
                tb = S - 1 - k
                # fwd gates come from timestep k, bwd gates from timestep tb:
                # one vselect picks the right source per column block; one
                # block-diagonal matmul covers both directions' recurrences.
                g = jnp.where(sel8, gx_blk[k], gx_blk[tb]) + jnp.dot(
                    h_cat.astype(bf16), whh, preferred_element_type=f32)
                sig = jax.nn.sigmoid(g[:, :6 * LH])   # i_f,i_b,f_f,f_b,o_f,o_b
                gg = jnp.tanh(g[:, 6 * LH:])          # g_f,g_b
                c_cat = sig[:, 2 * LH:4 * LH] * c_cat + sig[:, :2 * LH] * gg
                h_cat = sig[:, 4 * LH:6 * LH] * jnp.tanh(c_cat)      # [h_f|h_b]
                hs.append(h_cat)
            if l + 1 < n_lstm:
                # Next layer's input: row block t = [h_f(t) | h_b(t)]; the fwd
                # half sits in hs[t], the bwd half in hs[S-1-t].
                x = jnp.concatenate(
                    [jnp.where(sel2, hs[t], hs[S - 1 - t]) for t in range(S)],
                    axis=0)                                          # (R, 2LH)

        # ---- head: cat(hn[-2], hn[-1]) is exactly the final h_cat ----
        rel = jnp.maximum(h_cat, 0.0)
        dense = jnp.dot(rel, fcw_ref[...],
                        preferred_element_type=f32) + fcb_ref[...]
        # TODO(synk): Dropout(p=0.3) is identity in eval/inference mode; omitted.
        o_ref[...] = (jnp.dot(dense, clsw_ref[...], preferred_element_type=f32)
                      + clsb_ref[...]).astype(o_ref.dtype)

    return kernel


# ----------------------------- params (PyTorch-like) -----------------------

def init_params(key, cfg):
    """Random parameters in PyTorch-like layout (LSTM gate order i,f,g,o)."""
    ks = iter(jax.random.split(key, 512))

    def nrm(shape, scale=0.02):
        return (scale * jax.random.normal(next(ks), shape)).astype(jnp.float32)

    H, I = cfg["hidden"], cfg["intermediate"]
    p = dict(
        word_emb=nrm((cfg["vocab"], H)),
        pos_emb=nrm((cfg["max_pos"], H)),
        type_emb=nrm((cfg["type_vocab"], H)),
        emb_ln_g=jnp.ones((H,), jnp.float32),
        emb_ln_b=jnp.zeros((H,), jnp.float32),
        layers=[], lstm=[],
    )
    for _ in range(cfg["enc_layers"]):
        p["layers"].append(dict(
            wq=nrm((H, H)), bq=jnp.zeros((H,), jnp.float32),
            wk=nrm((H, H)), bk=jnp.zeros((H,), jnp.float32),
            wv=nrm((H, H)), bv=jnp.zeros((H,), jnp.float32),
            wo=nrm((H, H)), bo=jnp.zeros((H,), jnp.float32),
            ln1_g=jnp.ones((H,), jnp.float32), ln1_b=jnp.zeros((H,), jnp.float32),
            w1=nrm((H, I)), b1=jnp.zeros((I,), jnp.float32),
            w2=nrm((I, H)), b2=jnp.zeros((H,), jnp.float32),
            ln2_g=jnp.ones((H,), jnp.float32), ln2_b=jnp.zeros((H,), jnp.float32),
        ))
    LH = cfg["lstm_hidden"]
    for layer in range(cfg["lstm_layers"]):
        in_dim = H if layer == 0 else 2 * LH
        dirs = []
        for _ in range(2):  # forward, backward
            dirs.append(dict(
                w_ih=nrm((4 * LH, in_dim), 0.1),   # PyTorch layout, gates (i,f,g,o)
                w_hh=nrm((4 * LH, LH), 0.1),
                b_ih=jnp.zeros((4 * LH,), jnp.float32),
                b_hh=jnp.zeros((4 * LH,), jnp.float32),
            ))
        p["lstm"].append(dirs)
    p["fc_w"] = nrm((2 * LH, cfg["fc_dim"]))
    p["fc_b"] = jnp.zeros((cfg["fc_dim"],), jnp.float32)
    p["cls_w"] = nrm((cfg["fc_dim"], cfg["num_classes"]))
    p["cls_b"] = jnp.zeros((cfg["num_classes"],), jnp.float32)
    return p


def _reorder_ifgo(w, axis=0):
    """PyTorch LSTM gate order (i,f,g,o) -> kernel order (i,f,o,g)."""
    i, f, g, o = jnp.split(w, 4, axis=axis)
    return jnp.concatenate([i, f, o, g], axis=axis)


def _interleave_dirs(wf, wb, LH):
    """fwd (...,4LH) + bwd (...,4LH), gate order (i,f,o,g) each ->
    (...,8LH) combined order [i_f,i_b,f_f,f_b,o_f,o_b,g_f,g_b]."""
    lead = wf.shape[:-1]
    nf = wf.reshape(lead + (4, 1, LH))
    nb = wb.reshape(lead + (4, 1, LH))
    return jnp.concatenate([nf, nb], axis=-2).reshape(lead + (8 * LH,))


def prepare_params(p, cfg):
    """Weight-prep: fuse QKV, stack encoder layers, reorder + direction-interleave
    LSTM gates, fold biases, build block-diagonal recurrent weights, bf16-cast
    every big matmul weight, reshape biases to (1, N)."""
    H, LH = cfg["hidden"], cfg["lstm_hidden"]
    bf16 = jnp.bfloat16
    out = dict(
        word_emb=p["word_emb"], pos_emb=p["pos_emb"], type_emb=p["type_emb"],
        emb_ln_g=p["emb_ln_g"].reshape(1, H), emb_ln_b=p["emb_ln_b"].reshape(1, H),
        fc_w=p["fc_w"], fc_b=p["fc_b"].reshape(1, -1),
        cls_w=p["cls_w"], cls_b=p["cls_b"].reshape(1, -1),
    )
    # ---- encoder: fuse QKV and stack the layers along a leading dim ----
    enc = p["layers"]
    out["enc_wqkv"] = jnp.stack([jnp.concatenate([lp["wq"], lp["wk"], lp["wv"]], 1)
                                 for lp in enc]).astype(bf16)
    out["enc_bqkv"] = jnp.stack([jnp.concatenate(
        [lp["bq"], lp["bk"], lp["bv"]]).reshape(1, 3 * H) for lp in enc])
    out["enc_wo"] = jnp.stack([lp["wo"] for lp in enc]).astype(bf16)
    out["enc_bo"] = jnp.stack([lp["bo"].reshape(1, H) for lp in enc])
    out["enc_ln1g"] = jnp.stack([lp["ln1_g"].reshape(1, H) for lp in enc])
    out["enc_ln1b"] = jnp.stack([lp["ln1_b"].reshape(1, H) for lp in enc])
    out["enc_w1"] = jnp.stack([lp["w1"] for lp in enc]).astype(bf16)
    out["enc_b1"] = jnp.stack([lp["b1"].reshape(1, -1) for lp in enc])
    out["enc_w2"] = jnp.stack([lp["w2"] for lp in enc]).astype(bf16)
    out["enc_b2"] = jnp.stack([lp["b2"].reshape(1, H) for lp in enc])
    out["enc_ln2g"] = jnp.stack([lp["ln2_g"].reshape(1, H) for lp in enc])
    out["enc_ln2b"] = jnp.stack([lp["ln2_b"].reshape(1, H) for lp in enc])
    # ---- LSTM: gate reorder, direction interleave, block-diagonal w_hh ----
    wih_layers, b_layers, whh_layers = [], [], []
    for df, db in p["lstm"]:
        wih_f = _reorder_ifgo(df["w_ih"]).T          # (in_dim, 4LH)
        wih_b = _reorder_ifgo(db["w_ih"]).T
        wih_layers.append(_interleave_dirs(wih_f, wih_b, LH))        # (in_dim, 8LH)
        bf_ = _reorder_ifgo(df["b_ih"] + df["b_hh"]).reshape(1, 4 * LH)
        bb_ = _reorder_ifgo(db["b_ih"] + db["b_hh"]).reshape(1, 4 * LH)
        b_layers.append(_interleave_dirs(bf_, bb_, LH))              # (1, 8LH)
        whh_f = _reorder_ifgo(df["w_hh"]).T          # (LH, 4LH)
        whh_b = _reorder_ifgo(db["w_hh"]).T
        whh_layers.append(jnp.concatenate(
            [_interleave_dirs(whh_f, jnp.zeros_like(whh_f), LH),
             _interleave_dirs(jnp.zeros_like(whh_b), whh_b, LH)],
            axis=0))                                                 # (2LH, 8LH)
    out["lstm_wih0"] = wih_layers[0].astype(bf16)                    # (H, 8LH)
    out["lstm_wih"] = jnp.stack(wih_layers[1:]).astype(bf16)         # (L-1,2LH,8LH)
    out["lstm_b"] = jnp.stack(b_layers)                              # (L, 1, 8LH)
    out["lstm_whh"] = jnp.stack(whh_layers).astype(bf16)             # (L, 2LH, 8LH)
    # ---- column-selection masks for the fused fwd/bwd gate slab ----
    blk = (jnp.arange(8 * LH) // LH) % 2
    out["dirsel8"] = (blk == 0).astype(jnp.float32).reshape(1, 8 * LH)
    out["dirsel2"] = (jnp.arange(2 * LH) < LH).astype(jnp.float32).reshape(1, 2 * LH)
    return out


# --------------------------------- forward ---------------------------------

def forward(params, input_ids, attention_mask, token_type_ids, cfg):
    B, S = input_ids.shape
    H, LH = cfg["hidden"], cfg["lstm_hidden"]
    nh, n_enc = cfg["heads"], cfg["enc_layers"]
    n_lstm, n_cls = cfg["lstm_layers"], cfg["num_classes"]
    interm, fc = cfg["intermediate"], cfg["fc_dim"]
    R = S * B  # time-major rows: r = t*B + b

    # Embedding gathers stay in XLA; everything else is ONE fused kernel.
    ids_t = input_ids.T.reshape(R)
    tt_t = token_type_ids.T.reshape(R)
    pos_t = jnp.repeat(jnp.arange(S), B)
    emb = (params["word_emb"][ids_t] + params["pos_emb"][pos_t]
           + params["type_emb"][tt_t])                            # (R, H)

    batch_ids = jnp.tile(jnp.arange(B), S).astype(jnp.float32)    # r -> b = r % B
    qid = batch_ids.reshape(R, 1)                                 # query batch id
    key_ok = attention_mask.T.reshape(R) > 0
    kid = jnp.where(key_ok, batch_ids, -1.0).reshape(1, R)        # -1 = padded key

    operands = (
        emb, qid, kid, params["emb_ln_g"], params["emb_ln_b"],
        params["enc_wqkv"], params["enc_bqkv"], params["enc_wo"], params["enc_bo"],
        params["enc_ln1g"], params["enc_ln1b"], params["enc_w1"], params["enc_b1"],
        params["enc_w2"], params["enc_b2"], params["enc_ln2g"], params["enc_ln2b"],
        params["dirsel8"], params["dirsel2"],
        params["lstm_wih0"], params["lstm_wih"], params["lstm_b"], params["lstm_whh"],
        params["fc_w"], params["fc_b"], params["cls_w"], params["cls_b"])

    dh = H // nh
    flops = int(
        n_enc * (2 * R * H * 3 * H + nh * 2 * (2 * R * R * dh)
                 + 2 * R * H * H + 2 * 2 * R * H * interm)
        + 2 * R * H * 8 * LH + (n_lstm - 1) * 2 * R * 2 * LH * 8 * LH
        + n_lstm * S * 2 * B * 2 * LH * 8 * LH
        + 2 * B * 2 * LH * fc + 2 * B * fc * n_cls)
    trans = int(n_enc * (nh * R * R + R * interm) + n_lstm * S * B * 10 * LH)
    bytes_acc = int(sum(int(a.size) * a.dtype.itemsize for a in operands)
                    + B * n_cls * 4)

    return pl.pallas_call(
        _make_fused_kernel(S, B, H, nh, LH, n_enc, n_lstm),
        out_shape=jax.ShapeDtypeStruct((B, n_cls), jnp.float32),
        cost_estimate=pl.CostEstimate(flops=flops, transcendentals=trans,
                                      bytes_accessed=bytes_acc),
        compiler_params=pltpu.CompilerParams(vmem_limit_bytes=16 * 1024 * 1024),
    )(*operands)


# ----------------------------------- main -----------------------------------

if __name__ == "__main__":
    cfg = CFG
    key = jax.random.PRNGKey(0)
    kp, ki = jax.random.split(key, 2)
    params = prepare_params(init_params(kp, cfg), cfg)

    B, S = 2, 8
    input_ids = jax.random.randint(ki, (B, S), 0, cfg["vocab"], dtype=jnp.int32)
    attention_mask = jnp.ones((B, S), jnp.int32).at[1, -2:].set(0)
    token_type_ids = jnp.zeros((B, S), jnp.int32)

    fwd = jax.jit(lambda p, a, m, t: forward(p, a, m, t, cfg))
    out = fwd(params, input_ids, attention_mask, token_type_ids)
    jax.block_until_ready(out)
    assert out.shape == (B, cfg["num_classes"]), out.shape
    assert bool(jnp.all(jnp.isfinite(out)))
    print("KERNEL_OK")
</pallas_src>

<mosaic_0001>
module attributes {stable_mosaic.version = 11 : i64} {
  func.func @kernel(%arg0: memref<16x32xf32, #tpu.memory_space<vmem>>, %arg1: memref<16x1xf32, #tpu.memory_space<vmem>>, %arg2: memref<1x16xf32, #tpu.memory_space<vmem>>, %arg3: memref<1x32xf32, #tpu.memory_space<vmem>>, %arg4: memref<1x32xf32, #tpu.memory_space<vmem>>, %arg5: memref<2x32x96xbf16, #tpu.memory_space<vmem>>, %arg6: memref<2x1x96xf32, #tpu.memory_space<vmem>>, %arg7: memref<2x32x32xbf16, #tpu.memory_space<vmem>>, %arg8: memref<2x1x32xf32, #tpu.memory_space<vmem>>, %arg9: memref<2x1x32xf32, #tpu.memory_space<vmem>>, %arg10: memref<2x1x32xf32, #tpu.memory_space<vmem>>, %arg11: memref<2x32x64xbf16, #tpu.memory_space<vmem>>, %arg12: memref<2x1x64xf32, #tpu.memory_space<vmem>>, %arg13: memref<2x64x32xbf16, #tpu.memory_space<vmem>>, %arg14: memref<2x1x32xf32, #tpu.memory_space<vmem>>, %arg15: memref<2x1x32xf32, #tpu.memory_space<vmem>>, %arg16: memref<2x1x32xf32, #tpu.memory_space<vmem>>, %arg17: memref<1x256xf32, #tpu.memory_space<vmem>>, %arg18: memref<1x64xf32, #tpu.memory_space<vmem>>, %arg19: memref<32x256xbf16, #tpu.memory_space<vmem>>, %arg20: memref<4x64x256xbf16, #tpu.memory_space<vmem>>, %arg21: memref<5x1x256xf32, #tpu.memory_space<vmem>>, %arg22: memref<5x64x256xbf16, #tpu.memory_space<vmem>>, %arg23: memref<64x16xf32, #tpu.memory_space<vmem>>, %arg24: memref<1x16xf32, #tpu.memory_space<vmem>>, %arg25: memref<16x6xf32, #tpu.memory_space<vmem>>, %arg26: memref<1x6xf32, #tpu.memory_space<vmem>>, %arg27: memref<2x6xf32, #tpu.memory_space<vmem>>) attributes {dimension_semantics = [], scalar_prefetch = 0 : i64, scratch_operands = 0 : i64, tpu.core_type = #tpu.core_type<tc>} {
    %c0 = arith.constant 0 : index
    %c0_0 = arith.constant 0 : index
    %0 = vector.load %arg0[%c0, %c0_0] : memref<16x32xf32, #tpu.memory_space<vmem>>, vector<16x32xf32>
    %c0_1 = arith.constant 0 : index
    %c0_2 = arith.constant 0 : index
    %1 = vector.load %arg3[%c0_1, %c0_2] : memref<1x32xf32, #tpu.memory_space<vmem>>, vector<1x32xf32>
    %c0_3 = arith.constant 0 : index
    %c0_4 = arith.constant 0 : index
    %2 = vector.load %arg4[%c0_3, %c0_4] : memref<1x32xf32, #tpu.memory_space<vmem>>, vector<1x32xf32>
    %cst = arith.constant dense<0.000000e+00> : vector<16xf32>
    %3 = vector.multi_reduction <add>, %0, %cst [1] : vector<16x32xf32> to vector<16xf32>
    %4 = vector.shape_cast %3 : vector<16xf32> to vector<16x1xf32>
    %cst_5 = arith.constant 3.200000e+01 : f32
    %5 = vector.broadcast %cst_5 : f32 to vector<16x1xf32>
    %6 = arith.divf %4, %5 : vector<16x1xf32>
    %7 = vector.broadcast %6 : vector<16x1xf32> to vector<16x32xf32>
    %8 = arith.subf %0, %7 : vector<16x32xf32>
    %9 = arith.mulf %8, %8 : vector<16x32xf32>
    %cst_6 = arith.constant dense<0.000000e+00> : vector<16xf32>
    %10 = vector.multi_reduction <add>, %9, %cst_6 [1] : vector<16x32xf32> to vector<16xf32>
    %11 = vector.shape_cast %10 : vector<16xf32> to vector<16x1xf32>
    %cst_7 = arith.constant 3.200000e+01 : f32
    %12 = vector.broadcast %cst_7 : f32 to vector<16x1xf32>
    %13 = arith.divf %11, %12 : vector<16x1xf32>
    %cst_8 = arith.constant 9.99999996E-13 : f32
    %14 = vector.broadcast %cst_8 : f32 to vector<16x1xf32>
    %15 = arith.addf %13, %14 : vector<16x1xf32>
    %16 = math.rsqrt %15 : vector<16x1xf32>
    %17 = vector.broadcast %16 : vector<16x1xf32> to vector<16x32xf32>
    %18 = arith.mulf %8, %17 : vector<16x32xf32>
    %19 = vector.broadcast %1 : vector<1x32xf32> to vector<16x32xf32>
    %20 = arith.mulf %18, %19 : vector<16x32xf32>
    %21 = vector.broadcast %2 : vector<1x32xf32> to vector<16x32xf32>
    %22 = arith.addf %20, %21 : vector<16x32xf32>
    %c0_9 = arith.constant 0 : index
    %c0_10 = arith.constant 0 : index
    %23 = vector.load %arg1[%c0_9, %c0_10] : memref<16x1xf32, #tpu.memory_space<vmem>>, vector<16x1xf32>
    %c0_11 = arith.constant 0 : index
    %c0_12 = arith.constant 0 : index
    %24 = vector.load %arg2[%c0_11, %c0_12] : memref<1x16xf32, #tpu.memory_space<vmem>>, vector<1x16xf32>
    %25 = vector.broadcast %23 : vector<16x1xf32> to vector<16x16xf32>
    %26 = vector.broadcast %24 : vector<1x16xf32> to vector<16x16xf32>
    %27 = arith.cmpf oeq, %25, %26 : vector<16x16xf32>
    %cst_13 = arith.constant 0.000000e+00 : f32
    %cst_14 = arith.constant -1.000000e+09 : f32
    %28 = vector.broadcast %cst_13 : f32 to vector<16x16xf32>
    %29 = vector.broadcast %cst_14 : f32 to vector<16x16xf32>
    %30 = arith.select %27, %28, %29 : vector<16x16xi1>, vector<16x16xf32>
    %31 = arith.truncf %22 : vector<16x32xf32> to vector<16x32xbf16>
    %c0_15 = arith.constant 0 : index
    %c0_16 = arith.constant 0 : index
    %c0_17 = arith.constant 0 : index
    %32 = vector.load %arg5[%c0_15, %c0_16, %c0_17] : memref<2x32x96xbf16, #tpu.memory_space<vmem>>, vector<1x32x96xbf16>
    %33 = vector.shape_cast %32 : vector<1x32x96xbf16> to vector<32x96xbf16>
    %cst_18 = arith.constant dense<0.000000e+00> : vector<16x96xf32>
    %34 = tpu.matmul %31, %33, %cst_18 {dimension_numbers = #tpu.dot_dimension_numbers<[1], [0], [0], [1], [0, 0, 1, 1], [], []>} : vector<16x32xbf16>, vector<32x96xbf16>, vector<16x96xf32> -> vector<16x96xf32>
    %c0_19 = arith.constant 0 : index
    %c0_20 = arith.constant 0 : index
    %c0_21 = arith.constant 0 : index
    %35 = vector.load %arg6[%c0_19, %c0_20, %c0_21] : memref<2x1x96xf32, #tpu.memory_space<vmem>>, vector<1x1x96xf32>
    %36 = vector.shape_cast %35 : vector<1x1x96xf32> to vector<1x96xf32>
    %37 = vector.broadcast %36 : vector<1x96xf32> to vector<16x96xf32>
    %38 = arith.addf %34, %37 : vector<16x96xf32>
    %39 = vector.extract_strided_slice %38 {offsets = [0, 0], sizes = [16, 16], strides = [1, 1]} : vector<16x96xf32> to vector<16x16xf32>
    %40 = vector.extract_strided_slice %38 {offsets = [0, 32], sizes = [16, 16], strides = [1, 1]} : vector<16x96xf32> to vector<16x16xf32>
    %41 = vector.extract_strided_slice %38 {offsets = [0, 64], sizes = [16, 16], strides = [1, 1]} : vector<16x96xf32> to vector<16x16xf32>
    %cst_22 = arith.constant dense<0.000000e+00> : vector<16x16xf32>
    %42 = tpu.matmul %39, %40, %cst_22 {dimension_numbers = #tpu.dot_dimension_numbers<[1], [1], [0], [0], [0, 0, 1, 0], [], []>} : vector<16x16xf32>, vector<16x16xf32>, vector<16x16xf32> -> vector<16x16xf32>
    %cst_23 = arith.constant 2.500000e-01 : f32
    %43 = vector.broadcast %cst_23 : f32 to vector<16x16xf32>
    %44 = arith.mulf %42, %43 : vector<16x16xf32>
    %45 = arith.addf %44, %30 : vector<16x16xf32>
    %cst_24 = arith.constant dense<0xFF800000> : vector<16xf32>
    %46 = vector.multi_reduction <maximumf>, %45, %cst_24 [1] : vector<16x16xf32> to vector<16xf32>
    %47 = vector.shape_cast %46 : vector<16xf32> to vector<16x1xf32>
    %48 = vector.broadcast %47 : vector<16x1xf32> to vector<16x16xf32>
    %49 = arith.subf %45, %48 : vector<16x16xf32>
    %50 = math.exp %49 : vector<16x16xf32>
    %cst_25 = arith.constant dense<0.000000e+00> : vector<16xf32>
    %51 = vector.multi_reduction <add>, %50, %cst_25 [1] : vector<16x16xf32> to vector<16xf32>
    %52 = vector.shape_cast %51 : vector<16xf32> to vector<16x1xf32>
    %53 = tpu.reciprocal %52 {approx = true} : vector<16x1xf32> -> vector<16x1xf32>
    %54 = vector.broadcast %53 : vector<16x1xf32> to vector<16x16xf32>
    %55 = arith.mulf %50, %54 : vector<16x16xf32>
    %cst_26 = arith.constant dense<0.000000e+00> : vector<16x16xf32>
    %56 = tpu.matmul %55, %41, %cst_26 {dimension_numbers = #tpu.dot_dimension_numbers<[1], [0], [0], [1], [0, 0, 1, 1], [], []>} : vector<16x16xf32>, vector<16x16xf32>, vector<16x16xf32> -> vector<16x16xf32>
    %57 = vector.extract_strided_slice %38 {offsets = [0, 16], sizes = [16, 16], strides = [1, 1]} : vector<16x96xf32> to vector<16x16xf32>
    %58 = vector.extract_strided_slice %38 {offsets = [0, 48], sizes = [16, 16], strides = [1, 1]} : vector<16x96xf32> to vector<16x16xf32>
    %59 = vector.extract_strided_slice %38 {offsets = [0, 80], sizes = [16, 16], strides = [1, 1]} : vector<16x96xf32> to vector<16x16xf32>
    %cst_27 = arith.constant dense<0.000000e+00> : vector<16x16xf32>
    %60 = tpu.matmul %57, %58, %cst_27 {dimension_numbers = #tpu.dot_dimension_numbers<[1], [1], [0], [0], [0, 0, 1, 0], [], []>} : vector<16x16xf32>, vector<16x16xf32>, vector<16x16xf32> -> vector<16x16xf32>
    %cst_28 = arith.constant 2.500000e-01 : f32
    %61 = vector.broadcast %cst_28 : f32 to vector<16x16xf32>
    %62 = arith.mulf %60, %61 : vector<16x16xf32>
    %63 = arith.addf %62, %30 : vector<16x16xf32>
    %cst_29 = arith.constant dense<0xFF800000> : vector<16xf32>
    %64 = vector.multi_reduction <maximumf>, %63, %cst_29 [1] : vector<16x16xf32> to vector<16xf32>
    %65 = vector.shape_cast %64 : vector<16xf32> to vector<16x1xf32>
    %66 = vector.broadcast %65 : vector<16x1xf32> to vector<16x16xf32>
    %67 = arith.subf %63, %66 : vector<16x16xf32>
    %68 = math.exp %67 : vector<16x16xf32>
    %cst_30 = arith.constant dense<0.000000e+00> : vector<16xf32>
    %69 = vector.multi_reduction <add>, %68, %cst_30 [1] : vector<16x16xf32> to vector<16xf32>
    %70 = vector.shape_cast %69 : vector<16xf32> to vector<16x1xf32>
    %71 = tpu.reciprocal %70 {approx = true} : vector<16x1xf32> -> vector<16x1xf32>
    %72 = vector.broadcast %71 : vector<16x1xf32> to vector<16x16xf32>
    %73 = arith.mulf %68, %72 : vector<16x16xf32>
    %cst_31 = arith.constant dense<0.000000e+00> : vector<16x16xf32>
    %74 = tpu.matmul %73, %59, %cst_31 {dimension_numbers = #tpu.dot_dimension_numbers<[1], [0], [0], [1], [0, 0, 1, 1], [], []>} : vector<16x16xf32>, vector<16x16xf32>, vector<16x16xf32> -> vector<16x16xf32>
    %75 = tpu.concatenate %56, %74 in 1 : vector<16x16xf32>, vector<16x16xf32> -> vector<16x32xf32>
    %76 = arith.truncf %75 : vector<16x32xf32> to vector<16x32xbf16>
    %c0_32 = arith.constant 0 : index
    %c0_33 = arith.constant 0 : index
    %c0_34 = arith.constant 0 : index
    %77 = vector.load %arg7[%c0_32, %c0_33, %c0_34] : memref<2x32x32xbf16, #tpu.memory_space<vmem>>, vector<1x32x32xbf16>
    %78 = vector.shape_cast %77 : vector<1x32x32xbf16> to vector<32x32xbf16>
    %cst_35 = arith.constant dense<0.000000e+00> : vector<16x32xf32>
    %79 = tpu.matmul %76, %78, %cst_35 {dimension_numbers = #tpu.dot_dimension_numbers<[1], [0], [0], [1], [0, 0, 1, 1], [], []>} : vector<16x32xbf16>, vector<32x32xbf16>, vector<16x32xf32> -> vector<16x32xf32>
    %c0_36 = arith.constant 0 : index
    %c0_37 = arith.constant 0 : index
    %c0_38 = arith.constant 0 : index
    %80 = vector.load %arg8[%c0_36, %c0_37, %c0_38] : memref<2x1x32xf32, #tpu.memory_space<vmem>>, vector<1x1x32xf32>
    %81 = vector.shape_cast %80 : vector<1x1x32xf32> to vector<1x32xf32>
    %82 = vector.broadcast %81 : vector<1x32xf32> to vector<16x32xf32>
    %83 = arith.addf %79, %82 : vector<16x32xf32>
    %84 = arith.addf %22, %83 : vector<16x32xf32>
    %c0_39 = arith.constant 0 : index
    %c0_40 = arith.constant 0 : index
    %c0_41 = arith.constant 0 : index
    %85 = vector.load %arg9[%c0_39, %c0_40, %c0_41] : memref<2x1x32xf32, #tpu.memory_space<vmem>>, vector<1x1x32xf32>
    %86 = vector.shape_cast %85 : vector<1x1x32xf32> to vector<1x32xf32>
    %c0_42 = arith.constant 0 : index
    %c0_43 = arith.constant 0 : index
    %c0_44 = arith.constant 0 : index
    %87 = vector.load %arg10[%c0_42, %c0_43, %c0_44] : memref<2x1x32xf32, #tpu.memory_space<vmem>>, vector<1x1x32xf32>
    %88 = vector.shape_cast %87 : vector<1x1x32xf32> to vector<1x32xf32>
    %cst_45 = arith.constant dense<0.000000e+00> : vector<16xf32>
    %89 = vector.multi_reduction <add>, %84, %cst_45 [1] : vector<16x32xf32> to vector<16xf32>
    %90 = vector.shape_cast %89 : vector<16xf32> to vector<16x1xf32>
    %cst_46 = arith.constant 3.200000e+01 : f32
    %91 = vector.broadcast %cst_46 : f32 to vector<16x1xf32>
    %92 = arith.divf %90, %91 : vector<16x1xf32>
    %93 = vector.broadcast %92 : vector<16x1xf32> to vector<16x32xf32>
    %94 = arith.subf %84, %93 : vector<16x32xf32>
    %95 = arith.mulf %94, %94 : vector<16x32xf32>
    %cst_47 = arith.constant dense<0.000000e+00> : vector<16xf32>
    %96 = vector.multi_reduction <add>, %95, %cst_47 [1] : vector<16x32xf32> to vector<16xf32>
    %97 = vector.shape_cast %96 : vector<16xf32> to vector<16x1xf32>
    %cst_48 = arith.constant 3.200000e+01 : f32
    %98 = vector.broadcast %cst_48 : f32 to vector<16x1xf32>
    %99 = arith.divf %97, %98 : vector<16x1xf32>
    %cst_49 = arith.constant 9.99999996E-13 : f32
    %100 = vector.broadcast %cst_49 : f32 to vector<16x1xf32>
    %101 = arith.addf %99, %100 : vector<16x1xf32>
    %102 = math.rsqrt %101 : vector<16x1xf32>
    %103 = vector.broadcast %102 : vector<16x1xf32> to vector<16x32xf32>
    %104 = arith.mulf %94, %103 : vector<16x32xf32>
    %105 = vector.broadcast %86 : vector<1x32xf32> to vector<16x32xf32>
    %106 = arith.mulf %104, %105 : vector<16x32xf32>
    %107 = vector.broadcast %88 : vector<1x32xf32> to vector<16x32xf32>
    %108 = arith.addf %106, %107 : vector<16x32xf32>
    %109 = arith.truncf %108 : vector<16x32xf32> to vector<16x32xbf16>
    %c0_50 = arith.constant 0 : index
    %c0_51 = arith.constant 0 : index
    %c0_52 = arith.constant 0 : index
    %110 = vector.load %arg11[%c0_50, %c0_51, %c0_52] : memref<2x32x64xbf16, #tpu.memory_space<vmem>>, vector<1x32x64xbf16>
    %111 = vector.shape_cast %110 : vector<1x32x64xbf16> to vector<32x64xbf16>
    %cst_53 = arith.constant dense<0.000000e+00> : vector<16x64xf32>
    %112 = tpu.matmul %109, %111, %cst_53 {dimension_numbers = #tpu.dot_dimension_numbers<[1], [0], [0], [1], [0, 0, 1, 1], [], []>} : vector<16x32xbf16>, vector<32x64xbf16>, vector<16x64xf32> -> vector<16x64xf32>
    %c0_54 = arith.constant 0 : index
    %c0_55 = arith.constant 0 : index
    %c0_56 = arith.constant 0 : index
    %113 = vector.load %arg12[%c0_54, %c0_55, %c0_56] : memref<2x1x64xf32, #tpu.memory_space<vmem>>, vector<1x1x64xf32>
    %114 = vector.shape_cast %113 : vector<1x1x64xf32> to vector<1x64xf32>
    %115 = vector.broadcast %114 : vector<1x64xf32> to vector<16x64xf32>
    %116 = arith.addf %112, %115 : vector<16x64xf32>
    %117 = arith.mulf %116, %116 : vector<16x64xf32>
    %118 = arith.mulf %116, %117 : vector<16x64xf32>
    %cst_57 = arith.constant 4.471500e-02 : f32
    %119 = vector.broadcast %cst_57 : f32 to vector<16x64xf32>
    %120 = arith.mulf %119, %118 : vector<16x64xf32>
    %121 = arith.addf %116, %120 : vector<16x64xf32>
    %cst_58 = arith.constant 0.797884583 : f32
    %122 = vector.broadcast %cst_58 : f32 to vector<16x64xf32>
    %123 = arith.mulf %122, %121 : vector<16x64xf32>
    %124 = math.tanh %123 : vector<16x64xf32>
    %cst_59 = arith.constant 1.000000e+00 : f32
    %125 = vector.broadcast %cst_59 : f32 to vector<16x64xf32>
    %126 = arith.addf %125, %124 : vector<16x64xf32>
    %cst_60 = arith.constant 5.000000e-01 : f32
    %127 = vector.broadcast %cst_60 : f32 to vector<16x64xf32>
    %128 = arith.mulf %127, %126 : vector<16x64xf32>
    %129 = arith.mulf %116, %128 : vector<16x64xf32>
    %130 = arith.truncf %129 : vector<16x64xf32> to vector<16x64xbf16>
    %c0_61 = arith.constant 0 : index
    %c0_62 = arith.constant 0 : index
    %c0_63 = arith.constant 0 : index
    %131 = vector.load %arg13[%c0_61, %c0_62, %c0_63] : memref<2x64x32xbf16, #tpu.memory_space<vmem>>, vector<1x64x32xbf16>
    %132 = vector.shape_cast %131 : vector<1x64x32xbf16> to vector<64x32xbf16>
    %cst_64 = arith.constant dense<0.000000e+00> : vector<16x32xf32>
    %133 = tpu.matmul %130, %132, %cst_64 {dimension_numbers = #tpu.dot_dimension_numbers<[1], [0], [0], [1], [0, 0, 1, 1], [], []>} : vector<16x64xbf16>, vector<64x32xbf16>, vector<16x32xf32> -> vector<16x32xf32>
    %c0_65 = arith.constant 0 : index
    %c0_66 = arith.constant 0 : index
    %c0_67 = arith.constant 0 : index
    %134 = vector.load %arg14[%c0_65, %c0_66, %c0_67] : memref<2x1x32xf32, #tpu.memory_space<vmem>>, vector<1x1x32xf32>
    %135 = vector.shape_cast %134 : vector<1x1x32xf32> to vector<1x32xf32>
    %136 = vector.broadcast %135 : vector<1x32xf32> to vector<16x32xf32>
    %137 = arith.addf %133, %136 : vector<16x32xf32>
    %138 = arith.addf %108, %137 : vector<16x32xf32>
    %c0_68 = arith.constant 0 : index
    %c0_69 = arith.constant 0 : index
    %c0_70 = arith.constant 0 : index
    %139 = vector.load %arg15[%c0_68, %c0_69, %c0_70] : memref<2x1x32xf32, #tpu.memory_space<vmem>>, vector<1x1x32xf32>
    %140 = vector.shape_cast %139 : vector<1x1x32xf32> to vector<1x32xf32>
    %c0_71 = arith.constant 0 : index
    %c0_72 = arith.constant 0 : index
    %c0_73 = arith.constant 0 : index
    %141 = vector.load %arg16[%c0_71, %c0_72, %c0_73] : memref<2x1x32xf32, #tpu.memory_space<vmem>>, vector<1x1x32xf32>
    %142 = vector.shape_cast %141 : vector<1x1x32xf32> to vector<1x32xf32>
    %cst_74 = arith.constant dense<0.000000e+00> : vector<16xf32>
    %143 = vector.multi_reduction <add>, %138, %cst_74 [1] : vector<16x32xf32> to vector<16xf32>
    %144 = vector.shape_cast %143 : vector<16xf32> to vector<16x1xf32>
    %cst_75 = arith.constant 3.200000e+01 : f32
    %145 = vector.broadcast %cst_75 : f32 to vector<16x1xf32>
    %146 = arith.divf %144, %145 : vector<16x1xf32>
    %147 = vector.broadcast %146 : vector<16x1xf32> to vector<16x32xf32>
    %148 = arith.subf %138, %147 : vector<16x32xf32>
    %149 = arith.mulf %148, %148 : vector<16x32xf32>
    %cst_76 = arith.constant dense<0.000000e+00> : vector<16xf32>
    %150 = vector.multi_reduction <add>, %149, %cst_76 [1] : vector<16x32xf32> to vector<16xf32>
    %151 = vector.shape_cast %150 : vector<16xf32> to vector<16x1xf32>
    %cst_77 = arith.constant 3.200000e+01 : f32
    %152 = vector.broadcast %cst_77 : f32 to vector<16x1xf32>
    %153 = arith.divf %151, %152 : vector<16x1xf32>
    %cst_78 = arith.constant 9.99999996E-13 : f32
    %154 = vector.broadcast %cst_78 : f32 to vector<16x1xf32>
    %155 = arith.addf %153, %154 : vector<16x1xf32>
    %156 = math.rsqrt %155 : vector<16x1xf32>
    %157 = vector.broadcast %156 : vector<16x1xf32> to vector<16x32xf32>
    %158 = arith.mulf %148, %157 : vector<16x32xf32>
    %159 = vector.broadcast %140 : vector<1x32xf32> to vector<16x32xf32>
    %160 = arith.mulf %158, %159 : vector<16x32xf32>
    %161 = vector.broadcast %142 : vector<1x32xf32> to vector<16x32xf32>
    %162 = arith.addf %160, %161 : vector<16x32xf32>
    %163 = arith.truncf %162 : vector<16x32xf32> to vector<16x32xbf16>
    %c1 = arith.constant 1 : index
    %c0_79 = arith.constant 0 : index
    %c0_80 = arith.constant 0 : index
    %164 = vector.load %arg5[%c1, %c0_79, %c0_80] : memref<2x32x96xbf16, #tpu.memory_space<vmem>>, vector<1x32x96xbf16>
    %165 = vector.shape_cast %164 : vector<1x32x96xbf16> to vector<32x96xbf16>
    %cst_81 = arith.constant dense<0.000000e+00> : vector<16x96xf32>
    %166 = tpu.matmul %163, %165, %cst_81 {dimension_numbers = #tpu.dot_dimension_numbers<[1], [0], [0], [1], [0, 0, 1, 1], [], []>} : vector<16x32xbf16>, vector<32x96xbf16>, vector<16x96xf32> -> vector<16x96xf32>
    %c1_82 = arith.constant 1 : index
    %c0_83 = arith.constant 0 : index
    %c0_84 = arith.constant 0 : index
    %167 = vector.load %arg6[%c1_82, %c0_83, %c0_84] : memref<2x1x96xf32, #tpu.memory_space<vmem>>, vector<1x1x96xf32>
    %168 = vector.shape_cast %167 : vector<1x1x96xf32> to vector<1x96xf32>
    %169 = vector.broadcast %168 : vector<1x96xf32> to vector<16x96xf32>
    %170 = arith.addf %166, %169 : vector<16x96xf32>
    %171 = vector.extract_strided_slice %170 {offsets = [0, 0], sizes = [16, 16], strides = [1, 1]} : vector<16x96xf32> to vector<16x16xf32>
    %172 = vector.extract_strided_slice %170 {offsets = [0, 32], sizes = [16, 16], strides = [1, 1]} : vector<16x96xf32> to vector<16x16xf32>
    %173 = vector.extract_strided_slice %170 {offsets = [0, 64], sizes = [16, 16], strides = [1, 1]} : vector<16x96xf32> to vector<16x16xf32>
    %cst_85 = arith.constant dense<0.000000e+00> : vector<16x16xf32>
    %174 = tpu.matmul %171, %172, %cst_85 {dimension_numbers = #tpu.dot_dimension_numbers<[1], [1], [0], [0], [0, 0, 1, 0], [], []>} : vector<16x16xf32>, vector<16x16xf32>, vector<16x16xf32> -> vector<16x16xf32>
    %cst_86 = arith.constant 2.500000e-01 : f32
    %175 = vector.broadcast %cst_86 : f32 to vector<16x16xf32>
    %176 = arith.mulf %174, %175 : vector<16x16xf32>
    %177 = arith.addf %176, %30 : vector<16x16xf32>
    %cst_87 = arith.constant dense<0xFF800000> : vector<16xf32>
    %178 = vector.multi_reduction <maximumf>, %177, %cst_87 [1] : vector<16x16xf32> to vector<16xf32>
    %179 = vector.shape_cast %178 : vector<16xf32> to vector<16x1xf32>
    %180 = vector.broadcast %179 : vector<16x1xf32> to vector<16x16xf32>
    %181 = arith.subf %177, %180 : vector<16x16xf32>
    %182 = math.exp %181 : vector<16x16xf32>
    %cst_88 = arith.constant dense<0.000000e+00> : vector<16xf32>
    %183 = vector.multi_reduction <add>, %182, %cst_88 [1] : vector<16x16xf32> to vector<16xf32>
    %184 = vector.shape_cast %183 : vector<16xf32> to vector<16x1xf32>
    %185 = tpu.reciprocal %184 {approx = true} : vector<16x1xf32> -> vector<16x1xf32>
    %186 = vector.broadcast %185 : vector<16x1xf32> to vector<16x16xf32>
    %187 = arith.mulf %182, %186 : vector<16x16xf32>
    %cst_89 = arith.constant dense<0.000000e+00> : vector<16x16xf32>
    %188 = tpu.matmul %187, %173, %cst_89 {dimension_numbers = #tpu.dot_dimension_numbers<[1], [0], [0], [1], [0, 0, 1, 1], [], []>} : vector<16x16xf32>, vector<16x16xf32>, vector<16x16xf32> -> vector<16x16xf32>
    %189 = vector.extract_strided_slice %170 {offsets = [0, 16], sizes = [16, 16], strides = [1, 1]} : vector<16x96xf32> to vector<16x16xf32>
    %190 = vector.extract_strided_slice %170 {offsets = [0, 48], sizes = [16, 16], strides = [1, 1]} : vector<16x96xf32> to vector<16x16xf32>
    %191 = vector.extract_strided_slice %170 {offsets = [0, 80], sizes = [16, 16], strides = [1, 1]} : vector<16x96xf32> to vector<16x16xf32>
    %cst_90 = arith.constant dense<0.000000e+00> : vector<16x16xf32>
    %192 = tpu.matmul %189, %190, %cst_90 {dimension_numbers = #tpu.dot_dimension_numbers<[1], [1], [0], [0], [0, 0, 1, 0], [], []>} : vector<16x16xf32>, vector<16x16xf32>, vector<16x16xf32> -> vector<16x16xf32>
    %cst_91 = arith.constant 2.500000e-01 : f32
    %193 = vector.broadcast %cst_91 : f32 to vector<16x16xf32>
    %194 = arith.mulf %192, %193 : vector<16x16xf32>
    %195 = arith.addf %194, %30 : vector<16x16xf32>
    %cst_92 = arith.constant dense<0xFF800000> : vector<16xf32>
    %196 = vector.multi_reduction <maximumf>, %195, %cst_92 [1] : vector<16x16xf32> to vector<16xf32>
    %197 = vector.shape_cast %196 : vector<16xf32> to vector<16x1xf32>
    %198 = vector.broadcast %197 : vector<16x1xf32> to vector<16x16xf32>
    %199 = arith.subf %195, %198 : vector<16x16xf32>
    %200 = math.exp %199 : vector<16x16xf32>
    %cst_93 = arith.constant dense<0.000000e+00> : vector<16xf32>
    %201 = vector.multi_reduction <add>, %200, %cst_93 [1] : vector<16x16xf32> to vector<16xf32>
    %202 = vector.shape_cast %201 : vector<16xf32> to vector<16x1xf32>
    %203 = tpu.reciprocal %202 {approx = true} : vector<16x1xf32> -> vector<16x1xf32>
    %204 = vector.broadcast %203 : vector<16x1xf32> to vector<16x16xf32>
    %205 = arith.mulf %200, %204 : vector<16x16xf32>
    %cst_94 = arith.constant dense<0.000000e+00> : vector<16x16xf32>
    %206 = tpu.matmul %205, %191, %cst_94 {dimension_numbers = #tpu.dot_dimension_numbers<[1], [0], [0], [1], [0, 0, 1, 1], [], []>} : vector<16x16xf32>, vector<16x16xf32>, vector<16x16xf32> -> vector<16x16xf32>
    %207 = tpu.concatenate %188, %206 in 1 : vector<16x16xf32>, vector<16x16xf32> -> vector<16x32xf32>
    %208 = arith.truncf %207 : vector<16x32xf32> to vector<16x32xbf16>
    %c1_95 = arith.constant 1 : index
    %c0_96 = arith.constant 0 : index
    %c0_97 = arith.constant 0 : index
    %209 = vector.load %arg7[%c1_95, %c0_96, %c0_97] : memref<2x32x32xbf16, #tpu.memory_space<vmem>>, vector<1x32x32xbf16>
    %210 = vector.shape_cast %209 : vector<1x32x32xbf16> to vector<32x32xbf16>
    %cst_98 = arith.constant dense<0.000000e+00> : vector<16x32xf32>
    %211 = tpu.matmul %208, %210, %cst_98 {dimension_numbers = #tpu.dot_dimension_numbers<[1], [0], [0], [1], [0, 0, 1, 1], [], []>} : vector<16x32xbf16>, vector<32x32xbf16>, vector<16x32xf32> -> vector<16x32xf32>
    %c1_99 = arith.constant 1 : index
    %c0_100 = arith.constant 0 : index
    %c0_101 = arith.constant 0 : index
    %212 = vector.load %arg8[%c1_99, %c0_100, %c0_101] : memref<2x1x32xf32, #tpu.memory_space<vmem>>, vector<1x1x32xf32>
    %213 = vector.shape_cast %212 : vector<1x1x32xf32> to vector<1x32xf32>
    %214 = vector.broadcast %213 : vector<1x32xf32> to vector<16x32xf32>
    %215 = arith.addf %211, %214 : vector<16x32xf32>
    %216 = arith.addf %162, %215 : vector<16x32xf32>
    %c1_102 = arith.constant 1 : index
    %c0_103 = arith.constant 0 : index
    %c0_104 = arith.constant 0 : index
    %217 = vector.load %arg9[%c1_102, %c0_103, %c0_104] : memref<2x1x32xf32, #tpu.memory_space<vmem>>, vector<1x1x32xf32>
    %218 = vector.shape_cast %217 : vector<1x1x32xf32> to vector<1x32xf32>
    %c1_105 = arith.constant 1 : index
    %c0_106 = arith.constant 0 : index
    %c0_107 = arith.constant 0 : index
    %219 = vector.load %arg10[%c1_105, %c0_106, %c0_107] : memref<2x1x32xf32, #tpu.memory_space<vmem>>, vector<1x1x32xf32>
    %220 = vector.shape_cast %219 : vector<1x1x32xf32> to vector<1x32xf32>
    %cst_108 = arith.constant dense<0.000000e+00> : vector<16xf32>
    %221 = vector.multi_reduction <add>, %216, %cst_108 [1] : vector<16x32xf32> to vector<16xf32>
    %222 = vector.shape_cast %221 : vector<16xf32> to vector<16x1xf32>
    %cst_109 = arith.constant 3.200000e+01 : f32
    %223 = vector.broadcast %cst_109 : f32 to vector<16x1xf32>
    %224 = arith.divf %222, %223 : vector<16x1xf32>
    %225 = vector.broadcast %224 : vector<16x1xf32> to vector<16x32xf32>
    %226 = arith.subf %216, %225 : vector<16x32xf32>
    %227 = arith.mulf %226, %226 : vector<16x32xf32>
    %cst_110 = arith.constant dense<0.000000e+00> : vector<16xf32>
    %228 = vector.multi_reduction <add>, %227, %cst_110 [1] : vector<16x32xf32> to vector<16xf32>
    %229 = vector.shape_cast %228 : vector<16xf32> to vector<16x1xf32>
    %cst_111 = arith.constant 3.200000e+01 : f32
    %230 = vector.broadcast %cst_111 : f32 to vector<16x1xf32>
    %231 = arith.divf %229, %230 : vector<16x1xf32>
    %cst_112 = arith.constant 9.99999996E-13 : f32
    %232 = vector.broadcast %cst_112 : f32 to vector<16x1xf32>
    %233 = arith.addf %231, %232 : vector<16x1xf32>
    %234 = math.rsqrt %233 : vector<16x1xf32>
    %235 = vector.broadcast %234 : vector<16x1xf32> to vector<16x32xf32>
    %236 = arith.mulf %226, %235 : vector<16x32xf32>
    %237 = vector.broadcast %218 : vector<1x32xf32> to vector<16x32xf32>
    %238 = arith.mulf %236, %237 : vector<16x32xf32>
    %239 = vector.broadcast %220 : vector<1x32xf32> to vector<16x32xf32>
    %240 = arith.addf %238, %239 : vector<16x32xf32>
    %241 = arith.truncf %240 : vector<16x32xf32> to vector<16x32xbf16>
    %c1_113 = arith.constant 1 : index
    %c0_114 = arith.constant 0 : index
    %c0_115 = arith.constant 0 : index
    %242 = vector.load %arg11[%c1_113, %c0_114, %c0_115] : memref<2x32x64xbf16, #tpu.memory_space<vmem>>, vector<1x32x64xbf16>
    %243 = vector.shape_cast %242 : vector<1x32x64xbf16> to vector<32x64xbf16>
    %cst_116 = arith.constant dense<0.000000e+00> : vector<16x64xf32>
    %244 = tpu.matmul %241, %243, %cst_116 {dimension_numbers = #tpu.dot_dimension_numbers<[1], [0], [0], [1], [0, 0, 1, 1], [], []>} : vector<16x32xbf16>, vector<32x64xbf16>, vector<16x64xf32> -> vector<16x64xf32>
    %c1_117 = arith.constant 1 : index
    %c0_118 = arith.constant 0 : index
    %c0_119 = arith.constant 0 : index
    %245 = vector.load %arg12[%c1_117, %c0_118, %c0_119] : memref<2x1x64xf32, #tpu.memory_space<vmem>>, vector<1x1x64xf32>
    %246 = vector.shape_cast %245 : vector<1x1x64xf32> to vector<1x64xf32>
    %247 = vector.broadcast %246 : vector<1x64xf32> to vector<16x64xf32>
    %248 = arith.addf %244, %247 : vector<16x64xf32>
    %249 = arith.mulf %248, %248 : vector<16x64xf32>
    %250 = arith.mulf %248, %249 : vector<16x64xf32>
    %cst_120 = arith.constant 4.471500e-02 : f32
    %251 = vector.broadcast %cst_120 : f32 to vector<16x64xf32>
    %252 = arith.mulf %251, %250 : vector<16x64xf32>
    %253 = arith.addf %248, %252 : vector<16x64xf32>
    %cst_121 = arith.constant 0.797884583 : f32
    %254 = vector.broadcast %cst_121 : f32 to vector<16x64xf32>
    %255 = arith.mulf %254, %253 : vector<16x64xf32>
    %256 = math.tanh %255 : vector<16x64xf32>
    %cst_122 = arith.constant 1.000000e+00 : f32
    %257 = vector.broadcast %cst_122 : f32 to vector<16x64xf32>
    %258 = arith.addf %257, %256 : vector<16x64xf32>
    %cst_123 = arith.constant 5.000000e-01 : f32
    %259 = vector.broadcast %cst_123 : f32 to vector<16x64xf32>
    %260 = arith.mulf %259, %258 : vector<16x64xf32>
    %261 = arith.mulf %248, %260 : vector<16x64xf32>
    %262 = arith.truncf %261 : vector<16x64xf32> to vector<16x64xbf16>
    %c1_124 = arith.constant 1 : index
    %c0_125 = arith.constant 0 : index
    %c0_126 = arith.constant 0 : index
    %263 = vector.load %arg13[%c1_124, %c0_125, %c0_126] : memref<2x64x32xbf16, #tpu.memory_space<vmem>>, vector<1x64x32xbf16>
    %264 = vector.shape_cast %263 : vector<1x64x32xbf16> to vector<64x32xbf16>
    %cst_127 = arith.constant dense<0.000000e+00> : vector<16x32xf32>
    %265 = tpu.matmul %262, %264, %cst_127 {dimension_numbers = #tpu.dot_dimension_numbers<[1], [0], [0], [1], [0, 0, 1, 1], [], []>} : vector<16x64xbf16>, vector<64x32xbf16>, vector<16x32xf32> -> vector<16x32xf32>
    %c1_128 = arith.constant 1 : index
    %c0_129 = arith.constant 0 : index
    %c0_130 = arith.constant 0 : index
    %266 = vector.load %arg14[%c1_128, %c0_129, %c0_130] : memref<2x1x32xf32, #tpu.memory_space<vmem>>, vector<1x1x32xf32>
    %267 = vector.shape_cast %266 : vector<1x1x32xf32> to vector<1x32xf32>
    %268 = vector.broadcast %267 : vector<1x32xf32> to vector<16x32xf32>
    %269 = arith.addf %265, %268 : vector<16x32xf32>
    %270 = arith.addf %240, %269 : vector<16x32xf32>
    %c1_131 = arith.constant 1 : index
    %c0_132 = arith.constant 0 : index
    %c0_133 = arith.constant 0 : index
    %271 = vector.load %arg15[%c1_131, %c0_132, %c0_133] : memref<2x1x32xf32, #tpu.memory_space<vmem>>, vector<1x1x32xf32>
    %272 = vector.shape_cast %271 : vector<1x1x32xf32> to vector<1x32xf32>
    %c1_134 = arith.constant 1 : index
    %c0_135 = arith.constant 0 : index
    %c0_136 = arith.constant 0 : index
    %273 = vector.load %arg16[%c1_134, %c0_135, %c0_136] : memref<2x1x32xf32, #tpu.memory_space<vmem>>, vector<1x1x32xf32>
    %274 = vector.shape_cast %273 : vector<1x1x32xf32> to vector<1x32xf32>
    %cst_137 = arith.constant dense<0.000000e+00> : vector<16xf32>
    %275 = vector.multi_reduction <add>, %270, %cst_137 [1] : vector<16x32xf32> to vector<16xf32>
    %276 = vector.shape_cast %275 : vector<16xf32> to vector<16x1xf32>
    %cst_138 = arith.constant 3.200000e+01 : f32
    %277 = vector.broadcast %cst_138 : f32 to vector<16x1xf32>
    %278 = arith.divf %276, %277 : vector<16x1xf32>
    %279 = vector.broadcast %278 : vector<16x1xf32> to vector<16x32xf32>
    %280 = arith.subf %270, %279 : vector<16x32xf32>
    %281 = arith.mulf %280, %280 : vector<16x32xf32>
    %cst_139 = arith.constant dense<0.000000e+00> : vector<16xf32>
    %282 = vector.multi_reduction <add>, %281, %cst_139 [1] : vector<16x32xf32> to vector<16xf32>
    %283 = vector.shape_cast %282 : vector<16xf32> to vector<16x1xf32>
    %cst_140 = arith.constant 3.200000e+01 : f32
    %284 = vector.broadcast %cst_140 : f32 to vector<16x1xf32>
    %285 = arith.divf %283, %284 : vector<16x1xf32>
    %cst_141 = arith.constant 9.99999996E-13 : f32
    %286 = vector.broadcast %cst_141 : f32 to vector<16x1xf32>
    %287 = arith.addf %285, %286 : vector<16x1xf32>
    %288 = math.rsqrt %287 : vector<16x1xf32>
    %289 = vector.broadcast %288 : vector<16x1xf32> to vector<16x32xf32>
    %290 = arith.mulf %280, %289 : vector<16x32xf32>
    %291 = vector.broadcast %272 : vector<1x32xf32> to vector<16x32xf32>
    %292 = arith.mulf %290, %291 : vector<16x32xf32>
    %293 = vector.broadcast %274 : vector<1x32xf32> to vector<16x32xf32>
    %294 = arith.addf %292, %293 : vector<16x32xf32>
    %c0_142 = arith.constant 0 : index
    %c0_143 = arith.constant 0 : index
    %295 = vector.load %arg17[%c0_142, %c0_143] : memref<1x256xf32, #tpu.memory_space<vmem>>, vector<1x256xf32>
    %cst_144 = arith.constant 0.000000e+00 : f32
    %296 = vector.broadcast %cst_144 : f32 to vector<1x256xf32>
    %297 = arith.cmpf ogt, %295, %296 : vector<1x256xf32>
    %c0_145 = arith.constant 0 : index
    %c0_146 = arith.constant 0 : index
    %298 = vector.load %arg18[%c0_145, %c0_146] : memref<1x64xf32, #tpu.memory_space<vmem>>, vector<1x64xf32>
    %cst_147 = arith.constant 0.000000e+00 : f32
    %299 = vector.broadcast %cst_147 : f32 to vector<1x64xf32>
    %300 = arith.cmpf ogt, %298, %299 : vector<1x64xf32>
    %c0_148 = arith.constant 0 : index
    %c0_149 = arith.constant 0 : index
    %301 = vector.load %arg19[%c0_148, %c0_149] : memref<32x256xbf16, #tpu.memory_space<vmem>>, vector<32x256xbf16>
    %302 = arith.truncf %294 : vector<16x32xf32> to vector<16x32xbf16>
    %cst_150 = arith.constant dense<0.000000e+00> : vector<16x256xf32>
    %303 = tpu.matmul %302, %301, %cst_150 {dimension_numbers = #tpu.dot_dimension_numbers<[1], [0], [0], [1], [0, 0, 1, 1], [], []>} : vector<16x32xbf16>, vector<32x256xbf16>, vector<16x256xf32> -> vector<16x256xf32>
    %c0_151 = arith.constant 0 : index
    %c0_152 = arith.constant 0 : index
    %c0_153 = arith.constant 0 : index
    %304 = vector.load %arg21[%c0_151, %c0_152, %c0_153] : memref<5x1x256xf32, #tpu.memory_space<vmem>>, vector<1x1x256xf32>
    %305 = vector.shape_cast %304 : vector<1x1x256xf32> to vector<1x256xf32>
    %306 = vector.broadcast %305 : vector<1x256xf32> to vector<16x256xf32>
    %307 = arith.addf %303, %306 : vector<16x256xf32>
    %308 = vector.extract_strided_slice %307 {offsets = [0, 0], sizes = [2, 256], strides = [1, 1]} : vector<16x256xf32> to vector<2x256xf32>
    %309 = vector.extract_strided_slice %307 {offsets = [2, 0], sizes = [2, 256], strides = [1, 1]} : vector<16x256xf32> to vector<2x256xf32>
    %310 = vector.extract_strided_slice %307 {offsets = [4, 0], sizes = [2, 256], strides = [1, 1]} : vector<16x256xf32> to vector<2x256xf32>
    %311 = vector.extract_strided_slice %307 {offsets = [6, 0], sizes = [2, 256], strides = [1, 1]} : vector<16x256xf32> to vector<2x256xf32>
    %312 = vector.extract_strided_slice %307 {offsets = [8, 0], sizes = [2, 256], strides = [1, 1]} : vector<16x256xf32> to vector<2x256xf32>
    %313 = vector.extract_strided_slice %307 {offsets = [10, 0], sizes = [2, 256], strides = [1, 1]} : vector<16x256xf32> to vector<2x256xf32>
    %314 = vector.extract_strided_slice %307 {offsets = [12, 0], sizes = [2, 256], strides = [1, 1]} : vector<16x256xf32> to vector<2x256xf32>
    %315 = vector.extract_strided_slice %307 {offsets = [14, 0], sizes = [2, 256], strides = [1, 1]} : vector<16x256xf32> to vector<2x256xf32>
    %c0_154 = arith.constant 0 : index
    %c0_155 = arith.constant 0 : index
    %c0_156 = arith.constant 0 : index
    %316 = vector.load %arg22[%c0_154, %c0_155, %c0_156] : memref<5x64x256xbf16, #tpu.memory_space<vmem>>, vector<1x64x256xbf16>
    %317 = vector.shape_cast %316 : vector<1x64x256xbf16> to vector<64x256xbf16>
    %cst_157 = arith.constant 0.000000e+00 : f32
    %318 = vector.broadcast %cst_157 : f32 to vector<2x64xf32>
    %cst_158 = arith.constant 0.000000e+00 : f32
    %319 = vector.broadcast %cst_158 : f32 to vector<2x64xf32>
    %320 = vector.shape_cast %297 : vector<1x256xi1> to vector<1x256xi1>
    %321 = vector.broadcast %320 : vector<1x256xi1> to vector<2x256xi1>
    %322 = arith.select %321, %308, %315 : vector<2x256xi1>, vector<2x256xf32>
    %323 = arith.truncf %318 : vector<2x64xf32> to vector<2x64xbf16>
    %cst_159 = arith.constant dense<0.000000e+00> : vector<2x256xf32>
    %324 = tpu.matmul %323, %317, %cst_159 {dimension_numbers = #tpu.dot_dimension_numbers<[1], [0], [0], [1], [0, 0, 1, 1], [], []>} : vector<2x64xbf16>, vector<64x256xbf16>, vector<2x256xf32> -> vector<2x256xf32>
    %325 = arith.addf %322, %324 : vector<2x256xf32>
    %326 = vector.extract_strided_slice %325 {offsets = [0, 0], sizes = [2, 192], strides = [1, 1]} : vector<2x256xf32> to vector<2x192xf32>
    %327 = arith.negf %326 : vector<2x192xf32>
    %328 = math.exp %327 : vector<2x192xf32>
    %cst_160 = arith.constant 1.000000e+00 : f32
    %329 = vector.broadcast %cst_160 : f32 to vector<2x192xf32>
    %330 = arith.addf %329, %328 : vector<2x192xf32>
    %331 = arith.divf %329, %330 : vector<2x192xf32>
    %332 = vector.extract_strided_slice %325 {offsets = [0, 192], sizes = [2, 64], strides = [1, 1]} : vector<2x256xf32> to vector<2x64xf32>
    %333 = math.tanh %332 : vector<2x64xf32>
    %334 = vector.extract_strided_slice %331 {offsets = [0, 64], sizes = [2, 64], strides = [1, 1]} : vector<2x192xf32> to vector<2x64xf32>
    %335 = arith.mulf %334, %319 : vector<2x64xf32>
    %336 = vector.extract_strided_slice %331 {offsets = [0, 0], sizes = [2, 64], strides = [1, 1]} : vector<2x192xf32> to vector<2x64xf32>
    %337 = arith.mulf %336, %333 : vector<2x64xf32>
    %338 = arith.addf %335, %337 : vector<2x64xf32>
    %339 = vector.extract_strided_slice %331 {offsets = [0, 128], sizes = [2, 64], strides = [1, 1]} : vector<2x192xf32> to vector<2x64xf32>
    %340 = math.tanh %338 : vector<2x64xf32>
    %341 = arith.mulf %339, %340 : vector<2x64xf32>
    %342 = vector.shape_cast %297 : vector<1x256xi1> to vector<1x256xi1>
    %343 = vector.broadcast %342 : vector<1x256xi1> to vector<2x256xi1>
    %344 = arith.select %343, %309, %314 : vector<2x256xi1>, vector<2x256xf32>
    %345 = arith.truncf %341 : vector<2x64xf32> to vector<2x64xbf16>
    %cst_161 = arith.constant dense<0.000000e+00> : vector<2x256xf32>
    %346 = tpu.matmul %345, %317, %cst_161 {dimension_numbers = #tpu.dot_dimension_numbers<[1], [0], [0], [1], [0, 0, 1, 1], [], []>} : vector<2x64xbf16>, vector<64x256xbf16>, vector<2x256xf32> -> vector<2x256xf32>
    %347 = arith.addf %344, %346 : vector<2x256xf32>
    %348 = vector.extract_strided_slice %347 {offsets = [0, 0], sizes = [2, 192], strides = [1, 1]} : vector<2x256xf32> to vector<2x192xf32>
    %349 = arith.negf %348 : vector<2x192xf32>
    %350 = math.exp %349 : vector<2x192xf32>
    %cst_162 = arith.constant 1.000000e+00 : f32
    %351 = vector.broadcast %cst_162 : f32 to vector<2x192xf32>
    %352 = arith.addf %351, %350 : vector<2x192xf32>
    %353 = arith.divf %351, %352 : vector<2x192xf32>
    %354 = vector.extract_strided_slice %347 {offsets = [0, 192], sizes = [2, 64], strides = [1, 1]} : vector<2x256xf32> to vector<2x64xf32>
    %355 = math.tanh %354 : vector<2x64xf32>
    %356 = vector.extract_strided_slice %353 {offsets = [0, 64], sizes = [2, 64], strides = [1, 1]} : vector<2x192xf32> to vector<2x64xf32>
    %357 = arith.mulf %356, %338 : vector<2x64xf32>
    %358 = vector.extract_strided_slice %353 {offsets = [0, 0], sizes = [2, 64], strides = [1, 1]} : vector<2x192xf32> to vector<2x64xf32>
    %359 = arith.mulf %358, %355 : vector<2x64xf32>
    %360 = arith.addf %357, %359 : vector<2x64xf32>
    %361 = vector.extract_strided_slice %353 {offsets = [0, 128], sizes = [2, 64], strides = [1, 1]} : vector<2x192xf32> to vector<2x64xf32>
    %362 = math.tanh %360 : vector<2x64xf32>
    %363 = arith.mulf %361, %362 : vector<2x64xf32>
    %364 = vector.shape_cast %297 : vector<1x256xi1> to vector<1x256xi1>
    %365 = vector.broadcast %364 : vector<1x256xi1> to vector<2x256xi1>
    %366 = arith.select %365, %310, %313 : vector<2x256xi1>, vector<2x256xf32>
    %367 = arith.truncf %363 : vector<2x64xf32> to vector<2x64xbf16>
    %cst_163 = arith.constant dense<0.000000e+00> : vector<2x256xf32>
    %368 = tpu.matmul %367, %317, %cst_163 {dimension_numbers = #tpu.dot_dimension_numbers<[1], [0], [0], [1], [0, 0, 1, 1], [], []>} : vector<2x64xbf16>, vector<64x256xbf16>, vector<2x256xf32> -> vector<2x256xf32>
    %369 = arith.addf %366, %368 : vector<2x256xf32>
    %370 = vector.extract_strided_slice %369 {offsets = [0, 0], sizes = [2, 192], strides = [1, 1]} : vector<2x256xf32> to vector<2x192xf32>
    %371 = arith.negf %370 : vector<2x192xf32>
    %372 = math.exp %371 : vector<2x192xf32>
    %cst_164 = arith.constant 1.000000e+00 : f32
    %373 = vector.broadcast %cst_164 : f32 to vector<2x192xf32>
    %374 = arith.addf %373, %372 : vector<2x192xf32>
    %375 = arith.divf %373, %374 : vector<2x192xf32>
    %376 = vector.extract_strided_slice %369 {offsets = [0, 192], sizes = [2, 64], strides = [1, 1]} : vector<2x256xf32> to vector<2x64xf32>
    %377 = math.tanh %376 : vector<2x64xf32>
    %378 = vector.extract_strided_slice %375 {offsets = [0, 64], sizes = [2, 64], strides = [1, 1]} : vector<2x192xf32> to vector<2x64xf32>
    %379 = arith.mulf %378, %360 : vector<2x64xf32>
    %380 = vector.extract_strided_slice %375 {offsets = [0, 0], sizes = [2, 64], strides = [1, 1]} : vector<2x192xf32> to vector<2x64xf32>
    %381 = arith.mulf %380, %377 : vector<2x64xf32>
    %382 = arith.addf %379, %381 : vector<2x64xf32>
    %383 = vector.extract_strided_slice %375 {offsets = [0, 128], sizes = [2, 64], strides = [1, 1]} : vector<2x192xf32> to vector<2x64xf32>
    %384 = math.tanh %382 : vector<2x64xf32>
    %385 = arith.mulf %383, %384 : vector<2x64xf32>
    %386 = vector.shape_cast %297 : vector<1x256xi1> to vector<1x256xi1>
    %387 = vector.broadcast %386 : vector<1x256xi1> to vector<2x256xi1>
    %388 = arith.select %387, %311, %312 : vector<2x256xi1>, vector<2x256xf32>
    %389 = arith.truncf %385 : vector<2x64xf32> to vector<2x64xbf16>
    %cst_165 = arith.constant dense<0.000000e+00> : vector<2x256xf32>
    %390 = tpu.matmul %389, %317, %cst_165 {dimension_numbers = #tpu.dot_dimension_numbers<[1], [0], [0], [1], [0, 0, 1, 1], [], []>} : vector<2x64xbf16>, vector<64x256xbf16>, vector<2x256xf32> -> vector<2x256xf32>
    %391 = arith.addf %388, %390 : vector<2x256xf32>
    %392 = vector.extract_strided_slice %391 {offsets = [0, 0], sizes = [2, 192], strides = [1, 1]} : vector<2x256xf32> to vector<2x192xf32>
    %393 = arith.negf %392 : vector<2x192xf32>
    %394 = math.exp %393 : vector<2x192xf32>
    %cst_166 = arith.constant 1.000000e+00 : f32
    %395 = vector.broadcast %cst_166 : f32 to vector<2x192xf32>
    %396 = arith.addf %395, %394 : vector<2x192xf32>
    %397 = arith.divf %395, %396 : vector<2x192xf32>
    %398 = vector.extract_strided_slice %391 {offsets = [0, 192], sizes = [2, 64], strides = [1, 1]} : vector<2x256xf32> to vector<2x64xf32>
    %399 = math.tanh %398 : vector<2x64xf32>
    %400 = vector.extract_strided_slice %397 {offsets = [0, 64], sizes = [2, 64], strides = [1, 1]} : vector<2x192xf32> to vector<2x64xf32>
    %401 = arith.mulf %400, %382 : vector<2x64xf32>
    %402 = vector.extract_strided_slice %397 {offsets = [0, 0], sizes = [2, 64], strides = [1, 1]} : vector<2x192xf32> to vector<2x64xf32>
    %403 = arith.mulf %402, %399 : vector<2x64xf32>
    %404 = arith.addf %401, %403 : vector<2x64xf32>
    %405 = vector.extract_strided_slice %397 {offsets = [0, 128], sizes = [2, 64], strides = [1, 1]} : vector<2x192xf32> to vector<2x64xf32>
    %406 = math.tanh %404 : vector<2x64xf32>
    %407 = arith.mulf %405, %406 : vector<2x64xf32>
    %408 = vector.shape_cast %297 : vector<1x256xi1> to vector<1x256xi1>
    %409 = vector.broadcast %408 : vector<1x256xi1> to vector<2x256xi1>
    %410 = arith.select %409, %312, %311 : vector<2x256xi1>, vector<2x256xf32>
    %411 = arith.truncf %407 : vector<2x64xf32> to vector<2x64xbf16>
    %cst_167 = arith.constant dense<0.000000e+00> : vector<2x256xf32>
    %412 = tpu.matmul %411, %317, %cst_167 {dimension_numbers = #tpu.dot_dimension_numbers<[1], [0], [0], [1], [0, 0, 1, 1], [], []>} : vector<2x64xbf16>, vector<64x256xbf16>, vector<2x256xf32> -> vector<2x256xf32>
    %413 = arith.addf %410, %412 : vector<2x256xf32>
    %414 = vector.extract_strided_slice %413 {offsets = [0, 0], sizes = [2, 192], strides = [1, 1]} : vector<2x256xf32> to vector<2x192xf32>
    %415 = arith.negf %414 : vector<2x192xf32>
    %416 = math.exp %415 : vector<2x192xf32>
    %cst_168 = arith.constant 1.000000e+00 : f32
    %417 = vector.broadcast %cst_168 : f32 to vector<2x192xf32>
    %418 = arith.addf %417, %416 : vector<2x192xf32>
    %419 = arith.divf %417, %418 : vector<2x192xf32>
    %420 = vector.extract_strided_slice %413 {offsets = [0, 192], sizes = [2, 64], strides = [1, 1]} : vector<2x256xf32> to vector<2x64xf32>
    %421 = math.tanh %420 : vector<2x64xf32>
    %422 = vector.extract_strided_slice %419 {offsets = [0, 64], sizes = [2, 64], strides = [1, 1]} : vector<2x192xf32> to vector<2x64xf32>
    %423 = arith.mulf %422, %404 : vector<2x64xf32>
    %424 = vector.extract_strided_slice %419 {offsets = [0, 0], sizes = [2, 64], strides = [1, 1]} : vector<2x192xf32> to vector<2x64xf32>
    %425 = arith.mulf %424, %421 : vector<2x64xf32>
    %426 = arith.addf %423, %425 : vector<2x64xf32>
    %427 = vector.extract_strided_slice %419 {offsets = [0, 128], sizes = [2, 64], strides = [1, 1]} : vector<2x192xf32> to vector<2x64xf32>
    %428 = math.tanh %426 : vector<2x64xf32>
    %429 = arith.mulf %427, %428 : vector<2x64xf32>
    %430 = vector.shape_cast %297 : vector<1x256xi1> to vector<1x256xi1>
    %431 = vector.broadcast %430 : vector<1x256xi1> to vector<2x256xi1>
    %432 = arith.select %431, %313, %310 : vector<2x256xi1>, vector<2x256xf32>
    %433 = arith.truncf %429 : vector<2x64xf32> to vector<2x64xbf16>
    %cst_169 = arith.constant dense<0.000000e+00> : vector<2x256xf32>
    %434 = tpu.matmul %433, %317, %cst_169 {dimension_numbers = #tpu.dot_dimension_numbers<[1], [0], [0], [1], [0, 0, 1, 1], [], []>} : vector<2x64xbf16>, vector<64x256xbf16>, vector<2x256xf32> -> vector<2x256xf32>
    %435 = arith.addf %432, %434 : vector<2x256xf32>
    %436 = vector.extract_strided_slice %435 {offsets = [0, 0], sizes = [2, 192], strides = [1, 1]} : vector<2x256xf32> to vector<2x192xf32>
    %437 = arith.negf %436 : vector<2x192xf32>
    %438 = math.exp %437 : vector<2x192xf32>
    %cst_170 = arith.constant 1.000000e+00 : f32
    %439 = vector.broadcast %cst_170 : f32 to vector<2x192xf32>
    %440 = arith.addf %439, %438 : vector<2x192xf32>
    %441 = arith.divf %439, %440 : vector<2x192xf32>
    %442 = vector.extract_strided_slice %435 {offsets = [0, 192], sizes = [2, 64], strides = [1, 1]} : vector<2x256xf32> to vector<2x64xf32>
    %443 = math.tanh %442 : vector<2x64xf32>
    %444 = vector.extract_strided_slice %441 {offsets = [0, 64], sizes = [2, 64], strides = [1, 1]} : vector<2x192xf32> to vector<2x64xf32>
    %445 = arith.mulf %444, %426 : vector<2x64xf32>
    %446 = vector.extract_strided_slice %441 {offsets = [0, 0], sizes = [2, 64], strides = [1, 1]} : vector<2x192xf32> to vector<2x64xf32>
    %447 = arith.mulf %446, %443 : vector<2x64xf32>
    %448 = arith.addf %445, %447 : vector<2x64xf32>
    %449 = vector.extract_strided_slice %441 {offsets = [0, 128], sizes = [2, 64], strides = [1, 1]} : vector<2x192xf32> to vector<2x64xf32>
    %450 = math.tanh %448 : vector<2x64xf32>
    %451 = arith.mulf %449, %450 : vector<2x64xf32>
    %452 = vector.shape_cast %297 : vector<1x256xi1> to vector<1x256xi1>
    %453 = vector.broadcast %452 : vector<1x256xi1> to vector<2x256xi1>
    %454 = arith.select %453, %314, %309 : vector<2x256xi1>, vector<2x256xf32>
    %455 = arith.truncf %451 : vector<2x64xf32> to vector<2x64xbf16>
    %cst_171 = arith.constant dense<0.000000e+00> : vector<2x256xf32>
    %456 = tpu.matmul %455, %317, %cst_171 {dimension_numbers = #tpu.dot_dimension_numbers<[1], [0], [0], [1], [0, 0, 1, 1], [], []>} : vector<2x64xbf16>, vector<64x256xbf16>, vector<2x256xf32> -> vector<2x256xf32>
    %457 = arith.addf %454, %456 : vector<2x256xf32>
    %458 = vector.extract_strided_slice %457 {offsets = [0, 0], sizes = [2, 192], strides = [1, 1]} : vector<2x256xf32> to vector<2x192xf32>
    %459 = arith.negf %458 : vector<2x192xf32>
    %460 = math.exp %459 : vector<2x192xf32>
    %cst_172 = arith.constant 1.000000e+00 : f32
    %461 = vector.broadcast %cst_172 : f32 to vector<2x192xf32>
    %462 = arith.addf %461, %460 : vector<2x192xf32>
    %463 = arith.divf %461, %462 : vector<2x192xf32>
    %464 = vector.extract_strided_slice %457 {offsets = [0, 192], sizes = [2, 64], strides = [1, 1]} : vector<2x256xf32> to vector<2x64xf32>
    %465 = math.tanh %464 : vector<2x64xf32>
    %466 = vector.extract_strided_slice %463 {offsets = [0, 64], sizes = [2, 64], strides = [1, 1]} : vector<2x192xf32> to vector<2x64xf32>
    %467 = arith.mulf %466, %448 : vector<2x64xf32>
    %468 = vector.extract_strided_slice %463 {offsets = [0, 0], sizes = [2, 64], strides = [1, 1]} : vector<2x192xf32> to vector<2x64xf32>
    %469 = arith.mulf %468, %465 : vector<2x64xf32>
    %470 = arith.addf %467, %469 : vector<2x64xf32>
    %471 = vector.extract_strided_slice %463 {offsets = [0, 128], sizes = [2, 64], strides = [1, 1]} : vector<2x192xf32> to vector<2x64xf32>
    %472 = math.tanh %470 : vector<2x64xf32>
    %473 = arith.mulf %471, %472 : vector<2x64xf32>
    %474 = vector.shape_cast %297 : vector<1x256xi1> to vector<1x256xi1>
    %475 = vector.broadcast %474 : vector<1x256xi1> to vector<2x256xi1>
    %476 = arith.select %475, %315, %308 : vector<2x256xi1>, vector<2x256xf32>
    %477 = arith.truncf %473 : vector<2x64xf32> to vector<2x64xbf16>
    %cst_173 = arith.constant dense<0.000000e+00> : vector<2x256xf32>
    %478 = tpu.matmul %477, %317, %cst_173 {dimension_numbers = #tpu.dot_dimension_numbers<[1], [0], [0], [1], [0, 0, 1, 1], [], []>} : vector<2x64xbf16>, vector<64x256xbf16>, vector<2x256xf32> -> vector<2x256xf32>
    %479 = arith.addf %476, %478 : vector<2x256xf32>
    %480 = vector.extract_strided_slice %479 {offsets = [0, 0], sizes = [2, 192], strides = [1, 1]} : vector<2x256xf32> to vector<2x192xf32>
    %481 = arith.negf %480 : vector<2x192xf32>
    %482 = math.exp %481 : vector<2x192xf32>
    %cst_174 = arith.constant 1.000000e+00 : f32
    %483 = vector.broadcast %cst_174 : f32 to vector<2x192xf32>
    %484 = arith.addf %483, %482 : vector<2x192xf32>
    %485 = arith.divf %483, %484 : vector<2x192xf32>
    %486 = vector.extract_strided_slice %479 {offsets = [0, 192], sizes = [2, 64], strides = [1, 1]} : vector<2x256xf32> to vector<2x64xf32>
    %487 = math.tanh %486 : vector<2x64xf32>
    %488 = vector.extract_strided_slice %485 {offsets = [0, 64], sizes = [2, 64], strides = [1, 1]} : vector<2x192xf32> to vector<2x64xf32>
    %489 = arith.mulf %488, %470 : vector<2x64xf32>
    %490 = vector.extract_strided_slice %485 {offsets = [0, 0], sizes = [2, 64], strides = [1, 1]} : vector<2x192xf32> to vector<2x64xf32>
    %491 = arith.mulf %490, %487 : vector<2x64xf32>
    %492 = arith.addf %489, %491 : vector<2x64xf32>
    %493 = vector.extract_strided_slice %485 {offsets = [0, 128], sizes = [2, 64], strides = [1, 1]} : vector<2x192xf32> to vector<2x64xf32>
    %494 = math.tanh %492 : vector<2x64xf32>
    %495 = arith.mulf %493, %494 : vector<2x64xf32>
    %496 = vector.shape_cast %300 : vector<1x64xi1> to vector<1x64xi1>
    %497 = vector.broadcast %496 : vector<1x64xi1> to vector<2x64xi1>
    %498 = arith.select %497, %341, %495 : vector<2x64xi1>, vector<2x64xf32>
    %499 = vector.shape_cast %300 : vector<1x64xi1> to vector<1x64xi1>
    %500 = vector.broadcast %499 : vector<1x64xi1> to vector<2x64xi1>
    %501 = arith.select %500, %363, %473 : vector<2x64xi1>, vector<2x64xf32>
    %502 = vector.shape_cast %300 : vector<1x64xi1> to vector<1x64xi1>
    %503 = vector.broadcast %502 : vector<1x64xi1> to vector<2x64xi1>
    %504 = arith.select %503, %385, %451 : vector<2x64xi1>, vector<2x64xf32>
    %505 = vector.shape_cast %300 : vector<1x64xi1> to vector<1x64xi1>
    %506 = vector.broadcast %505 : vector<1x64xi1> to vector<2x64xi1>
    %507 = arith.select %506, %407, %429 : vector<2x64xi1>, vector<2x64xf32>
    %508 = vector.shape_cast %300 : vector<1x64xi1> to vector<1x64xi1>
    %509 = vector.broadcast %508 : vector<1x64xi1> to vector<2x64xi1>
    %510 = arith.select %509, %429, %407 : vector<2x64xi1>, vector<2x64xf32>
    %511 = vector.shape_cast %300 : vector<1x64xi1> to vector<1x64xi1>
    %512 = vector.broadcast %511 : vector<1x64xi1> to vector<2x64xi1>
    %513 = arith.select %512, %451, %385 : vector<2x64xi1>, vector<2x64xf32>
    %514 = vector.shape_cast %300 : vector<1x64xi1> to vector<1x64xi1>
    %515 = vector.broadcast %514 : vector<1x64xi1> to vector<2x64xi1>
    %516 = arith.select %515, %473, %363 : vector<2x64xi1>, vector<2x64xf32>
    %517 = vector.shape_cast %300 : vector<1x64xi1> to vector<1x64xi1>
    %518 = vector.broadcast %517 : vector<1x64xi1> to vector<2x64xi1>
    %519 = arith.select %518, %495, %341 : vector<2x64xi1>, vector<2x64xf32>
    %520 = tpu.concatenate %498, %501, %504, %507, %510, %513, %516, %519 in 0 : vector<2x64xf32>, vector<2x64xf32>, vector<2x64xf32>, vector<2x64xf32>, vector<2x64xf32>, vector<2x64xf32>, vector<2x64xf32>, vector<2x64xf32> -> vector<16x64xf32>
    %c0_175 = arith.constant 0 : index
    %c0_176 = arith.constant 0 : index
    %c0_177 = arith.constant 0 : index
    %521 = vector.load %arg20[%c0_175, %c0_176, %c0_177] : memref<4x64x256xbf16, #tpu.memory_space<vmem>>, vector<1x64x256xbf16>
    %522 = vector.shape_cast %521 : vector<1x64x256xbf16> to vector<64x256xbf16>
    %523 = arith.truncf %520 : vector<16x64xf32> to vector<16x64xbf16>
    %cst_178 = arith.constant dense<0.000000e+00> : vector<16x256xf32>
    %524 = tpu.matmul %523, %522, %cst_178 {dimension_numbers = #tpu.dot_dimension_numbers<[1], [0], [0], [1], [0, 0, 1, 1], [], []>} : vector<16x64xbf16>, vector<64x256xbf16>, vector<16x256xf32> -> vector<16x256xf32>
    %c1_179 = arith.constant 1 : index
    %c0_180 = arith.constant 0 : index
    %c0_181 = arith.constant 0 : index
    %525 = vector.load %arg21[%c1_179, %c0_180, %c0_181] : memref<5x1x256xf32, #tpu.memory_space<vmem>>, vector<1x1x256xf32>
    %526 = vector.shape_cast %525 : vector<1x1x256xf32> to vector<1x256xf32>
    %527 = vector.broadcast %526 : vector<1x256xf32> to vector<16x256xf32>
    %528 = arith.addf %524, %527 : vector<16x256xf32>
    %529 = vector.extract_strided_slice %528 {offsets = [0, 0], sizes = [2, 256], strides = [1, 1]} : vector<16x256xf32> to vector<2x256xf32>
    %530 = vector.extract_strided_slice %528 {offsets = [2, 0], sizes = [2, 256], strides = [1, 1]} : vector<16x256xf32> to vector<2x256xf32>
    %531 = vector.extract_strided_slice %528 {offsets = [4, 0], sizes = [2, 256], strides = [1, 1]} : vector<16x256xf32> to vector<2x256xf32>
    %532 = vector.extract_strided_slice %528 {offsets = [6, 0], sizes = [2, 256], strides = [1, 1]} : vector<16x256xf32> to vector<2x256xf32>
    %533 = vector.extract_strided_slice %528 {offsets = [8, 0], sizes = [2, 256], strides = [1, 1]} : vector<16x256xf32> to vector<2x256xf32>
    %534 = vector.extract_strided_slice %528 {offsets = [10, 0], sizes = [2, 256], strides = [1, 1]} : vector<16x256xf32> to vector<2x256xf32>
    %535 = vector.extract_strided_slice %528 {offsets = [12, 0], sizes = [2, 256], strides = [1, 1]} : vector<16x256xf32> to vector<2x256xf32>
    %536 = vector.extract_strided_slice %528 {offsets = [14, 0], sizes = [2, 256], strides = [1, 1]} : vector<16x256xf32> to vector<2x256xf32>
    %c1_182 = arith.constant 1 : index
    %c0_183 = arith.constant 0 : index
    %c0_184 = arith.constant 0 : index
    %537 = vector.load %arg22[%c1_182, %c0_183, %c0_184] : memref<5x64x256xbf16, #tpu.memory_space<vmem>>, vector<1x64x256xbf16>
    %538 = vector.shape_cast %537 : vector<1x64x256xbf16> to vector<64x256xbf16>
    %cst_185 = arith.constant 0.000000e+00 : f32
    %539 = vector.broadcast %cst_185 : f32 to vector<2x64xf32>
    %cst_186 = arith.constant 0.000000e+00 : f32
    %540 = vector.broadcast %cst_186 : f32 to vector<2x64xf32>
    %541 = vector.shape_cast %297 : vector<1x256xi1> to vector<1x256xi1>
    %542 = vector.broadcast %541 : vector<1x256xi1> to vector<2x256xi1>
    %543 = arith.select %542, %529, %536 : vector<2x256xi1>, vector<2x256xf32>
    %544 = arith.truncf %539 : vector<2x64xf32> to vector<2x64xbf16>
    %cst_187 = arith.constant dense<0.000000e+00> : vector<2x256xf32>
    %545 = tpu.matmul %544, %538, %cst_187 {dimension_numbers = #tpu.dot_dimension_numbers<[1], [0], [0], [1], [0, 0, 1, 1], [], []>} : vector<2x64xbf16>, vector<64x256xbf16>, vector<2x256xf32> -> vector<2x256xf32>
    %546 = arith.addf %543, %545 : vector<2x256xf32>
    %547 = vector.extract_strided_slice %546 {offsets = [0, 0], sizes = [2, 192], strides = [1, 1]} : vector<2x256xf32> to vector<2x192xf32>
    %548 = arith.negf %547 : vector<2x192xf32>
    %549 = math.exp %548 : vector<2x192xf32>
    %cst_188 = arith.constant 1.000000e+00 : f32
    %550 = vector.broadcast %cst_188 : f32 to vector<2x192xf32>
    %551 = arith.addf %550, %549 : vector<2x192xf32>
    %552 = arith.divf %550, %551 : vector<2x192xf32>
    %553 = vector.extract_strided_slice %546 {offsets = [0, 192], sizes = [2, 64], strides = [1, 1]} : vector<2x256xf32> to vector<2x64xf32>
    %554 = math.tanh %553 : vector<2x64xf32>
    %555 = vector.extract_strided_slice %552 {offsets = [0, 64], sizes = [2, 64], strides = [1, 1]} : vector<2x192xf32> to vector<2x64xf32>
    %556 = arith.mulf %555, %540 : vector<2x64xf32>
    %557 = vector.extract_strided_slice %552 {offsets = [0, 0], sizes = [2, 64], strides = [1, 1]} : vector<2x192xf32> to vector<2x64xf32>
    %558 = arith.mulf %557, %554 : vector<2x64xf32>
    %559 = arith.addf %556, %558 : vector<2x64xf32>
    %560 = vector.extract_strided_slice %552 {offsets = [0, 128], sizes = [2, 64], strides = [1, 1]} : vector<2x192xf32> to vector<2x64xf32>
    %561 = math.tanh %559 : vector<2x64xf32>
    %562 = arith.mulf %560, %561 : vector<2x64xf32>
    %563 = vector.shape_cast %297 : vector<1x256xi1> to vector<1x256xi1>
    %564 = vector.broadcast %563 : vector<1x256xi1> to vector<2x256xi1>
    %565 = arith.select %564, %530, %535 : vector<2x256xi1>, vector<2x256xf32>
    %566 = arith.truncf %562 : vector<2x64xf32> to vector<2x64xbf16>
    %cst_189 = arith.constant dense<0.000000e+00> : vector<2x256xf32>
    %567 = tpu.matmul %566, %538, %cst_189 {dimension_numbers = #tpu.dot_dimension_numbers<[1], [0], [0], [1], [0, 0, 1, 1], [], []>} : vector<2x64xbf16>, vector<64x256xbf16>, vector<2x256xf32> -> vector<2x256xf32>
    %568 = arith.addf %565, %567 : vector<2x256xf32>
    %569 = vector.extract_strided_slice %568 {offsets = [0, 0], sizes = [2, 192], strides = [1, 1]} : vector<2x256xf32> to vector<2x192xf32>
    %570 = arith.negf %569 : vector<2x192xf32>
    %571 = math.exp %570 : vector<2x192xf32>
    %cst_190 = arith.constant 1.000000e+00 : f32
    %572 = vector.broadcast %cst_190 : f32 to vector<2x192xf32>
    %573 = arith.addf %572, %571 : vector<2x192xf32>
    %574 = arith.divf %572, %573 : vector<2x192xf32>
    %575 = vector.extract_strided_slice %568 {offsets = [0, 192], sizes = [2, 64], strides = [1, 1]} : vector<2x256xf32> to vector<2x64xf32>
    %576 = math.tanh %575 : vector<2x64xf32>
    %577 = vector.extract_strided_slice %574 {offsets = [0, 64], sizes = [2, 64], strides = [1, 1]} : vector<2x192xf32> to vector<2x64xf32>
    %578 = arith.mulf %577, %559 : vector<2x64xf32>
    %579 = vector.extract_strided_slice %574 {offsets = [0, 0], sizes = [2, 64], strides = [1, 1]} : vector<2x192xf32> to vector<2x64xf32>
    %580 = arith.mulf %579, %576 : vector<2x64xf32>
    %581 = arith.addf %578, %580 : vector<2x64xf32>
    %582 = vector.extract_strided_slice %574 {offsets = [0, 128], sizes = [2, 64], strides = [1, 1]} : vector<2x192xf32> to vector<2x64xf32>
    %583 = math.tanh %581 : vector<2x64xf32>
    %584 = arith.mulf %582, %583 : vector<2x64xf32>
    %585 = vector.shape_cast %297 : vector<1x256xi1> to vector<1x256xi1>
    %586 = vector.broadcast %585 : vector<1x256xi1> to vector<2x256xi1>
    %587 = arith.select %586, %531, %534 : vector<2x256xi1>, vector<2x256xf32>
    %588 = arith.truncf %584 : vector<2x64xf32> to vector<2x64xbf16>
    %cst_191 = arith.constant dense<0.000000e+00> : vector<2x256xf32>
    %589 = tpu.matmul %588, %538, %cst_191 {dimension_numbers = #tpu.dot_dimension_numbers<[1], [0], [0], [1], [0, 0, 1, 1], [], []>} : vector<2x64xbf16>, vector<64x256xbf16>, vector<2x256xf32> -> vector<2x256xf32>
    %590 = arith.addf %587, %589 : vector<2x256xf32>
    %591 = vector.extract_strided_slice %590 {offsets = [0, 0], sizes = [2, 192], strides = [1, 1]} : vector<2x256xf32> to vector<2x192xf32>
    %592 = arith.negf %591 : vector<2x192xf32>
    %593 = math.exp %592 : vector<2x192xf32>
    %cst_192 = arith.constant 1.000000e+00 : f32
    %594 = vector.broadcast %cst_192 : f32 to vector<2x192xf32>
    %595 = arith.addf %594, %593 : vector<2x192xf32>
    %596 = arith.divf %594, %595 : vector<2x192xf32>
    %597 = vector.extract_strided_slice %590 {offsets = [0, 192], sizes = [2, 64], strides = [1, 1]} : vector<2x256xf32> to vector<2x64xf32>
    %598 = math.tanh %597 : vector<2x64xf32>
    %599 = vector.extract_strided_slice %596 {offsets = [0, 64], sizes = [2, 64], strides = [1, 1]} : vector<2x192xf32> to vector<2x64xf32>
    %600 = arith.mulf %599, %581 : vector<2x64xf32>
    %601 = vector.extract_strided_slice %596 {offsets = [0, 0], sizes = [2, 64], strides = [1, 1]} : vector<2x192xf32> to vector<2x64xf32>
    %602 = arith.mulf %601, %598 : vector<2x64xf32>
    %603 = arith.addf %600, %602 : vector<2x64xf32>
    %604 = vector.extract_strided_slice %596 {offsets = [0, 128], sizes = [2, 64], strides = [1, 1]} : vector<2x192xf32> to vector<2x64xf32>
    %605 = math.tanh %603 : vector<2x64xf32>
    %606 = arith.mulf %604, %605 : vector<2x64xf32>
    %607 = vector.shape_cast %297 : vector<1x256xi1> to vector<1x256xi1>
    %608 = vector.broadcast %607 : vector<1x256xi1> to vector<2x256xi1>
    %609 = arith.select %608, %532, %533 : vector<2x256xi1>, vector<2x256xf32>
    %610 = arith.truncf %606 : vector<2x64xf32> to vector<2x64xbf16>
    %cst_193 = arith.constant dense<0.000000e+00> : vector<2x256xf32>
    %611 = tpu.matmul %610, %538, %cst_193 {dimension_numbers = #tpu.dot_dimension_numbers<[1], [0], [0], [1], [0, 0, 1, 1], [], []>} : vector<2x64xbf16>, vector<64x256xbf16>, vector<2x256xf32> -> vector<2x256xf32>
    %612 = arith.addf %609, %611 : vector<2x256xf32>
    %613 = vector.extract_strided_slice %612 {offsets = [0, 0], sizes = [2, 192], strides = [1, 1]} : vector<2x256xf32> to vector<2x192xf32>
    %614 = arith.negf %613 : vector<2x192xf32>
    %615 = math.exp %614 : vector<2x192xf32>
    %cst_194 = arith.constant 1.000000e+00 : f32
    %616 = vector.broadcast %cst_194 : f32 to vector<2x192xf32>
    %617 = arith.addf %616, %615 : vector<2x192xf32>
    %618 = arith.divf %616, %617 : vector<2x192xf32>
    %619 = vector.extract_strided_slice %612 {offsets = [0, 192], sizes = [2, 64], strides = [1, 1]} : vector<2x256xf32> to vector<2x64xf32>
    %620 = math.tanh %619 : vector<2x64xf32>
    %621 = vector.extract_strided_slice %618 {offsets = [0, 64], sizes = [2, 64], strides = [1, 1]} : vector<2x192xf32> to vector<2x64xf32>
    %622 = arith.mulf %621, %603 : vector<2x64xf32>
    %623 = vector.extract_strided_slice %618 {offsets = [0, 0], sizes = [2, 64], strides = [1, 1]} : vector<2x192xf32> to vector<2x64xf32>
    %624 = arith.mulf %623, %620 : vector<2x64xf32>
    %625 = arith.addf %622, %624 : vector<2x64xf32>
    %626 = vector.extract_strided_slice %618 {offsets = [0, 128], sizes = [2, 64], strides = [1, 1]} : vector<2x192xf32> to vector<2x64xf32>
    %627 = math.tanh %625 : vector<2x64xf32>
    %628 = arith.mulf %626, %627 : vector<2x64xf32>
    %629 = vector.shape_cast %297 : vector<1x256xi1> to vector<1x256xi1>
    %630 = vector.broadcast %629 : vector<1x256xi1> to vector<2x256xi1>
    %631 = arith.select %630, %533, %532 : vector<2x256xi1>, vector<2x256xf32>
    %632 = arith.truncf %628 : vector<2x64xf32> to vector<2x64xbf16>
    %cst_195 = arith.constant dense<0.000000e+00> : vector<2x256xf32>
    %633 = tpu.matmul %632, %538, %cst_195 {dimension_numbers = #tpu.dot_dimension_numbers<[1], [0], [0], [1], [0, 0, 1, 1], [], []>} : vector<2x64xbf16>, vector<64x256xbf16>, vector<2x256xf32> -> vector<2x256xf32>
    %634 = arith.addf %631, %633 : vector<2x256xf32>
    %635 = vector.extract_strided_slice %634 {offsets = [0, 0], sizes = [2, 192], strides = [1, 1]} : vector<2x256xf32> to vector<2x192xf32>
    %636 = arith.negf %635 : vector<2x192xf32>
    %637 = math.exp %636 : vector<2x192xf32>
    %cst_196 = arith.constant 1.000000e+00 : f32
    %638 = vector.broadcast %cst_196 : f32 to vector<2x192xf32>
    %639 = arith.addf %638, %637 : vector<2x192xf32>
    %640 = arith.divf %638, %639 : vector<2x192xf32>
    %641 = vector.extract_strided_slice %634 {offsets = [0, 192], sizes = [2, 64], strides = [1, 1]} : vector<2x256xf32> to vector<2x64xf32>
    %642 = math.tanh %641 : vector<2x64xf32>
    %643 = vector.extract_strided_slice %640 {offsets = [0, 64], sizes = [2, 64], strides = [1, 1]} : vector<2x192xf32> to vector<2x64xf32>
    %644 = arith.mulf %643, %625 : vector<2x64xf32>
    %645 = vector.extract_strided_slice %640 {offsets = [0, 0], sizes = [2, 64], strides = [1, 1]} : vector<2x192xf32> to vector<2x64xf32>
    %646 = arith.mulf %645, %642 : vector<2x64xf32>
    %647 = arith.addf %644, %646 : vector<2x64xf32>
    %648 = vector.extract_strided_slice %640 {offsets = [0, 128], sizes = [2, 64], strides = [1, 1]} : vector<2x192xf32> to vector<2x64xf32>
    %649 = math.tanh %647 : vector<2x64xf32>
    %650 = arith.mulf %648, %649 : vector<2x64xf32>
    %651 = vector.shape_cast %297 : vector<1x256xi1> to vector<1x256xi1>
    %652 = vector.broadcast %651 : vector<1x256xi1> to vector<2x256xi1>
    %653 = arith.select %652, %534, %531 : vector<2x256xi1>, vector<2x256xf32>
    %654 = arith.truncf %650 : vector<2x64xf32> to vector<2x64xbf16>
    %cst_197 = arith.constant dense<0.000000e+00> : vector<2x256xf32>
    %655 = tpu.matmul %654, %538, %cst_197 {dimension_numbers = #tpu.dot_dimension_numbers<[1], [0], [0], [1], [0, 0, 1, 1], [], []>} : vector<2x64xbf16>, vector<64x256xbf16>, vector<2x256xf32> -> vector<2x256xf32>
    %656 = arith.addf %653, %655 : vector<2x256xf32>
    %657 = vector.extract_strided_slice %656 {offsets = [0, 0], sizes = [2, 192], strides = [1, 1]} : vector<2x256xf32> to vector<2x192xf32>
    %658 = arith.negf %657 : vector<2x192xf32>
    %659 = math.exp %658 : vector<2x192xf32>
    %cst_198 = arith.constant 1.000000e+00 : f32
    %660 = vector.broadcast %cst_198 : f32 to vector<2x192xf32>
    %661 = arith.addf %660, %659 : vector<2x192xf32>
    %662 = arith.divf %660, %661 : vector<2x192xf32>
    %663 = vector.extract_strided_slice %656 {offsets = [0, 192], sizes = [2, 64], strides = [1, 1]} : vector<2x256xf32> to vector<2x64xf32>
    %664 = math.tanh %663 : vector<2x64xf32>
    %665 = vector.extract_strided_slice %662 {offsets = [0, 64], sizes = [2, 64], strides = [1, 1]} : vector<2x192xf32> to vector<2x64xf32>
    %666 = arith.mulf %665, %647 : vector<2x64xf32>
    %667 = vector.extract_strided_slice %662 {offsets = [0, 0], sizes = [2, 64], strides = [1, 1]} : vector<2x192xf32> to vector<2x64xf32>
    %668 = arith.mulf %667, %664 : vector<2x64xf32>
    %669 = arith.addf %666, %668 : vector<2x64xf32>
    %670 = vector.extract_strided_slice %662 {offsets = [0, 128], sizes = [2, 64], strides = [1, 1]} : vector<2x192xf32> to vector<2x64xf32>
    %671 = math.tanh %669 : vector<2x64xf32>
    %672 = arith.mulf %670, %671 : vector<2x64xf32>
    %673 = vector.shape_cast %297 : vector<1x256xi1> to vector<1x256xi1>
    %674 = vector.broadcast %673 : vector<1x256xi1> to vector<2x256xi1>
    %675 = arith.select %674, %535, %530 : vector<2x256xi1>, vector<2x256xf32>
    %676 = arith.truncf %672 : vector<2x64xf32> to vector<2x64xbf16>
    %cst_199 = arith.constant dense<0.000000e+00> : vector<2x256xf32>
    %677 = tpu.matmul %676, %538, %cst_199 {dimension_numbers = #tpu.dot_dimension_numbers<[1], [0], [0], [1], [0, 0, 1, 1], [], []>} : vector<2x64xbf16>, vector<64x256xbf16>, vector<2x256xf32> -> vector<2x256xf32>
    %678 = arith.addf %675, %677 : vector<2x256xf32>
    %679 = vector.extract_strided_slice %678 {offsets = [0, 0], sizes = [2, 192], strides = [1, 1]} : vector<2x256xf32> to vector<2x192xf32>
    %680 = arith.negf %679 : vector<2x192xf32>
    %681 = math.exp %680 : vector<2x192xf32>
    %cst_200 = arith.constant 1.000000e+00 : f32
    %682 = vector.broadcast %cst_200 : f32 to vector<2x192xf32>
    %683 = arith.addf %682, %681 : vector<2x192xf32>
    %684 = arith.divf %682, %683 : vector<2x192xf32>
    %685 = vector.extract_strided_slice %678 {offsets = [0, 192], sizes = [2, 64], strides = [1, 1]} : vector<2x256xf32> to vector<2x64xf32>
    %686 = math.tanh %685 : vector<2x64xf32>
    %687 = vector.extract_strided_slice %684 {offsets = [0, 64], sizes = [2, 64], strides = [1, 1]} : vector<2x192xf32> to vector<2x64xf32>
    %688 = arith.mulf %687, %669 : vector<2x64xf32>
    %689 = vector.extract_strided_slice %684 {offsets = [0, 0], sizes = [2, 64], strides = [1, 1]} : vector<2x192xf32> to vector<2x64xf32>
    %690 = arith.mulf %689, %686 : vector<2x64xf32>
    %691 = arith.addf %688, %690 : vector<2x64xf32>
    %692 = vector.extract_strided_slice %684 {offsets = [0, 128], sizes = [2, 64], strides = [1, 1]} : vector<2x192xf32> to vector<2x64xf32>
    %693 = math.tanh %691 : vector<2x64xf32>
    %694 = arith.mulf %692, %693 : vector<2x64xf32>
    %695 = vector.shape_cast %297 : vector<1x256xi1> to vector<1x256xi1>
    %696 = vector.broadcast %695 : vector<1x256xi1> to vector<2x256xi1>
    %697 = arith.select %696, %536, %529 : vector<2x256xi1>, vector<2x256xf32>
    %698 = arith.truncf %694 : vector<2x64xf32> to vector<2x64xbf16>
    %cst_201 = arith.constant dense<0.000000e+00> : vector<2x256xf32>
    %699 = tpu.matmul %698, %538, %cst_201 {dimension_numbers = #tpu.dot_dimension_numbers<[1], [0], [0], [1], [0, 0, 1, 1], [], []>} : vector<2x64xbf16>, vector<64x256xbf16>, vector<2x256xf32> -> vector<2x256xf32>
    %700 = arith.addf %697, %699 : vector<2x256xf32>
    %701 = vector.extract_strided_slice %700 {offsets = [0, 0], sizes = [2, 192], strides = [1, 1]} : vector<2x256xf32> to vector<2x192xf32>
    %702 = arith.negf %701 : vector<2x192xf32>
    %703 = math.exp %702 : vector<2x192xf32>
    %cst_202 = arith.constant 1.000000e+00 : f32
    %704 = vector.broadcast %cst_202 : f32 to vector<2x192xf32>
    %705 = arith.addf %704, %703 : vector<2x192xf32>
    %706 = arith.divf %704, %705 : vector<2x192xf32>
    %707 = vector.extract_strided_slice %700 {offsets = [0, 192], sizes = [2, 64], strides = [1, 1]} : vector<2x256xf32> to vector<2x64xf32>
    %708 = math.tanh %707 : vector<2x64xf32>
    %709 = vector.extract_strided_slice %706 {offsets = [0, 64], sizes = [2, 64], strides = [1, 1]} : vector<2x192xf32> to vector<2x64xf32>
    %710 = arith.mulf %709, %691 : vector<2x64xf32>
    %711 = vector.extract_strided_slice %706 {offsets = [0, 0], sizes = [2, 64], strides = [1, 1]} : vector<2x192xf32> to vector<2x64xf32>
    %712 = arith.mulf %711, %708 : vector<2x64xf32>
    %713 = arith.addf %710, %712 : vector<2x64xf32>
    %714 = vector.extract_strided_slice %706 {offsets = [0, 128], sizes = [2, 64], strides = [1, 1]} : vector<2x192xf32> to vector<2x64xf32>
    %715 = math.tanh %713 : vector<2x64xf32>
    %716 = arith.mulf %714, %715 : vector<2x64xf32>
    %717 = vector.shape_cast %300 : vector<1x64xi1> to vector<1x64xi1>
    %718 = vector.broadcast %717 : vector<1x64xi1> to vector<2x64xi1>
    %719 = arith.select %718, %562, %716 : vector<2x64xi1>, vector<2x64xf32>
    %720 = vector.shape_cast %300 : vector<1x64xi1> to vector<1x64xi1>
    %721 = vector.broadcast %720 : vector<1x64xi1> to vector<2x64xi1>
    %722 = arith.select %721, %584, %694 : vector<2x64xi1>, vector<2x64xf32>
    %723 = vector.shape_cast %300 : vector<1x64xi1> to vector<1x64xi1>
    %724 = vector.broadcast %723 : vector<1x64xi1> to vector<2x64xi1>
    %725 = arith.select %724, %606, %672 : vector<2x64xi1>, vector<2x64xf32>
    %726 = vector.shape_cast %300 : vector<1x64xi1> to vector<1x64xi1>
    %727 = vector.broadcast %726 : vector<1x64xi1> to vector<2x64xi1>
    %728 = arith.select %727, %628, %650 : vector<2x64xi1>, vector<2x64xf32>
    %729 = vector.shape_cast %300 : vector<1x64xi1> to vector<1x64xi1>
    %730 = vector.broadcast %729 : vector<1x64xi1> to vector<2x64xi1>
    %731 = arith.select %730, %650, %628 : vector<2x64xi1>, vector<2x64xf32>
    %732 = vector.shape_cast %300 : vector<1x64xi1> to vector<1x64xi1>
    %733 = vector.broadcast %732 : vector<1x64xi1> to vector<2x64xi1>
    %734 = arith.select %733, %672, %606 : vector<2x64xi1>, vector<2x64xf32>
    %735 = vector.shape_cast %300 : vector<1x64xi1> to vector<1x64xi1>
    %736 = vector.broadcast %735 : vector<1x64xi1> to vector<2x64xi1>
    %737 = arith.select %736, %694, %584 : vector<2x64xi1>, vector<2x64xf32>
    %738 = vector.shape_cast %300 : vector<1x64xi1> to vector<1x64xi1>
    %739 = vector.broadcast %738 : vector<1x64xi1> to vector<2x64xi1>
    %740 = arith.select %739, %716, %562 : vector<2x64xi1>, vector<2x64xf32>
    %741 = tpu.concatenate %719, %722, %725, %728, %731, %734, %737, %740 in 0 : vector<2x64xf32>, vector<2x64xf32>, vector<2x64xf32>, vector<2x64xf32>, vector<2x64xf32>, vector<2x64xf32>, vector<2x64xf32>, vector<2x64xf32> -> vector<16x64xf32>
    %c1_203 = arith.constant 1 : index
    %c0_204 = arith.constant 0 : index
    %c0_205 = arith.constant 0 : index
    %742 = vector.load %arg20[%c1_203, %c0_204, %c0_205] : memref<4x64x256xbf16, #tpu.memory_space<vmem>>, vector<1x64x256xbf16>
    %743 = vector.shape_cast %742 : vector<1x64x256xbf16> to vector<64x256xbf16>
    %744 = arith.truncf %741 : vector<16x64xf32> to vector<16x64xbf16>
    %cst_206 = arith.constant dense<0.000000e+00> : vector<16x256xf32>
    %745 = tpu.matmul %744, %743, %cst_206 {dimension_numbers = #tpu.dot_dimension_numbers<[1], [0], [0], [1], [0, 0, 1, 1], [], []>} : vector<16x64xbf16>, vector<64x256xbf16>, vector<16x256xf32> -> vector<16x256xf32>
    %c2 = arith.constant 2 : index
    %c0_207 = arith.constant 0 : index
    %c0_208 = arith.constant 0 : index
    %746 = vector.load %arg21[%c2, %c0_207, %c0_208] : memref<5x1x256xf32, #tpu.memory_space<vmem>>, vector<1x1x256xf32>
    %747 = vector.shape_cast %746 : vector<1x1x256xf32> to vector<1x256xf32>
    %748 = vector.broadcast %747 : vector<1x256xf32> to vector<16x256xf32>
    %749 = arith.addf %745, %748 : vector<16x256xf32>
    %750 = vector.extract_strided_slice %749 {offsets = [0, 0], sizes = [2, 256], strides = [1, 1]} : vector<16x256xf32> to vector<2x256xf32>
    %751 = vector.extract_strided_slice %749 {offsets = [2, 0], sizes = [2, 256], strides = [1, 1]} : vector<16x256xf32> to vector<2x256xf32>
    %752 = vector.extract_strided_slice %749 {offsets = [4, 0], sizes = [2, 256], strides = [1, 1]} : vector<16x256xf32> to vector<2x256xf32>
    %753 = vector.extract_strided_slice %749 {offsets = [6, 0], sizes = [2, 256], strides = [1, 1]} : vector<16x256xf32> to vector<2x256xf32>
    %754 = vector.extract_strided_slice %749 {offsets = [8, 0], sizes = [2, 256], strides = [1, 1]} : vector<16x256xf32> to vector<2x256xf32>
    %755 = vector.extract_strided_slice %749 {offsets = [10, 0], sizes = [2, 256], strides = [1, 1]} : vector<16x256xf32> to vector<2x256xf32>
    %756 = vector.extract_strided_slice %749 {offsets = [12, 0], sizes = [2, 256], strides = [1, 1]} : vector<16x256xf32> to vector<2x256xf32>
    %757 = vector.extract_strided_slice %749 {offsets = [14, 0], sizes = [2, 256], strides = [1, 1]} : vector<16x256xf32> to vector<2x256xf32>
    %c2_209 = arith.constant 2 : index
    %c0_210 = arith.constant 0 : index
    %c0_211 = arith.constant 0 : index
    %758 = vector.load %arg22[%c2_209, %c0_210, %c0_211] : memref<5x64x256xbf16, #tpu.memory_space<vmem>>, vector<1x64x256xbf16>
    %759 = vector.shape_cast %758 : vector<1x64x256xbf16> to vector<64x256xbf16>
    %cst_212 = arith.constant 0.000000e+00 : f32
    %760 = vector.broadcast %cst_212 : f32 to vector<2x64xf32>
    %cst_213 = arith.constant 0.000000e+00 : f32
    %761 = vector.broadcast %cst_213 : f32 to vector<2x64xf32>
    %762 = vector.shape_cast %297 : vector<1x256xi1> to vector<1x256xi1>
    %763 = vector.broadcast %762 : vector<1x256xi1> to vector<2x256xi1>
    %764 = arith.select %763, %750, %757 : vector<2x256xi1>, vector<2x256xf32>
    %765 = arith.truncf %760 : vector<2x64xf32> to vector<2x64xbf16>
    %cst_214 = arith.constant dense<0.000000e+00> : vector<2x256xf32>
    %766 = tpu.matmul %765, %759, %cst_214 {dimension_numbers = #tpu.dot_dimension_numbers<[1], [0], [0], [1], [0, 0, 1, 1], [], []>} : vector<2x64xbf16>, vector<64x256xbf16>, vector<2x256xf32> -> vector<2x256xf32>
    %767 = arith.addf %764, %766 : vector<2x256xf32>
    %768 = vector.extract_strided_slice %767 {offsets = [0, 0], sizes = [2, 192], strides = [1, 1]} : vector<2x256xf32> to vector<2x192xf32>
    %769 = arith.negf %768 : vector<2x192xf32>
    %770 = math.exp %769 : vector<2x192xf32>
    %cst_215 = arith.constant 1.000000e+00 : f32
    %771 = vector.broadcast %cst_215 : f32 to vector<2x192xf32>
    %772 = arith.addf %771, %770 : vector<2x192xf32>
    %773 = arith.divf %771, %772 : vector<2x192xf32>
    %774 = vector.extract_strided_slice %767 {offsets = [0, 192], sizes = [2, 64], strides = [1, 1]} : vector<2x256xf32> to vector<2x64xf32>
    %775 = math.tanh %774 : vector<2x64xf32>
    %776 = vector.extract_strided_slice %773 {offsets = [0, 64], sizes = [2, 64], strides = [1, 1]} : vector<2x192xf32> to vector<2x64xf32>
    %777 = arith.mulf %776, %761 : vector<2x64xf32>
    %778 = vector.extract_strided_slice %773 {offsets = [0, 0], sizes = [2, 64], strides = [1, 1]} : vector<2x192xf32> to vector<2x64xf32>
    %779 = arith.mulf %778, %775 : vector<2x64xf32>
    %780 = arith.addf %777, %779 : vector<2x64xf32>
    %781 = vector.extract_strided_slice %773 {offsets = [0, 128], sizes = [2, 64], strides = [1, 1]} : vector<2x192xf32> to vector<2x64xf32>
    %782 = math.tanh %780 : vector<2x64xf32>
    %783 = arith.mulf %781, %782 : vector<2x64xf32>
    %784 = vector.shape_cast %297 : vector<1x256xi1> to vector<1x256xi1>
    %785 = vector.broadcast %784 : vector<1x256xi1> to vector<2x256xi1>
    %786 = arith.select %785, %751, %756 : vector<2x256xi1>, vector<2x256xf32>
    %787 = arith.truncf %783 : vector<2x64xf32> to vector<2x64xbf16>
    %cst_216 = arith.constant dense<0.000000e+00> : vector<2x256xf32>
    %788 = tpu.matmul %787, %759, %cst_216 {dimension_numbers = #tpu.dot_dimension_numbers<[1], [0], [0], [1], [0, 0, 1, 1], [], []>} : vector<2x64xbf16>, vector<64x256xbf16>, vector<2x256xf32> -> vector<2x256xf32>
    %789 = arith.addf %786, %788 : vector<2x256xf32>
    %790 = vector.extract_strided_slice %789 {offsets = [0, 0], sizes = [2, 192], strides = [1, 1]} : vector<2x256xf32> to vector<2x192xf32>
    %791 = arith.negf %790 : vector<2x192xf32>
    %792 = math.exp %791 : vector<2x192xf32>
    %cst_217 = arith.constant 1.000000e+00 : f32
    %793 = vector.broadcast %cst_217 : f32 to vector<2x192xf32>
    %794 = arith.addf %793, %792 : vector<2x192xf32>
    %795 = arith.divf %793, %794 : vector<2x192xf32>
    %796 = vector.extract_strided_slice %789 {offsets = [0, 192], sizes = [2, 64], strides = [1, 1]} : vector<2x256xf32> to vector<2x64xf32>
    %797 = math.tanh %796 : vector<2x64xf32>
    %798 = vector.extract_strided_slice %795 {offsets = [0, 64], sizes = [2, 64], strides = [1, 1]} : vector<2x192xf32> to vector<2x64xf32>
    %799 = arith.mulf %798, %780 : vector<2x64xf32>
    %800 = vector.extract_strided_slice %795 {offsets = [0, 0], sizes = [2, 64], strides = [1, 1]} : vector<2x192xf32> to vector<2x64xf32>
    %801 = arith.mulf %800, %797 : vector<2x64xf32>
    %802 = arith.addf %799, %801 : vector<2x64xf32>
    %803 = vector.extract_strided_slice %795 {offsets = [0, 128], sizes = [2, 64], strides = [1, 1]} : vector<2x192xf32> to vector<2x64xf32>
    %804 = math.tanh %802 : vector<2x64xf32>
    %805 = arith.mulf %803, %804 : vector<2x64xf32>
    %806 = vector.shape_cast %297 : vector<1x256xi1> to vector<1x256xi1>
    %807 = vector.broadcast %806 : vector<1x256xi1> to vector<2x256xi1>
    %808 = arith.select %807, %752, %755 : vector<2x256xi1>, vector<2x256xf32>
    %809 = arith.truncf %805 : vector<2x64xf32> to vector<2x64xbf16>
    %cst_218 = arith.constant dense<0.000000e+00> : vector<2x256xf32>
    %810 = tpu.matmul %809, %759, %cst_218 {dimension_numbers = #tpu.dot_dimension_numbers<[1], [0], [0], [1], [0, 0, 1, 1], [], []>} : vector<2x64xbf16>, vector<64x256xbf16>, vector<2x256xf32> -> vector<2x256xf32>
    %811 = arith.addf %808, %810 : vector<2x256xf32>
    %812 = vector.extract_strided_slice %811 {offsets = [0, 0], sizes = [2, 192], strides = [1, 1]} : vector<2x256xf32> to vector<2x192xf32>
    %813 = arith.negf %812 : vector<2x192xf32>
    %814 = math.exp %813 : vector<2x192xf32>
    %cst_219 = arith.constant 1.000000e+00 : f32
    %815 = vector.broadcast %cst_219 : f32 to vector<2x192xf32>
    %816 = arith.addf %815, %814 : vector<2x192xf32>
    %817 = arith.divf %815, %816 : vector<2x192xf32>
    %818 = vector.extract_strided_slice %811 {offsets = [0, 192], sizes = [2, 64], strides = [1, 1]} : vector<2x256xf32> to vector<2x64xf32>
    %819 = math.tanh %818 : vector<2x64xf32>
    %820 = vector.extract_strided_slice %817 {offsets = [0, 64], sizes = [2, 64], strides = [1, 1]} : vector<2x192xf32> to vector<2x64xf32>
    %821 = arith.mulf %820, %802 : vector<2x64xf32>
    %822 = vector.extract_strided_slice %817 {offsets = [0, 0], sizes = [2, 64], strides = [1, 1]} : vector<2x192xf32> to vector<2x64xf32>
    %823 = arith.mulf %822, %819 : vector<2x64xf32>
    %824 = arith.addf %821, %823 : vector<2x64xf32>
    %825 = vector.extract_strided_slice %817 {offsets = [0, 128], sizes = [2, 64], strides = [1, 1]} : vector<2x192xf32> to vector<2x64xf32>
    %826 = math.tanh %824 : vector<2x64xf32>
    %827 = arith.mulf %825, %826 : vector<2x64xf32>
    %828 = vector.shape_cast %297 : vector<1x256xi1> to vector<1x256xi1>
    %829 = vector.broadcast %828 : vector<1x256xi1> to vector<2x256xi1>
    %830 = arith.select %829, %753, %754 : vector<2x256xi1>, vector<2x256xf32>
    %831 = arith.truncf %827 : vector<2x64xf32> to vector<2x64xbf16>
    %cst_220 = arith.constant dense<0.000000e+00> : vector<2x256xf32>
    %832 = tpu.matmul %831, %759, %cst_220 {dimension_numbers = #tpu.dot_dimension_numbers<[1], [0], [0], [1], [0, 0, 1, 1], [], []>} : vector<2x64xbf16>, vector<64x256xbf16>, vector<2x256xf32> -> vector<2x256xf32>
    %833 = arith.addf %830, %832 : vector<2x256xf32>
    %834 = vector.extract_strided_slice %833 {offsets = [0, 0], sizes = [2, 192], strides = [1, 1]} : vector<2x256xf32> to vector<2x192xf32>
    %835 = arith.negf %834 : vector<2x192xf32>
    %836 = math.exp %835 : vector<2x192xf32>
    %cst_221 = arith.constant 1.000000e+00 : f32
    %837 = vector.broadcast %cst_221 : f32 to vector<2x192xf32>
    %838 = arith.addf %837, %836 : vector<2x192xf32>
    %839 = arith.divf %837, %838 : vector<2x192xf32>
    %840 = vector.extract_strided_slice %833 {offsets = [0, 192], sizes = [2, 64], strides = [1, 1]} : vector<2x256xf32> to vector<2x64xf32>
    %841 = math.tanh %840 : vector<2x64xf32>
    %842 = vector.extract_strided_slice %839 {offsets = [0, 64], sizes = [2, 64], strides = [1, 1]} : vector<2x192xf32> to vector<2x64xf32>
    %843 = arith.mulf %842, %824 : vector<2x64xf32>
    %844 = vector.extract_strided_slice %839 {offsets = [0, 0], sizes = [2, 64], strides = [1, 1]} : vector<2x192xf32> to vector<2x64xf32>
    %845 = arith.mulf %844, %841 : vector<2x64xf32>
    %846 = arith.addf %843, %845 : vector<2x64xf32>
    %847 = vector.extract_strided_slice %839 {offsets = [0, 128], sizes = [2, 64], strides = [1, 1]} : vector<2x192xf32> to vector<2x64xf32>
    %848 = math.tanh %846 : vector<2x64xf32>
    %849 = arith.mulf %847, %848 : vector<2x64xf32>
    %850 = vector.shape_cast %297 : vector<1x256xi1> to vector<1x256xi1>
    %851 = vector.broadcast %850 : vector<1x256xi1> to vector<2x256xi1>
    %852 = arith.select %851, %754, %753 : vector<2x256xi1>, vector<2x256xf32>
    %853 = arith.truncf %849 : vector<2x64xf32> to vector<2x64xbf16>
    %cst_222 = arith.constant dense<0.000000e+00> : vector<2x256xf32>
    %854 = tpu.matmul %853, %759, %cst_222 {dimension_numbers = #tpu.dot_dimension_numbers<[1], [0], [0], [1], [0, 0, 1, 1], [], []>} : vector<2x64xbf16>, vector<64x256xbf16>, vector<2x256xf32> -> vector<2x256xf32>
    %855 = arith.addf %852, %854 : vector<2x256xf32>
    %856 = vector.extract_strided_slice %855 {offsets = [0, 0], sizes = [2, 192], strides = [1, 1]} : vector<2x256xf32> to vector<2x192xf32>
    %857 = arith.negf %856 : vector<2x192xf32>
    %858 = math.exp %857 : vector<2x192xf32>
    %cst_223 = arith.constant 1.000000e+00 : f32
    %859 = vector.broadcast %cst_223 : f32 to vector<2x192xf32>
    %860 = arith.addf %859, %858 : vector<2x192xf32>
    %861 = arith.divf %859, %860 : vector<2x192xf32>
    %862 = vector.extract_strided_slice %855 {offsets = [0, 192], sizes = [2, 64], strides = [1, 1]} : vector<2x256xf32> to vector<2x64xf32>
    %863 = math.tanh %862 : vector<2x64xf32>
    %864 = vector.extract_strided_slice %861 {offsets = [0, 64], sizes = [2, 64], strides = [1, 1]} : vector<2x192xf32> to vector<2x64xf32>
    %865 = arith.mulf %864, %846 : vector<2x64xf32>
    %866 = vector.extract_strided_slice %861 {offsets = [0, 0], sizes = [2, 64], strides = [1, 1]} : vector<2x192xf32> to vector<2x64xf32>
    %867 = arith.mulf %866, %863 : vector<2x64xf32>
    %868 = arith.addf %865, %867 : vector<2x64xf32>
    %869 = vector.extract_strided_slice %861 {offsets = [0, 128], sizes = [2, 64], strides = [1, 1]} : vector<2x192xf32> to vector<2x64xf32>
    %870 = math.tanh %868 : vector<2x64xf32>
    %871 = arith.mulf %869, %870 : vector<2x64xf32>
    %872 = vector.shape_cast %297 : vector<1x256xi1> to vector<1x256xi1>
    %873 = vector.broadcast %872 : vector<1x256xi1> to vector<2x256xi1>
    %874 = arith.select %873, %755, %752 : vector<2x256xi1>, vector<2x256xf32>
    %875 = arith.truncf %871 : vector<2x64xf32> to vector<2x64xbf16>
    %cst_224 = arith.constant dense<0.000000e+00> : vector<2x256xf32>
    %876 = tpu.matmul %875, %759, %cst_224 {dimension_numbers = #tpu.dot_dimension_numbers<[1], [0], [0], [1], [0, 0, 1, 1], [], []>} : vector<2x64xbf16>, vector<64x256xbf16>, vector<2x256xf32> -> vector<2x256xf32>
    %877 = arith.addf %874, %876 : vector<2x256xf32>
    %878 = vector.extract_strided_slice %877 {offsets = [0, 0], sizes = [2, 192], strides = [1, 1]} : vector<2x256xf32> to vector<2x192xf32>
    %879 = arith.negf %878 : vector<2x192xf32>
    %880 = math.exp %879 : vector<2x192xf32>
    %cst_225 = arith.constant 1.000000e+00 : f32
    %881 = vector.broadcast %cst_225 : f32 to vector<2x192xf32>
    %882 = arith.addf %881, %880 : vector<2x192xf32>
    %883 = arith.divf %881, %882 : vector<2x192xf32>
    %884 = vector.extract_strided_slice %877 {offsets = [0, 192], sizes = [2, 64], strides = [1, 1]} : vector<2x256xf32> to vector<2x64xf32>
    %885 = math.tanh %884 : vector<2x64xf32>
    %886 = vector.extract_strided_slice %883 {offsets = [0, 64], sizes = [2, 64], strides = [1, 1]} : vector<2x192xf32> to vector<2x64xf32>
    %887 = arith.mulf %886, %868 : vector<2x64xf32>
    %888 = vector.extract_strided_slice %883 {offsets = [0, 0], sizes = [2, 64], strides = [1, 1]} : vector<2x192xf32> to vector<2x64xf32>
    %889 = arith.mulf %888, %885 : vector<2x64xf32>
    %890 = arith.addf %887, %889 : vector<2x64xf32>
    %891 = vector.extract_strided_slice %883 {offsets = [0, 128], sizes = [2, 64], strides = [1, 1]} : vector<2x192xf32> to vector<2x64xf32>
    %892 = math.tanh %890 : vector<2x64xf32>
    %893 = arith.mulf %891, %892 : vector<2x64xf32>
    %894 = vector.shape_cast %297 : vector<1x256xi1> to vector<1x256xi1>
    %895 = vector.broadcast %894 : vector<1x256xi1> to vector<2x256xi1>
    %896 = arith.select %895, %756, %751 : vector<2x256xi1>, vector<2x256xf32>
    %897 = arith.truncf %893 : vector<2x64xf32> to vector<2x64xbf16>
    %cst_226 = arith.constant dense<0.000000e+00> : vector<2x256xf32>
    %898 = tpu.matmul %897, %759, %cst_226 {dimension_numbers = #tpu.dot_dimension_numbers<[1], [0], [0], [1], [0, 0, 1, 1], [], []>} : vector<2x64xbf16>, vector<64x256xbf16>, vector<2x256xf32> -> vector<2x256xf32>
    %899 = arith.addf %896, %898 : vector<2x256xf32>
    %900 = vector.extract_strided_slice %899 {offsets = [0, 0], sizes = [2, 192], strides = [1, 1]} : vector<2x256xf32> to vector<2x192xf32>
    %901 = arith.negf %900 : vector<2x192xf32>
    %902 = math.exp %901 : vector<2x192xf32>
    %cst_227 = arith.constant 1.000000e+00 : f32
    %903 = vector.broadcast %cst_227 : f32 to vector<2x192xf32>
    %904 = arith.addf %903, %902 : vector<2x192xf32>
    %905 = arith.divf %903, %904 : vector<2x192xf32>
    %906 = vector.extract_strided_slice %899 {offsets = [0, 192], sizes = [2, 64], strides = [1, 1]} : vector<2x256xf32> to vector<2x64xf32>
    %907 = math.tanh %906 : vector<2x64xf32>
    %908 = vector.extract_strided_slice %905 {offsets = [0, 64], sizes = [2, 64], strides = [1, 1]} : vector<2x192xf32> to vector<2x64xf32>
    %909 = arith.mulf %908, %890 : vector<2x64xf32>
    %910 = vector.extract_strided_slice %905 {offsets = [0, 0], sizes = [2, 64], strides = [1, 1]} : vector<2x192xf32> to vector<2x64xf32>
    %911 = arith.mulf %910, %907 : vector<2x64xf32>
    %912 = arith.addf %909, %911 : vector<2x64xf32>
    %913 = vector.extract_strided_slice %905 {offsets = [0, 128], sizes = [2, 64], strides = [1, 1]} : vector<2x192xf32> to vector<2x64xf32>
    %914 = math.tanh %912 : vector<2x64xf32>
    %915 = arith.mulf %913, %914 : vector<2x64xf32>
    %916 = vector.shape_cast %297 : vector<1x256xi1> to vector<1x256xi1>
    %917 = vector.broadcast %916 : vector<1x256xi1> to vector<2x256xi1>
    %918 = arith.select %917, %757, %750 : vector<2x256xi1>, vector<2x256xf32>
    %919 = arith.truncf %915 : vector<2x64xf32> to vector<2x64xbf16>
    %cst_228 = arith.constant dense<0.000000e+00> : vector<2x256xf32>
    %920 = tpu.matmul %919, %759, %cst_228 {dimension_numbers = #tpu.dot_dimension_numbers<[1], [0], [0], [1], [0, 0, 1, 1], [], []>} : vector<2x64xbf16>, vector<64x256xbf16>, vector<2x256xf32> -> vector<2x256xf32>
    %921 = arith.addf %918, %920 : vector<2x256xf32>
    %922 = vector.extract_strided_slice %921 {offsets = [0, 0], sizes = [2, 192], strides = [1, 1]} : vector<2x256xf32> to vector<2x192xf32>
    %923 = arith.negf %922 : vector<2x192xf32>
    %924 = math.exp %923 : vector<2x192xf32>
    %cst_229 = arith.constant 1.000000e+00 : f32
    %925 = vector.broadcast %cst_229 : f32 to vector<2x192xf32>
    %926 = arith.addf %925, %924 : vector<2x192xf32>
    %927 = arith.divf %925, %926 : vector<2x192xf32>
    %928 = vector.extract_strided_slice %921 {offsets = [0, 192], sizes = [2, 64], strides = [1, 1]} : vector<2x256xf32> to vector<2x64xf32>
    %929 = math.tanh %928 : vector<2x64xf32>
    %930 = vector.extract_strided_slice %927 {offsets = [0, 64], sizes = [2, 64], strides = [1, 1]} : vector<2x192xf32> to vector<2x64xf32>
    %931 = arith.mulf %930, %912 : vector<2x64xf32>
    %932 = vector.extract_strided_slice %927 {offsets = [0, 0], sizes = [2, 64], strides = [1, 1]} : vector<2x192xf32> to vector<2x64xf32>
    %933 = arith.mulf %932, %929 : vector<2x64xf32>
    %934 = arith.addf %931, %933 : vector<2x64xf32>
    %935 = vector.extract_strided_slice %927 {offsets = [0, 128], sizes = [2, 64], strides = [1, 1]} : vector<2x192xf32> to vector<2x64xf32>
    %936 = math.tanh %934 : vector<2x64xf32>
    %937 = arith.mulf %935, %936 : vector<2x64xf32>
    %938 = vector.shape_cast %300 : vector<1x64xi1> to vector<1x64xi1>
    %939 = vector.broadcast %938 : vector<1x64xi1> to vector<2x64xi1>
    %940 = arith.select %939, %783, %937 : vector<2x64xi1>, vector<2x64xf32>
    %941 = vector.shape_cast %300 : vector<1x64xi1> to vector<1x64xi1>
    %942 = vector.broadcast %941 : vector<1x64xi1> to vector<2x64xi1>
    %943 = arith.select %942, %805, %915 : vector<2x64xi1>, vector<2x64xf32>
    %944 = vector.shape_cast %300 : vector<1x64xi1> to vector<1x64xi1>
    %945 = vector.broadcast %944 : vector<1x64xi1> to vector<2x64xi1>
    %946 = arith.select %945, %827, %893 : vector<2x64xi1>, vector<2x64xf32>
    %947 = vector.shape_cast %300 : vector<1x64xi1> to vector<1x64xi1>
    %948 = vector.broadcast %947 : vector<1x64xi1> to vector<2x64xi1>
    %949 = arith.select %948, %849, %871 : vector<2x64xi1>, vector<2x64xf32>
    %950 = vector.shape_cast %300 : vector<1x64xi1> to vector<1x64xi1>
    %951 = vector.broadcast %950 : vector<1x64xi1> to vector<2x64xi1>
    %952 = arith.select %951, %871, %849 : vector<2x64xi1>, vector<2x64xf32>
    %953 = vector.shape_cast %300 : vector<1x64xi1> to vector<1x64xi1>
    %954 = vector.broadcast %953 : vector<1x64xi1> to vector<2x64xi1>
    %955 = arith.select %954, %893, %827 : vector<2x64xi1>, vector<2x64xf32>
    %956 = vector.shape_cast %300 : vector<1x64xi1> to vector<1x64xi1>
    %957 = vector.broadcast %956 : vector<1x64xi1> to vector<2x64xi1>
    %958 = arith.select %957, %915, %805 : vector<2x64xi1>, vector<2x64xf32>
    %959 = vector.shape_cast %300 : vector<1x64xi1> to vector<1x64xi1>
    %960 = vector.broadcast %959 : vector<1x64xi1> to vector<2x64xi1>
    %961 = arith.select %960, %937, %783 : vector<2x64xi1>, vector<2x64xf32>
    %962 = tpu.concatenate %940, %943, %946, %949, %952, %955, %958, %961 in 0 : vector<2x64xf32>, vector<2x64xf32>, vector<2x64xf32>, vector<2x64xf32>, vector<2x64xf32>, vector<2x64xf32>, vector<2x64xf32>, vector<2x64xf32> -> vector<16x64xf32>
    %c2_230 = arith.constant 2 : index
    %c0_231 = arith.constant 0 : index
    %c0_232 = arith.constant 0 : index
    %963 = vector.load %arg20[%c2_230, %c0_231, %c0_232] : memref<4x64x256xbf16, #tpu.memory_space<vmem>>, vector<1x64x256xbf16>
    %964 = vector.shape_cast %963 : vector<1x64x256xbf16> to vector<64x256xbf16>
    %965 = arith.truncf %962 : vector<16x64xf32> to vector<16x64xbf16>
    %cst_233 = arith.constant dense<0.000000e+00> : vector<16x256xf32>
    %966 = tpu.matmul %965, %964, %cst_233 {dimension_numbers = #tpu.dot_dimension_numbers<[1], [0], [0], [1], [0, 0, 1, 1], [], []>} : vector<16x64xbf16>, vector<64x256xbf16>, vector<16x256xf32> -> vector<16x256xf32>
    %c3 = arith.constant 3 : index
    %c0_234 = arith.constant 0 : index
    %c0_235 = arith.constant 0 : index
    %967 = vector.load %arg21[%c3, %c0_234, %c0_235] : memref<5x1x256xf32, #tpu.memory_space<vmem>>, vector<1x1x256xf32>
    %968 = vector.shape_cast %967 : vector<1x1x256xf32> to vector<1x256xf32>
    %969 = vector.broadcast %968 : vector<1x256xf32> to vector<16x256xf32>
    %970 = arith.addf %966, %969 : vector<16x256xf32>
    %971 = vector.extract_strided_slice %970 {offsets = [0, 0], sizes = [2, 256], strides = [1, 1]} : vector<16x256xf32> to vector<2x256xf32>
    %972 = vector.extract_strided_slice %970 {offsets = [2, 0], sizes = [2, 256], strides = [1, 1]} : vector<16x256xf32> to vector<2x256xf32>
    %973 = vector.extract_strided_slice %970 {offsets = [4, 0], sizes = [2, 256], strides = [1, 1]} : vector<16x256xf32> to vector<2x256xf32>
    %974 = vector.extract_strided_slice %970 {offsets = [6, 0], sizes = [2, 256], strides = [1, 1]} : vector<16x256xf32> to vector<2x256xf32>
    %975 = vector.extract_strided_slice %970 {offsets = [8, 0], sizes = [2, 256], strides = [1, 1]} : vector<16x256xf32> to vector<2x256xf32>
    %976 = vector.extract_strided_slice %970 {offsets = [10, 0], sizes = [2, 256], strides = [1, 1]} : vector<16x256xf32> to vector<2x256xf32>
    %977 = vector.extract_strided_slice %970 {offsets = [12, 0], sizes = [2, 256], strides = [1, 1]} : vector<16x256xf32> to vector<2x256xf32>
    %978 = vector.extract_strided_slice %970 {offsets = [14, 0], sizes = [2, 256], strides = [1, 1]} : vector<16x256xf32> to vector<2x256xf32>
    %c3_236 = arith.constant 3 : index
    %c0_237 = arith.constant 0 : index
    %c0_238 = arith.constant 0 : index
    %979 = vector.load %arg22[%c3_236, %c0_237, %c0_238] : memref<5x64x256xbf16, #tpu.memory_space<vmem>>, vector<1x64x256xbf16>
    %980 = vector.shape_cast %979 : vector<1x64x256xbf16> to vector<64x256xbf16>
    %cst_239 = arith.constant 0.000000e+00 : f32
    %981 = vector.broadcast %cst_239 : f32 to vector<2x64xf32>
    %cst_240 = arith.constant 0.000000e+00 : f32
    %982 = vector.broadcast %cst_240 : f32 to vector<2x64xf32>
    %983 = vector.shape_cast %297 : vector<1x256xi1> to vector<1x256xi1>
    %984 = vector.broadcast %983 : vector<1x256xi1> to vector<2x256xi1>
    %985 = arith.select %984, %971, %978 : vector<2x256xi1>, vector<2x256xf32>
    %986 = arith.truncf %981 : vector<2x64xf32> to vector<2x64xbf16>
    %cst_241 = arith.constant dense<0.000000e+00> : vector<2x256xf32>
    %987 = tpu.matmul %986, %980, %cst_241 {dimension_numbers = #tpu.dot_dimension_numbers<[1], [0], [0], [1], [0, 0, 1, 1], [], []>} : vector<2x64xbf16>, vector<64x256xbf16>, vector<2x256xf32> -> vector<2x256xf32>
    %988 = arith.addf %985, %987 : vector<2x256xf32>
    %989 = vector.extract_strided_slice %988 {offsets = [0, 0], sizes = [2, 192], strides = [1, 1]} : vector<2x256xf32> to vector<2x192xf32>
    %990 = arith.negf %989 : vector<2x192xf32>
    %991 = math.exp %990 : vector<2x192xf32>
    %cst_242 = arith.constant 1.000000e+00 : f32
    %992 = vector.broadcast %cst_242 : f32 to vector<2x192xf32>
    %993 = arith.addf %992, %991 : vector<2x192xf32>
    %994 = arith.divf %992, %993 : vector<2x192xf32>
    %995 = vector.extract_strided_slice %988 {offsets = [0, 192], sizes = [2, 64], strides = [1, 1]} : vector<2x256xf32> to vector<2x64xf32>
    %996 = math.tanh %995 : vector<2x64xf32>
    %997 = vector.extract_strided_slice %994 {offsets = [0, 64], sizes = [2, 64], strides = [1, 1]} : vector<2x192xf32> to vector<2x64xf32>
    %998 = arith.mulf %997, %982 : vector<2x64xf32>
    %999 = vector.extract_strided_slice %994 {offsets = [0, 0], sizes = [2, 64], strides = [1, 1]} : vector<2x192xf32> to vector<2x64xf32>
    %1000 = arith.mulf %999, %996 : vector<2x64xf32>
    %1001 = arith.addf %998, %1000 : vector<2x64xf32>
    %1002 = vector.extract_strided_slice %994 {offsets = [0, 128], sizes = [2, 64], strides = [1, 1]} : vector<2x192xf32> to vector<2x64xf32>
    %1003 = math.tanh %1001 : vector<2x64xf32>
    %1004 = arith.mulf %1002, %1003 : vector<2x64xf32>
    %1005 = vector.shape_cast %297 : vector<1x256xi1> to vector<1x256xi1>
    %1006 = vector.broadcast %1005 : vector<1x256xi1> to vector<2x256xi1>
    %1007 = arith.select %1006, %972, %977 : vector<2x256xi1>, vector<2x256xf32>
    %1008 = arith.truncf %1004 : vector<2x64xf32> to vector<2x64xbf16>
    %cst_243 = arith.constant dense<0.000000e+00> : vector<2x256xf32>
    %1009 = tpu.matmul %1008, %980, %cst_243 {dimension_numbers = #tpu.dot_dimension_numbers<[1], [0], [0], [1], [0, 0, 1, 1], [], []>} : vector<2x64xbf16>, vector<64x256xbf16>, vector<2x256xf32> -> vector<2x256xf32>
    %1010 = arith.addf %1007, %1009 : vector<2x256xf32>
    %1011 = vector.extract_strided_slice %1010 {offsets = [0, 0], sizes = [2, 192], strides = [1, 1]} : vector<2x256xf32> to vector<2x192xf32>
    %1012 = arith.negf %1011 : vector<2x192xf32>
    %1013 = math.exp %1012 : vector<2x192xf32>
    %cst_244 = arith.constant 1.000000e+00 : f32
    %1014 = vector.broadcast %cst_244 : f32 to vector<2x192xf32>
    %1015 = arith.addf %1014, %1013 : vector<2x192xf32>
    %1016 = arith.divf %1014, %1015 : vector<2x192xf32>
    %1017 = vector.extract_strided_slice %1010 {offsets = [0, 192], sizes = [2, 64], strides = [1, 1]} : vector<2x256xf32> to vector<2x64xf32>
    %1018 = math.tanh %1017 : vector<2x64xf32>
    %1019 = vector.extract_strided_slice %1016 {offsets = [0, 64], sizes = [2, 64], strides = [1, 1]} : vector<2x192xf32> to vector<2x64xf32>
    %1020 = arith.mulf %1019, %1001 : vector<2x64xf32>
    %1021 = vector.extract_strided_slice %1016 {offsets = [0, 0], sizes = [2, 64], strides = [1, 1]} : vector<2x192xf32> to vector<2x64xf32>
    %1022 = arith.mulf %1021, %1018 : vector<2x64xf32>
    %1023 = arith.addf %1020, %1022 : vector<2x64xf32>
    %1024 = vector.extract_strided_slice %1016 {offsets = [0, 128], sizes = [2, 64], strides = [1, 1]} : vector<2x192xf32> to vector<2x64xf32>
    %1025 = math.tanh %1023 : vector<2x64xf32>
    %1026 = arith.mulf %1024, %1025 : vector<2x64xf32>
    %1027 = vector.shape_cast %297 : vector<1x256xi1> to vector<1x256xi1>
    %1028 = vector.broadcast %1027 : vector<1x256xi1> to vector<2x256xi1>
    %1029 = arith.select %1028, %973, %976 : vector<2x256xi1>, vector<2x256xf32>
    %1030 = arith.truncf %1026 : vector<2x64xf32> to vector<2x64xbf16>
    %cst_245 = arith.constant dense<0.000000e+00> : vector<2x256xf32>
    %1031 = tpu.matmul %1030, %980, %cst_245 {dimension_numbers = #tpu.dot_dimension_numbers<[1], [0], [0], [1], [0, 0, 1, 1], [], []>} : vector<2x64xbf16>, vector<64x256xbf16>, vector<2x256xf32> -> vector<2x256xf32>
    %1032 = arith.addf %1029, %1031 : vector<2x256xf32>
    %1033 = vector.extract_strided_slice %1032 {offsets = [0, 0], sizes = [2, 192], strides = [1, 1]} : vector<2x256xf32> to vector<2x192xf32>
    %1034 = arith.negf %1033 : vector<2x192xf32>
    %1035 = math.exp %1034 : vector<2x192xf32>
    %cst_246 = arith.constant 1.000000e+00 : f32
    %1036 = vector.broadcast %cst_246 : f32 to vector<2x192xf32>
    %1037 = arith.addf %1036, %1035 : vector<2x192xf32>
    %1038 = arith.divf %1036, %1037 : vector<2x192xf32>
    %1039 = vector.extract_strided_slice %1032 {offsets = [0, 192], sizes = [2, 64], strides = [1, 1]} : vector<2x256xf32> to vector<2x64xf32>
    %1040 = math.tanh %1039 : vector<2x64xf32>
    %1041 = vector.extract_strided_slice %1038 {offsets = [0, 64], sizes = [2, 64], strides = [1, 1]} : vector<2x192xf32> to vector<2x64xf32>
    %1042 = arith.mulf %1041, %1023 : vector<2x64xf32>
    %1043 = vector.extract_strided_slice %1038 {offsets = [0, 0], sizes = [2, 64], strides = [1, 1]} : vector<2x192xf32> to vector<2x64xf32>
    %1044 = arith.mulf %1043, %1040 : vector<2x64xf32>
    %1045 = arith.addf %1042, %1044 : vector<2x64xf32>
    %1046 = vector.extract_strided_slice %1038 {offsets = [0, 128], sizes = [2, 64], strides = [1, 1]} : vector<2x192xf32> to vector<2x64xf32>
    %1047 = math.tanh %1045 : vector<2x64xf32>
    %1048 = arith.mulf %1046, %1047 : vector<2x64xf32>
    %1049 = vector.shape_cast %297 : vector<1x256xi1> to vector<1x256xi1>
    %1050 = vector.broadcast %1049 : vector<1x256xi1> to vector<2x256xi1>
    %1051 = arith.select %1050, %974, %975 : vector<2x256xi1>, vector<2x256xf32>
    %1052 = arith.truncf %1048 : vector<2x64xf32> to vector<2x64xbf16>
    %cst_247 = arith.constant dense<0.000000e+00> : vector<2x256xf32>
    %1053 = tpu.matmul %1052, %980, %cst_247 {dimension_numbers = #tpu.dot_dimension_numbers<[1], [0], [0], [1], [0, 0, 1, 1], [], []>} : vector<2x64xbf16>, vector<64x256xbf16>, vector<2x256xf32> -> vector<2x256xf32>
    %1054 = arith.addf %1051, %1053 : vector<2x256xf32>
    %1055 = vector.extract_strided_slice %1054 {offsets = [0, 0], sizes = [2, 192], strides = [1, 1]} : vector<2x256xf32> to vector<2x192xf32>
    %1056 = arith.negf %1055 : vector<2x192xf32>
    %1057 = math.exp %1056 : vector<2x192xf32>
    %cst_248 = arith.constant 1.000000e+00 : f32
    %1058 = vector.broadcast %cst_248 : f32 to vector<2x192xf32>
    %1059 = arith.addf %1058, %1057 : vector<2x192xf32>
    %1060 = arith.divf %1058, %1059 : vector<2x192xf32>
    %1061 = vector.extract_strided_slice %1054 {offsets = [0, 192], sizes = [2, 64], strides = [1, 1]} : vector<2x256xf32> to vector<2x64xf32>
    %1062 = math.tanh %1061 : vector<2x64xf32>
    %1063 = vector.extract_strided_slice %1060 {offsets = [0, 64], sizes = [2, 64], strides = [1, 1]} : vector<2x192xf32> to vector<2x64xf32>
    %1064 = arith.mulf %1063, %1045 : vector<2x64xf32>
    %1065 = vector.extract_strided_slice %1060 {offsets = [0, 0], sizes = [2, 64], strides = [1, 1]} : vector<2x192xf32> to vector<2x64xf32>
    %1066 = arith.mulf %1065, %1062 : vector<2x64xf32>
    %1067 = arith.addf %1064, %1066 : vector<2x64xf32>
    %1068 = vector.extract_strided_slice %1060 {offsets = [0, 128], sizes = [2, 64], strides = [1, 1]} : vector<2x192xf32> to vector<2x64xf32>
    %1069 = math.tanh %1067 : vector<2x64xf32>
    %1070 = arith.mulf %1068, %1069 : vector<2x64xf32>
    %1071 = vector.shape_cast %297 : vector<1x256xi1> to vector<1x256xi1>
    %1072 = vector.broadcast %1071 : vector<1x256xi1> to vector<2x256xi1>
    %1073 = arith.select %1072, %975, %974 : vector<2x256xi1>, vector<2x256xf32>
    %1074 = arith.truncf %1070 : vector<2x64xf32> to vector<2x64xbf16>
    %cst_249 = arith.constant dense<0.000000e+00> : vector<2x256xf32>
    %1075 = tpu.matmul %1074, %980, %cst_249 {dimension_numbers = #tpu.dot_dimension_numbers<[1], [0], [0], [1], [0, 0, 1, 1], [], []>} : vector<2x64xbf16>, vector<64x256xbf16>, vector<2x256xf32> -> vector<2x256xf32>
    %1076 = arith.addf %1073, %1075 : vector<2x256xf32>
    %1077 = vector.extract_strided_slice %1076 {offsets = [0, 0], sizes = [2, 192], strides = [1, 1]} : vector<2x256xf32> to vector<2x192xf32>
    %1078 = arith.negf %1077 : vector<2x192xf32>
    %1079 = math.exp %1078 : vector<2x192xf32>
    %cst_250 = arith.constant 1.000000e+00 : f32
    %1080 = vector.broadcast %cst_250 : f32 to vector<2x192xf32>
    %1081 = arith.addf %1080, %1079 : vector<2x192xf32>
    %1082 = arith.divf %1080, %1081 : vector<2x192xf32>
    %1083 = vector.extract_strided_slice %1076 {offsets = [0, 192], sizes = [2, 64], strides = [1, 1]} : vector<2x256xf32> to vector<2x64xf32>
    %1084 = math.tanh %1083 : vector<2x64xf32>
    %1085 = vector.extract_strided_slice %1082 {offsets = [0, 64], sizes = [2, 64], strides = [1, 1]} : vector<2x192xf32> to vector<2x64xf32>
    %1086 = arith.mulf %1085, %1067 : vector<2x64xf32>
    %1087 = vector.extract_strided_slice %1082 {offsets = [0, 0], sizes = [2, 64], strides = [1, 1]} : vector<2x192xf32> to vector<2x64xf32>
    %1088 = arith.mulf %1087, %1084 : vector<2x64xf32>
    %1089 = arith.addf %1086, %1088 : vector<2x64xf32>
    %1090 = vector.extract_strided_slice %1082 {offsets = [0, 128], sizes = [2, 64], strides = [1, 1]} : vector<2x192xf32> to vector<2x64xf32>
    %1091 = math.tanh %1089 : vector<2x64xf32>
    %1092 = arith.mulf %1090, %1091 : vector<2x64xf32>
    %1093 = vector.shape_cast %297 : vector<1x256xi1> to vector<1x256xi1>
    %1094 = vector.broadcast %1093 : vector<1x256xi1> to vector<2x256xi1>
    %1095 = arith.select %1094, %976, %973 : vector<2x256xi1>, vector<2x256xf32>
    %1096 = arith.truncf %1092 : vector<2x64xf32> to vector<2x64xbf16>
    %cst_251 = arith.constant dense<0.000000e+00> : vector<2x256xf32>
    %1097 = tpu.matmul %1096, %980, %cst_251 {dimension_numbers = #tpu.dot_dimension_numbers<[1], [0], [0], [1], [0, 0, 1, 1], [], []>} : vector<2x64xbf16>, vector<64x256xbf16>, vector<2x256xf32> -> vector<2x256xf32>
    %1098 = arith.addf %1095, %1097 : vector<2x256xf32>
    %1099 = vector.extract_strided_slice %1098 {offsets = [0, 0], sizes = [2, 192], strides = [1, 1]} : vector<2x256xf32> to vector<2x192xf32>
    %1100 = arith.negf %1099 : vector<2x192xf32>
    %1101 = math.exp %1100 : vector<2x192xf32>
    %cst_252 = arith.constant 1.000000e+00 : f32
    %1102 = vector.broadcast %cst_252 : f32 to vector<2x192xf32>
    %1103 = arith.addf %1102, %1101 : vector<2x192xf32>
    %1104 = arith.divf %1102, %1103 : vector<2x192xf32>
    %1105 = vector.extract_strided_slice %1098 {offsets = [0, 192], sizes = [2, 64], strides = [1, 1]} : vector<2x256xf32> to vector<2x64xf32>
    %1106 = math.tanh %1105 : vector<2x64xf32>
    %1107 = vector.extract_strided_slice %1104 {offsets = [0, 64], sizes = [2, 64], strides = [1, 1]} : vector<2x192xf32> to vector<2x64xf32>
    %1108 = arith.mulf %1107, %1089 : vector<2x64xf32>
    %1109 = vector.extract_strided_slice %1104 {offsets = [0, 0], sizes = [2, 64], strides = [1, 1]} : vector<2x192xf32> to vector<2x64xf32>
    %1110 = arith.mulf %1109, %1106 : vector<2x64xf32>
    %1111 = arith.addf %1108, %1110 : vector<2x64xf32>
    %1112 = vector.extract_strided_slice %1104 {offsets = [0, 128], sizes = [2, 64], strides = [1, 1]} : vector<2x192xf32> to vector<2x64xf32>
    %1113 = math.tanh %1111 : vector<2x64xf32>
    %1114 = arith.mulf %1112, %1113 : vector<2x64xf32>
    %1115 = vector.shape_cast %297 : vector<1x256xi1> to vector<1x256xi1>
    %1116 = vector.broadcast %1115 : vector<1x256xi1> to vector<2x256xi1>
    %1117 = arith.select %1116, %977, %972 : vector<2x256xi1>, vector<2x256xf32>
    %1118 = arith.truncf %1114 : vector<2x64xf32> to vector<2x64xbf16>
    %cst_253 = arith.constant dense<0.000000e+00> : vector<2x256xf32>
    %1119 = tpu.matmul %1118, %980, %cst_253 {dimension_numbers = #tpu.dot_dimension_numbers<[1], [0], [0], [1], [0, 0, 1, 1], [], []>} : vector<2x64xbf16>, vector<64x256xbf16>, vector<2x256xf32> -> vector<2x256xf32>
    %1120 = arith.addf %1117, %1119 : vector<2x256xf32>
    %1121 = vector.extract_strided_slice %1120 {offsets = [0, 0], sizes = [2, 192], strides = [1, 1]} : vector<2x256xf32> to vector<2x192xf32>
    %1122 = arith.negf %1121 : vector<2x192xf32>
    %1123 = math.exp %1122 : vector<2x192xf32>
    %cst_254 = arith.constant 1.000000e+00 : f32
    %1124 = vector.broadcast %cst_254 : f32 to vector<2x192xf32>
    %1125 = arith.addf %1124, %1123 : vector<2x192xf32>
    %1126 = arith.divf %1124, %1125 : vector<2x192xf32>
    %1127 = vector.extract_strided_slice %1120 {offsets = [0, 192], sizes = [2, 64], strides = [1, 1]} : vector<2x256xf32> to vector<2x64xf32>
    %1128 = math.tanh %1127 : vector<2x64xf32>
    %1129 = vector.extract_strided_slice %1126 {offsets = [0, 64], sizes = [2, 64], strides = [1, 1]} : vector<2x192xf32> to vector<2x64xf32>
    %1130 = arith.mulf %1129, %1111 : vector<2x64xf32>
    %1131 = vector.extract_strided_slice %1126 {offsets = [0, 0], sizes = [2, 64], strides = [1, 1]} : vector<2x192xf32> to vector<2x64xf32>
    %1132 = arith.mulf %1131, %1128 : vector<2x64xf32>
    %1133 = arith.addf %1130, %1132 : vector<2x64xf32>
    %1134 = vector.extract_strided_slice %1126 {offsets = [0, 128], sizes = [2, 64], strides = [1, 1]} : vector<2x192xf32> to vector<2x64xf32>
    %1135 = math.tanh %1133 : vector<2x64xf32>
    %1136 = arith.mulf %1134, %1135 : vector<2x64xf32>
    %1137 = vector.shape_cast %297 : vector<1x256xi1> to vector<1x256xi1>
    %1138 = vector.broadcast %1137 : vector<1x256xi1> to vector<2x256xi1>
    %1139 = arith.select %1138, %978, %971 : vector<2x256xi1>, vector<2x256xf32>
    %1140 = arith.truncf %1136 : vector<2x64xf32> to vector<2x64xbf16>
    %cst_255 = arith.constant dense<0.000000e+00> : vector<2x256xf32>
    %1141 = tpu.matmul %1140, %980, %cst_255 {dimension_numbers = #tpu.dot_dimension_numbers<[1], [0], [0], [1], [0, 0, 1, 1], [], []>} : vector<2x64xbf16>, vector<64x256xbf16>, vector<2x256xf32> -> vector<2x256xf32>
    %1142 = arith.addf %1139, %1141 : vector<2x256xf32>
    %1143 = vector.extract_strided_slice %1142 {offsets = [0, 0], sizes = [2, 192], strides = [1, 1]} : vector<2x256xf32> to vector<2x192xf32>
    %1144 = arith.negf %1143 : vector<2x192xf32>
    %1145 = math.exp %1144 : vector<2x192xf32>
    %cst_256 = arith.constant 1.000000e+00 : f32
    %1146 = vector.broadcast %cst_256 : f32 to vector<2x192xf32>
    %1147 = arith.addf %1146, %1145 : vector<2x192xf32>
    %1148 = arith.divf %1146, %1147 : vector<2x192xf32>
    %1149 = vector.extract_strided_slice %1142 {offsets = [0, 192], sizes = [2, 64], strides = [1, 1]} : vector<2x256xf32> to vector<2x64xf32>
    %1150 = math.tanh %1149 : vector<2x64xf32>
    %1151 = vector.extract_strided_slice %1148 {offsets = [0, 64], sizes = [2, 64], strides = [1, 1]} : vector<2x192xf32> to vector<2x64xf32>
    %1152 = arith.mulf %1151, %1133 : vector<2x64xf32>
    %1153 = vector.extract_strided_slice %1148 {offsets = [0, 0], sizes = [2, 64], strides = [1, 1]} : vector<2x192xf32> to vector<2x64xf32>
    %1154 = arith.mulf %1153, %1150 : vector<2x64xf32>
    %1155 = arith.addf %1152, %1154 : vector<2x64xf32>
    %1156 = vector.extract_strided_slice %1148 {offsets = [0, 128], sizes = [2, 64], strides = [1, 1]} : vector<2x192xf32> to vector<2x64xf32>
    %1157 = math.tanh %1155 : vector<2x64xf32>
    %1158 = arith.mulf %1156, %1157 : vector<2x64xf32>
    %1159 = vector.shape_cast %300 : vector<1x64xi1> to vector<1x64xi1>
    %1160 = vector.broadcast %1159 : vector<1x64xi1> to vector<2x64xi1>
    %1161 = arith.select %1160, %1004, %1158 : vector<2x64xi1>, vector<2x64xf32>
    %1162 = vector.shape_cast %300 : vector<1x64xi1> to vector<1x64xi1>
    %1163 = vector.broadcast %1162 : vector<1x64xi1> to vector<2x64xi1>
    %1164 = arith.select %1163, %1026, %1136 : vector<2x64xi1>, vector<2x64xf32>
    %1165 = vector.shape_cast %300 : vector<1x64xi1> to vector<1x64xi1>
    %1166 = vector.broadcast %1165 : vector<1x64xi1> to vector<2x64xi1>
    %1167 = arith.select %1166, %1048, %1114 : vector<2x64xi1>, vector<2x64xf32>
    %1168 = vector.shape_cast %300 : vector<1x64xi1> to vector<1x64xi1>
    %1169 = vector.broadcast %1168 : vector<1x64xi1> to vector<2x64xi1>
    %1170 = arith.select %1169, %1070, %1092 : vector<2x64xi1>, vector<2x64xf32>
    %1171 = vector.shape_cast %300 : vector<1x64xi1> to vector<1x64xi1>
    %1172 = vector.broadcast %1171 : vector<1x64xi1> to vector<2x64xi1>
    %1173 = arith.select %1172, %1092, %1070 : vector<2x64xi1>, vector<2x64xf32>
    %1174 = vector.shape_cast %300 : vector<1x64xi1> to vector<1x64xi1>
    %1175 = vector.broadcast %1174 : vector<1x64xi1> to vector<2x64xi1>
    %1176 = arith.select %1175, %1114, %1048 : vector<2x64xi1>, vector<2x64xf32>
    %1177 = vector.shape_cast %300 : vector<1x64xi1> to vector<1x64xi1>
    %1178 = vector.broadcast %1177 : vector<1x64xi1> to vector<2x64xi1>
    %1179 = arith.select %1178, %1136, %1026 : vector<2x64xi1>, vector<2x64xf32>
    %1180 = vector.shape_cast %300 : vector<1x64xi1> to vector<1x64xi1>
    %1181 = vector.broadcast %1180 : vector<1x64xi1> to vector<2x64xi1>
    %1182 = arith.select %1181, %1158, %1004 : vector<2x64xi1>, vector<2x64xf32>
    %1183 = tpu.concatenate %1161, %1164, %1167, %1170, %1173, %1176, %1179, %1182 in 0 : vector<2x64xf32>, vector<2x64xf32>, vector<2x64xf32>, vector<2x64xf32>, vector<2x64xf32>, vector<2x64xf32>, vector<2x64xf32>, vector<2x64xf32> -> vector<16x64xf32>
    %c3_257 = arith.constant 3 : index
    %c0_258 = arith.constant 0 : index
    %c0_259 = arith.constant 0 : index
    %1184 = vector.load %arg20[%c3_257, %c0_258, %c0_259] : memref<4x64x256xbf16, #tpu.memory_space<vmem>>, vector<1x64x256xbf16>
    %1185 = vector.shape_cast %1184 : vector<1x64x256xbf16> to vector<64x256xbf16>
    %1186 = arith.truncf %1183 : vector<16x64xf32> to vector<16x64xbf16>
    %cst_260 = arith.constant dense<0.000000e+00> : vector<16x256xf32>
    %1187 = tpu.matmul %1186, %1185, %cst_260 {dimension_numbers = #tpu.dot_dimension_numbers<[1], [0], [0], [1], [0, 0, 1, 1], [], []>} : vector<16x64xbf16>, vector<64x256xbf16>, vector<16x256xf32> -> vector<16x256xf32>
    %c4 = arith.constant 4 : index
    %c0_261 = arith.constant 0 : index
    %c0_262 = arith.constant 0 : index
    %1188 = vector.load %arg21[%c4, %c0_261, %c0_262] : memref<5x1x256xf32, #tpu.memory_space<vmem>>, vector<1x1x256xf32>
    %1189 = vector.shape_cast %1188 : vector<1x1x256xf32> to vector<1x256xf32>
    %1190 = vector.broadcast %1189 : vector<1x256xf32> to vector<16x256xf32>
    %1191 = arith.addf %1187, %1190 : vector<16x256xf32>
    %1192 = vector.extract_strided_slice %1191 {offsets = [0, 0], sizes = [2, 256], strides = [1, 1]} : vector<16x256xf32> to vector<2x256xf32>
    %1193 = vector.extract_strided_slice %1191 {offsets = [2, 0], sizes = [2, 256], strides = [1, 1]} : vector<16x256xf32> to vector<2x256xf32>
    %1194 = vector.extract_strided_slice %1191 {offsets = [4, 0], sizes = [2, 256], strides = [1, 1]} : vector<16x256xf32> to vector<2x256xf32>
    %1195 = vector.extract_strided_slice %1191 {offsets = [6, 0], sizes = [2, 256], strides = [1, 1]} : vector<16x256xf32> to vector<2x256xf32>
    %1196 = vector.extract_strided_slice %1191 {offsets = [8, 0], sizes = [2, 256], strides = [1, 1]} : vector<16x256xf32> to vector<2x256xf32>
    %1197 = vector.extract_strided_slice %1191 {offsets = [10, 0], sizes = [2, 256], strides = [1, 1]} : vector<16x256xf32> to vector<2x256xf32>
    %1198 = vector.extract_strided_slice %1191 {offsets = [12, 0], sizes = [2, 256], strides = [1, 1]} : vector<16x256xf32> to vector<2x256xf32>
    %1199 = vector.extract_strided_slice %1191 {offsets = [14, 0], sizes = [2, 256], strides = [1, 1]} : vector<16x256xf32> to vector<2x256xf32>
    %c4_263 = arith.constant 4 : index
    %c0_264 = arith.constant 0 : index
    %c0_265 = arith.constant 0 : index
    %1200 = vector.load %arg22[%c4_263, %c0_264, %c0_265] : memref<5x64x256xbf16, #tpu.memory_space<vmem>>, vector<1x64x256xbf16>
    %1201 = vector.shape_cast %1200 : vector<1x64x256xbf16> to vector<64x256xbf16>
    %cst_266 = arith.constant 0.000000e+00 : f32
    %1202 = vector.broadcast %cst_266 : f32 to vector<2x64xf32>
    %cst_267 = arith.constant 0.000000e+00 : f32
    %1203 = vector.broadcast %cst_267 : f32 to vector<2x64xf32>
    %1204 = vector.shape_cast %297 : vector<1x256xi1> to vector<1x256xi1>
    %1205 = vector.broadcast %1204 : vector<1x256xi1> to vector<2x256xi1>
    %1206 = arith.select %1205, %1192, %1199 : vector<2x256xi1>, vector<2x256xf32>
    %1207 = arith.truncf %1202 : vector<2x64xf32> to vector<2x64xbf16>
    %cst_268 = arith.constant dense<0.000000e+00> : vector<2x256xf32>
    %1208 = tpu.matmul %1207, %1201, %cst_268 {dimension_numbers = #tpu.dot_dimension_numbers<[1], [0], [0], [1], [0, 0, 1, 1], [], []>} : vector<2x64xbf16>, vector<64x256xbf16>, vector<2x256xf32> -> vector<2x256xf32>
    %1209 = arith.addf %1206, %1208 : vector<2x256xf32>
    %1210 = vector.extract_strided_slice %1209 {offsets = [0, 0], sizes = [2, 192], strides = [1, 1]} : vector<2x256xf32> to vector<2x192xf32>
    %1211 = arith.negf %1210 : vector<2x192xf32>
    %1212 = math.exp %1211 : vector<2x192xf32>
    %cst_269 = arith.constant 1.000000e+00 : f32
    %1213 = vector.broadcast %cst_269 : f32 to vector<2x192xf32>
    %1214 = arith.addf %1213, %1212 : vector<2x192xf32>
    %1215 = arith.divf %1213, %1214 : vector<2x192xf32>
    %1216 = vector.extract_strided_slice %1209 {offsets = [0, 192], sizes = [2, 64], strides = [1, 1]} : vector<2x256xf32> to vector<2x64xf32>
    %1217 = math.tanh %1216 : vector<2x64xf32>
    %1218 = vector.extract_strided_slice %1215 {offsets = [0, 64], sizes = [2, 64], strides = [1, 1]} : vector<2x192xf32> to vector<2x64xf32>
    %1219 = arith.mulf %1218, %1203 : vector<2x64xf32>
    %1220 = vector.extract_strided_slice %1215 {offsets = [0, 0], sizes = [2, 64], strides = [1, 1]} : vector<2x192xf32> to vector<2x64xf32>
    %1221 = arith.mulf %1220, %1217 : vector<2x64xf32>
    %1222 = arith.addf %1219, %1221 : vector<2x64xf32>
    %1223 = vector.extract_strided_slice %1215 {offsets = [0, 128], sizes = [2, 64], strides = [1, 1]} : vector<2x192xf32> to vector<2x64xf32>
    %1224 = math.tanh %1222 : vector<2x64xf32>
    %1225 = arith.mulf %1223, %1224 : vector<2x64xf32>
    %1226 = vector.shape_cast %297 : vector<1x256xi1> to vector<1x256xi1>
    %1227 = vector.broadcast %1226 : vector<1x256xi1> to vector<2x256xi1>
    %1228 = arith.select %1227, %1193, %1198 : vector<2x256xi1>, vector<2x256xf32>
    %1229 = arith.truncf %1225 : vector<2x64xf32> to vector<2x64xbf16>
    %cst_270 = arith.constant dense<0.000000e+00> : vector<2x256xf32>
    %1230 = tpu.matmul %1229, %1201, %cst_270 {dimension_numbers = #tpu.dot_dimension_numbers<[1], [0], [0], [1], [0, 0, 1, 1], [], []>} : vector<2x64xbf16>, vector<64x256xbf16>, vector<2x256xf32> -> vector<2x256xf32>
    %1231 = arith.addf %1228, %1230 : vector<2x256xf32>
    %1232 = vector.extract_strided_slice %1231 {offsets = [0, 0], sizes = [2, 192], strides = [1, 1]} : vector<2x256xf32> to vector<2x192xf32>
    %1233 = arith.negf %1232 : vector<2x192xf32>
    %1234 = math.exp %1233 : vector<2x192xf32>
    %cst_271 = arith.constant 1.000000e+00 : f32
    %1235 = vector.broadcast %cst_271 : f32 to vector<2x192xf32>
    %1236 = arith.addf %1235, %1234 : vector<2x192xf32>
    %1237 = arith.divf %1235, %1236 : vector<2x192xf32>
    %1238 = vector.extract_strided_slice %1231 {offsets = [0, 192], sizes = [2, 64], strides = [1, 1]} : vector<2x256xf32> to vector<2x64xf32>
    %1239 = math.tanh %1238 : vector<2x64xf32>
    %1240 = vector.extract_strided_slice %1237 {offsets = [0, 64], sizes = [2, 64], strides = [1, 1]} : vector<2x192xf32> to vector<2x64xf32>
    %1241 = arith.mulf %1240, %1222 : vector<2x64xf32>
    %1242 = vector.extract_strided_slice %1237 {offsets = [0, 0], sizes = [2, 64], strides = [1, 1]} : vector<2x192xf32> to vector<2x64xf32>
    %1243 = arith.mulf %1242, %1239 : vector<2x64xf32>
    %1244 = arith.addf %1241, %1243 : vector<2x64xf32>
    %1245 = vector.extract_strided_slice %1237 {offsets = [0, 128], sizes = [2, 64], strides = [1, 1]} : vector<2x192xf32> to vector<2x64xf32>
    %1246 = math.tanh %1244 : vector<2x64xf32>
    %1247 = arith.mulf %1245, %1246 : vector<2x64xf32>
    %1248 = vector.shape_cast %297 : vector<1x256xi1> to vector<1x256xi1>
    %1249 = vector.broadcast %1248 : vector<1x256xi1> to vector<2x256xi1>
    %1250 = arith.select %1249, %1194, %1197 : vector<2x256xi1>, vector<2x256xf32>
    %1251 = arith.truncf %1247 : vector<2x64xf32> to vector<2x64xbf16>
    %cst_272 = arith.constant dense<0.000000e+00> : vector<2x256xf32>
    %1252 = tpu.matmul %1251, %1201, %cst_272 {dimension_numbers = #tpu.dot_dimension_numbers<[1], [0], [0], [1], [0, 0, 1, 1], [], []>} : vector<2x64xbf16>, vector<64x256xbf16>, vector<2x256xf32> -> vector<2x256xf32>
    %1253 = arith.addf %1250, %1252 : vector<2x256xf32>
    %1254 = vector.extract_strided_slice %1253 {offsets = [0, 0], sizes = [2, 192], strides = [1, 1]} : vector<2x256xf32> to vector<2x192xf32>
    %1255 = arith.negf %1254 : vector<2x192xf32>
    %1256 = math.exp %1255 : vector<2x192xf32>
    %cst_273 = arith.constant 1.000000e+00 : f32
    %1257 = vector.broadcast %cst_273 : f32 to vector<2x192xf32>
    %1258 = arith.addf %1257, %1256 : vector<2x192xf32>
    %1259 = arith.divf %1257, %1258 : vector<2x192xf32>
    %1260 = vector.extract_strided_slice %1253 {offsets = [0, 192], sizes = [2, 64], strides = [1, 1]} : vector<2x256xf32> to vector<2x64xf32>
    %1261 = math.tanh %1260 : vector<2x64xf32>
    %1262 = vector.extract_strided_slice %1259 {offsets = [0, 64], sizes = [2, 64], strides = [1, 1]} : vector<2x192xf32> to vector<2x64xf32>
    %1263 = arith.mulf %1262, %1244 : vector<2x64xf32>
    %1264 = vector.extract_strided_slice %1259 {offsets = [0, 0], sizes = [2, 64], strides = [1, 1]} : vector<2x192xf32> to vector<2x64xf32>
    %1265 = arith.mulf %1264, %1261 : vector<2x64xf32>
    %1266 = arith.addf %1263, %1265 : vector<2x64xf32>
    %1267 = vector.extract_strided_slice %1259 {offsets = [0, 128], sizes = [2, 64], strides = [1, 1]} : vector<2x192xf32> to vector<2x64xf32>
    %1268 = math.tanh %1266 : vector<2x64xf32>
    %1269 = arith.mulf %1267, %1268 : vector<2x64xf32>
    %1270 = vector.shape_cast %297 : vector<1x256xi1> to vector<1x256xi1>
    %1271 = vector.broadcast %1270 : vector<1x256xi1> to vector<2x256xi1>
    %1272 = arith.select %1271, %1195, %1196 : vector<2x256xi1>, vector<2x256xf32>
    %1273 = arith.truncf %1269 : vector<2x64xf32> to vector<2x64xbf16>
    %cst_274 = arith.constant dense<0.000000e+00> : vector<2x256xf32>
    %1274 = tpu.matmul %1273, %1201, %cst_274 {dimension_numbers = #tpu.dot_dimension_numbers<[1], [0], [0], [1], [0, 0, 1, 1], [], []>} : vector<2x64xbf16>, vector<64x256xbf16>, vector<2x256xf32> -> vector<2x256xf32>
    %1275 = arith.addf %1272, %1274 : vector<2x256xf32>
    %1276 = vector.extract_strided_slice %1275 {offsets = [0, 0], sizes = [2, 192], strides = [1, 1]} : vector<2x256xf32> to vector<2x192xf32>
    %1277 = arith.negf %1276 : vector<2x192xf32>
    %1278 = math.exp %1277 : vector<2x192xf32>
    %cst_275 = arith.constant 1.000000e+00 : f32
    %1279 = vector.broadcast %cst_275 : f32 to vector<2x192xf32>
    %1280 = arith.addf %1279, %1278 : vector<2x192xf32>
    %1281 = arith.divf %1279, %1280 : vector<2x192xf32>
    %1282 = vector.extract_strided_slice %1275 {offsets = [0, 192], sizes = [2, 64], strides = [1, 1]} : vector<2x256xf32> to vector<2x64xf32>
    %1283 = math.tanh %1282 : vector<2x64xf32>
    %1284 = vector.extract_strided_slice %1281 {offsets = [0, 64], sizes = [2, 64], strides = [1, 1]} : vector<2x192xf32> to vector<2x64xf32>
    %1285 = arith.mulf %1284, %1266 : vector<2x64xf32>
    %1286 = vector.extract_strided_slice %1281 {offsets = [0, 0], sizes = [2, 64], strides = [1, 1]} : vector<2x192xf32> to vector<2x64xf32>
    %1287 = arith.mulf %1286, %1283 : vector<2x64xf32>
    %1288 = arith.addf %1285, %1287 : vector<2x64xf32>
    %1289 = vector.extract_strided_slice %1281 {offsets = [0, 128], sizes = [2, 64], strides = [1, 1]} : vector<2x192xf32> to vector<2x64xf32>
    %1290 = math.tanh %1288 : vector<2x64xf32>
    %1291 = arith.mulf %1289, %1290 : vector<2x64xf32>
    %1292 = vector.shape_cast %297 : vector<1x256xi1> to vector<1x256xi1>
    %1293 = vector.broadcast %1292 : vector<1x256xi1> to vector<2x256xi1>
    %1294 = arith.select %1293, %1196, %1195 : vector<2x256xi1>, vector<2x256xf32>
    %1295 = arith.truncf %1291 : vector<2x64xf32> to vector<2x64xbf16>
    %cst_276 = arith.constant dense<0.000000e+00> : vector<2x256xf32>
    %1296 = tpu.matmul %1295, %1201, %cst_276 {dimension_numbers = #tpu.dot_dimension_numbers<[1], [0], [0], [1], [0, 0, 1, 1], [], []>} : vector<2x64xbf16>, vector<64x256xbf16>, vector<2x256xf32> -> vector<2x256xf32>
    %1297 = arith.addf %1294, %1296 : vector<2x256xf32>
    %1298 = vector.extract_strided_slice %1297 {offsets = [0, 0], sizes = [2, 192], strides = [1, 1]} : vector<2x256xf32> to vector<2x192xf32>
    %1299 = arith.negf %1298 : vector<2x192xf32>
    %1300 = math.exp %1299 : vector<2x192xf32>
    %cst_277 = arith.constant 1.000000e+00 : f32
    %1301 = vector.broadcast %cst_277 : f32 to vector<2x192xf32>
    %1302 = arith.addf %1301, %1300 : vector<2x192xf32>
    %1303 = arith.divf %1301, %1302 : vector<2x192xf32>
    %1304 = vector.extract_strided_slice %1297 {offsets = [0, 192], sizes = [2, 64], strides = [1, 1]} : vector<2x256xf32> to vector<2x64xf32>
    %1305 = math.tanh %1304 : vector<2x64xf32>
    %1306 = vector.extract_strided_slice %1303 {offsets = [0, 64], sizes = [2, 64], strides = [1, 1]} : vector<2x192xf32> to vector<2x64xf32>
    %1307 = arith.mulf %1306, %1288 : vector<2x64xf32>
    %1308 = vector.extract_strided_slice %1303 {offsets = [0, 0], sizes = [2, 64], strides = [1, 1]} : vector<2x192xf32> to vector<2x64xf32>
    %1309 = arith.mulf %1308, %1305 : vector<2x64xf32>
    %1310 = arith.addf %1307, %1309 : vector<2x64xf32>
    %1311 = vector.extract_strided_slice %1303 {offsets = [0, 128], sizes = [2, 64], strides = [1, 1]} : vector<2x192xf32> to vector<2x64xf32>
    %1312 = math.tanh %1310 : vector<2x64xf32>
    %1313 = arith.mulf %1311, %1312 : vector<2x64xf32>
    %1314 = vector.shape_cast %297 : vector<1x256xi1> to vector<1x256xi1>
    %1315 = vector.broadcast %1314 : vector<1x256xi1> to vector<2x256xi1>
    %1316 = arith.select %1315, %1197, %1194 : vector<2x256xi1>, vector<2x256xf32>
    %1317 = arith.truncf %1313 : vector<2x64xf32> to vector<2x64xbf16>
    %cst_278 = arith.constant dense<0.000000e+00> : vector<2x256xf32>
    %1318 = tpu.matmul %1317, %1201, %cst_278 {dimension_numbers = #tpu.dot_dimension_numbers<[1], [0], [0], [1], [0, 0, 1, 1], [], []>} : vector<2x64xbf16>, vector<64x256xbf16>, vector<2x256xf32> -> vector<2x256xf32>
    %1319 = arith.addf %1316, %1318 : vector<2x256xf32>
    %1320 = vector.extract_strided_slice %1319 {offsets = [0, 0], sizes = [2, 192], strides = [1, 1]} : vector<2x256xf32> to vector<2x192xf32>
    %1321 = arith.negf %1320 : vector<2x192xf32>
    %1322 = math.exp %1321 : vector<2x192xf32>
    %cst_279 = arith.constant 1.000000e+00 : f32
    %1323 = vector.broadcast %cst_279 : f32 to vector<2x192xf32>
    %1324 = arith.addf %1323, %1322 : vector<2x192xf32>
    %1325 = arith.divf %1323, %1324 : vector<2x192xf32>
    %1326 = vector.extract_strided_slice %1319 {offsets = [0, 192], sizes = [2, 64], strides = [1, 1]} : vector<2x256xf32> to vector<2x64xf32>
    %1327 = math.tanh %1326 : vector<2x64xf32>
    %1328 = vector.extract_strided_slice %1325 {offsets = [0, 64], sizes = [2, 64], strides = [1, 1]} : vector<2x192xf32> to vector<2x64xf32>
    %1329 = arith.mulf %1328, %1310 : vector<2x64xf32>
    %1330 = vector.extract_strided_slice %1325 {offsets = [0, 0], sizes = [2, 64], strides = [1, 1]} : vector<2x192xf32> to vector<2x64xf32>
    %1331 = arith.mulf %1330, %1327 : vector<2x64xf32>
    %1332 = arith.addf %1329, %1331 : vector<2x64xf32>
    %1333 = vector.extract_strided_slice %1325 {offsets = [0, 128], sizes = [2, 64], strides = [1, 1]} : vector<2x192xf32> to vector<2x64xf32>
    %1334 = math.tanh %1332 : vector<2x64xf32>
    %1335 = arith.mulf %1333, %1334 : vector<2x64xf32>
    %1336 = vector.shape_cast %297 : vector<1x256xi1> to vector<1x256xi1>
    %1337 = vector.broadcast %1336 : vector<1x256xi1> to vector<2x256xi1>
    %1338 = arith.select %1337, %1198, %1193 : vector<2x256xi1>, vector<2x256xf32>
    %1339 = arith.truncf %1335 : vector<2x64xf32> to vector<2x64xbf16>
    %cst_280 = arith.constant dense<0.000000e+00> : vector<2x256xf32>
    %1340 = tpu.matmul %1339, %1201, %cst_280 {dimension_numbers = #tpu.dot_dimension_numbers<[1], [0], [0], [1], [0, 0, 1, 1], [], []>} : vector<2x64xbf16>, vector<64x256xbf16>, vector<2x256xf32> -> vector<2x256xf32>
    %1341 = arith.addf %1338, %1340 : vector<2x256xf32>
    %1342 = vector.extract_strided_slice %1341 {offsets = [0, 0], sizes = [2, 192], strides = [1, 1]} : vector<2x256xf32> to vector<2x192xf32>
    %1343 = arith.negf %1342 : vector<2x192xf32>
    %1344 = math.exp %1343 : vector<2x192xf32>
    %cst_281 = arith.constant 1.000000e+00 : f32
    %1345 = vector.broadcast %cst_281 : f32 to vector<2x192xf32>
    %1346 = arith.addf %1345, %1344 : vector<2x192xf32>
    %1347 = arith.divf %1345, %1346 : vector<2x192xf32>
    %1348 = vector.extract_strided_slice %1341 {offsets = [0, 192], sizes = [2, 64], strides = [1, 1]} : vector<2x256xf32> to vector<2x64xf32>
    %1349 = math.tanh %1348 : vector<2x64xf32>
    %1350 = vector.extract_strided_slice %1347 {offsets = [0, 64], sizes = [2, 64], strides = [1, 1]} : vector<2x192xf32> to vector<2x64xf32>
    %1351 = arith.mulf %1350, %1332 : vector<2x64xf32>
    %1352 = vector.extract_strided_slice %1347 {offsets = [0, 0], sizes = [2, 64], strides = [1, 1]} : vector<2x192xf32> to vector<2x64xf32>
    %1353 = arith.mulf %1352, %1349 : vector<2x64xf32>
    %1354 = arith.addf %1351, %1353 : vector<2x64xf32>
    %1355 = vector.extract_strided_slice %1347 {offsets = [0, 128], sizes = [2, 64], strides = [1, 1]} : vector<2x192xf32> to vector<2x64xf32>
    %1356 = math.tanh %1354 : vector<2x64xf32>
    %1357 = arith.mulf %1355, %1356 : vector<2x64xf32>
    %1358 = vector.shape_cast %297 : vector<1x256xi1> to vector<1x256xi1>
    %1359 = vector.broadcast %1358 : vector<1x256xi1> to vector<2x256xi1>
    %1360 = arith.select %1359, %1199, %1192 : vector<2x256xi1>, vector<2x256xf32>
    %1361 = arith.truncf %1357 : vector<2x64xf32> to vector<2x64xbf16>
    %cst_282 = arith.constant dense<0.000000e+00> : vector<2x256xf32>
    %1362 = tpu.matmul %1361, %1201, %cst_282 {dimension_numbers = #tpu.dot_dimension_numbers<[1], [0], [0], [1], [0, 0, 1, 1], [], []>} : vector<2x64xbf16>, vector<64x256xbf16>, vector<2x256xf32> -> vector<2x256xf32>
    %1363 = arith.addf %1360, %1362 : vector<2x256xf32>
    %1364 = vector.extract_strided_slice %1363 {offsets = [0, 0], sizes = [2, 192], strides = [1, 1]} : vector<2x256xf32> to vector<2x192xf32>
    %1365 = arith.negf %1364 : vector<2x192xf32>
    %1366 = math.exp %1365 : vector<2x192xf32>
    %cst_283 = arith.constant 1.000000e+00 : f32
    %1367 = vector.broadcast %cst_283 : f32 to vector<2x192xf32>
    %1368 = arith.addf %1367, %1366 : vector<2x192xf32>
    %1369 = arith.divf %1367, %1368 : vector<2x192xf32>
    %1370 = vector.extract_strided_slice %1363 {offsets = [0, 192], sizes = [2, 64], strides = [1, 1]} : vector<2x256xf32> to vector<2x64xf32>
    %1371 = math.tanh %1370 : vector<2x64xf32>
    %1372 = vector.extract_strided_slice %1369 {offsets = [0, 64], sizes = [2, 64], strides = [1, 1]} : vector<2x192xf32> to vector<2x64xf32>
    %1373 = arith.mulf %1372, %1354 : vector<2x64xf32>
    %1374 = vector.extract_strided_slice %1369 {offsets = [0, 0], sizes = [2, 64], strides = [1, 1]} : vector<2x192xf32> to vector<2x64xf32>
    %1375 = arith.mulf %1374, %1371 : vector<2x64xf32>
    %1376 = arith.addf %1373, %1375 : vector<2x64xf32>
    %1377 = vector.extract_strided_slice %1369 {offsets = [0, 128], sizes = [2, 64], strides = [1, 1]} : vector<2x192xf32> to vector<2x64xf32>
    %1378 = math.tanh %1376 : vector<2x64xf32>
    %1379 = arith.mulf %1377, %1378 : vector<2x64xf32>
    %cst_284 = arith.constant 0.000000e+00 : f32
    %1380 = vector.broadcast %cst_284 : f32 to vector<2x64xf32>
    %1381 = arith.maximumf %1379, %1380 : vector<2x64xf32>
    %c0_285 = arith.constant 0 : index
    %c0_286 = arith.constant 0 : index
    %1382 = vector.load %arg23[%c0_285, %c0_286] : memref<64x16xf32, #tpu.memory_space<vmem>>, vector<64x16xf32>
    %cst_287 = arith.constant dense<0.000000e+00> : vector<2x16xf32>
    %1383 = tpu.matmul %1381, %1382, %cst_287 {dimension_numbers = #tpu.dot_dimension_numbers<[1], [0], [0], [1], [0, 0, 1, 1], [], []>} : vector<2x64xf32>, vector<64x16xf32>, vector<2x16xf32> -> vector<2x16xf32>
    %c0_288 = arith.constant 0 : index
    %c0_289 = arith.constant 0 : index
    %1384 = vector.load %arg24[%c0_288, %c0_289] : memref<1x16xf32, #tpu.memory_space<vmem>>, vector<1x16xf32>
    %1385 = vector.broadcast %1384 : vector<1x16xf32> to vector<2x16xf32>
    %1386 = arith.addf %1383, %1385 : vector<2x16xf32>
    %c0_290 = arith.constant 0 : index
    %c0_291 = arith.constant 0 : index
    %1387 = vector.load %arg25[%c0_290, %c0_291] : memref<16x6xf32, #tpu.memory_space<vmem>>, vector<16x6xf32>
    %cst_292 = arith.constant dense<0.000000e+00> : vector<2x6xf32>
    %1388 = tpu.matmul %1386, %1387, %cst_292 {dimension_numbers = #tpu.dot_dimension_numbers<[1], [0], [0], [1], [0, 0, 1, 1], [], []>} : vector<2x16xf32>, vector<16x6xf32>, vector<2x6xf32> -> vector<2x6xf32>
    %c0_293 = arith.constant 0 : index
    %c0_294 = arith.constant 0 : index
    %1389 = vector.load %arg26[%c0_293, %c0_294] : memref<1x6xf32, #tpu.memory_space<vmem>>, vector<1x6xf32>
    %1390 = vector.broadcast %1389 : vector<1x6xf32> to vector<2x6xf32>
    %1391 = arith.addf %1388, %1390 : vector<2x6xf32>
    %c0_295 = arith.constant 0 : index
    %c0_296 = arith.constant 0 : index
    %1392 = vector.load %arg27[%c0_295, %c0_296] : memref<2x6xf32, #tpu.memory_space<vmem>>, vector<2x6xf32>
    tpu.vector_store %arg27[%c0_295, %c0_296], %1391 {strides = array<i32>} : memref<2x6xf32, #tpu.memory_space<vmem>>, vector<2x6xf32>,
    return
  }
}

</mosaic_0001>

<llo_original>
// kernel: _lambda_.1
$region0: #{_lambda_.1}
  #allocation0 [shape = 'u32[]', space=smem, size = 0x4, offset = 0x4, fixed_abs, tag = 'smem constant byte address 0x4 - core index']
  #allocation1 [shape = 'u32[144,128]{1,0:T(1,128)}', space=vmem, size = 0x12000, scoped, tag = 'internal scratch']
  %s0 = inlined_call_operand.vmem [shape: f32[16,32], index: 0, kind: input, shape index: {}]
  %s1 = inlined_call_operand.vmem [shape: f32[16,1], index: 1, kind: input, shape index: {}]
  %s2 = inlined_call_operand.vmem [shape: f32[1,16], index: 2, kind: input, shape index: {}]
  %s3 = inlined_call_operand.vmem [shape: f32[1,32], index: 3, kind: input, shape index: {}]
  %s4 = inlined_call_operand.vmem [shape: f32[1,32], index: 4, kind: input, shape index: {}]
  %s5 = inlined_call_operand.vmem [shape: bf16[2,32,96], index: 5, kind: input, shape index: {}]
  %s6 = inlined_call_operand.vmem [shape: f32[2,1,96], index: 6, kind: input, shape index: {}]
  %s7 = inlined_call_operand.vmem [shape: bf16[2,32,32], index: 7, kind: input, shape index: {}]
  %s8 = inlined_call_operand.vmem [shape: f32[2,1,32], index: 8, kind: input, shape index: {}]
  %s9 = inlined_call_operand.vmem [shape: f32[2,1,32], index: 9, kind: input, shape index: {}]
  %s10 = inlined_call_operand.vmem [shape: f32[2,1,32], index: 10, kind: input, shape index: {}]
  %s11 = inlined_call_operand.vmem [shape: bf16[2,32,64], index: 11, kind: input, shape index: {}]
  %s12 = inlined_call_operand.vmem [shape: f32[2,1,64], index: 12, kind: input, shape index: {}]
  %s13 = inlined_call_operand.vmem [shape: bf16[2,64,32], index: 13, kind: input, shape index: {}]
  %s14 = inlined_call_operand.vmem [shape: f32[2,1,32], index: 14, kind: input, shape index: {}]
  %s15 = inlined_call_operand.vmem [shape: f32[2,1,32], index: 15, kind: input, shape index: {}]
  %s16 = inlined_call_operand.vmem [shape: f32[2,1,32], index: 16, kind: input, shape index: {}]
  %s17 = inlined_call_operand.vmem [shape: f32[1,256], index: 17, kind: input, shape index: {}]
  %s18 = inlined_call_operand.vmem [shape: f32[1,64], index: 18, kind: input, shape index: {}]
  %s19 = inlined_call_operand.vmem [shape: bf16[32,256], index: 19, kind: input, shape index: {}]
  %s20 = inlined_call_operand.vmem [shape: bf16[4,64,256], index: 20, kind: input, shape index: {}]
  %s21 = inlined_call_operand.vmem [shape: f32[5,1,256], index: 21, kind: input, shape index: {}]
  %s22 = inlined_call_operand.vmem [shape: bf16[5,64,256], index: 22, kind: input, shape index: {}]
  %s23 = inlined_call_operand.vmem [shape: f32[64,16], index: 23, kind: input, shape index: {}]
  %s24 = inlined_call_operand.vmem [shape: f32[1,16], index: 24, kind: input, shape index: {}]
  %s25 = inlined_call_operand.vmem [shape: f32[16,6], index: 25, kind: input, shape index: {}]
  %s26 = inlined_call_operand.vmem [shape: f32[1,6], index: 26, kind: input, shape index: {}]
  %s27 = inlined_call_operand.hbm [shape: f32[2,6], index: 27, kind: output, shape index: {}]
  %s28 = sld [smem:[#allocation0]]
  $region118: #{_lambda_.1} parent=0
    _
  %s30 = ssub.s32 1, %s28
  %s31 = scalar_select 0, %s30, %s28
  $region1: #{_lambda_.1} parent=0
    #allocation2 [shape = 'u8[1024]{0}', space=vmem, size = 0x400, scoped, tag = 'output window, operand 0, single buffered']
    #allocation3 [shape = 's32[1]{0}', space=sflag, size = 0x4, scoped, tag = 'scoped memory for _lambda_.1']
    %32 = vsyncpa [#allocation3], 0
    // Predicated region
    $region2: #{_lambda_.1} parent=1 // pred_check
      _
    $region3: #{_lambda_.1} parent=1 // pred_check_branch
      %34 = sbr.rel (0) target = $region5
    $region4: #{_lambda_.1} parent=1 // pred_region
      _
    $region5: #{_lambda_.1} parent=1 // pred_fallthru
      _
    // Predicated region
    $region6: #{_lambda_.1} parent=1 // pred_check
      _
    $region7: #{_lambda_.1} parent=1 // pred_check_branch
      %36 = sbr.rel (0) target = $region9
    $region8: #{_lambda_.1} parent=1 // pred_region
      _
    $region9: #{_lambda_.1} parent=1 // pred_fallthru
      _
    // Predicated region
    $region10: #{_lambda_.1} parent=1 // pred_check
      _
    $region11: #{_lambda_.1} parent=1 // pred_check_branch
      %38 = sbr.rel (0) target = $region13
    $region12: #{_lambda_.1} parent=1 // pred_region
      _
    $region13: #{_lambda_.1} parent=1 // pred_fallthru
      _
    // Predicated region
    $region14: #{_lambda_.1} parent=1 // pred_check
      _
    $region15: #{_lambda_.1} parent=1 // pred_check_branch
      %40 = sbr.rel (0) target = $region17
    $region16: #{_lambda_.1} parent=1 // pred_region
      _
    $region17: #{_lambda_.1} parent=1 // pred_fallthru
      _
    // Predicated region
    $region18: #{_lambda_.1} parent=1 // pred_check
      _
    $region19: #{_lambda_.1} parent=1 // pred_check_branch
      %42 = sbr.rel (0) target = $region21
    $region20: #{_lambda_.1} parent=1 // pred_region
      _
    $region21: #{_lambda_.1} parent=1 // pred_fallthru
      _
    // Predicated region
    $region22: #{_lambda_.1} parent=1 // pred_check
      _
    $region23: #{_lambda_.1} parent=1 // pred_check_branch
      %44 = sbr.rel (0) target = $region25
    $region24: #{_lambda_.1} parent=1 // pred_region
      _
    $region25: #{_lambda_.1} parent=1 // pred_fallthru
      _
    // Predicated region
    $region26: #{_lambda_.1} parent=1 // pred_check
      _
    $region27: #{_lambda_.1} parent=1 // pred_check_branch
      %46 = sbr.rel (0) target = $region29
    $region28: #{_lambda_.1} parent=1 // pred_region
      _
    $region29: #{_lambda_.1} parent=1 // pred_fallthru
      _
    // Predicated region
    $region30: #{_lambda_.1} parent=1 // pred_check
      _
    $region31: #{_lambda_.1} parent=1 // pred_check_branch
      %48 = sbr.rel (0) target = $region33
    $region32: #{_lambda_.1} parent=1 // pred_region
      _
    $region33: #{_lambda_.1} parent=1 // pred_fallthru
      _
    // Predicated region
    $region34: #{_lambda_.1} parent=1 // pred_check
      _
    $region35: #{_lambda_.1} parent=1 // pred_check_branch
      %50 = sbr.rel (0) target = $region37
    $region36: #{_lambda_.1} parent=1 // pred_region
      _
    $region37: #{_lambda_.1} parent=1 // pred_fallthru
      _
    // Predicated region
    $region38: #{_lambda_.1} parent=1 // pred_check
      _
    $region39: #{_lambda_.1} parent=1 // pred_check_branch
      %52 = sbr.rel (0) target = $region41
    $region40: #{_lambda_.1} parent=1 // pred_region
      _
    $region41: #{_lambda_.1} parent=1 // pred_fallthru
      _
    // Predicated region
    $region42: #{_lambda_.1} parent=1 // pred_check
      _
    $region43: #{_lambda_.1} parent=1 // pred_check_branch
      %54 = sbr.rel (0) target = $region45
    $region44: #{_lambda_.1} parent=1 // pred_region
      _
    $region45: #{_lambda_.1} parent=1 // pred_fallthru
      _
    // Predicated region
    $region46: #{_lambda_.1} parent=1 // pred_check
      _
    $region47: #{_lambda_.1} parent=1 // pred_check_branch
      %56 = sbr.rel (0) target = $region49
    $region48: #{_lambda_.1} parent=1 // pred_region
      _
    $region49: #{_lambda_.1} parent=1 // pred_fallthru
      _
    // Predicated region
    $region50: #{_lambda_.1} parent=1 // pred_check
      _
    $region51: #{_lambda_.1} parent=1 // pred_check_branch
      %58 = sbr.rel (0) target = $region53
    $region52: #{_lambda_.1} parent=1 // pred_region
      _
    $region53: #{_lambda_.1} parent=1 // pred_fallthru
      _
    // Predicated region
    $region54: #{_lambda_.1} parent=1 // pred_check
      _
    $region55: #{_lambda_.1} parent=1 // pred_check_branch
      %60 = sbr.rel (0) target = $region57
    $region56: #{_lambda_.1} parent=1 // pred_region
      _
    $region57: #{_lambda_.1} parent=1 // pred_fallthru
      _
    // Predicated region
    $region58: #{_lambda_.1} parent=1 // pred_check
      _
    $region59: #{_lambda_.1} parent=1 // pred_check_branch
      %62 = sbr.rel (0) target = $region61
    $region60: #{_lambda_.1} parent=1 // pred_region
      _
    $region61: #{_lambda_.1} parent=1 // pred_fallthru
      _
    // Predicated region
    $region62: #{_lambda_.1} parent=1 // pred_check
      _
    $region63: #{_lambda_.1} parent=1 // pred_check_branch
      %64 = sbr.rel (0) target = $region65
    $region64: #{_lambda_.1} parent=1 // pred_region
      _
    $region65: #{_lambda_.1} parent=1 // pred_fallthru
      _
    // Predicated region
    $region66: #{_lambda_.1} parent=1 // pred_check
      _
    $region67: #{_lambda_.1} parent=1 // pred_check_branch
      %66 = sbr.rel (0) target = $region69
    $region68: #{_lambda_.1} parent=1 // pred_region
      _
    $region69: #{_lambda_.1} parent=1 // pred_fallthru
      _
    // Predicated region
    $region70: #{_lambda_.1} parent=1 // pred_check
      _
    $region71: #{_lambda_.1} parent=1 // pred_check_branch
      %68 = sbr.rel (0) target = $region73
    $region72: #{_lambda_.1} parent=1 // pred_region
      _
    $region73: #{_lambda_.1} parent=1 // pred_fallthru
      _
    // Predicated region
    $region74: #{_lambda_.1} parent=1 // pred_check
      _
    $region75: #{_lambda_.1} parent=1 // pred_check_branch
      %70 = sbr.rel (0) target = $region77
    $region76: #{_lambda_.1} parent=1 // pred_region
      _
    $region77: #{_lambda_.1} parent=1 // pred_fallthru
      _
    // Predicated region
    $region78: #{_lambda_.1} parent=1 // pred_check
      _
    $region79: #{_lambda_.1} parent=1 // pred_check_branch
      %72 = sbr.rel (0) target = $region81
    $region80: #{_lambda_.1} parent=1 // pred_region
      _
    $region81: #{_lambda_.1} parent=1 // pred_fallthru
      _
    // Predicated region
    $region82: #{_lambda_.1} parent=1 // pred_check
      _
    $region83: #{_lambda_.1} parent=1 // pred_check_branch
      %74 = sbr.rel (0) target = $region85
    $region84: #{_lambda_.1} parent=1 // pred_region
      _
    $region85: #{_lambda_.1} parent=1 // pred_fallthru
      _
    // Predicated region
    $region86: #{_lambda_.1} parent=1 // pred_check
      _
    $region87: #{_lambda_.1} parent=1 // pred_check_branch
      %76 = sbr.rel (0) target = $region89
    $region88: #{_lambda_.1} parent=1 // pred_region
      _
    $region89: #{_lambda_.1} parent=1 // pred_fallthru
      _
    // Predicated region
    $region90: #{_lambda_.1} parent=1 // pred_check
      _
    $region91: #{_lambda_.1} parent=1 // pred_check_branch
      %78 = sbr.rel (0) target = $region93
    $region92: #{_lambda_.1} parent=1 // pred_region
      _
    $region93: #{_lambda_.1} parent=1 // pred_fallthru
      _
    // Predicated region
    $region94: #{_lambda_.1} parent=1 // pred_check
      _
    $region95: #{_lambda_.1} parent=1 // pred_check_branch
      %80 = sbr.rel (0) target = $region97
    $region96: #{_lambda_.1} parent=1 // pred_region
      _
    $region97: #{_lambda_.1} parent=1 // pred_fallthru
      _
    // Predicated region
    $region98: #{_lambda_.1} parent=1 // pred_check
      _
    $region99: #{_lambda_.1} parent=1 // pred_check_branch
      %82 = sbr.rel (0) target = $region101
    $region100: #{_lambda_.1} parent=1 // pred_region
      _
    $region101: #{_lambda_.1} parent=1 // pred_fallthru
      _
    // Predicated region
    $region102: #{_lambda_.1} parent=1 // pred_check
      _
    $region103: #{_lambda_.1} parent=1 // pred_check_branch
      %84 = sbr.rel (0) target = $region105
    $region104: #{_lambda_.1} parent=1 // pred_region
      _
    $region105: #{_lambda_.1} parent=1 // pred_fallthru
      _
    // Predicated region
    $region106: #{_lambda_.1} parent=1 // pred_check
      _
    $region107: #{_lambda_.1} parent=1 // pred_check_branch
      %86 = sbr.rel (0) target = $region109
    $region108: #{_lambda_.1} parent=1 // pred_region
      _
    $region109: #{_lambda_.1} parent=1 // pred_fallthru
      _
    %v88 = vld [vmem:[%s0] sm:$0xff]
    %v89 = vld [vmem:[%s0 + $0x8] sm:$0xff]
    %v90 = vld [vmem:[%s3] sm:$0x1]
    %v91 = vld [vmem:[%s4] sm:$0x1]
    %vm92 = vcmask 261120
    %v93 = vsel %vm92, %v88, 0.0
    %94 = vadd.xlane.f32.xlu0 %v93
    %v95 = vpop.xlane.xlu0 %94
    %v96 = vsel %vm92, %v89, 0.0
    %97 = vadd.xlane.f32.xlu0 %v96
    %v98 = vpop.xlane.xlu0 %97
    %v99 = vrcp.pop 32.0
    %v100 = vmul.f32 %v95, %v99
    %v101 = vmul.f32 %v98, %v99
    %v102 = vsub.f32 %v88, %v100
    %v103 = vsub.f32 %v89, %v101
    %v104 = vmul.f32 %v102, %v102
    %v105 = vmul.f32 %v103, %v103
    %v106 = vsel %vm92, %v104, 0.0
    %107 = vadd.xlane.f32.xlu0 %v106
    %v108 = vpop.xlane.xlu0 %107
    %v109 = vsel %vm92, %v105, 0.0
    %110 = vadd.xlane.f32.xlu0 %v109
    %v111 = vpop.xlane.xlu0 %110
    %v112 = vmul.f32 %v108, %v99
    %v113 = vmul.f32 %v111, %v99
    %v114 = vadd.f32 %v112, 1e-12
    %v115 = vadd.f32 %v113, 1e-12
    %v116 = vrsqrt.pop %v114
    %v117 = vrsqrt.pop %v115
    %v118 = vmul.f32 %v102, %v116
    %v119 = vmul.f32 %v103, %v117
    %v121 = vlaneseq
    %v122 = vshrl.u32 %v121, 7
    %v123 = vsub.s32 0, %v122
    %v124 = vrot.slane %v90, %v123
    %v126 = vmul.f32 %v118, %v124
    %v127 = vmul.f32 %v119, %v124
    %v129 = vlaneseq
    %v130 = vshrl.u32 %v129, 7
    %v131 = vsub.s32 0, %v130
    %v132 = vrot.slane %v91, %v131
    %v134 = vadd.f32 %v126, %v132
    %v135 = vadd.f32 %v127, %v132
    %v136 = vld [vmem:[%s1] sm:$0xff]
    %v137 = vld [vmem:[%s1 + $0x8] sm:$0xff]
    %v138 = vld [vmem:[%s2] sm:$0x1]
    %140 = vset.pattern.permute.xlu0 0
    %141 = vperm.xlu0 %140, %v136
    %v142 = vpop.permute.xlu0 %141
    %145 = vset.pattern.permute.xlu0 0
    %146 = vperm.xlu0 %145, %v137
    %v147 = vpop.permute.xlu0 %146
    %v150 = vlaneseq
    %v151 = vshrl.u32 %v150, 7
    %v152 = vsub.s32 0, %v151
    %v153 = vrot.slane %v138, %v152
    %vm155 = vcmp.eq.f32.partialorder %v142, %v153
    %vm156 = vcmp.eq.f32.partialorder %v147, %v153
    %v157 = vsel %vm155, 0.0, -1e+09
    %v158 = vsel %vm156, 0.0, -1e+09
    %v159 = vpack.c.bf16 %v135, %v134
    %v160 = vld [vmem:[%s5] sm:$0xf]
    %v161 = vld [vmem:[%s5 + $0x4] sm:$0xf]
    %v162 = vld [vmem:[%s5 + $0x8] sm:$0xf]
    %v163 = vld [vmem:[%s5 + $0xc] sm:$0xf]
    %v164 = vld [vmem:[%s6] sm:$0x1]
    %v166 = vlaneseq
    %v167 = vshrl.u32 %v166, 7
    %v168 = vsub.s32 0, %v167
    %v169 = vrot.slane %v164, %v168
    %v175 = vunpack.c.l.b16 %v160
    %v176 = vunpack.c.l.b16 %v161
    %v177 = vunpack.c.l.b16 %v162
    %v178 = vunpack.c.l.b16 %v163
    %v179 = vpack.c.b16 %v176, %v175
    %v180 = vpack.c.b16 %v178, %v177
    %v184 = vsel %vm92, %v159, 0
    %186 = vmatprep.subr.bf16.mxu0 0
    %187 = vmatpush1.bf16.msra.mxu0 %v179
    %188 = vmatprep.subr.bf16.mxu0 0
    %189 = vmatpush1.bf16.msra.mxu0 %v180
    %190 = vmatprep.subr.bf16.mxu0 0
    %191 = vmatpush1.bf16.msra.mxu0 0
    %192 = vmatprep.subr.bf16.mxu0 0
    %193 = vmatpush1.bf16.msra.mxu0 0
    %194 = vmatprep.subr.bf16.mxu0 0
    %195 = vmatpush1.bf16.msra.mxu0 0
    %196 = vmatprep.subr.bf16.mxu0 0
    %197 = vmatpush1.bf16.msra.mxu0 0
    %198 = vmatprep.subr.bf16.mxu0 0
    %199 = vmatpush1.bf16.msra.mxu0 0
    %200 = vmatprep.subr.bf16.mxu0 0
    %201 = vmatpush1.bf16.msra.mxu0 0
    %202 = vmatprep.subr.bf16.mxu0 0
    %203 = vmatpush1.bf16.msra.mxu0 0
    %204 = vmatprep.subr.bf16.mxu0 0
    %205 = vmatpush1.bf16.msra.mxu0 0
    %206 = vmatprep.subr.bf16.mxu0 0
    %207 = vmatpush1.bf16.msra.mxu0 0
    %208 = vmatprep.subr.bf16.mxu0 0
    %209 = vmatpush1.bf16.msra.mxu0 0
    %210 = vmatprep.subr.bf16.mxu0 0
    %211 = vmatpush1.bf16.msra.mxu0 0
    %212 = vmatprep.subr.bf16.mxu0 0
    %213 = vmatpush1.bf16.msra.mxu0 0
    %214 = vmatprep.subr.bf16.mxu0 0
    %215 = vmatpush1.bf16.msra.mxu0 0
    %216 = vmatprep.subr.bf16.mxu0 0
    %217 = vmatpush1.bf16.msra.mxu0 0
    %218 = vmatprep.mubr.bf16.mxu0 0
    %219 = vmatmul.mubr.bf16.gmra.mrb[0].mxu0 %v184
    %v220 = vpop.f32.mrb[0].mxu0
    %v221 = vadd.f32 %v169, %v220
    %v222 = vpop.f32.mrb[0].mxu0
    %v223 = vpop.f32.mrb[0].mxu0
    %v224 = vadd.f32 %v169, %v223
    %v225 = vpop.f32.mrb[0].mxu0
    %226 = vdwg.mxu0
    %229 = vrot.lane.b32.xlu0 %v221, 96
    %v230 = vpop.permute.xlu0 %229
    %231 = vrot.lane.b32.xlu0 %v224, 96
    %v232 = vpop.permute.xlu0 %231
    %vm233 = vcmask 130048
    %v234 = vsel %vm233, %v221, 0
    %v236 = vsel %vm233, %v224, 0
    %v238 = vsel %vm233, %v230, 0
    %v240 = vsel %vm233, %v232, 0
    %242 = vmatprep.subr.mxu0 0.0
    %243 = vmatpush1.xpose.msra.mxu0 %v238
    %244 = vmatprep.subr.mxu0 0.0
    %245 = vmatpush1.xpose.msra.mxu0 %v240
    %246 = vmatprep.subr.mxu0 0.0
    %247 = vmatpush1.xpose.msra.mxu0 0.0
    %248 = vmatprep.subr.mxu0 0.0
    %249 = vmatpush1.xpose.msra.mxu0 0.0
    %250 = vmatprep.subr.mxu0 0.0
    %251 = vmatpush1.xpose.msra.mxu0 0.0
    %252 = vmatprep.subr.mxu0 0.0
    %253 = vmatpush1.xpose.msra.mxu0 0.0
    %254 = vmatprep.subr.mxu0 0.0
    %255 = vmatpush1.xpose.msra.mxu0 0.0
    %256 = vmatprep.subr.mxu0 0.0
    %257 = vmatpush1.xpose.msra.mxu0 0.0
    %258 = vmatprep.subr.mxu0 0.0
    %259 = vmatpush1.xpose.msra.mxu0 0.0
    %260 = vmatprep.subr.mxu0 0.0
    %261 = vmatpush1.xpose.msra.mxu0 0.0
    %262 = vmatprep.subr.mxu0 0.0
    %263 = vmatpush1.xpose.msra.mxu0 0.0
    %264 = vmatprep.subr.mxu0 0.0
    %265 = vmatpush1.xpose.msra.mxu0 0.0
    %266 = vmatprep.subr.mxu0 0.0
    %267 = vmatpush1.xpose.msra.mxu0 0.0
    %268 = vmatprep.subr.mxu0 0.0
    %269 = vmatpush1.xpose.msra.mxu0 0.0
    %270 = vmatprep.subr.mxu0 0.0
    %271 = vmatpush1.xpose.msra.mxu0 0.0
    %272 = vmatprep.subr.mxu0 0.0
    %273 = vmatpush1.xpose.msra.mxu0 0.0
    %274 = vmatprep.subr.mxu0 0.0
    %275 = vmatpush1.xpose.msra.mxu0 0.0
    %276 = vmatprep.subr.mxu0 0.0
    %277 = vmatpush1.xpose.msra.mxu0 0.0
    %278 = vmatprep.subr.mxu0 0.0
    %279 = vmatpush1.xpose.msra.mxu0 0.0
    %280 = vmatprep.subr.mxu0 0.0
    %281 = vmatpush1.xpose.msra.mxu0 0.0
    %282 = vmatprep.subr.mxu0 0.0
    %283 = vmatpush1.xpose.msra.mxu0 0.0
    %284 = vmatprep.subr.mxu0 0.0
    %285 = vmatpush1.xpose.msra.mxu0 0.0
    %286 = vmatprep.subr.mxu0 0.0
    %287 = vmatpush1.xpose.msra.mxu0 0.0
    %288 = vmatprep.subr.mxu0 0.0
    %289 = vmatpush1.xpose.msra.mxu0 0.0
    %290 = vmatprep.subr.mxu0 0.0
    %291 = vmatpush1.xpose.msra.mxu0 0.0
    %292 = vmatprep.subr.mxu0 0.0
    %293 = vmatpush1.xpose.msra.mxu0 0.0
    %294 = vmatprep.subr.mxu0 0.0
    %295 = vmatpush1.xpose.msra.mxu0 0.0
    %296 = vmatprep.subr.mxu0 0.0
    %297 = vmatpush1.xpose.msra.mxu0 0.0
    %298 = vmatprep.subr.mxu0 0.0
    %299 = vmatpush1.xpose.msra.mxu0 0.0
    %300 = vmatprep.subr.mxu0 0.0
    %301 = vmatpush1.xpose.msra.mxu0 0.0
    %302 = vmatprep.subr.mxu0 0.0
    %303 = vmatpush1.xpose.msra.mxu0 0.0
    %304 = vmatprep.subr.mxu0 0.0
    %305 = vmatpush1.xpose.msra.mxu0 0.0
    %306 = vmatprep.mubr.f32.mxu0 0.0
    %307 = vmatmul.mubr.f32.gmra.mrb[0].mxu0 %v234
    %v308 = vpop.f32.mrb[0].mxu0
    %v309 = vadd.f32 0.0, %v308
    %v310 = vpop.f32.mrb[0].mxu0
    %311 = vmatprep.mubr.f32.mxu0 0.0
    %312 = vmatmul.mubr.f32.gmra.mrb[0].mxu0 %v236
    %v313 = vpop.f32.mrb[0].mxu0
    %v314 = vadd.f32 0.0, %v313
    %v315 = vpop.f32.mrb[0].mxu0
    %316 = vdwg.mxu0
    %v317 = vmul.f32 %v309, 0.25
    %v318 = vmul.f32 %v314, 0.25
    %v319 = vadd.f32 %v317, %v157
    %v320 = vadd.f32 %v318, %v158
    %v321 = vsel %vm233, %v319, -inf
    %322 = vmax.xlane.f32.xlu0 %v321
    %v323 = vpop.xlane.xlu0 %322
    %v324 = vsel %vm233, %v320, -inf
    %325 = vmax.xlane.f32.xlu0 %v324
    %v326 = vpop.xlane.xlu0 %325
    %v327 = vsub.f32 %v319, %v323
    %v328 = vsub.f32 %v320, %v326
    %v329 = vmul.f32 %v327, 1.442695
    %v330 = vpow.pop %v329
    %v331 = vmul.f32 %v328, 1.442695
    %v332 = vpow.pop %v331
    %v333 = vsel %vm233, %v330, 0.0
    %334 = vadd.xlane.f32.xlu0 %v333
    %v335 = vpop.xlane.xlu0 %334
    %v336 = vsel %vm233, %v332, 0.0
    %337 = vadd.xlane.f32.xlu0 %v336
    %v338 = vpop.xlane.xlu0 %337
    %v339 = vrcp.pop %v335
    %v340 = vrcp.pop %v338
    %v341 = vmul.f32 %v330, %v339
    %v342 = vmul.f32 %v332, %v340
    %343 = vrot.lane.b32.xlu0 %v221, 64
    %v344 = vpop.permute.xlu0 %343
    %345 = vrot.lane.b32.xlu0 %v224, 64
    %v346 = vpop.permute.xlu0 %345
    %v350 = vsel %vm233, %v341, 0
    %v353 = vsel %vm233, %v342, 0
    %355 = vmatprep.subr.mxu0 0.0
    %356 = vmatpush1.msra.mxu0 %v344
    %357 = vmatprep.subr.mxu0 0.0
    %358 = vmatpush1.msra.mxu0 %v346
    %359 = vmatprep.subr.mxu0 0.0
    %360 = vmatpush1.msra.mxu0 0.0
    %361 = vmatprep.subr.mxu0 0.0
    %362 = vmatpush1.msra.mxu0 0.0
    %363 = vmatprep.subr.mxu0 0.0
    %364 = vmatpush1.msra.mxu0 0.0
    %365 = vmatprep.subr.mxu0 0.0
    %366 = vmatpush1.msra.mxu0 0.0
    %367 = vmatprep.subr.mxu0 0.0
    %368 = vmatpush1.msra.mxu0 0.0
    %369 = vmatprep.subr.mxu0 0.0
    %370 = vmatpush1.msra.mxu0 0.0
    %371 = vmatprep.subr.mxu0 0.0
    %372 = vmatpush1.msra.mxu0 0.0
    %373 = vmatprep.subr.mxu0 0.0
    %374 = vmatpush1.msra.mxu0 0.0
    %375 = vmatprep.subr.mxu0 0.0
    %376 = vmatpush1.msra.mxu0 0.0
    %377 = vmatprep.subr.mxu0 0.0
    %378 = vmatpush1.msra.mxu0 0.0
    %379 = vmatprep.subr.mxu0 0.0
    %380 = vmatpush1.msra.mxu0 0.0
    %381 = vmatprep.subr.mxu0 0.0
    %382 = vmatpush1.msra.mxu0 0.0
    %383 = vmatprep.subr.mxu0 0.0
    %384 = vmatpush1.msra.mxu0 0.0
    %385 = vmatprep.subr.mxu0 0.0
    %386 = vmatpush1.msra.mxu0 0.0
    %387 = vmatprep.subr.mxu0 0.0
    %388 = vmatpush1.msra.mxu0 0.0
    %389 = vmatprep.subr.mxu0 0.0
    %390 = vmatpush1.msra.mxu0 0.0
    %391 = vmatprep.subr.mxu0 0.0
    %392 = vmatpush1.msra.mxu0 0.0
    %393 = vmatprep.subr.mxu0 0.0
    %394 = vmatpush1.msra.mxu0 0.0
    %395 = vmatprep.subr.mxu0 0.0
    %396 = vmatpush1.msra.mxu0 0.0
    %397 = vmatprep.subr.mxu0 0.0
    %398 = vmatpush1.msra.mxu0 0.0
    %399 = vmatprep.subr.mxu0 0.0
    %400 = vmatpush1.msra.mxu0 0.0
    %401 = vmatprep.subr.mxu0 0.0
    %402 = vmatpush1.msra.mxu0 0.0
    %403 = vmatprep.subr.mxu0 0.0
    %404 = vmatpush1.msra.mxu0 0.0
    %405 = vmatprep.subr.mxu0 0.0
    %406 = vmatpush1.msra.mxu0 0.0
    %407 = vmatprep.subr.mxu0 0.0
    %408 = vmatpush1.msra.mxu0 0.0
    %409 = vmatprep.subr.mxu0 0.0
    %410 = vmatpush1.msra.mxu0 0.0
    %411 = vmatprep.subr.mxu0 0.0
    %412 = vmatpush1.msra.mxu0 0.0
    %413 = vmatprep.subr.mxu0 0.0
    %414 = vmatpush1.msra.mxu0 0.0
    %415 = vmatprep.subr.mxu0 0.0
    %416 = vmatpush1.msra.mxu0 0.0
    %417 = vmatprep.subr.mxu0 0.0
    %418 = vmatpush1.msra.mxu0 0.0
    %419 = vmatprep.mubr.f32.mxu0 0.0
    %420 = vmatmul.mubr.f32.gmra.mrb[0].mxu0 %v350
    %v421 = vpop.f32.mrb[0].mxu0
    %v422 = vadd.f32 0.0, %v421
    %v423 = vpop.f32.mrb[0].mxu0
    %424 = vmatprep.mubr.f32.mxu0 0.0
    %425 = vmatmul.mubr.f32.gmra.mrb[0].mxu0 %v353
    %v426 = vpop.f32.mrb[0].mxu0
    %v427 = vadd.f32 0.0, %v426
    %v428 = vpop.f32.mrb[0].mxu0
    %429 = vdwg.mxu0
    %430 = vrot.lane.b32.xlu0 %v221, 112
    %v431 = vpop.permute.xlu0 %430
    %432 = vrot.lane.b32.xlu0 %v224, 112
    %v433 = vpop.permute.xlu0 %432
    %434 = vrot.lane.b32.xlu0 %v221, 80
    %v435 = vpop.permute.xlu0 %434
    %436 = vrot.lane.b32.xlu0 %v224, 80
    %v437 = vpop.permute.xlu0 %436
    %v438 = vsel %vm233, %v431, 0
    %v440 = vsel %vm233, %v433, 0
    %v442 = vsel %vm233, %v435, 0
    %v444 = vsel %vm233, %v437, 0
    %446 = vmatprep.subr.mxu0 0.0
    %447 = vmatpush1.xpose.msra.mxu0 %v442
    %448 = vmatprep.subr.mxu0 0.0
    %449 = vmatpush1.xpose.msra.mxu0 %v444
    %450 = vmatprep.subr.mxu0 0.0
    %451 = vmatpush1.xpose.msra.mxu0 0.0
    %452 = vmatprep.subr.mxu0 0.0
    %453 = vmatpush1.xpose.msra.mxu0 0.0
    %454 = vmatprep.subr.mxu0 0.0
    %455 = vmatpush1.xpose.msra.mxu0 0.0
    %456 = vmatprep.subr.mxu0 0.0
    %457 = vmatpush1.xpose.msra.mxu0 0.0
    %458 = vmatprep.subr.mxu0 0.0
    %459 = vmatpush1.xpose.msra.mxu0 0.0
    %460 = vmatprep.subr.mxu0 0.0
    %461 = vmatpush1.xpose.msra.mxu0 0.0
    %462 = vmatprep.subr.mxu0 0.0
    %463 = vmatpush1.xpose.msra.mxu0 0.0
    %464 = vmatprep.subr.mxu0 0.0
    %465 = vmatpush1.xpose.msra.mxu0 0.0
    %466 = vmatprep.subr.mxu0 0.0
    %467 = vmatpush1.xpose.msra.mxu0 0.0
    %468 = vmatprep.subr.mxu0 0.0
    %469 = vmatpush1.xpose.msra.mxu0 0.0
    %470 = vmatprep.subr.mxu0 0.0
    %471 = vmatpush1.xpose.msra.mxu0 0.0
    %472 = vmatprep.subr.mxu0 0.0
    %473 = vmatpush1.xpose.msra.mxu0 0.0
    %474 = vmatprep.subr.mxu0 0.0
    %475 = vmatpush1.xpose.msra.mxu0 0.0
    %476 = vmatprep.subr.mxu0 0.0
    %477 = vmatpush1.xpose.msra.mxu0 0.0
    %478 = vmatprep.subr.mxu0 0.0
    %479 = vmatpush1.xpose.msra.mxu0 0.0
    %480 = vmatprep.subr.mxu0 0.0
    %481 = vmatpush1.xpose.msra.mxu0 0.0
    %482 = vmatprep.subr.mxu0 0.0
    %483 = vmatpush1.xpose.msra.mxu0 0.0
    %484 = vmatprep.subr.mxu0 0.0
    %485 = vmatpush1.xpose.msra.mxu0 0.0
    %486 = vmatprep.subr.mxu0 0.0
    %487 = vmatpush1.xpose.msra.mxu0 0.0
    %488 = vmatprep.subr.mxu0 0.0
    %489 = vmatpush1.xpose.msra.mxu0 0.0
    %490 = vmatprep.subr.mxu0 0.0
    %491 = vmatpush1.xpose.msra.mxu0 0.0
    %492 = vmatprep.subr.mxu0 0.0
    %493 = vmatpush1.xpose.msra.mxu0 0.0
    %494 = vmatprep.subr.mxu0 0.0
    %495 = vmatpush1.xpose.msra.mxu0 0.0
    %496 = vmatprep.subr.mxu0 0.0
    %497 = vmatpush1.xpose.msra.mxu0 0.0
    %498 = vmatprep.subr.mxu0 0.0
    %499 = vmatpush1.xpose.msra.mxu0 0.0
    %500 = vmatprep.subr.mxu0 0.0
    %501 = vmatpush1.xpose.msra.mxu0 0.0
    %502 = vmatprep.subr.mxu0 0.0
    %503 = vmatpush1.xpose.msra.mxu0 0.0
    %504 = vmatprep.subr.mxu0 0.0
    %505 = vmatpush1.xpose.msra.mxu0 0.0
    %506 = vmatprep.subr.mxu0 0.0
    %507 = vmatpush1.xpose.msra.mxu0 0.0
    %508 = vmatprep.subr.mxu0 0.0
    %509 = vmatpush1.xpose.msra.mxu0 0.0
    %510 = vmatprep.mubr.f32.mxu0 0.0
    %511 = vmatmul.mubr.f32.gmra.mrb[0].mxu0 %v438
    %v512 = vpop.f32.mrb[0].mxu0
    %v513 = vadd.f32 0.0, %v512
    %v514 = vpop.f32.mrb[0].mxu0
    %515 = vmatprep.mubr.f32.mxu0 0.0
    %516 = vmatmul.mubr.f32.gmra.mrb[0].mxu0 %v440
    %v517 = vpop.f32.mrb[0].mxu0
    %v518 = vadd.f32 0.0, %v517
    %v519 = vpop.f32.mrb[0].mxu0
    %520 = vdwg.mxu0
    %v521 = vmul.f32 %v513, 0.25
    %v522 = vmul.f32 %v518, 0.25
    %v523 = vadd.f32 %v521, %v157
    %v524 = vadd.f32 %v522, %v158
    %v525 = vsel %vm233, %v523, -inf
    %526 = vmax.xlane.f32.xlu0 %v525
    %v527 = vpop.xlane.xlu0 %526
    %v528 = vsel %vm233, %v524, -inf
    %529 = vmax.xlane.f32.xlu0 %v528
    %v530 = vpop.xlane.xlu0 %529
    %v531 = vsub.f32 %v523, %v527
    %v532 = vsub.f32 %v524, %v530
    %v533 = vmul.f32 %v531, 1.442695
    %v534 = vpow.pop %v533
    %v535 = vmul.f32 %v532, 1.442695
    %v536 = vpow.pop %v535
    %v537 = vsel %vm233, %v534, 0.0
    %538 = vadd.xlane.f32.xlu0 %v537
    %v539 = vpop.xlane.xlu0 %538
    %v540 = vsel %vm233, %v536, 0.0
    %541 = vadd.xlane.f32.xlu0 %v540
    %v542 = vpop.xlane.xlu0 %541
    %v543 = vrcp.pop %v539
    %v544 = vrcp.pop %v542
    %v545 = vmul.f32 %v534, %v543
    %v546 = vmul.f32 %v536, %v544
    %547 = vrot.lane.b32.xlu0 %v221, 48
    %v548 = vpop.permute.xlu0 %547
    %549 = vrot.lane.b32.xlu0 %v224, 48
    %v550 = vpop.permute.xlu0 %549
    %v554 = vsel %vm233, %v545, 0
    %v557 = vsel %vm233, %v546, 0
    %559 = vmatprep.subr.mxu0 0.0
    %560 = vmatpush1.msra.mxu0 %v548
    %561 = vmatprep.subr.mxu0 0.0
    %562 = vmatpush1.msra.mxu0 %v550
    %563 = vmatprep.subr.mxu0 0.0
    %564 = vmatpush1.msra.mxu0 0.0
    %565 = vmatprep.subr.mxu0 0.0
    %566 = vmatpush1.msra.mxu0 0.0
    %567 = vmatprep.subr.mxu0 0.0
    %568 = vmatpush1.msra.mxu0 0.0
    %569 = vmatprep.subr.mxu0 0.0
    %570 = vmatpush1.msra.mxu0 0.0
    %571 = vmatprep.subr.mxu0 0.0
    %572 = vmatpush1.msra.mxu0 0.0
    %573 = vmatprep.subr.mxu0 0.0
    %574 = vmatpush1.msra.mxu0 0.0
    %575 = vmatprep.subr.mxu0 0.0
    %576 = vmatpush1.msra.mxu0 0.0
    %577 = vmatprep.subr.mxu0 0.0
    %578 = vmatpush1.msra.mxu0 0.0
    %579 = vmatprep.subr.mxu0 0.0
    %580 = vmatpush1.msra.mxu0 0.0
    %581 = vmatprep.subr.mxu0 0.0
    %582 = vmatpush1.msra.mxu0 0.0
    %583 = vmatprep.subr.mxu0 0.0
    %584 = vmatpush1.msra.mxu0 0.0
    %585 = vmatprep.subr.mxu0 0.0
    %586 = vmatpush1.msra.mxu0 0.0
    %587 = vmatprep.subr.mxu0 0.0
    %588 = vmatpush1.msra.mxu0 0.0
    %589 = vmatprep.subr.mxu0 0.0
    %590 = vmatpush1.msra.mxu0 0.0
    %591 = vmatprep.subr.mxu0 0.0
    %592 = vmatpush1.msra.mxu0 0.0
    %593 = vmatprep.subr.mxu0 0.0
    %594 = vmatpush1.msra.mxu0 0.0
    %595 = vmatprep.subr.mxu0 0.0
    %596 = vmatpush1.msra.mxu0 0.0
    %597 = vmatprep.subr.mxu0 0.0
    %598 = vmatpush1.msra.mxu0 0.0
    %599 = vmatprep.subr.mxu0 0.0
    %600 = vmatpush1.msra.mxu0 0.0
    %601 = vmatprep.subr.mxu0 0.0
    %602 = vmatpush1.msra.mxu0 0.0
    %603 = vmatprep.subr.mxu0 0.0
    %604 = vmatpush1.msra.mxu0 0.0
    %605 = vmatprep.subr.mxu0 0.0
    %606 = vmatpush1.msra.mxu0 0.0
    %607 = vmatprep.subr.mxu0 0.0
    %608 = vmatpush1.msra.mxu0 0.0
    %609 = vmatprep.subr.mxu0 0.0
    %610 = vmatpush1.msra.mxu0 0.0
    %611 = vmatprep.subr.mxu0 0.0
    %612 = vmatpush1.msra.mxu0 0.0
    %613 = vmatprep.subr.mxu0 0.0
    %614 = vmatpush1.msra.mxu0 0.0
    %615 = vmatprep.subr.mxu0 0.0
    %616 = vmatpush1.msra.mxu0 0.0
    %617 = vmatprep.subr.mxu0 0.0
    %618 = vmatpush1.msra.mxu0 0.0
    %619 = vmatprep.subr.mxu0 0.0
    %620 = vmatpush1.msra.mxu0 0.0
    %621 = vmatprep.subr.mxu0 0.0
    %622 = vmatpush1.msra.mxu0 0.0
    %623 = vmatprep.mubr.f32.mxu0 0.0
    %624 = vmatmul.mubr.f32.gmra.mrb[0].mxu0 %v554
    %v625 = vpop.f32.mrb[0].mxu0
    %v626 = vadd.f32 0.0, %v625
    %v627 = vpop.f32.mrb[0].mxu0
    %628 = vmatprep.mubr.f32.mxu0 0.0
    %629 = vmatmul.mubr.f32.gmra.mrb[0].mxu0 %v557
    %v630 = vpop.f32.mrb[0].mxu0
    %v631 = vadd.f32 0.0, %v630
    %v632 = vpop.f32.mrb[0].mxu0
    %633 = vdwg.mxu0
    %636 = vrot.lane.b32.xlu0 %v626, 16
    %v637 = vpop.permute.xlu0 %636
    %638 = vrot.lane.b32.xlu0 %v631, 16
    %v639 = vpop.permute.xlu0 %638
    %v642 = vsel %vm233, %v422, %v637
    %v643 = vsel %vm233, %v427, %v639
    %v644 = vpack.c.bf16 %v643, %v642
    %v645 = vld [vmem:[%s7] sm:$0xf]
    %v646 = vld [vmem:[%s7 + $0x4] sm:$0xf]
    %v647 = vld [vmem:[%s7 + $0x8] sm:$0xf]
    %v648 = vld [vmem:[%s7 + $0xc] sm:$0xf]
    %v649 = vld [vmem:[%s8] sm:$0x1]
    %v651 = vlaneseq
    %v652 = vshrl.u32 %v651, 7
    %v653 = vsub.s32 0, %v652
    %v654 = vrot.slane %v649, %v653
    %v660 = vunpack.c.l.b16 %v645
    %v661 = vunpack.c.l.b16 %v646
    %v662 = vunpack.c.l.b16 %v647
    %v663 = vunpack.c.l.b16 %v648
    %v664 = vpack.c.b16 %v661, %v660
    %v665 = vpack.c.b16 %v663, %v662
    %v669 = vsel %vm92, %v644, 0
    %671 = vmatprep.subr.bf16.mxu0 0
    %672 = vmatpush1.bf16.msra.mxu0 %v664
    %673 = vmatprep.subr.bf16.mxu0 0
    %674 = vmatpush1.bf16.msra.mxu0 %v665
    %675 = vmatprep.subr.bf16.mxu0 0
    %676 = vmatpush1.bf16.msra.mxu0 0
    %677 = vmatprep.subr.bf16.mxu0 0
    %678 = vmatpush1.bf16.msra.mxu0 0
    %679 = vmatprep.subr.bf16.mxu0 0
    %680 = vmatpush1.bf16.msra.mxu0 0
    %681 = vmatprep.subr.bf16.mxu0 0
    %682 = vmatpush1.bf16.msra.mxu0 0
    %683 = vmatprep.subr.bf16.mxu0 0
    %684 = vmatpush1.bf16.msra.mxu0 0
    %685 = vmatprep.subr.bf16.mxu0 0
    %686 = vmatpush1.bf16.msra.mxu0 0
    %687 = vmatprep.subr.bf16.mxu0 0
    %688 = vmatpush1.bf16.msra.mxu0 0
    %689 = vmatprep.subr.bf16.mxu0 0
    %690 = vmatpush1.bf16.msra.mxu0 0
    %691 = vmatprep.subr.bf16.mxu0 0
    %692 = vmatpush1.bf16.msra.mxu0 0
    %693 = vmatprep.subr.bf16.mxu0 0
    %694 = vmatpush1.bf16.msra.mxu0 0
    %695 = vmatprep.subr.bf16.mxu0 0
    %696 = vmatpush1.bf16.msra.mxu0 0
    %697 = vmatprep.subr.bf16.mxu0 0
    %698 = vmatpush1.bf16.msra.mxu0 0
    %699 = vmatprep.subr.bf16.mxu0 0
    %700 = vmatpush1.bf16.msra.mxu0 0
    %701 = vmatprep.subr.bf16.mxu0 0
    %702 = vmatpush1.bf16.msra.mxu0 0
    %703 = vmatprep.mubr.bf16.mxu0 0
    %704 = vmatmul.mubr.bf16.gmra.mrb[0].mxu0 %v669
    %v705 = vpop.f32.mrb[0].mxu0
    %v706 = vadd.f32 %v654, %v705
    %v707 = vpop.f32.mrb[0].mxu0
    %v708 = vpop.f32.mrb[0].mxu0
    %v709 = vadd.f32 %v654, %v708
    %v710 = vpop.f32.mrb[0].mxu0
    %711 = vdwg.mxu0
    %v712 = vadd.f32 %v134, %v706
    %v713 = vadd.f32 %v135, %v709
    %v714 = vld [vmem:[%s9] sm:$0x1]
    %v715 = vld [vmem:[%s10] sm:$0x1]
    %v716 = vsel %vm92, %v712, 0.0
    %717 = vadd.xlane.f32.xlu0 %v716
    %v718 = vpop.xlane.xlu0 %717
    %v719 = vsel %vm92, %v713, 0.0
    %720 = vadd.xlane.f32.xlu0 %v719
    %v721 = vpop.xlane.xlu0 %720
    %v722 = vmul.f32 %v718, %v99
    %v723 = vmul.f32 %v721, %v99
    %v724 = vsub.f32 %v712, %v722
    %v725 = vsub.f32 %v713, %v723
    %v726 = vmul.f32 %v724, %v724
    %v727 = vmul.f32 %v725, %v725
    %v728 = vsel %vm92, %v726, 0.0
    %729 = vadd.xlane.f32.xlu0 %v728
    %v730 = vpop.xlane.xlu0 %729
    %v731 = vsel %vm92, %v727, 0.0
    %732 = vadd.xlane.f32.xlu0 %v731
    %v733 = vpop.xlane.xlu0 %732
    %v734 = vmul.f32 %v730, %v99
    %v735 = vmul.f32 %v733, %v99
    %v736 = vadd.f32 %v734, 1e-12
    %v737 = vadd.f32 %v735, 1e-12
    %v738 = vrsqrt.pop %v736
    %v739 = vrsqrt.pop %v737
    %v740 = vmul.f32 %v724, %v738
    %v741 = vmul.f32 %v725, %v739
    %v743 = vlaneseq
    %v744 = vshrl.u32 %v743, 7
    %v745 = vsub.s32 0, %v744
    %v746 = vrot.slane %v714, %v745
    %v748 = vmul.f32 %v740, %v746
    %v749 = vmul.f32 %v741, %v746
    %v751 = vlaneseq
    %v752 = vshrl.u32 %v751, 7
    %v753 = vsub.s32 0, %v752
    %v754 = vrot.slane %v715, %v753
    %v756 = vadd.f32 %v748, %v754
    %v757 = vadd.f32 %v749, %v754
    %v758 = vpack.c.bf16 %v757, %v756
    %v759 = vld [vmem:[%s11] sm:$0xf]
    %v760 = vld [vmem:[%s11 + $0x4] sm:$0xf]
    %v761 = vld [vmem:[%s11 + $0x8] sm:$0xf]
    %v762 = vld [vmem:[%s11 + $0xc] sm:$0xf]
    %v763 = vld [vmem:[%s12] sm:$0x1]
    %v765 = vlaneseq
    %v766 = vshrl.u32 %v765, 7
    %v767 = vsub.s32 0, %v766
    %v768 = vrot.slane %v763, %v767
    %v774 = vunpack.c.l.b16 %v759
    %v775 = vunpack.c.l.b16 %v760
    %v776 = vunpack.c.l.b16 %v761
    %v777 = vunpack.c.l.b16 %v762
    %v778 = vpack.c.b16 %v775, %v774
    %v779 = vpack.c.b16 %v777, %v776
    %v783 = vsel %vm92, %v758, 0
    %785 = vmatprep.subr.bf16.mxu0 0
    %786 = vmatpush1.bf16.msra.mxu0 %v778
    %787 = vmatprep.subr.bf16.mxu0 0
    %788 = vmatpush1.bf16.msra.mxu0 %v779
    %789 = vmatprep.subr.bf16.mxu0 0
    %790 = vmatpush1.bf16.msra.mxu0 0
    %791 = vmatprep.subr.bf16.mxu0 0
    %792 = vmatpush1.bf16.msra.mxu0 0
    %793 = vmatprep.subr.bf16.mxu0 0
    %794 = vmatpush1.bf16.msra.mxu0 0
    %795 = vmatprep.subr.bf16.mxu0 0
    %796 = vmatpush1.bf16.msra.mxu0 0
    %797 = vmatprep.subr.bf16.mxu0 0
    %798 = vmatpush1.bf16.msra.mxu0 0
    %799 = vmatprep.subr.bf16.mxu0 0
    %800 = vmatpush1.bf16.msra.mxu0 0
    %801 = vmatprep.subr.bf16.mxu0 0
    %802 = vmatpush1.bf16.msra.mxu0 0
    %803 = vmatprep.subr.bf16.mxu0 0
    %804 = vmatpush1.bf16.msra.mxu0 0
    %805 = vmatprep.subr.bf16.mxu0 0
    %806 = vmatpush1.bf16.msra.mxu0 0
    %807 = vmatprep.subr.bf16.mxu0 0
    %808 = vmatpush1.bf16.msra.mxu0 0
    %809 = vmatprep.subr.bf16.mxu0 0
    %810 = vmatpush1.bf16.msra.mxu0 0
    %811 = vmatprep.subr.bf16.mxu0 0
    %812 = vmatpush1.bf16.msra.mxu0 0
    %813 = vmatprep.subr.bf16.mxu0 0
    %814 = vmatpush1.bf16.msra.mxu0 0
    %815 = vmatprep.subr.bf16.mxu0 0
    %816 = vmatpush1.bf16.msra.mxu0 0
    %817 = vmatprep.mubr.bf16.mxu0 0
    %818 = vmatmul.mubr.bf16.gmra.mrb[0].mxu0 %v783
    %v819 = vpop.f32.mrb[0].mxu0
    %v820 = vadd.f32 %v768, %v819
    %v821 = vpop.f32.mrb[0].mxu0
    %v822 = vpop.f32.mrb[0].mxu0
    %v823 = vadd.f32 %v768, %v822
    %v824 = vpop.f32.mrb[0].mxu0
    %825 = vdwg.mxu0
    %v826 = vmul.f32 %v820, %v820
    %v827 = vmul.f32 %v823, %v823
    %v828 = vmul.f32 %v820, %v826
    %v829 = vmul.f32 %v823, %v827
    %v830 = vmul.f32 %v828, 0.044715
    %v831 = vmul.f32 %v829, 0.044715
    %v832 = vadd.f32 %v820, %v830
    %v833 = vadd.f32 %v823, %v831
    %v834 = vmul.f32 %v832, 0.7978846
    %v835 = vmul.f32 %v833, 0.7978846
    %v836 = vtanh.pop %v834
    %v837 = vtanh.pop %v835
    %v838 = vadd.f32 %v836, 1.0
    %v839 = vadd.f32 %v837, 1.0
    %v840 = vmul.f32 %v838, 0.5
    %v841 = vmul.f32 %v839, 0.5
    %v842 = vmul.f32 %v820, %v840
    %v843 = vmul.f32 %v823, %v841
    %v844 = vpack.c.bf16 %v843, %v842
    %v845 = vld [vmem:[%s13] sm:$0xf]
    %v846 = vld [vmem:[%s13 + $0x4] sm:$0xf]
    %v847 = vld [vmem:[%s13 + $0x8] sm:$0xf]
    %v848 = vld [vmem:[%s13 + $0xc] sm:$0xf]
    %v849 = vld [vmem:[%s13 + $0x10] sm:$0xf]
    %v850 = vld [vmem:[%s13 + $0x14] sm:$0xf]
    %v851 = vld [vmem:[%s13 + $0x18] sm:$0xf]
    %v852 = vld [vmem:[%s13 + $0x1c] sm:$0xf]
    %v853 = vld [vmem:[%s14] sm:$0x1]
    %v855 = vlaneseq
    %v856 = vshrl.u32 %v855, 7
    %v857 = vsub.s32 0, %v856
    %v858 = vrot.slane %v853, %v857
    %v868 = vunpack.c.l.b16 %v845
    %v869 = vunpack.c.l.b16 %v846
    %v870 = vunpack.c.l.b16 %v847
    %v871 = vunpack.c.l.b16 %v848
    %v872 = vunpack.c.l.b16 %v849
    %v873 = vunpack.c.l.b16 %v850
    %v874 = vunpack.c.l.b16 %v851
    %v875 = vunpack.c.l.b16 %v852
    %v876 = vpack.c.b16 %v869, %v868
    %v877 = vpack.c.b16 %v871, %v870
    %v878 = vpack.c.b16 %v873, %v872
    %v879 = vpack.c.b16 %v875, %v874
    %vm884 = vcmask 523264
    %v886 = vsel %vm884, %v844, 0
    %888 = vmatprep.subr.bf16.mxu0 0
    %889 = vmatpush1.bf16.msra.mxu0 %v876
    %890 = vmatprep.subr.bf16.mxu0 0
    %891 = vmatpush1.bf16.msra.mxu0 %v877
    %892 = vmatprep.subr.bf16.mxu0 0
    %893 = vmatpush1.bf16.msra.mxu0 %v878
    %894 = vmatprep.subr.bf16.mxu0 0
    %895 = vmatpush1.bf16.msra.mxu0 %v879
    %896 = vmatprep.subr.bf16.mxu0 0
    %897 = vmatpush1.bf16.msra.mxu0 0
    %898 = vmatprep.subr.bf16.mxu0 0
    %899 = vmatpush1.bf16.msra.mxu0 0
    %900 = vmatprep.subr.bf16.mxu0 0
    %901 = vmatpush1.bf16.msra.mxu0 0
    %902 = vmatprep.subr.bf16.mxu0 0
    %903 = vmatpush1.bf16.msra.mxu0 0
    %904 = vmatprep.subr.bf16.mxu0 0
    %905 = vmatpush1.bf16.msra.mxu0 0
    %906 = vmatprep.subr.bf16.mxu0 0
    %907 = vmatpush1.bf16.msra.mxu0 0
    %908 = vmatprep.subr.bf16.mxu0 0
    %909 = vmatpush1.bf16.msra.mxu0 0
    %910 = vmatprep.subr.bf16.mxu0 0
    %911 = vmatpush1.bf16.msra.mxu0 0
    %912 = vmatprep.subr.bf16.mxu0 0
    %913 = vmatpush1.bf16.msra.mxu0 0
    %914 = vmatprep.subr.bf16.mxu0 0
    %915 = vmatpush1.bf16.msra.mxu0 0
    %916 = vmatprep.subr.bf16.mxu0 0
    %917 = vmatpush1.bf16.msra.mxu0 0
    %918 = vmatprep.subr.bf16.mxu0 0
    %919 = vmatpush1.bf16.msra.mxu0 0
    %920 = vmatprep.mubr.bf16.mxu0 0
    %921 = vmatmul.mubr.bf16.gmra.mrb[0].mxu0 %v886
    %v922 = vpop.f32.mrb[0].mxu0
    %v923 = vadd.f32 %v858, %v922
    %v924 = vpop.f32.mrb[0].mxu0
    %v925 = vpop.f32.mrb[0].mxu0
    %v926 = vadd.f32 %v858, %v925
    %v927 = vpop.f32.mrb[0].mxu0
    %928 = vdwg.mxu0
    %v929 = vadd.f32 %v756, %v923
    %v930 = vadd.f32 %v757, %v926
    %v931 = vld [vmem:[%s15] sm:$0x1]
    %v932 = vld [vmem:[%s16] sm:$0x1]
    %v933 = vsel %vm92, %v929, 0.0
    %934 = vadd.xlane.f32.xlu0 %v933
    %v935 = vpop.xlane.xlu0 %934
    %v936 = vsel %vm92, %v930, 0.0
    %937 = vadd.xlane.f32.xlu0 %v936
    %v938 = vpop.xlane.xlu0 %937
    %v939 = vmul.f32 %v935, %v99
    %v940 = vmul.f32 %v938, %v99
    %v941 = vsub.f32 %v929, %v939
    %v942 = vsub.f32 %v930, %v940
    %v943 = vmul.f32 %v941, %v941
    %v944 = vmul.f32 %v942, %v942
    %v945 = vsel %vm92, %v943, 0.0
    %946 = vadd.xlane.f32.xlu0 %v945
    %v947 = vpop.xlane.xlu0 %946
    %v948 = vsel %vm92, %v944, 0.0
    %949 = vadd.xlane.f32.xlu0 %v948
    %v950 = vpop.xlane.xlu0 %949
    %v951 = vmul.f32 %v947, %v99
    %v952 = vmul.f32 %v950, %v99
    %v953 = vadd.f32 %v951, 1e-12
    %v954 = vadd.f32 %v952, 1e-12
    %v955 = vrsqrt.pop %v953
    %v956 = vrsqrt.pop %v954
    %v957 = vmul.f32 %v941, %v955
    %v958 = vmul.f32 %v942, %v956
    %v960 = vlaneseq
    %v961 = vshrl.u32 %v960, 7
    %v962 = vsub.s32 0, %v961
    %v963 = vrot.slane %v931, %v962
    %v965 = vmul.f32 %v957, %v963
    %v966 = vmul.f32 %v958, %v963
    %v968 = vlaneseq
    %v969 = vshrl.u32 %v968, 7
    %v970 = vsub.s32 0, %v969
    %v971 = vrot.slane %v932, %v970
    %v973 = vadd.f32 %v965, %v971
    %v974 = vadd.f32 %v966, %v971
    %v975 = vpack.c.bf16 %v974, %v973
    %s976 = scalar_lea.vmem %s5, 16
    %v977 = vld [vmem:[%s976] sm:$0xf]
    %v978 = vld [vmem:[%s976 + $0x4] sm:$0xf]
    %v979 = vld [vmem:[%s976 + $0x8] sm:$0xf]
    %v980 = vld [vmem:[%s976 + $0xc] sm:$0xf]
    %s981 = scalar_lea.vmem %s6, 1
    %v982 = vld [vmem:[%s981] sm:$0x1]
    %v984 = vlaneseq
    %v985 = vshrl.u32 %v984, 7
    %v986 = vsub.s32 0, %v985
    %v987 = vrot.slane %v982, %v986
    %v993 = vunpack.c.l.b16 %v977
    %v994 = vunpack.c.l.b16 %v978
    %v995 = vunpack.c.l.b16 %v979
    %v996 = vunpack.c.l.b16 %v980
    %v997 = vpack.c.b16 %v994, %v993
    %v998 = vpack.c.b16 %v996, %v995
    %v1002 = vsel %vm92, %v975, 0
    %1004 = vmatprep.subr.bf16.mxu0 0
    %1005 = vmatpush1.bf16.msra.mxu0 %v997
    %1006 = vmatprep.subr.bf16.mxu0 0
    %1007 = vmatpush1.bf16.msra.mxu0 %v998
    %1008 = vmatprep.subr.bf16.mxu0 0
    %1009 = vmatpush1.bf16.msra.mxu0 0
    %1010 = vmatprep.subr.bf16.mxu0 0
    %1011 = vmatpush1.bf16.msra.mxu0 0
    %1012 = vmatprep.subr.bf16.mxu0 0
    %1013 = vmatpush1.bf16.msra.mxu0 0
    %1014 = vmatprep.subr.bf16.mxu0 0
    %1015 = vmatpush1.bf16.msra.mxu0 0
    %1016 = vmatprep.subr.bf16.mxu0 0
    %1017 = vmatpush1.bf16.msra.mxu0 0
    %1018 = vmatprep.subr.bf16.mxu0 0
    %1019 = vmatpush1.bf16.msra.mxu0 0
    %1020 = vmatprep.subr.bf16.mxu0 0
    %1021 = vmatpush1.bf16.msra.mxu0 0
    %1022 = vmatprep.subr.bf16.mxu0 0
    %1023 = vmatpush1.bf16.msra.mxu0 0
    %1024 = vmatprep.subr.bf16.mxu0 0
    %1025 = vmatpush1.bf16.msra.mxu0 0
    %1026 = vmatprep.subr.bf16.mxu0 0
    %1027 = vmatpush1.bf16.msra.mxu0 0
    %1028 = vmatprep.subr.bf16.mxu0 0
    %1029 = vmatpush1.bf16.msra.mxu0 0
    %1030 = vmatprep.subr.bf16.mxu0 0
    %1031 = vmatpush1.bf16.msra.mxu0 0
    %1032 = vmatprep.subr.bf16.mxu0 0
    %1033 = vmatpush1.bf16.msra.mxu0 0
    %1034 = vmatprep.subr.bf16.mxu0 0
    %1035 = vmatpush1.bf16.msra.mxu0 0
    %1036 = vmatprep.mubr.bf16.mxu0 0
    %1037 = vmatmul.mubr.bf16.gmra.mrb[0].mxu0 %v1002
    %v1038 = vpop.f32.mrb[0].mxu0
    %v1039 = vadd.f32 %v987, %v1038
    %v1040 = vpop.f32.mrb[0].mxu0
    %v1041 = vpop.f32.mrb[0].mxu0
    %v1042 = vadd.f32 %v987, %v1041
    %v1043 = vpop.f32.mrb[0].mxu0
    %1044 = vdwg.mxu0
    %1047 = vrot.lane.b32.xlu0 %v1039, 96
    %v1048 = vpop.permute.xlu0 %1047
    %1049 = vrot.lane.b32.xlu0 %v1042, 96
    %v1050 = vpop.permute.xlu0 %1049
    %v1051 = vsel %vm233, %v1039, 0
    %v1053 = vsel %vm233, %v1042, 0
    %v1055 = vsel %vm233, %v1048, 0
    %v1057 = vsel %vm233, %v1050, 0
    %1059 = vmatprep.subr.mxu0 0.0
    %1060 = vmatpush1.xpose.msra.mxu0 %v1055
    %1061 = vmatprep.subr.mxu0 0.0
    %1062 = vmatpush1.xpose.msra.mxu0 %v1057
    %1063 = vmatprep.subr.mxu0 0.0
    %1064 = vmatpush1.xpose.msra.mxu0 0.0
    %1065 = vmatprep.subr.mxu0 0.0
    %1066 = vmatpush1.xpose.msra.mxu0 0.0
    %1067 = vmatprep.subr.mxu0 0.0
    %1068 = vmatpush1.xpose.msra.mxu0 0.0
    %1069 = vmatprep.subr.mxu0 0.0
    %1070 = vmatpush1.xpose.msra.mxu0 0.0
    %1071 = vmatprep.subr.mxu0 0.0
    %1072 = vmatpush1.xpose.msra.mxu0 0.0
    %1073 = vmatprep.subr.mxu0 0.0
    %1074 = vmatpush1.xpose.msra.mxu0 0.0
    %1075 = vmatprep.subr.mxu0 0.0
    %1076 = vmatpush1.xpose.msra.mxu0 0.0
    %1077 = vmatprep.subr.mxu0 0.0
    %1078 = vmatpush1.xpose.msra.mxu0 0.0
    %1079 = vmatprep.subr.mxu0 0.0
    %1080 = vmatpush1.xpose.msra.mxu0 0.0
    %1081 = vmatprep.subr.mxu0 0.0
    %1082 = vmatpush1.xpose.msra.mxu0 0.0
    %1083 = vmatprep.subr.mxu0 0.0
    %1084 = vmatpush1.xpose.msra.mxu0 0.0
    %1085 = vmatprep.subr.mxu0 0.0
    %1086 = vmatpush1.xpose.msra.mxu0 0.0
    %1087 = vmatprep.subr.mxu0 0.0
    %1088 = vmatpush1.xpose.msra.mxu0 0.0
    %1089 = vmatprep.subr.mxu0 0.0
    %1090 = vmatpush1.xpose.msra.mxu0 0.0
    %1091 = vmatprep.subr.mxu0 0.0
    %1092 = vmatpush1.xpose.msra.mxu0 0.0
    %1093 = vmatprep.subr.mxu0 0.0
    %1094 = vmatpush1.xpose.msra.mxu0 0.0
    %1095 = vmatprep.subr.mxu0 0.0
    %1096 = vmatpush1.xpose.msra.mxu0 0.0
    %1097 = vmatprep.subr.mxu0 0.0
    %1098 = vmatpush1.xpose.msra.mxu0 0.0
    %1099 = vmatprep.subr.mxu0 0.0
    %1100 = vmatpush1.xpose.msra.mxu0 0.0
    %1101 = vmatprep.subr.mxu0 0.0
    %1102 = vmatpush1.xpose.msra.mxu0 0.0
    %1103 = vmatprep.subr.mxu0 0.0
    %1104 = vmatpush1.xpose.msra.mxu0 0.0
    %1105 = vmatprep.subr.mxu0 0.0
    %1106 = vmatpush1.xpose.msra.mxu0 0.0
    %1107 = vmatprep.subr.mxu0 0.0
    %1108 = vmatpush1.xpose.msra.mxu0 0.0
    %1109 = vmatprep.subr.mxu0 0.0
    %1110 = vmatpush1.xpose.msra.mxu0 0.0
    %1111 = vmatprep.subr.mxu0 0.0
    %1112 = vmatpush1.xpose.msra.mxu0 0.0
    %1113 = vmatprep.subr.mxu0 0.0
    %1114 = vmatpush1.xpose.msra.mxu0 0.0
    %1115 = vmatprep.subr.mxu0 0.0
    %1116 = vmatpush1.xpose.msra.mxu0 0.0
    %1117 = vmatprep.subr.mxu0 0.0
    %1118 = vmatpush1.xpose.msra.mxu0 0.0
    %1119 = vmatprep.subr.mxu0 0.0
    %1120 = vmatpush1.xpose.msra.mxu0 0.0
    %1121 = vmatprep.subr.mxu0 0.0
    %1122 = vmatpush1.xpose.msra.mxu0 0.0
    %1123 = vmatprep.mubr.f32.mxu0 0.0
    %1124 = vmatmul.mubr.f32.gmra.mrb[0].mxu0 %v1051
    %v1125 = vpop.f32.mrb[0].mxu0
    %v1126 = vadd.f32 0.0, %v1125
    %v1127 = vpop.f32.mrb[0].mxu0
    %1128 = vmatprep.mubr.f32.mxu0 0.0
    %1129 = vmatmul.mubr.f32.gmra.mrb[0].mxu0 %v1053
    %v1130 = vpop.f32.mrb[0].mxu0
    %v1131 = vadd.f32 0.0, %v1130
    %v1132 = vpop.f32.mrb[0].mxu0
    %1133 = vdwg.mxu0
    %v1134 = vmul.f32 %v1126, 0.25
    %v1135 = vmul.f32 %v1131, 0.25
    %v1136 = vadd.f32 %v1134, %v157
    %v1137 = vadd.f32 %v1135, %v158
    %v1138 = vsel %vm233, %v1136, -inf
    %1139 = vmax.xlane.f32.xlu0 %v1138
    %v1140 = vpop.xlane.xlu0 %1139
    %v1141 = vsel %vm233, %v1137, -inf
    %1142 = vmax.xlane.f32.xlu0 %v1141
    %v1143 = vpop.xlane.xlu0 %1142
    %v1144 = vsub.f32 %v1136, %v1140
    %v1145 = vsub.f32 %v1137, %v1143
    %v1146 = vmul.f32 %v1144, 1.442695
    %v1147 = vpow.pop %v1146
    %v1148 = vmul.f32 %v1145, 1.442695
    %v1149 = vpow.pop %v1148
    %v1150 = vsel %vm233, %v1147, 0.0
    %1151 = vadd.xlane.f32.xlu0 %v1150
    %v1152 = vpop.xlane.xlu0 %1151
    %v1153 = vsel %vm233, %v1149, 0.0
    %1154 = vadd.xlane.f32.xlu0 %v1153
    %v1155 = vpop.xlane.xlu0 %1154
    %v1156 = vrcp.pop %v1152
    %v1157 = vrcp.pop %v1155
    %v1158 = vmul.f32 %v1147, %v1156
    %v1159 = vmul.f32 %v1149, %v1157
    %1160 = vrot.lane.b32.xlu0 %v1039, 64
    %v1161 = vpop.permute.xlu0 %1160
    %1162 = vrot.lane.b32.xlu0 %v1042, 64
    %v1163 = vpop.permute.xlu0 %1162
    %v1167 = vsel %vm233, %v1158, 0
    %v1170 = vsel %vm233, %v1159, 0
    %1172 = vmatprep.subr.mxu0 0.0
    %1173 = vmatpush1.msra.mxu0 %v1161
    %1174 = vmatprep.subr.mxu0 0.0
    %1175 = vmatpush1.msra.mxu0 %v1163
    %1176 = vmatprep.subr.mxu0 0.0
    %1177 = vmatpush1.msra.mxu0 0.0
    %1178 = vmatprep.subr.mxu0 0.0
    %1179 = vmatpush1.msra.mxu0 0.0
    %1180 = vmatprep.subr.mxu0 0.0
    %1181 = vmatpush1.msra.mxu0 0.0
    %1182 = vmatprep.subr.mxu0 0.0
    %1183 = vmatpush1.msra.mxu0 0.0
    %1184 = vmatprep.subr.mxu0 0.0
    %1185 = vmatpush1.msra.mxu0 0.0
    %1186 = vmatprep.subr.mxu0 0.0
    %1187 = vmatpush1.msra.mxu0 0.0
    %1188 = vmatprep.subr.mxu0 0.0
    %1189 = vmatpush1.msra.mxu0 0.0
    %1190 = vmatprep.subr.mxu0 0.0
    %1191 = vmatpush1.msra.mxu0 0.0
    %1192 = vmatprep.subr.mxu0 0.0
    %1193 = vmatpush1.msra.mxu0 0.0
    %1194 = vmatprep.subr.mxu0 0.0
    %1195 = vmatpush1.msra.mxu0 0.0
    %1196 = vmatprep.subr.mxu0 0.0
    %1197 = vmatpush1.msra.mxu0 0.0
    %1198 = vmatprep.subr.mxu0 0.0
    %1199 = vmatpush1.msra.mxu0 0.0
    %1200 = vmatprep.subr.mxu0 0.0
    %1201 = vmatpush1.msra.mxu0 0.0
    %1202 = vmatprep.subr.mxu0 0.0
    %1203 = vmatpush1.msra.mxu0 0.0
    %1204 = vmatprep.subr.mxu0 0.0
    %1205 = vmatpush1.msra.mxu0 0.0
    %1206 = vmatprep.subr.mxu0 0.0
    %1207 = vmatpush1.msra.mxu0 0.0
    %1208 = vmatprep.subr.mxu0 0.0
    %1209 = vmatpush1.msra.mxu0 0.0
    %1210 = vmatprep.subr.mxu0 0.0
    %1211 = vmatpush1.msra.mxu0 0.0
    %1212 = vmatprep.subr.mxu0 0.0
    %1213 = vmatpush1.msra.mxu0 0.0
    %1214 = vmatprep.subr.mxu0 0.0
    %1215 = vmatpush1.msra.mxu0 0.0
    %1216 = vmatprep.subr.mxu0 0.0
    %1217 = vmatpush1.msra.mxu0 0.0
    %1218 = vmatprep.subr.mxu0 0.0
    %1219 = vmatpush1.msra.mxu0 0.0
    %1220 = vmatprep.subr.mxu0 0.0
    %1221 = vmatpush1.msra.mxu0 0.0
    %1222 = vmatprep.subr.mxu0 0.0
    %1223 = vmatpush1.msra.mxu0 0.0
    %1224 = vmatprep.subr.mxu0 0.0
    %1225 = vmatpush1.msra.mxu0 0.0
    %1226 = vmatprep.subr.mxu0 0.0
    %1227 = vmatpush1.msra.mxu0 0.0
    %1228 = vmatprep.subr.mxu0 0.0
    %1229 = vmatpush1.msra.mxu0 0.0
    %1230 = vmatprep.subr.mxu0 0.0
    %1231 = vmatpush1.msra.mxu0 0.0
    %1232 = vmatprep.subr.mxu0 0.0
    %1233 = vmatpush1.msra.mxu0 0.0
    %1234 = vmatprep.subr.mxu0 0.0
    %1235 = vmatpush1.msra.mxu0 0.0
    %1236 = vmatprep.mubr.f32.mxu0 0.0
    %1237 = vmatmul.mubr.f32.gmra.mrb[0].mxu0 %v1167
    %v1238 = vpop.f32.mrb[0].mxu0
    %v1239 = vadd.f32 0.0, %v1238
    %v1240 = vpop.f32.mrb[0].mxu0
    %1241 = vmatprep.mubr.f32.mxu0 0.0
    %1242 = vmatmul.mubr.f32.gmra.mrb[0].mxu0 %v1170
    %v1243 = vpop.f32.mrb[0].mxu0
    %v1244 = vadd.f32 0.0, %v1243
    %v1245 = vpop.f32.mrb[0].mxu0
    %1246 = vdwg.mxu0
    %1247 = vrot.lane.b32.xlu0 %v1039, 112
    %v1248 = vpop.permute.xlu0 %1247
    %1249 = vrot.lane.b32.xlu0 %v1042, 112
    %v1250 = vpop.permute.xlu0 %1249
    %1251 = vrot.lane.b32.xlu0 %v1039, 80
    %v1252 = vpop.permute.xlu0 %1251
    %1253 = vrot.lane.b32.xlu0 %v1042, 80
    %v1254 = vpop.permute.xlu0 %1253
    %v1255 = vsel %vm233, %v1248, 0
    %v1257 = vsel %vm233, %v1250, 0
    %v1259 = vsel %vm233, %v1252, 0
    %v1261 = vsel %vm233, %v1254, 0
    %1263 = vmatprep.subr.mxu0 0.0
    %1264 = vmatpush1.xpose.msra.mxu0 %v1259
    %1265 = vmatprep.subr.mxu0 0.0
    %1266 = vmatpush1.xpose.msra.mxu0 %v1261
    %1267 = vmatprep.subr.mxu0 0.0
    %1268 = vmatpush1.xpose.msra.mxu0 0.0
    %1269 = vmatprep.subr.mxu0 0.0
    %1270 = vmatpush1.xpose.msra.mxu0 0.0
    %1271 = vmatprep.subr.mxu0 0.0
    %1272 = vmatpush1.xpose.msra.mxu0 0.0
    %1273 = vmatprep.subr.mxu0 0.0
    %1274 = vmatpush1.xpose.msra.mxu0 0.0
    %1275 = vmatprep.subr.mxu0 0.0
    %1276 = vmatpush1.xpose.msra.mxu0 0.0
    %1277 = vmatprep.subr.mxu0 0.0
    %1278 = vmatpush1.xpose.msra.mxu0 0.0
    %1279 = vmatprep.subr.mxu0 0.0
    %1280 = vmatpush1.xpose.msra.mxu0 0.0
    %1281 = vmatprep.subr.mxu0 0.0
    %1282 = vmatpush1.xpose.msra.mxu0 0.0
    %1283 = vmatprep.subr.mxu0 0.0
    %1284 = vmatpush1.xpose.msra.mxu0 0.0
    %1285 = vmatprep.subr.mxu0 0.0
    %1286 = vmatpush1.xpose.msra.mxu0 0.0
    %1287 = vmatprep.subr.mxu0 0.0
    %1288 = vmatpush1.xpose.msra.mxu0 0.0
    %1289 = vmatprep.subr.mxu0 0.0
    %1290 = vmatpush1.xpose.msra.mxu0 0.0
    %1291 = vmatprep.subr.mxu0 0.0
    %1292 = vmatpush1.xpose.msra.mxu0 0.0
    %1293 = vmatprep.subr.mxu0 0.0
    %1294 = vmatpush1.xpose.msra.mxu0 0.0
    %1295 = vmatprep.subr.mxu0 0.0
    %1296 = vmatpush1.xpose.msra.mxu0 0.0
    %1297 = vmatprep.subr.mxu0 0.0
    %1298 = vmatpush1.xpose.msra.mxu0 0.0
    %1299 = vmatprep.subr.mxu0 0.0
    %1300 = vmatpush1.xpose.msra.mxu0 0.0
    %1301 = vmatprep.subr.mxu0 0.0
    %1302 = vmatpush1.xpose.msra.mxu0 0.0
    %1303 = vmatprep.subr.mxu0 0.0
    %1304 = vmatpush1.xpose.msra.mxu0 0.0
    %1305 = vmatprep.subr.mxu0 0.0
    %1306 = vmatpush1.xpose.msra.mxu0 0.0
    %1307 = vmatprep.subr.mxu0 0.0
    %1308 = vmatpush1.xpose.msra.mxu0 0.0
    %1309 = vmatprep.subr.mxu0 0.0
    %1310 = vmatpush1.xpose.msra.mxu0 0.0
    %1311 = vmatprep.subr.mxu0 0.0
    %1312 = vmatpush1.xpose.msra.mxu0 0.0
    %1313 = vmatprep.subr.mxu0 0.0
    %1314 = vmatpush1.xpose.msra.mxu0 0.0
    %1315 = vmatprep.subr.mxu0 0.0
    %1316 = vmatpush1.xpose.msra.mxu0 0.0
    %1317 = vmatprep.subr.mxu0 0.0
    %1318 = vmatpush1.xpose.msra.mxu0 0.0
    %1319 = vmatprep.subr.mxu0 0.0
    %1320 = vmatpush1.xpose.msra.mxu0 0.0
    %1321 = vmatprep.subr.mxu0 0.0
    %1322 = vmatpush1.xpose.msra.mxu0 0.0
    %1323 = vmatprep.subr.mxu0 0.0
    %1324 = vmatpush1.xpose.msra.mxu0 0.0
    %1325 = vmatprep.subr.mxu0 0.0
    %1326 = vmatpush1.xpose.msra.mxu0 0.0
    %1327 = vmatprep.mubr.f32.mxu0 0.0
    %1328 = vmatmul.mubr.f32.gmra.mrb[0].mxu0 %v1255
    %v1329 = vpop.f32.mrb[0].mxu0
    %v1330 = vadd.f32 0.0, %v1329
    %v1331 = vpop.f32.mrb[0].mxu0
    %1332 = vmatprep.mubr.f32.mxu0 0.0
    %1333 = vmatmul.mubr.f32.gmra.mrb[0].mxu0 %v1257
    %v1334 = vpop.f32.mrb[0].mxu0
    %v1335 = vadd.f32 0.0, %v1334
    %v1336 = vpop.f32.mrb[0].mxu0
    %1337 = vdwg.mxu0
    %v1338 = vmul.f32 %v1330, 0.25
    %v1339 = vmul.f32 %v1335, 0.25
    %v1340 = vadd.f32 %v1338, %v157
    %v1341 = vadd.f32 %v1339, %v158
    %v1342 = vsel %vm233, %v1340, -inf
    %1343 = vmax.xlane.f32.xlu0 %v1342
    %v1344 = vpop.xlane.xlu0 %1343
    %v1345 = vsel %vm233, %v1341, -inf
    %1346 = vmax.xlane.f32.xlu0 %v1345
    %v1347 = vpop.xlane.xlu0 %1346
    %v1348 = vsub.f32 %v1340, %v1344
    %v1349 = vsub.f32 %v1341, %v1347
    %v1350 = vmul.f32 %v1348, 1.442695
    %v1351 = vpow.pop %v1350
    %v1352 = vmul.f32 %v1349, 1.442695
    %v1353 = vpow.pop %v1352
    %v1354 = vsel %vm233, %v1351, 0.0
    %1355 = vadd.xlane.f32.xlu0 %v1354
    %v1356 = vpop.xlane.xlu0 %1355
    %v1357 = vsel %vm233, %v1353, 0.0
    %1358 = vadd.xlane.f32.xlu0 %v1357
    %v1359 = vpop.xlane.xlu0 %1358
    %v1360 = vrcp.pop %v1356
    %v1361 = vrcp.pop %v1359
    %v1362 = vmul.f32 %v1351, %v1360
    %v1363 = vmul.f32 %v1353, %v1361
    %1364 = vrot.lane.b32.xlu0 %v1039, 48
    %v1365 = vpop.permute.xlu0 %1364
    %1366 = vrot.lane.b32.xlu0 %v1042, 48
    %v1367 = vpop.permute.xlu0 %1366
    %v1371 = vsel %vm233, %v1362, 0
    %v1374 = vsel %vm233, %v1363, 0
    %1376 = vmatprep.subr.mxu0 0.0
    %1377 = vmatpush1.msra.mxu0 %v1365
    %1378 = vmatprep.subr.mxu0 0.0
    %1379 = vmatpush1.msra.mxu0 %v1367
    %1380 = vmatprep.subr.mxu0 0.0
    %1381 = vmatpush1.msra.mxu0 0.0
    %1382 = vmatprep.subr.mxu0 0.0
    %1383 = vmatpush1.msra.mxu0 0.0
    %1384 = vmatprep.subr.mxu0 0.0
    %1385 = vmatpush1.msra.mxu0 0.0
    %1386 = vmatprep.subr.mxu0 0.0
    %1387 = vmatpush1.msra.mxu0 0.0
    %1388 = vmatprep.subr.mxu0 0.0
    %1389 = vmatpush1.msra.mxu0 0.0
    %1390 = vmatprep.subr.mxu0 0.0
    %1391 = vmatpush1.msra.mxu0 0.0
    %1392 = vmatprep.subr.mxu0 0.0
    %1393 = vmatpush1.msra.mxu0 0.0
    %1394 = vmatprep.subr.mxu0 0.0
    %1395 = vmatpush1.msra.mxu0 0.0
    %1396 = vmatprep.subr.mxu0 0.0
    %1397 = vmatpush1.msra.mxu0 0.0
    %1398 = vmatprep.subr.mxu0 0.0
    %1399 = vmatpush1.msra.mxu0 0.0
    %1400 = vmatprep.subr.mxu0 0.0
    %1401 = vmatpush1.msra.mxu0 0.0
    %1402 = vmatprep.subr.mxu0 0.0
    %1403 = vmatpush1.msra.mxu0 0.0
    %1404 = vmatprep.subr.mxu0 0.0
    %1405 = vmatpush1.msra.mxu0 0.0
    %1406 = vmatprep.subr.mxu0 0.0
    %1407 = vmatpush1.msra.mxu0 0.0
    %1408 = vmatprep.subr.mxu0 0.0
    %1409 = vmatpush1.msra.mxu0 0.0
    %1410 = vmatprep.subr.mxu0 0.0
    %1411 = vmatpush1.msra.mxu0 0.0
    %1412 = vmatprep.subr.mxu0 0.0
    %1413 = vmatpush1.msra.mxu0 0.0
    %1414 = vmatprep.subr.mxu0 0.0
    %1415 = vmatpush1.msra.mxu0 0.0
    %1416 = vmatprep.subr.mxu0 0.0
    %1417 = vmatpush1.msra.mxu0 0.0
    %1418 = vmatprep.subr.mxu0 0.0
    %1419 = vmatpush1.msra.mxu0 0.0
    %1420 = vmatprep.subr.mxu0 0.0
    %1421 = vmatpush1.msra.mxu0 0.0
    %1422 = vmatprep.subr.mxu0 0.0
    %1423 = vmatpush1.msra.mxu0 0.0
    %1424 = vmatprep.subr.mxu0 0.0
    %1425 = vmatpush1.msra.mxu0 0.0
    %1426 = vmatprep.subr.mxu0 0.0
    %1427 = vmatpush1.msra.mxu0 0.0
    %1428 = vmatprep.subr.mxu0 0.0
    %1429 = vmatpush1.msra.mxu0 0.0
    %1430 = vmatprep.subr.mxu0 0.0
    %1431 = vmatpush1.msra.mxu0 0.0
    %1432 = vmatprep.subr.mxu0 0.0
    %1433 = vmatpush1.msra.mxu0 0.0
    %1434 = vmatprep.subr.mxu0 0.0
    %1435 = vmatpush1.msra.mxu0 0.0
    %1436 = vmatprep.subr.mxu0 0.0
    %1437 = vmatpush1.msra.mxu0 0.0
    %1438 = vmatprep.subr.mxu0 0.0
    %1439 = vmatpush1.msra.mxu0 0.0
    %1440 = vmatprep.mubr.f32.mxu0 0.0
    %1441 = vmatmul.mubr.f32.gmra.mrb[0].mxu0 %v1371
    %v1442 = vpop.f32.mrb[0].mxu0
    %v1443 = vadd.f32 0.0, %v1442
    %v1444 = vpop.f32.mrb[0].mxu0
    %1445 = vmatprep.mubr.f32.mxu0 0.0
    %1446 = vmatmul.mubr.f32.gmra.mrb[0].mxu0 %v1374
    %v1447 = vpop.f32.mrb[0].mxu0
    %v1448 = vadd.f32 0.0, %v1447
    %v1449 = vpop.f32.mrb[0].mxu0
    %1450 = vdwg.mxu0
    %1453 = vrot.lane.b32.xlu0 %v1443, 16
    %v1454 = vpop.permute.xlu0 %1453
    %1455 = vrot.lane.b32.xlu0 %v1448, 16
    %v1456 = vpop.permute.xlu0 %1455
    %v1459 = vsel %vm233, %v1239, %v1454
    %v1460 = vsel %vm233, %v1244, %v1456
    %v1461 = vpack.c.bf16 %v1460, %v1459
    %s1462 = scalar_lea.vmem %s7, 16
    %v1463 = vld [vmem:[%s1462] sm:$0xf]
    %v1464 = vld [vmem:[%s1462 + $0x4] sm:$0xf]
    %v1465 = vld [vmem:[%s1462 + $0x8] sm:$0xf]
    %v1466 = vld [vmem:[%s1462 + $0xc] sm:$0xf]
    %s1467 = scalar_lea.vmem %s8, 1
    %v1468 = vld [vmem:[%s1467] sm:$0x1]
    %v1470 = vlaneseq
    %v1471 = vshrl.u32 %v1470, 7
    %v1472 = vsub.s32 0, %v1471
    %v1473 = vrot.slane %v1468, %v1472
    %v1479 = vunpack.c.l.b16 %v1463
    %v1480 = vunpack.c.l.b16 %v1464
    %v1481 = vunpack.c.l.b16 %v1465
    %v1482 = vunpack.c.l.b16 %v1466
    %v1483 = vpack.c.b16 %v1480, %v1479
    %v1484 = vpack.c.b16 %v1482, %v1481
    %v1488 = vsel %vm92, %v1461, 0
    %1490 = vmatprep.subr.bf16.mxu0 0
    %1491 = vmatpush1.bf16.msra.mxu0 %v1483
    %1492 = vmatprep.subr.bf16.mxu0 0
    %1493 = vmatpush1.bf16.msra.mxu0 %v1484
    %1494 = vmatprep.subr.bf16.mxu0 0
    %1495 = vmatpush1.bf16.msra.mxu0 0
    %1496 = vmatprep.subr.bf16.mxu0 0
    %1497 = vmatpush1.bf16.msra.mxu0 0
    %1498 = vmatprep.subr.bf16.mxu0 0
    %1499 = vmatpush1.bf16.msra.mxu0 0
    %1500 = vmatprep.subr.bf16.mxu0 0
    %1501 = vmatpush1.bf16.msra.mxu0 0
    %1502 = vmatprep.subr.bf16.mxu0 0
    %1503 = vmatpush1.bf16.msra.mxu0 0
    %1504 = vmatprep.subr.bf16.mxu0 0
    %1505 = vmatpush1.bf16.msra.mxu0 0
    %1506 = vmatprep.subr.bf16.mxu0 0
    %1507 = vmatpush1.bf16.msra.mxu0 0
    %1508 = vmatprep.subr.bf16.mxu0 0
    %1509 = vmatpush1.bf16.msra.mxu0 0
    %1510 = vmatprep.subr.bf16.mxu0 0
    %1511 = vmatpush1.bf16.msra.mxu0 0
    %1512 = vmatprep.subr.bf16.mxu0 0
    %1513 = vmatpush1.bf16.msra.mxu0 0
    %1514 = vmatprep.subr.bf16.mxu0 0
    %1515 = vmatpush1.bf16.msra.mxu0 0
    %1516 = vmatprep.subr.bf16.mxu0 0
    %1517 = vmatpush1.bf16.msra.mxu0 0
    %1518 = vmatprep.subr.bf16.mxu0 0
    %1519 = vmatpush1.bf16.msra.mxu0 0
    %1520 = vmatprep.subr.bf16.mxu0 0
    %1521 = vmatpush1.bf16.msra.mxu0 0
    %1522 = vmatprep.mubr.bf16.mxu0 0
    %1523 = vmatmul.mubr.bf16.gmra.mrb[0].mxu0 %v1488
    %v1524 = vpop.f32.mrb[0].mxu0
    %v1525 = vadd.f32 %v1473, %v1524
    %v1526 = vpop.f32.mrb[0].mxu0
    %v1527 = vpop.f32.mrb[0].mxu0
    %v1528 = vadd.f32 %v1473, %v1527
    %v1529 = vpop.f32.mrb[0].mxu0
    %1530 = vdwg.mxu0
    %v1531 = vadd.f32 %v973, %v1525
    %v1532 = vadd.f32 %v974, %v1528
    %s1533 = scalar_lea.vmem %s9, 1
    %v1534 = vld [vmem:[%s1533] sm:$0x1]
    %s1535 = scalar_lea.vmem %s10, 1
    %v1536 = vld [vmem:[%s1535] sm:$0x1]
    %v1537 = vsel %vm92, %v1531, 0.0
    %1538 = vadd.xlane.f32.xlu0 %v1537
    %v1539 = vpop.xlane.xlu0 %1538
    %v1540 = vsel %vm92, %v1532, 0.0
    %1541 = vadd.xlane.f32.xlu0 %v1540
    %v1542 = vpop.xlane.xlu0 %1541
    %v1543 = vmul.f32 %v1539, %v99
    %v1544 = vmul.f32 %v1542, %v99
    %v1545 = vsub.f32 %v1531, %v1543
    %v1546 = vsub.f32 %v1532, %v1544
    %v1547 = vmul.f32 %v1545, %v1545
    %v1548 = vmul.f32 %v1546, %v1546
    %v1549 = vsel %vm92, %v1547, 0.0
    %1550 = vadd.xlane.f32.xlu0 %v1549
    %v1551 = vpop.xlane.xlu0 %1550
    %v1552 = vsel %vm92, %v1548, 0.0
    %1553 = vadd.xlane.f32.xlu0 %v1552
    %v1554 = vpop.xlane.xlu0 %1553
    %v1555 = vmul.f32 %v1551, %v99
    %v1556 = vmul.f32 %v1554, %v99
    %v1557 = vadd.f32 %v1555, 1e-12
    %v1558 = vadd.f32 %v1556, 1e-12
    %v1559 = vrsqrt.pop %v1557
    %v1560 = vrsqrt.pop %v1558
    %v1561 = vmul.f32 %v1545, %v1559
    %v1562 = vmul.f32 %v1546, %v1560
    %v1564 = vlaneseq
    %v1565 = vshrl.u32 %v1564, 7
    %v1566 = vsub.s32 0, %v1565
    %v1567 = vrot.slane %v1534, %v1566
    %v1569 = vmul.f32 %v1561, %v1567
    %v1570 = vmul.f32 %v1562, %v1567
    %v1572 = vlaneseq
    %v1573 = vshrl.u32 %v1572, 7
    %v1574 = vsub.s32 0, %v1573
    %v1575 = vrot.slane %v1536, %v1574
    %v1577 = vadd.f32 %v1569, %v1575
    %v1578 = vadd.f32 %v1570, %v1575
    %v1579 = vpack.c.bf16 %v1578, %v1577
    %s1580 = scalar_lea.vmem %s11, 16
    %v1581 = vld [vmem:[%s1580] sm:$0xf]
    %v1582 = vld [vmem:[%s1580 + $0x4] sm:$0xf]
    %v1583 = vld [vmem:[%s1580 + $0x8] sm:$0xf]
    %v1584 = vld [vmem:[%s1580 + $0xc] sm:$0xf]
    %s1585 = scalar_lea.vmem %s12, 1
    %v1586 = vld [vmem:[%s1585] sm:$0x1]
    %v1588 = vlaneseq
    %v1589 = vshrl.u32 %v1588, 7
    %v1590 = vsub.s32 0, %v1589
    %v1591 = vrot.slane %v1586, %v1590
    %v1597 = vunpack.c.l.b16 %v1581
    %v1598 = vunpack.c.l.b16 %v1582
    %v1599 = vunpack.c.l.b16 %v1583
    %v1600 = vunpack.c.l.b16 %v1584
    %v1601 = vpack.c.b16 %v1598, %v1597
    %v1602 = vpack.c.b16 %v1600, %v1599
    %v1606 = vsel %vm92, %v1579, 0
    %1608 = vmatprep.subr.bf16.mxu0 0
    %1609 = vmatpush1.bf16.msra.mxu0 %v1601
    %1610 = vmatprep.subr.bf16.mxu0 0
    %1611 = vmatpush1.bf16.msra.mxu0 %v1602
    %1612 = vmatprep.subr.bf16.mxu0 0
    %1613 = vmatpush1.bf16.msra.mxu0 0
    %1614 = vmatprep.subr.bf16.mxu0 0
    %1615 = vmatpush1.bf16.msra.mxu0 0
    %1616 = vmatprep.subr.bf16.mxu0 0
    %1617 = vmatpush1.bf16.msra.mxu0 0
    %1618 = vmatprep.subr.bf16.mxu0 0
    %1619 = vmatpush1.bf16.msra.mxu0 0
    %1620 = vmatprep.subr.bf16.mxu0 0
    %1621 = vmatpush1.bf16.msra.mxu0 0
    %1622 = vmatprep.subr.bf16.mxu0 0
    %1623 = vmatpush1.bf16.msra.mxu0 0
    %1624 = vmatprep.subr.bf16.mxu0 0
    %1625 = vmatpush1.bf16.msra.mxu0 0
    %1626 = vmatprep.subr.bf16.mxu0 0
    %1627 = vmatpush1.bf16.msra.mxu0 0
    %1628 = vmatprep.subr.bf16.mxu0 0
    %1629 = vmatpush1.bf16.msra.mxu0 0
    %1630 = vmatprep.subr.bf16.mxu0 0
    %1631 = vmatpush1.bf16.msra.mxu0 0
    %1632 = vmatprep.subr.bf16.mxu0 0
    %1633 = vmatpush1.bf16.msra.mxu0 0
    %1634 = vmatprep.subr.bf16.mxu0 0
    %1635 = vmatpush1.bf16.msra.mxu0 0
    %1636 = vmatprep.subr.bf16.mxu0 0
    %1637 = vmatpush1.bf16.msra.mxu0 0
    %1638 = vmatprep.subr.bf16.mxu0 0
    %1639 = vmatpush1.bf16.msra.mxu0 0
    %1640 = vmatprep.mubr.bf16.mxu0 0
    %1641 = vmatmul.mubr.bf16.gmra.mrb[0].mxu0 %v1606
    %v1642 = vpop.f32.mrb[0].mxu0
    %v1643 = vadd.f32 %v1591, %v1642
    %v1644 = vpop.f32.mrb[0].mxu0
    %v1645 = vpop.f32.mrb[0].mxu0
    %v1646 = vadd.f32 %v1591, %v1645
    %v1647 = vpop.f32.mrb[0].mxu0
    %1648 = vdwg.mxu0
    %v1649 = vmul.f32 %v1643, %v1643
    %v1650 = vmul.f32 %v1646, %v1646
    %v1651 = vmul.f32 %v1643, %v1649
    %v1652 = vmul.f32 %v1646, %v1650
    %v1653 = vmul.f32 %v1651, 0.044715
    %v1654 = vmul.f32 %v1652, 0.044715
    %v1655 = vadd.f32 %v1643, %v1653
    %v1656 = vadd.f32 %v1646, %v1654
    %v1657 = vmul.f32 %v1655, 0.7978846
    %v1658 = vmul.f32 %v1656, 0.7978846
    %v1659 = vtanh.pop %v1657
    %v1660 = vtanh.pop %v1658
    %v1661 = vadd.f32 %v1659, 1.0
    %v1662 = vadd.f32 %v1660, 1.0
    %v1663 = vmul.f32 %v1661, 0.5
    %v1664 = vmul.f32 %v1662, 0.5
    %v1665 = vmul.f32 %v1643, %v1663
    %v1666 = vmul.f32 %v1646, %v1664
    %v1667 = vpack.c.bf16 %v1666, %v1665
    %s1668 = scalar_lea.vmem %s13, 32
    %v1669 = vld [vmem:[%s1668] sm:$0xf]
    %v1670 = vld [vmem:[%s1668 + $0x4] sm:$0xf]
    %v1671 = vld [vmem:[%s1668 + $0x8] sm:$0xf]
    %v1672 = vld [vmem:[%s1668 + $0xc] sm:$0xf]
    %v1673 = vld [vmem:[%s1668 + $0x10] sm:$0xf]
    %v1674 = vld [vmem:[%s1668 + $0x14] sm:$0xf]
    %v1675 = vld [vmem:[%s1668 + $0x18] sm:$0xf]
    %v1676 = vld [vmem:[%s1668 + $0x1c] sm:$0xf]
    %s1677 = scalar_lea.vmem %s14, 1
    %v1678 = vld [vmem:[%s1677] sm:$0x1]
    %v1680 = vlaneseq
    %v1681 = vshrl.u32 %v1680, 7
    %v1682 = vsub.s32 0, %v1681
    %v1683 = vrot.slane %v1678, %v1682
    %v1693 = vunpack.c.l.b16 %v1669
    %v1694 = vunpack.c.l.b16 %v1670
    %v1695 = vunpack.c.l.b16 %v1671
    %v1696 = vunpack.c.l.b16 %v1672
    %v1697 = vunpack.c.l.b16 %v1673
    %v1698 = vunpack.c.l.b16 %v1674
    %v1699 = vunpack.c.l.b16 %v1675
    %v1700 = vunpack.c.l.b16 %v1676
    %v1701 = vpack.c.b16 %v1694, %v1693
    %v1702 = vpack.c.b16 %v1696, %v1695
    %v1703 = vpack.c.b16 %v1698, %v1697
    %v1704 = vpack.c.b16 %v1700, %v1699
    %v1710 = vsel %vm884, %v1667, 0
    %1712 = vmatprep.subr.bf16.mxu0 0
    %1713 = vmatpush1.bf16.msra.mxu0 %v1701
    %1714 = vmatprep.subr.bf16.mxu0 0
    %1715 = vmatpush1.bf16.msra.mxu0 %v1702
    %1716 = vmatprep.subr.bf16.mxu0 0
    %1717 = vmatpush1.bf16.msra.mxu0 %v1703
    %1718 = vmatprep.subr.bf16.mxu0 0
    %1719 = vmatpush1.bf16.msra.mxu0 %v1704
    %1720 = vmatprep.subr.bf16.mxu0 0
    %1721 = vmatpush1.bf16.msra.mxu0 0
    %1722 = vmatprep.subr.bf16.mxu0 0
    %1723 = vmatpush1.bf16.msra.mxu0 0
    %1724 = vmatprep.subr.bf16.mxu0 0
    %1725 = vmatpush1.bf16.msra.mxu0 0
    %1726 = vmatprep.subr.bf16.mxu0 0
    %1727 = vmatpush1.bf16.msra.mxu0 0
    %1728 = vmatprep.subr.bf16.mxu0 0
    %1729 = vmatpush1.bf16.msra.mxu0 0
    %1730 = vmatprep.subr.bf16.mxu0 0
    %1731 = vmatpush1.bf16.msra.mxu0 0
    %1732 = vmatprep.subr.bf16.mxu0 0
    %1733 = vmatpush1.bf16.msra.mxu0 0
    %1734 = vmatprep.subr.bf16.mxu0 0
    %1735 = vmatpush1.bf16.msra.mxu0 0
    %1736 = vmatprep.subr.bf16.mxu0 0
    %1737 = vmatpush1.bf16.msra.mxu0 0
    %1738 = vmatprep.subr.bf16.mxu0 0
    %1739 = vmatpush1.bf16.msra.mxu0 0
    %1740 = vmatprep.subr.bf16.mxu0 0
    %1741 = vmatpush1.bf16.msra.mxu0 0
    %1742 = vmatprep.subr.bf16.mxu0 0
    %1743 = vmatpush1.bf16.msra.mxu0 0
    %1744 = vmatprep.mubr.bf16.mxu0 0
    %1745 = vmatmul.mubr.bf16.gmra.mrb[0].mxu0 %v1710
    %v1746 = vpop.f32.mrb[0].mxu0
    %v1747 = vadd.f32 %v1683, %v1746
    %v1748 = vpop.f32.mrb[0].mxu0
    %v1749 = vpop.f32.mrb[0].mxu0
    %v1750 = vadd.f32 %v1683, %v1749
    %v1751 = vpop.f32.mrb[0].mxu0
    %1752 = vdwg.mxu0
    %v1753 = vadd.f32 %v1577, %v1747
    %v1754 = vadd.f32 %v1578, %v1750
    %s1755 = scalar_lea.vmem %s15, 1
    %v1756 = vld [vmem:[%s1755] sm:$0x1]
    %s1757 = scalar_lea.vmem %s16, 1
    %v1758 = vld [vmem:[%s1757] sm:$0x1]
    %v1759 = vsel %vm92, %v1753, 0.0
    %1760 = vadd.xlane.f32.xlu0 %v1759
    %v1761 = vpop.xlane.xlu0 %1760
    %v1762 = vsel %vm92, %v1754, 0.0
    %1763 = vadd.xlane.f32.xlu0 %v1762
    %v1764 = vpop.xlane.xlu0 %1763
    %v1765 = vmul.f32 %v1761, %v99
    %v1766 = vmul.f32 %v1764, %v99
    %v1767 = vsub.f32 %v1753, %v1765
    %v1768 = vsub.f32 %v1754, %v1766
    %v1769 = vmul.f32 %v1767, %v1767
    %v1770 = vmul.f32 %v1768, %v1768
    %v1771 = vsel %vm92, %v1769, 0.0
    %1772 = vadd.xlane.f32.xlu0 %v1771
    %v1773 = vpop.xlane.xlu0 %1772
    %v1774 = vsel %vm92, %v1770, 0.0
    %1775 = vadd.xlane.f32.xlu0 %v1774
    %v1776 = vpop.xlane.xlu0 %1775
    %v1777 = vmul.f32 %v1773, %v99
    %v1778 = vmul.f32 %v1776, %v99
    %v1779 = vadd.f32 %v1777, 1e-12
    %v1780 = vadd.f32 %v1778, 1e-12
    %v1781 = vrsqrt.pop %v1779
    %v1782 = vrsqrt.pop %v1780
    %v1783 = vmul.f32 %v1767, %v1781
    %v1784 = vmul.f32 %v1768, %v1782
    %v1786 = vlaneseq
    %v1787 = vshrl.u32 %v1786, 7
    %v1788 = vsub.s32 0, %v1787
    %v1789 = vrot.slane %v1756, %v1788
    %v1791 = vmul.f32 %v1783, %v1789
    %v1792 = vmul.f32 %v1784, %v1789
    %v1794 = vlaneseq
    %v1795 = vshrl.u32 %v1794, 7
    %v1796 = vsub.s32 0, %v1795
    %v1797 = vrot.slane %v1758, %v1796
    %v1799 = vadd.f32 %v1791, %v1797
    %v1800 = vadd.f32 %v1792, %v1797
    %v1801 = vld [vmem:[%s17] sm:$0x3]
    %vm1802 = vcmp.gt.f32.partialorder %v1801, 0.0
    %v1803 = vld [vmem:[%s18] sm:$0x1]
    %vm1804 = vcmp.gt.f32.partialorder %v1803, 0.0
    %v1805 = vld [vmem:[%s19] sm:$0xff]
    %v1806 = vld [vmem:[%s19 + $0x8] sm:$0xff]
    %v1807 = vld [vmem:[%s19 + $0x10] sm:$0xff]
    %v1808 = vld [vmem:[%s19 + $0x18] sm:$0xff]
    %v1809 = vpack.c.bf16 %v1800, %v1799
    %v1810 = vld [vmem:[%s21] sm:$0x3]
    %v1812 = vlaneseq
    %v1813 = vshrl.u32 %v1812, 7
    %v1814 = vsub.s32 0, %v1813
    %v1815 = vrot.slane %v1810, %v1814
    %v1816 = vlaneseq
    %v1817 = vshrl.u32 %v1816, 7
    %v1818 = vsub.s32 1, %v1817
    %v1819 = vrot.slane %v1810, %v1818
    %v1826 = vunpack.c.l.b16 %v1805
    %v1827 = vunpack.c.h.b16 %v1805
    %v1828 = vunpack.c.l.b16 %v1806
    %v1829 = vunpack.c.h.b16 %v1806
    %v1830 = vunpack.c.l.b16 %v1807
    %v1831 = vunpack.c.h.b16 %v1807
    %v1832 = vunpack.c.l.b16 %v1808
    %v1833 = vunpack.c.h.b16 %v1808
    %v1834 = vpack.c.b16 %v1828, %v1826
    %v1835 = vpack.c.b16 %v1829, %v1827
    %v1836 = vpack.c.b16 %v1832, %v1830
    %v1837 = vpack.c.b16 %v1833, %v1831
    %v1843 = vsel %vm92, %v1809, 0
    %1845 = vmatprep.subr.bf16.mxu0 %v1835
    %1846 = vmatpush1.bf16.msra.mxu0 %v1834
    %1847 = vmatprep.subr.bf16.mxu0 %v1837
    %1848 = vmatpush1.bf16.msra.mxu0 %v1836
    %1849 = vmatprep.subr.bf16.mxu0 0
    %1850 = vmatpush1.bf16.msra.mxu0 0
    %1851 = vmatprep.subr.bf16.mxu0 0
    %1852 = vmatpush1.bf16.msra.mxu0 0
    %1853 = vmatprep.subr.bf16.mxu0 0
    %1854 = vmatpush1.bf16.msra.mxu0 0
    %1855 = vmatprep.subr.bf16.mxu0 0
    %1856 = vmatpush1.bf16.msra.mxu0 0
    %1857 = vmatprep.subr.bf16.mxu0 0
    %1858 = vmatpush1.bf16.msra.mxu0 0
    %1859 = vmatprep.subr.bf16.mxu0 0
    %1860 = vmatpush1.bf16.msra.mxu0 0
    %1861 = vmatprep.subr.bf16.mxu0 0
    %1862 = vmatpush1.bf16.msra.mxu0 0
    %1863 = vmatprep.subr.bf16.mxu0 0
    %1864 = vmatpush1.bf16.msra.mxu0 0
    %1865 = vmatprep.subr.bf16.mxu0 0
    %1866 = vmatpush1.bf16.msra.mxu0 0
    %1867 = vmatprep.subr.bf16.mxu0 0
    %1868 = vmatpush1.bf16.msra.mxu0 0
    %1869 = vmatprep.subr.bf16.mxu0 0
    %1870 = vmatpush1.bf16.msra.mxu0 0
    %1871 = vmatprep.subr.bf16.mxu0 0
    %1872 = vmatpush1.bf16.msra.mxu0 0
    %1873 = vmatprep.subr.bf16.mxu0 0
    %1874 = vmatpush1.bf16.msra.mxu0 0
    %1875 = vmatprep.subr.bf16.mxu0 0
    %1876 = vmatpush1.bf16.msra.mxu0 0
    %1877 = vmatprep.mubr.bf16.mxu0 0
    %1878 = vmatmul.mubr.bf16.gmra.mrb[0].mxu0 %v1843
    %v1879 = vpop.f32.mrb[0].mxu0
    %v1880 = vadd.f32 %v1815, %v1879
    %v1881 = vpop.f32.mrb[0].mxu0
    %v1882 = vadd.f32 %v1819, %v1881
    %v1883 = vpop.f32.mrb[0].mxu0
    %v1884 = vadd.f32 %v1815, %v1883
    %v1885 = vpop.f32.mrb[0].mxu0
    %v1886 = vadd.f32 %v1819, %v1885
    %1887 = vdwg.mxu0
    %v1888 = vld [vmem:[%s22] sm:$0xff]
    %v1889 = vld [vmem:[%s22 + $0x8] sm:$0xff]
    %v1890 = vld [vmem:[%s22 + $0x10] sm:$0xff]
    %v1891 = vld [vmem:[%s22 + $0x18] sm:$0xff]
    %v1892 = vld [vmem:[%s22 + $0x20] sm:$0xff]
    %v1893 = vld [vmem:[%s22 + $0x28] sm:$0xff]
    %v1894 = vld [vmem:[%s22 + $0x30] sm:$0xff]
    %v1895 = vld [vmem:[%s22 + $0x38] sm:$0xff]
    %v1896 = vsel %vm1802, 1, 0
    %v1897 = vlaneseq
    %v1898 = vshrl.u32 %v1897, 7
    %v1899 = vsub.s32 0, %v1898
    %v1900 = vrot.slane %v1896, %v1899
    %v1901 = vlaneseq
    %v1902 = vshrl.u32 %v1901, 7
    %v1903 = vsub.s32 1, %v1902
    %v1904 = vrot.slane %v1896, %v1903
    %vm1905 = vcmp.eq.s32.totalorder %v1900, 1
    %vm1906 = vcmp.eq.s32.totalorder %v1904, 1
    %v1909 = vrot.slane %v1884, 6
    %v1910 = vrot.slane %v1886, 6
    %v1913 = vsel %vm1905, %v1880, %v1909
    %v1914 = vsel %vm1906, %v1882, %v1910
    %v1923 = vunpack.c.l.b16 %v1888
    %v1924 = vunpack.c.h.b16 %v1888
    %v1925 = vunpack.c.l.b16 %v1889
    %v1926 = vunpack.c.h.b16 %v1889
    %v1927 = vunpack.c.l.b16 %v1890
    %v1928 = vunpack.c.h.b16 %v1890
    %v1929 = vunpack.c.l.b16 %v1891
    %v1930 = vunpack.c.h.b16 %v1891
    %v1931 = vunpack.c.l.b16 %v1892
    %v1932 = vunpack.c.h.b16 %v1892
    %v1933 = vunpack.c.l.b16 %v1893
    %v1934 = vunpack.c.h.b16 %v1893
    %v1935 = vunpack.c.l.b16 %v1894
    %v1936 = vunpack.c.h.b16 %v1894
    %v1937 = vunpack.c.l.b16 %v1895
    %v1938 = vunpack.c.h.b16 %v1895
    %v1939 = vpack.c.b16 %v1925, %v1923
    %v1940 = vpack.c.b16 %v1926, %v1924
    %v1941 = vpack.c.b16 %v1929, %v1927
    %v1942 = vpack.c.b16 %v1930, %v1928
    %v1943 = vpack.c.b16 %v1933, %v1931
    %v1944 = vpack.c.b16 %v1934, %v1932
    %v1945 = vpack.c.b16 %v1937, %v1935
    %v1946 = vpack.c.b16 %v1938, %v1936
    %v1956 = vsel %vm884, 0, 0
    %1958 = vmatprep.subr.bf16.mxu0 %v1940
    %1959 = vmatpush1.bf16.msra.mxu0 %v1939
    %1960 = vmatprep.subr.bf16.mxu0 %v1942
    %1961 = vmatpush1.bf16.msra.mxu0 %v1941
    %1962 = vmatprep.subr.bf16.mxu0 %v1944
    %1963 = vmatpush1.bf16.msra.mxu0 %v1943
    %1964 = vmatprep.subr.bf16.mxu0 %v1946
    %1965 = vmatpush1.bf16.msra.mxu0 %v1945
    %1966 = vmatprep.subr.bf16.mxu0 0
    %1967 = vmatpush1.bf16.msra.mxu0 0
    %1968 = vmatprep.subr.bf16.mxu0 0
    %1969 = vmatpush1.bf16.msra.mxu0 0
    %1970 = vmatprep.subr.bf16.mxu0 0
    %1971 = vmatpush1.bf16.msra.mxu0 0
    %1972 = vmatprep.subr.bf16.mxu0 0
    %1973 = vmatpush1.bf16.msra.mxu0 0
    %1974 = vmatprep.subr.bf16.mxu0 0
    %1975 = vmatpush1.bf16.msra.mxu0 0
    %1976 = vmatprep.subr.bf16.mxu0 0
    %1977 = vmatpush1.bf16.msra.mxu0 0
    %1978 = vmatprep.subr.bf16.mxu0 0
    %1979 = vmatpush1.bf16.msra.mxu0 0
    %1980 = vmatprep.subr.bf16.mxu0 0
    %1981 = vmatpush1.bf16.msra.mxu0 0
    %1982 = vmatprep.subr.bf16.mxu0 0
    %1983 = vmatpush1.bf16.msra.mxu0 0
    %1984 = vmatprep.subr.bf16.mxu0 0
    %1985 = vmatpush1.bf16.msra.mxu0 0
    %1986 = vmatprep.subr.bf16.mxu0 0
    %1987 = vmatpush1.bf16.msra.mxu0 0
    %1988 = vmatprep.subr.bf16.mxu0 0
    %1989 = vmatpush1.bf16.msra.mxu0 0
    %1990 = vmatprep.mubr.bf16.mxu0 0
    %1991 = vmatmul.mubr.bf16.gmra.mrb[0].mxu0 %v1956
    %v1992 = vpop.f32.mrb[0].mxu0
    %v1993 = vadd.f32 0.0, %v1992
    %v1994 = vpop.f32.mrb[0].mxu0
    %v1995 = vadd.f32 0.0, %v1994
    %v1996 = vpop.f32.mrb[0].mxu0
    %v1997 = vpop.f32.mrb[0].mxu0
    %1998 = vdwg.mxu0
    %v1999 = vadd.f32 %v1913, %v1993
    %v2000 = vadd.f32 %v1914, %v1995
    %v2001 = vxor.u32 %v1999, 2147483648
    %v2002 = vxor.u32 %v2000, 2147483648
    %v2003 = vmul.f32 %v2001, 1.442695
    %v2004 = vpow.pop %v2003
    %v2005 = vmul.f32 %v2002, 1.442695
    %v2006 = vpow.pop %v2005
    %v2007 = vadd.f32 %v2004, 1.0
    %v2008 = vadd.f32 %v2006, 1.0
    %v2009 = vrcp.pop %v2007
    %v2010 = vmul.f32 1.0, %v2009
    %v2011 = vrcp.pop %v2008
    %v2012 = vmul.f32 1.0, %v2011
    %v2013 = vtanh.pop %v2000
    %v2014 = vmul.f32 %v2010, 0.0
    %2016 = vrot.lane.b32.xlu0 %v2013, 64
    %v2017 = vpop.permute.xlu0 %2016
    %v2019 = vmul.f32 %v2010, %v2017
    %2021 = vrot.lane.b32.xlu0 %v2019, 64
    %v2022 = vpop.permute.xlu0 %2021
    %v2024 = vadd.f32 %v2014, %v2022
    %v2025 = vtanh.pop %v2024
    %2027 = vrot.lane.b32.xlu0 %v2025, 64
    %v2028 = vpop.permute.xlu0 %2027
    %v2030 = vmul.f32 %v2012, %v2028
    %v2031 = vrot.slane %v1884, 2
    %v2032 = vrot.slane %v1886, 2
    %v2035 = vsel %vm1905, %v1880, %v2031
    %v2036 = vsel %vm1906, %v1882, %v2032
    %v2037 = vpack.c.bf16 %v2030, %v2030
    %v2039 = vsel %vm884, %v2037, 0
    %2041 = vmatprep.subr.bf16.mxu0 %v1940
    %2042 = vmatpush1.bf16.msra.mxu0 %v1939
    %2043 = vmatprep.subr.bf16.mxu0 %v1942
    %2044 = vmatpush1.bf16.msra.mxu0 %v1941
    %2045 = vmatprep.subr.bf16.mxu0 %v1944
    %2046 = vmatpush1.bf16.msra.mxu0 %v1943
    %2047 = vmatprep.subr.bf16.mxu0 %v1946
    %2048 = vmatpush1.bf16.msra.mxu0 %v1945
    %2049 = vmatprep.subr.bf16.mxu0 0
    %2050 = vmatpush1.bf16.msra.mxu0 0
    %2051 = vmatprep.subr.bf16.mxu0 0
    %2052 = vmatpush1.bf16.msra.mxu0 0
    %2053 = vmatprep.subr.bf16.mxu0 0
    %2054 = vmatpush1.bf16.msra.mxu0 0
    %2055 = vmatprep.subr.bf16.mxu0 0
    %2056 = vmatpush1.bf16.msra.mxu0 0
    %2057 = vmatprep.subr.bf16.mxu0 0
    %2058 = vmatpush1.bf16.msra.mxu0 0
    %2059 = vmatprep.subr.bf16.mxu0 0
    %2060 = vmatpush1.bf16.msra.mxu0 0
    %2061 = vmatprep.subr.bf16.mxu0 0
    %2062 = vmatpush1.bf16.msra.mxu0 0
    %2063 = vmatprep.subr.bf16.mxu0 0
    %2064 = vmatpush1.bf16.msra.mxu0 0
    %2065 = vmatprep.subr.bf16.mxu0 0
    %2066 = vmatpush1.bf16.msra.mxu0 0
    %2067 = vmatprep.subr.bf16.mxu0 0
    %2068 = vmatpush1.bf16.msra.mxu0 0
    %2069 = vmatprep.subr.bf16.mxu0 0
    %2070 = vmatpush1.bf16.msra.mxu0 0
    %2071 = vmatprep.subr.bf16.mxu0 0
    %2072 = vmatpush1.bf16.msra.mxu0 0
    %2073 = vmatprep.mubr.bf16.mxu0 0
    %2074 = vmatmul.mubr.bf16.gmra.mrb[0].mxu0 %v2039
    %v2075 = vpop.f32.mrb[0].mxu0
    %v2076 = vadd.f32 0.0, %v2075
    %v2077 = vpop.f32.mrb[0].mxu0
    %v2078 = vadd.f32 0.0, %v2077
    %v2079 = vpop.f32.mrb[0].mxu0
    %v2080 = vpop.f32.mrb[0].mxu0
    %2081 = vdwg.mxu0
    %v2084 = vrot.slane %v2076, 6
    %v2085 = vrot.slane %v2078, 6
    %v2088 = vadd.f32 %v2035, %v2084
    %v2089 = vadd.f32 %v2036, %v2085
    %v2090 = vxor.u32 %v2088, 2147483648
    %v2091 = vxor.u32 %v2089, 2147483648
    %v2092 = vmul.f32 %v2090, 1.442695
    %v2093 = vpow.pop %v2092
    %v2094 = vmul.f32 %v2091, 1.442695
    %v2095 = vpow.pop %v2094
    %v2096 = vadd.f32 %v2093, 1.0
    %v2097 = vadd.f32 %v2095, 1.0
    %v2098 = vrcp.pop %v2096
    %v2099 = vmul.f32 1.0, %v2098
    %v2100 = vrcp.pop %v2097
    %v2101 = vmul.f32 1.0, %v2100
    %v2102 = vtanh.pop %v2089
    %v2104 = vrot.slane %v2024, 6
    %v2106 = vmul.f32 %v2099, %v2104
    %2108 = vrot.lane.b32.xlu0 %v2102, 64
    %v2109 = vpop.permute.xlu0 %2108
    %v2111 = vmul.f32 %v2099, %v2109
    %2113 = vrot.lane.b32.xlu0 %v2111, 64
    %v2114 = vpop.permute.xlu0 %2113
    %v2116 = vadd.f32 %v2106, %v2114
    %v2117 = vtanh.pop %v2116
    %2119 = vrot.lane.b32.xlu0 %v2117, 64
    %v2120 = vpop.permute.xlu0 %2119
    %v2122 = vmul.f32 %v2101, %v2120
    %v2123 = vpack.c.bf16 %v2122, %v2122
    %v2125 = vrot.slane %v2123, 1
    %v2127 = vsel %vm884, %v2125, 0
    %2129 = vmatprep.subr.bf16.mxu0 %v1940
    %2130 = vmatpush1.bf16.msra.mxu0 %v1939
    %2131 = vmatprep.subr.bf16.mxu0 %v1942
    %2132 = vmatpush1.bf16.msra.mxu0 %v1941
    %2133 = vmatprep.subr.bf16.mxu0 %v1944
    %2134 = vmatpush1.bf16.msra.mxu0 %v1943
    %2135 = vmatprep.subr.bf16.mxu0 %v1946
    %2136 = vmatpush1.bf16.msra.mxu0 %v1945
    %2137 = vmatprep.subr.bf16.mxu0 0
    %2138 = vmatpush1.bf16.msra.mxu0 0
    %2139 = vmatprep.subr.bf16.mxu0 0
    %2140 = vmatpush1.bf16.msra.mxu0 0
    %2141 = vmatprep.subr.bf16.mxu0 0
    %2142 = vmatpush1.bf16.msra.mxu0 0
    %2143 = vmatprep.subr.bf16.mxu0 0
    %2144 = vmatpush1.bf16.msra.mxu0 0
    %2145 = vmatprep.subr.bf16.mxu0 0
    %2146 = vmatpush1.bf16.msra.mxu0 0
    %2147 = vmatprep.subr.bf16.mxu0 0
    %2148 = vmatpush1.bf16.msra.mxu0 0
    %2149 = vmatprep.subr.bf16.mxu0 0
    %2150 = vmatpush1.bf16.msra.mxu0 0
    %2151 = vmatprep.subr.bf16.mxu0 0
    %2152 = vmatpush1.bf16.msra.mxu0 0
    %2153 = vmatprep.subr.bf16.mxu0 0
    %2154 = vmatpush1.bf16.msra.mxu0 0
    %2155 = vmatprep.subr.bf16.mxu0 0
    %2156 = vmatpush1.bf16.msra.mxu0 0
    %2157 = vmatprep.subr.bf16.mxu0 0
    %2158 = vmatpush1.bf16.msra.mxu0 0
    %2159 = vmatprep.subr.bf16.mxu0 0
    %2160 = vmatpush1.bf16.msra.mxu0 0
    %2161 = vmatprep.mubr.bf16.mxu0 0
    %2162 = vmatmul.mubr.bf16.gmra.mrb[0].mxu0 %v2127
    %v2163 = vpop.f32.mrb[0].mxu0
    %v2164 = vadd.f32 0.0, %v2163
    %v2165 = vpop.f32.mrb[0].mxu0
    %v2166 = vadd.f32 0.0, %v2165
    %v2167 = vpop.f32.mrb[0].mxu0
    %v2168 = vpop.f32.mrb[0].mxu0
    %2169 = vdwg.mxu0
    %v2172 = vrot.slane %v2164, 4
    %v2173 = vrot.slane %v2166, 4
    %v2176 = vadd.f32 %v1913, %v2172
    %v2177 = vadd.f32 %v1914, %v2173
    %v2178 = vxor.u32 %v2176, 2147483648
    %v2179 = vxor.u32 %v2177, 2147483648
    %v2180 = vmul.f32 %v2178, 1.442695
    %v2181 = vpow.pop %v2180
    %v2182 = vmul.f32 %v2179, 1.442695
    %v2183 = vpow.pop %v2182
    %v2184 = vadd.f32 %v2181, 1.0
    %v2185 = vadd.f32 %v2183, 1.0
    %v2186 = vrcp.pop %v2184
    %v2187 = vmul.f32 1.0, %v2186
    %v2188 = vrcp.pop %v2185
    %v2189 = vmul.f32 1.0, %v2188
    %v2190 = vtanh.pop %v2177
    %v2192 = vrot.slane %v2116, 6
    %v2194 = vmul.f32 %v2187, %v2192
    %2196 = vrot.lane.b32.xlu0 %v2190, 64
    %v2197 = vpop.permute.xlu0 %2196
    %v2199 = vmul.f32 %v2187, %v2197
    %2201 = vrot.lane.b32.xlu0 %v2199, 64
    %v2202 = vpop.permute.xlu0 %2201
    %v2204 = vadd.f32 %v2194, %v2202
    %v2205 = vtanh.pop %v2204
    %2207 = vrot.lane.b32.xlu0 %v2205, 64
    %v2208 = vpop.permute.xlu0 %2207
    %v2210 = vmul.f32 %v2189, %v2208
    %v2211 = vpack.c.bf16 %v2210, %v2210
    %v2213 = vrot.slane %v2211, 2
    %v2215 = vsel %vm884, %v2213, 0
    %2217 = vmatprep.subr.bf16.mxu0 %v1940
    %2218 = vmatpush1.bf16.msra.mxu0 %v1939
    %2219 = vmatprep.subr.bf16.mxu0 %v1942
    %2220 = vmatpush1.bf16.msra.mxu0 %v1941
    %2221 = vmatprep.subr.bf16.mxu0 %v1944
    %2222 = vmatpush1.bf16.msra.mxu0 %v1943
    %2223 = vmatprep.subr.bf16.mxu0 %v1946
    %2224 = vmatpush1.bf16.msra.mxu0 %v1945
    %2225 = vmatprep.subr.bf16.mxu0 0
    %2226 = vmatpush1.bf16.msra.mxu0 0
    %2227 = vmatprep.subr.bf16.mxu0 0
    %2228 = vmatpush1.bf16.msra.mxu0 0
    %2229 = vmatprep.subr.bf16.mxu0 0
    %2230 = vmatpush1.bf16.msra.mxu0 0
    %2231 = vmatprep.subr.bf16.mxu0 0
    %2232 = vmatpush1.bf16.msra.mxu0 0
    %2233 = vmatprep.subr.bf16.mxu0 0
    %2234 = vmatpush1.bf16.msra.mxu0 0
    %2235 = vmatprep.subr.bf16.mxu0 0
    %2236 = vmatpush1.bf16.msra.mxu0 0
    %2237 = vmatprep.subr.bf16.mxu0 0
    %2238 = vmatpush1.bf16.msra.mxu0 0
    %2239 = vmatprep.subr.bf16.mxu0 0
    %2240 = vmatpush1.bf16.msra.mxu0 0
    %2241 = vmatprep.subr.bf16.mxu0 0
    %2242 = vmatpush1.bf16.msra.mxu0 0
    %2243 = vmatprep.subr.bf16.mxu0 0
    %2244 = vmatpush1.bf16.msra.mxu0 0
    %2245 = vmatprep.subr.bf16.mxu0 0
    %2246 = vmatpush1.bf16.msra.mxu0 0
    %2247 = vmatprep.subr.bf16.mxu0 0
    %2248 = vmatpush1.bf16.msra.mxu0 0
    %2249 = vmatprep.mubr.bf16.mxu0 0
    %2250 = vmatmul.mubr.bf16.gmra.mrb[0].mxu0 %v2215
    %v2251 = vpop.f32.mrb[0].mxu0
    %v2252 = vadd.f32 0.0, %v2251
    %v2253 = vpop.f32.mrb[0].mxu0
    %v2254 = vadd.f32 0.0, %v2253
    %v2255 = vpop.f32.mrb[0].mxu0
    %v2256 = vpop.f32.mrb[0].mxu0
    %2257 = vdwg.mxu0
    %v2260 = vrot.slane %v2252, 2
    %v2261 = vrot.slane %v2254, 2
    %v2264 = vadd.f32 %v2035, %v2260
    %v2265 = vadd.f32 %v2036, %v2261
    %v2266 = vxor.u32 %v2264, 2147483648
    %v2267 = vxor.u32 %v2265, 2147483648
    %v2268 = vmul.f32 %v2266, 1.442695
    %v2269 = vpow.pop %v2268
    %v2270 = vmul.f32 %v2267, 1.442695
    %v2271 = vpow.pop %v2270
    %v2272 = vadd.f32 %v2269, 1.0
    %v2273 = vadd.f32 %v2271, 1.0
    %v2274 = vrcp.pop %v2272
    %v2275 = vmul.f32 1.0, %v2274
    %v2276 = vrcp.pop %v2273
    %v2277 = vmul.f32 1.0, %v2276
    %v2278 = vtanh.pop %v2265
    %v2280 = vrot.slane %v2204, 6
    %v2282 = vmul.f32 %v2275, %v2280
    %2284 = vrot.lane.b32.xlu0 %v2278, 64
    %v2285 = vpop.permute.xlu0 %2284
    %v2287 = vmul.f32 %v2275, %v2285
    %2289 = vrot.lane.b32.xlu0 %v2287, 64
    %v2290 = vpop.permute.xlu0 %2289
    %v2292 = vadd.f32 %v2282, %v2290
    %v2293 = vtanh.pop %v2292
    %2295 = vrot.lane.b32.xlu0 %v2293, 64
    %v2296 = vpop.permute.xlu0 %2295
    %v2298 = vmul.f32 %v2277, %v2296
    %v2301 = vrot.slane %v1880, 6
    %v2302 = vrot.slane %v1882, 6
    %v2305 = vsel %vm1905, %v1884, %v2301
    %v2306 = vsel %vm1906, %v1886, %v2302
    %v2307 = vpack.c.bf16 %v2298, %v2298
    %v2309 = vrot.slane %v2307, 3
    %v2311 = vsel %vm884, %v2309, 0
    %2313 = vmatprep.subr.bf16.mxu0 %v1940
    %2314 = vmatpush1.bf16.msra.mxu0 %v1939
    %2315 = vmatprep.subr.bf16.mxu0 %v1942
    %2316 = vmatpush1.bf16.msra.mxu0 %v1941
    %2317 = vmatprep.subr.bf16.mxu0 %v1944
    %2318 = vmatpush1.bf16.msra.mxu0 %v1943
    %2319 = vmatprep.subr.bf16.mxu0 %v1946
    %2320 = vmatpush1.bf16.msra.mxu0 %v1945
    %2321 = vmatprep.subr.bf16.mxu0 0
    %2322 = vmatpush1.bf16.msra.mxu0 0
    %2323 = vmatprep.subr.bf16.mxu0 0
    %2324 = vmatpush1.bf16.msra.mxu0 0
    %2325 = vmatprep.subr.bf16.mxu0 0
    %2326 = vmatpush1.bf16.msra.mxu0 0
    %2327 = vmatprep.subr.bf16.mxu0 0
    %2328 = vmatpush1.bf16.msra.mxu0 0
    %2329 = vmatprep.subr.bf16.mxu0 0
    %2330 = vmatpush1.bf16.msra.mxu0 0
    %2331 = vmatprep.subr.bf16.mxu0 0
    %2332 = vmatpush1.bf16.msra.mxu0 0
    %2333 = vmatprep.subr.bf16.mxu0 0
    %2334 = vmatpush1.bf16.msra.mxu0 0
    %2335 = vmatprep.subr.bf16.mxu0 0
    %2336 = vmatpush1.bf16.msra.mxu0 0
    %2337 = vmatprep.subr.bf16.mxu0 0
    %2338 = vmatpush1.bf16.msra.mxu0 0
    %2339 = vmatprep.subr.bf16.mxu0 0
    %2340 = vmatpush1.bf16.msra.mxu0 0
    %2341 = vmatprep.subr.bf16.mxu0 0
    %2342 = vmatpush1.bf16.msra.mxu0 0
    %2343 = vmatprep.subr.bf16.mxu0 0
    %2344 = vmatpush1.bf16.msra.mxu0 0
    %2345 = vmatprep.mubr.bf16.mxu0 0
    %2346 = vmatmul.mubr.bf16.gmra.mrb[0].mxu0 %v2311
    %v2347 = vpop.f32.mrb[0].mxu0
    %v2348 = vadd.f32 0.0, %v2347
    %v2349 = vpop.f32.mrb[0].mxu0
    %v2350 = vadd.f32 0.0, %v2349
    %v2351 = vpop.f32.mrb[0].mxu0
    %v2352 = vpop.f32.mrb[0].mxu0
    %2353 = vdwg.mxu0
    %v2354 = vadd.f32 %v2305, %v2348
    %v2355 = vadd.f32 %v2306, %v2350
    %v2356 = vxor.u32 %v2354, 2147483648
    %v2357 = vxor.u32 %v2355, 2147483648
    %v2358 = vmul.f32 %v2356, 1.442695
    %v2359 = vpow.pop %v2358
    %v2360 = vmul.f32 %v2357, 1.442695
    %v2361 = vpow.pop %v2360
    %v2362 = vadd.f32 %v2359, 1.0
    %v2363 = vadd.f32 %v2361, 1.0
    %v2364 = vrcp.pop %v2362
    %v2365 = vmul.f32 1.0, %v2364
    %v2366 = vrcp.pop %v2363
    %v2367 = vmul.f32 1.0, %v2366
    %v2368 = vtanh.pop %v2355
    %v2370 = vrot.slane %v2292, 6
    %v2372 = vmul.f32 %v2365, %v2370
    %2374 = vrot.lane.b32.xlu0 %v2368, 64
    %v2375 = vpop.permute.xlu0 %2374
    %v2377 = vmul.f32 %v2365, %v2375
    %2379 = vrot.lane.b32.xlu0 %v2377, 64
    %v2380 = vpop.permute.xlu0 %2379
    %v2382 = vadd.f32 %v2372, %v2380
    %v2383 = vtanh.pop %v2382
    %2385 = vrot.lane.b32.xlu0 %v2383, 64
    %v2386 = vpop.permute.xlu0 %2385
    %v2388 = vmul.f32 %v2367, %v2386
    %v2389 = vrot.slane %v1880, 2
    %v2390 = vrot.slane %v1882, 2
    %v2393 = vsel %vm1905, %v1884, %v2389
    %v2394 = vsel %vm1906, %v1886, %v2390
    %v2395 = vpack.c.bf16 %v2388, %v2388
    %v2397 = vsel %vm884, %v2395, 0
    %2399 = vmatprep.subr.bf16.mxu0 %v1940
    %2400 = vmatpush1.bf16.msra.mxu0 %v1939
    %2401 = vmatprep.subr.bf16.mxu0 %v1942
    %2402 = vmatpush1.bf16.msra.mxu0 %v1941
    %2403 = vmatprep.subr.bf16.mxu0 %v1944
    %2404 = vmatpush1.bf16.msra.mxu0 %v1943
    %2405 = vmatprep.subr.bf16.mxu0 %v1946
    %2406 = vmatpush1.bf16.msra.mxu0 %v1945
    %2407 = vmatprep.subr.bf16.mxu0 0
    %2408 = vmatpush1.bf16.msra.mxu0 0
    %2409 = vmatprep.subr.bf16.mxu0 0
    %2410 = vmatpush1.bf16.msra.mxu0 0
    %2411 = vmatprep.subr.bf16.mxu0 0
    %2412 = vmatpush1.bf16.msra.mxu0 0
    %2413 = vmatprep.subr.bf16.mxu0 0
    %2414 = vmatpush1.bf16.msra.mxu0 0
    %2415 = vmatprep.subr.bf16.mxu0 0
    %2416 = vmatpush1.bf16.msra.mxu0 0
    %2417 = vmatprep.subr.bf16.mxu0 0
    %2418 = vmatpush1.bf16.msra.mxu0 0
    %2419 = vmatprep.subr.bf16.mxu0 0
    %2420 = vmatpush1.bf16.msra.mxu0 0
    %2421 = vmatprep.subr.bf16.mxu0 0
    %2422 = vmatpush1.bf16.msra.mxu0 0
    %2423 = vmatprep.subr.bf16.mxu0 0
    %2424 = vmatpush1.bf16.msra.mxu0 0
    %2425 = vmatprep.subr.bf16.mxu0 0
    %2426 = vmatpush1.bf16.msra.mxu0 0
    %2427 = vmatprep.subr.bf16.mxu0 0
    %2428 = vmatpush1.bf16.msra.mxu0 0
    %2429 = vmatprep.subr.bf16.mxu0 0
    %2430 = vmatpush1.bf16.msra.mxu0 0
    %2431 = vmatprep.mubr.bf16.mxu0 0
    %2432 = vmatmul.mubr.bf16.gmra.mrb[0].mxu0 %v2397
    %v2433 = vpop.f32.mrb[0].mxu0
    %v2434 = vadd.f32 0.0, %v2433
    %v2435 = vpop.f32.mrb[0].mxu0
    %v2436 = vadd.f32 0.0, %v2435
    %v2437 = vpop.f32.mrb[0].mxu0
    %v2438 = vpop.f32.mrb[0].mxu0
    %2439 = vdwg.mxu0
    %v2442 = vrot.slane %v2434, 6
    %v2443 = vrot.slane %v2436, 6
    %v2446 = vadd.f32 %v2393, %v2442
    %v2447 = vadd.f32 %v2394, %v2443
    %v2448 = vxor.u32 %v2446, 2147483648
    %v2449 = vxor.u32 %v2447, 2147483648
    %v2450 = vmul.f32 %v2448, 1.442695
    %v2451 = vpow.pop %v2450
    %v2452 = vmul.f32 %v2449, 1.442695
    %v2453 = vpow.pop %v2452
    %v2454 = vadd.f32 %v2451, 1.0
    %v2455 = vadd.f32 %v2453, 1.0
    %v2456 = vrcp.pop %v2454
    %v2457 = vmul.f32 1.0, %v2456
    %v2458 = vrcp.pop %v2455
    %v2459 = vmul.f32 1.0, %v2458
    %v2460 = vtanh.pop %v2447
    %v2462 = vrot.slane %v2382, 6
    %v2464 = vmul.f32 %v2457, %v2462
    %2466 = vrot.lane.b32.xlu0 %v2460, 64
    %v2467 = vpop.permute.xlu0 %2466
    %v2469 = vmul.f32 %v2457, %v2467
    %2471 = vrot.lane.b32.xlu0 %v2469, 64
    %v2472 = vpop.permute.xlu0 %2471
    %v2474 = vadd.f32 %v2464, %v2472
    %v2475 = vtanh.pop %v2474
    %2477 = vrot.lane.b32.xlu0 %v2475, 64
    %v2478 = vpop.permute.xlu0 %2477
    %v2480 = vmul.f32 %v2459, %v2478
    %v2481 = vpack.c.bf16 %v2480, %v2480
    %v2483 = vrot.slane %v2481, 1
    %v2485 = vsel %vm884, %v2483, 0
    %2487 = vmatprep.subr.bf16.mxu0 %v1940
    %2488 = vmatpush1.bf16.msra.mxu0 %v1939
    %2489 = vmatprep.subr.bf16.mxu0 %v1942
    %2490 = vmatpush1.bf16.msra.mxu0 %v1941
    %2491 = vmatprep.subr.bf16.mxu0 %v1944
    %2492 = vmatpush1.bf16.msra.mxu0 %v1943
    %2493 = vmatprep.subr.bf16.mxu0 %v1946
    %2494 = vmatpush1.bf16.msra.mxu0 %v1945
    %2495 = vmatprep.subr.bf16.mxu0 0
    %2496 = vmatpush1.bf16.msra.mxu0 0
    %2497 = vmatprep.subr.bf16.mxu0 0
    %2498 = vmatpush1.bf16.msra.mxu0 0
    %2499 = vmatprep.subr.bf16.mxu0 0
    %2500 = vmatpush1.bf16.msra.mxu0 0
    %2501 = vmatprep.subr.bf16.mxu0 0
    %2502 = vmatpush1.bf16.msra.mxu0 0
    %2503 = vmatprep.subr.bf16.mxu0 0
    %2504 = vmatpush1.bf16.msra.mxu0 0
    %2505 = vmatprep.subr.bf16.mxu0 0
    %2506 = vmatpush1.bf16.msra.mxu0 0
    %2507 = vmatprep.subr.bf16.mxu0 0
    %2508 = vmatpush1.bf16.msra.mxu0 0
    %2509 = vmatprep.subr.bf16.mxu0 0
    %2510 = vmatpush1.bf16.msra.mxu0 0
    %2511 = vmatprep.subr.bf16.mxu0 0
    %2512 = vmatpush1.bf16.msra.mxu0 0
    %2513 = vmatprep.subr.bf16.mxu0 0
    %2514 = vmatpush1.bf16.msra.mxu0 0
    %2515 = vmatprep.subr.bf16.mxu0 0
    %2516 = vmatpush1.bf16.msra.mxu0 0
    %2517 = vmatprep.subr.bf16.mxu0 0
    %2518 = vmatpush1.bf16.msra.mxu0 0
    %2519 = vmatprep.mubr.bf16.mxu0 0
    %2520 = vmatmul.mubr.bf16.gmra.mrb[0].mxu0 %v2485
    %v2521 = vpop.f32.mrb[0].mxu0
    %v2522 = vadd.f32 0.0, %v2521
    %v2523 = vpop.f32.mrb[0].mxu0
    %v2524 = vadd.f32 0.0, %v2523
    %v2525 = vpop.f32.mrb[0].mxu0
    %v2526 = vpop.f32.mrb[0].mxu0
    %2527 = vdwg.mxu0
    %v2530 = vrot.slane %v2522, 4
    %v2531 = vrot.slane %v2524, 4
    %v2534 = vadd.f32 %v2305, %v2530
    %v2535 = vadd.f32 %v2306, %v2531
    %v2536 = vxor.u32 %v2534, 2147483648
    %v2537 = vxor.u32 %v2535, 2147483648
    %v2538 = vmul.f32 %v2536, 1.442695
    %v2539 = vpow.pop %v2538
    %v2540 = vmul.f32 %v2537, 1.442695
    %v2541 = vpow.pop %v2540
    %v2542 = vadd.f32 %v2539, 1.0
    %v2543 = vadd.f32 %v2541, 1.0
    %v2544 = vrcp.pop %v2542
    %v2545 = vmul.f32 1.0, %v2544
    %v2546 = vrcp.pop %v2543
    %v2547 = vmul.f32 1.0, %v2546
    %v2548 = vtanh.pop %v2535
    %v2550 = vrot.slane %v2474, 6
    %v2552 = vmul.f32 %v2545, %v2550
    %2554 = vrot.lane.b32.xlu0 %v2548, 64
    %v2555 = vpop.permute.xlu0 %2554
    %v2557 = vmul.f32 %v2545, %v2555
    %2559 = vrot.lane.b32.xlu0 %v2557, 64
    %v2560 = vpop.permute.xlu0 %2559
    %v2562 = vadd.f32 %v2552, %v2560
    %v2563 = vtanh.pop %v2562
    %2565 = vrot.lane.b32.xlu0 %v2563, 64
    %v2566 = vpop.permute.xlu0 %2565
    %v2568 = vmul.f32 %v2547, %v2566
    %v2569 = vpack.c.bf16 %v2568, %v2568
    %v2571 = vrot.slane %v2569, 2
    %v2573 = vsel %vm884, %v2571, 0
    %2575 = vmatprep.subr.bf16.mxu0 %v1940
    %2576 = vmatpush1.bf16.msra.mxu0 %v1939
    %2577 = vmatprep.subr.bf16.mxu0 %v1942
    %2578 = vmatpush1.bf16.msra.mxu0 %v1941
    %2579 = vmatprep.subr.bf16.mxu0 %v1944
    %2580 = vmatpush1.bf16.msra.mxu0 %v1943
    %2581 = vmatprep.subr.bf16.mxu0 %v1946
    %2582 = vmatpush1.bf16.msra.mxu0 %v1945
    %2583 = vmatprep.subr.bf16.mxu0 0
    %2584 = vmatpush1.bf16.msra.mxu0 0
    %2585 = vmatprep.subr.bf16.mxu0 0
    %2586 = vmatpush1.bf16.msra.mxu0 0
    %2587 = vmatprep.subr.bf16.mxu0 0
    %2588 = vmatpush1.bf16.msra.mxu0 0
    %2589 = vmatprep.subr.bf16.mxu0 0
    %2590 = vmatpush1.bf16.msra.mxu0 0
    %2591 = vmatprep.subr.bf16.mxu0 0
    %2592 = vmatpush1.bf16.msra.mxu0 0
    %2593 = vmatprep.subr.bf16.mxu0 0
    %2594 = vmatpush1.bf16.msra.mxu0 0
    %2595 = vmatprep.subr.bf16.mxu0 0
    %2596 = vmatpush1.bf16.msra.mxu0 0
    %2597 = vmatprep.subr.bf16.mxu0 0
    %2598 = vmatpush1.bf16.msra.mxu0 0
    %2599 = vmatprep.subr.bf16.mxu0 0
    %2600 = vmatpush1.bf16.msra.mxu0 0
    %2601 = vmatprep.subr.bf16.mxu0 0
    %2602 = vmatpush1.bf16.msra.mxu0 0
    %2603 = vmatprep.subr.bf16.mxu0 0
    %2604 = vmatpush1.bf16.msra.mxu0 0
    %2605 = vmatprep.subr.bf16.mxu0 0
    %2606 = vmatpush1.bf16.msra.mxu0 0
    %2607 = vmatprep.mubr.bf16.mxu0 0
    %2608 = vmatmul.mubr.bf16.gmra.mrb[0].mxu0 %v2573
    %v2609 = vpop.f32.mrb[0].mxu0
    %v2610 = vadd.f32 0.0, %v2609
    %v2611 = vpop.f32.mrb[0].mxu0
    %v2612 = vadd.f32 0.0, %v2611
    %v2613 = vpop.f32.mrb[0].mxu0
    %v2614 = vpop.f32.mrb[0].mxu0
    %2615 = vdwg.mxu0
    %v2618 = vrot.slane %v2610, 2
    %v2619 = vrot.slane %v2612, 2
    %v2622 = vadd.f32 %v2393, %v2618
    %v2623 = vadd.f32 %v2394, %v2619
    %v2624 = vxor.u32 %v2622, 2147483648
    %v2625 = vxor.u32 %v2623, 2147483648
    %v2626 = vmul.f32 %v2624, 1.442695
    %v2627 = vpow.pop %v2626
    %v2628 = vmul.f32 %v2625, 1.442695
    %v2629 = vpow.pop %v2628
    %v2630 = vadd.f32 %v2627, 1.0
    %v2631 = vadd.f32 %v2629, 1.0
    %v2632 = vrcp.pop %v2630
    %v2633 = vmul.f32 1.0, %v2632
    %v2634 = vrcp.pop %v2631
    %v2635 = vmul.f32 1.0, %v2634
    %v2636 = vtanh.pop %v2623
    %v2638 = vrot.slane %v2562, 6
    %v2640 = vmul.f32 %v2633, %v2638
    %2642 = vrot.lane.b32.xlu0 %v2636, 64
    %v2643 = vpop.permute.xlu0 %2642
    %v2645 = vmul.f32 %v2633, %v2643
    %2647 = vrot.lane.b32.xlu0 %v2645, 64
    %v2648 = vpop.permute.xlu0 %2647
    %v2650 = vadd.f32 %v2640, %v2648
    %v2651 = vtanh.pop %v2650
    %2653 = vrot.lane.b32.xlu0 %v2651, 64
    %v2654 = vpop.permute.xlu0 %2653
    %v2656 = vmul.f32 %v2635, %v2654
    %v2657 = vsel %vm1804, 1, 0
    %v2658 = vlaneseq
    %v2659 = vshrl.u32 %v2658, 7
    %v2660 = vsub.s32 0, %v2659
    %v2661 = vrot.slane %v2657, %v2660
    %vm2662 = vcmp.eq.s32.totalorder %v2661, 1
    %v2664 = vrot.slane %v2656, 6
    %v2666 = vsel %vm2662, %v2030, %v2664
    %v2668 = vrot.slane %v2568, 2
    %v2670 = vsel %vm2662, %v2122, %v2668
    %v2672 = vrot.slane %v2480, 6
    %v2674 = vsel %vm2662, %v2210, %v2672
    %v2676 = vrot.slane %v2388, 2
    %v2678 = vsel %vm2662, %v2298, %v2676
    %v2680 = vrot.slane %v2298, 6
    %v2682 = vsel %vm2662, %v2388, %v2680
    %v2684 = vrot.slane %v2210, 2
    %v2686 = vsel %vm2662, %v2480, %v2684
    %v2688 = vrot.slane %v2122, 6
    %v2690 = vsel %vm2662, %v2568, %v2688
    %v2692 = vrot.slane %v2030, 2
    %v2694 = vsel %vm2662, %v2656, %v2692
    %vm2695 = vcmask 1041408
    %v2696 = vsel %vm2695, %v2666, %v2670
    %vm2697 = vcmask 1043456
    %v2698 = vsel %vm2697, %v2696, %v2674
    %vm2699 = vcmask 1045504
    %v2700 = vsel %vm2699, %v2698, %v2678
    %v2701 = vsel %vm2695, %v2682, %v2686
    %v2702 = vsel %vm2697, %v2701, %v2690
    %v2703 = vsel %vm2699, %v2702, %v2694
    %v2704 = vld [vmem:[%s20] sm:$0xff]
    %v2705 = vld [vmem:[%s20 + $0x8] sm:$0xff]
    %v2706 = vld [vmem:[%s20 + $0x10] sm:$0xff]
    %v2707 = vld [vmem:[%s20 + $0x18] sm:$0xff]
    %v2708 = vld [vmem:[%s20 + $0x20] sm:$0xff]
    %v2709 = vld [vmem:[%s20 + $0x28] sm:$0xff]
    %v2710 = vld [vmem:[%s20 + $0x30] sm:$0xff]
    %v2711 = vld [vmem:[%s20 + $0x38] sm:$0xff]
    %v2712 = vpack.c.bf16 %v2703, %v2700
    %s2713 = scalar_lea.vmem %s21, 2
    %v2714 = vld [vmem:[%s2713] sm:$0x3]
    %v2716 = vlaneseq
    %v2717 = vshrl.u32 %v2716, 7
    %v2718 = vsub.s32 0, %v2717
    %v2719 = vrot.slane %v2714, %v2718
    %v2720 = vlaneseq
    %v2721 = vshrl.u32 %v2720, 7
    %v2722 = vsub.s32 1, %v2721
    %v2723 = vrot.slane %v2714, %v2722
    %v2734 = vunpack.c.l.b16 %v2704
    %v2735 = vunpack.c.h.b16 %v2704
    %v2736 = vunpack.c.l.b16 %v2705
    %v2737 = vunpack.c.h.b16 %v2705
    %v2738 = vunpack.c.l.b16 %v2706
    %v2739 = vunpack.c.h.b16 %v2706
    %v2740 = vunpack.c.l.b16 %v2707
    %v2741 = vunpack.c.h.b16 %v2707
    %v2742 = vunpack.c.l.b16 %v2708
    %v2743 = vunpack.c.h.b16 %v2708
    %v2744 = vunpack.c.l.b16 %v2709
    %v2745 = vunpack.c.h.b16 %v2709
    %v2746 = vunpack.c.l.b16 %v2710
    %v2747 = vunpack.c.h.b16 %v2710
    %v2748 = vunpack.c.l.b16 %v2711
    %v2749 = vunpack.c.h.b16 %v2711
    %v2750 = vpack.c.b16 %v2736, %v2734
    %v2751 = vpack.c.b16 %v2737, %v2735
    %v2752 = vpack.c.b16 %v2740, %v2738
    %v2753 = vpack.c.b16 %v2741, %v2739
    %v2754 = vpack.c.b16 %v2744, %v2742
    %v2755 = vpack.c.b16 %v2745, %v2743
    %v2756 = vpack.c.b16 %v2748, %v2746
    %v2757 = vpack.c.b16 %v2749, %v2747
    %v2767 = vsel %vm884, %v2712, 0
    %2769 = vmatprep.subr.bf16.mxu0 %v2751
    %2770 = vmatpush1.bf16.msra.mxu0 %v2750
    %2771 = vmatprep.subr.bf16.mxu0 %v2753
    %2772 = vmatpush1.bf16.msra.mxu0 %v2752
    %2773 = vmatprep.subr.bf16.mxu0 %v2755
    %2774 = vmatpush1.bf16.msra.mxu0 %v2754
    %2775 = vmatprep.subr.bf16.mxu0 %v2757
    %2776 = vmatpush1.bf16.msra.mxu0 %v2756
    %2777 = vmatprep.subr.bf16.mxu0 0
    %2778 = vmatpush1.bf16.msra.mxu0 0
    %2779 = vmatprep.subr.bf16.mxu0 0
    %2780 = vmatpush1.bf16.msra.mxu0 0
    %2781 = vmatprep.subr.bf16.mxu0 0
    %2782 = vmatpush1.bf16.msra.mxu0 0
    %2783 = vmatprep.subr.bf16.mxu0 0
    %2784 = vmatpush1.bf16.msra.mxu0 0
    %2785 = vmatprep.subr.bf16.mxu0 0
    %2786 = vmatpush1.bf16.msra.mxu0 0
    %2787 = vmatprep.subr.bf16.mxu0 0
    %2788 = vmatpush1.bf16.msra.mxu0 0
    %2789 = vmatprep.subr.bf16.mxu0 0
    %2790 = vmatpush1.bf16.msra.mxu0 0
    %2791 = vmatprep.subr.bf16.mxu0 0
    %2792 = vmatpush1.bf16.msra.mxu0 0
    %2793 = vmatprep.subr.bf16.mxu0 0
    %2794 = vmatpush1.bf16.msra.mxu0 0
    %2795 = vmatprep.subr.bf16.mxu0 0
    %2796 = vmatpush1.bf16.msra.mxu0 0
    %2797 = vmatprep.subr.bf16.mxu0 0
    %2798 = vmatpush1.bf16.msra.mxu0 0
    %2799 = vmatprep.subr.bf16.mxu0 0
    %2800 = vmatpush1.bf16.msra.mxu0 0
    %2801 = vmatprep.mubr.bf16.mxu0 0
    %2802 = vmatmul.mubr.bf16.gmra.mrb[0].mxu0 %v2767
    %v2803 = vpop.f32.mrb[0].mxu0
    %v2804 = vadd.f32 %v2719, %v2803
    %v2805 = vpop.f32.mrb[0].mxu0
    %v2806 = vadd.f32 %v2723, %v2805
    %v2807 = vpop.f32.mrb[0].mxu0
    %v2808 = vadd.f32 %v2719, %v2807
    %v2809 = vpop.f32.mrb[0].mxu0
    %v2810 = vadd.f32 %v2723, %v2809
    %2811 = vdwg.mxu0
    %s2812 = scalar_lea.vmem %s22, 64
    %v2813 = vld [vmem:[%s2812] sm:$0xff]
    %v2814 = vld [vmem:[%s2812 + $0x8] sm:$0xff]
    %v2815 = vld [vmem:[%s2812 + $0x10] sm:$0xff]
    %v2816 = vld [vmem:[%s2812 + $0x18] sm:$0xff]
    %v2817 = vld [vmem:[%s2812 + $0x20] sm:$0xff]
    %v2818 = vld [vmem:[%s2812 + $0x28] sm:$0xff]
    %v2819 = vld [vmem:[%s2812 + $0x30] sm:$0xff]
    %v2820 = vld [vmem:[%s2812 + $0x38] sm:$0xff]
    %v2823 = vrot.slane %v2808, 6
    %v2824 = vrot.slane %v2810, 6
    %v2827 = vsel %vm1905, %v2804, %v2823
    %v2828 = vsel %vm1906, %v2806, %v2824
    %v2837 = vunpack.c.l.b16 %v2813
    %v2838 = vunpack.c.h.b16 %v2813
    %v2839 = vunpack.c.l.b16 %v2814
    %v2840 = vunpack.c.h.b16 %v2814
    %v2841 = vunpack.c.l.b16 %v2815
    %v2842 = vunpack.c.h.b16 %v2815
    %v2843 = vunpack.c.l.b16 %v2816
    %v2844 = vunpack.c.h.b16 %v2816
    %v2845 = vunpack.c.l.b16 %v2817
    %v2846 = vunpack.c.h.b16 %v2817
    %v2847 = vunpack.c.l.b16 %v2818
    %v2848 = vunpack.c.h.b16 %v2818
    %v2849 = vunpack.c.l.b16 %v2819
    %v2850 = vunpack.c.h.b16 %v2819
    %v2851 = vunpack.c.l.b16 %v2820
    %v2852 = vunpack.c.h.b16 %v2820
    %v2853 = vpack.c.b16 %v2839, %v2837
    %v2854 = vpack.c.b16 %v2840, %v2838
    %v2855 = vpack.c.b16 %v2843, %v2841
    %v2856 = vpack.c.b16 %v2844, %v2842
    %v2857 = vpack.c.b16 %v2847, %v2845
    %v2858 = vpack.c.b16 %v2848, %v2846
    %v2859 = vpack.c.b16 %v2851, %v2849
    %v2860 = vpack.c.b16 %v2852, %v2850
    %2869 = vmatprep.subr.bf16.mxu0 %v2854
    %2870 = vmatpush1.bf16.msra.mxu0 %v2853
    %2871 = vmatprep.subr.bf16.mxu0 %v2856
    %2872 = vmatpush1.bf16.msra.mxu0 %v2855
    %2873 = vmatprep.subr.bf16.mxu0 %v2858
    %2874 = vmatpush1.bf16.msra.mxu0 %v2857
    %2875 = vmatprep.subr.bf16.mxu0 %v2860
    %2876 = vmatpush1.bf16.msra.mxu0 %v2859
    %2877 = vmatprep.subr.bf16.mxu0 0
    %2878 = vmatpush1.bf16.msra.mxu0 0
    %2879 = vmatprep.subr.bf16.mxu0 0
    %2880 = vmatpush1.bf16.msra.mxu0 0
    %2881 = vmatprep.subr.bf16.mxu0 0
    %2882 = vmatpush1.bf16.msra.mxu0 0
    %2883 = vmatprep.subr.bf16.mxu0 0
    %2884 = vmatpush1.bf16.msra.mxu0 0
    %2885 = vmatprep.subr.bf16.mxu0 0
    %2886 = vmatpush1.bf16.msra.mxu0 0
    %2887 = vmatprep.subr.bf16.mxu0 0
    %2888 = vmatpush1.bf16.msra.mxu0 0
    %2889 = vmatprep.subr.bf16.mxu0 0
    %2890 = vmatpush1.bf16.msra.mxu0 0
    %2891 = vmatprep.subr.bf16.mxu0 0
    %2892 = vmatpush1.bf16.msra.mxu0 0
    %2893 = vmatprep.subr.bf16.mxu0 0
    %2894 = vmatpush1.bf16.msra.mxu0 0
    %2895 = vmatprep.subr.bf16.mxu0 0
    %2896 = vmatpush1.bf16.msra.mxu0 0
    %2897 = vmatprep.subr.bf16.mxu0 0
    %2898 = vmatpush1.bf16.msra.mxu0 0
    %2899 = vmatprep.subr.bf16.mxu0 0
    %2900 = vmatpush1.bf16.msra.mxu0 0
    %2901 = vmatprep.mubr.bf16.mxu0 0
    %2902 = vmatmul.mubr.bf16.gmra.mrb[0].mxu0 %v1956
    %v2903 = vpop.f32.mrb[0].mxu0
    %v2904 = vadd.f32 0.0, %v2903
    %v2905 = vpop.f32.mrb[0].mxu0
    %v2906 = vadd.f32 0.0, %v2905
    %v2907 = vpop.f32.mrb[0].mxu0
    %v2908 = vpop.f32.mrb[0].mxu0
    %2909 = vdwg.mxu0
    %v2910 = vadd.f32 %v2827, %v2904
    %v2911 = vadd.f32 %v2828, %v2906
    %v2912 = vxor.u32 %v2910, 2147483648
    %v2913 = vxor.u32 %v2911, 2147483648
    %v2914 = vmul.f32 %v2912, 1.442695
    %v2915 = vpow.pop %v2914
    %v2916 = vmul.f32 %v2913, 1.442695
    %v2917 = vpow.pop %v2916
    %v2918 = vadd.f32 %v2915, 1.0
    %v2919 = vadd.f32 %v2917, 1.0
    %v2920 = vrcp.pop %v2918
    %v2921 = vmul.f32 1.0, %v2920
    %v2922 = vrcp.pop %v2919
    %v2923 = vmul.f32 1.0, %v2922
    %v2924 = vtanh.pop %v2911
    %v2925 = vmul.f32 %v2921, 0.0
    %2927 = vrot.lane.b32.xlu0 %v2924, 64
    %v2928 = vpop.permute.xlu0 %2927
    %v2930 = vmul.f32 %v2921, %v2928
    %2932 = vrot.lane.b32.xlu0 %v2930, 64
    %v2933 = vpop.permute.xlu0 %2932
    %v2935 = vadd.f32 %v2925, %v2933
    %v2936 = vtanh.pop %v2935
    %2938 = vrot.lane.b32.xlu0 %v2936, 64
    %v2939 = vpop.permute.xlu0 %2938
    %v2941 = vmul.f32 %v2923, %v2939
    %v2942 = vrot.slane %v2808, 2
    %v2943 = vrot.slane %v2810, 2
    %v2946 = vsel %vm1905, %v2804, %v2942
    %v2947 = vsel %vm1906, %v2806, %v2943
    %v2948 = vpack.c.bf16 %v2941, %v2941
    %v2950 = vsel %vm884, %v2948, 0
    %2952 = vmatprep.subr.bf16.mxu0 %v2854
    %2953 = vmatpush1.bf16.msra.mxu0 %v2853
    %2954 = vmatprep.subr.bf16.mxu0 %v2856
    %2955 = vmatpush1.bf16.msra.mxu0 %v2855
    %2956 = vmatprep.subr.bf16.mxu0 %v2858
    %2957 = vmatpush1.bf16.msra.mxu0 %v2857
    %2958 = vmatprep.subr.bf16.mxu0 %v2860
    %2959 = vmatpush1.bf16.msra.mxu0 %v2859
    %2960 = vmatprep.subr.bf16.mxu0 0
    %2961 = vmatpush1.bf16.msra.mxu0 0
    %2962 = vmatprep.subr.bf16.mxu0 0
    %2963 = vmatpush1.bf16.msra.mxu0 0
    %2964 = vmatprep.subr.bf16.mxu0 0
    %2965 = vmatpush1.bf16.msra.mxu0 0
    %2966 = vmatprep.subr.bf16.mxu0 0
    %2967 = vmatpush1.bf16.msra.mxu0 0
    %2968 = vmatprep.subr.bf16.mxu0 0
    %2969 = vmatpush1.bf16.msra.mxu0 0
    %2970 = vmatprep.subr.bf16.mxu0 0
    %2971 = vmatpush1.bf16.msra.mxu0 0
    %2972 = vmatprep.subr.bf16.mxu0 0
    %2973 = vmatpush1.bf16.msra.mxu0 0
    %2974 = vmatprep.subr.bf16.mxu0 0
    %2975 = vmatpush1.bf16.msra.mxu0 0
    %2976 = vmatprep.subr.bf16.mxu0 0
    %2977 = vmatpush1.bf16.msra.mxu0 0
    %2978 = vmatprep.subr.bf16.mxu0 0
    %2979 = vmatpush1.bf16.msra.mxu0 0
    %2980 = vmatprep.subr.bf16.mxu0 0
    %2981 = vmatpush1.bf16.msra.mxu0 0
    %2982 = vmatprep.subr.bf16.mxu0 0
    %2983 = vmatpush1.bf16.msra.mxu0 0
    %2984 = vmatprep.mubr.bf16.mxu0 0
    %2985 = vmatmul.mubr.bf16.gmra.mrb[0].mxu0 %v2950
    %v2986 = vpop.f32.mrb[0].mxu0
    %v2987 = vadd.f32 0.0, %v2986
    %v2988 = vpop.f32.mrb[0].mxu0
    %v2989 = vadd.f32 0.0, %v2988
    %v2990 = vpop.f32.mrb[0].mxu0
    %v2991 = vpop.f32.mrb[0].mxu0
    %2992 = vdwg.mxu0
    %v2995 = vrot.slane %v2987, 6
    %v2996 = vrot.slane %v2989, 6
    %v2999 = vadd.f32 %v2946, %v2995
    %v3000 = vadd.f32 %v2947, %v2996
    %v3001 = vxor.u32 %v2999, 2147483648
    %v3002 = vxor.u32 %v3000, 2147483648
    %v3003 = vmul.f32 %v3001, 1.442695
    %v3004 = vpow.pop %v3003
    %v3005 = vmul.f32 %v3002, 1.442695
    %v3006 = vpow.pop %v3005
    %v3007 = vadd.f32 %v3004, 1.0
    %v3008 = vadd.f32 %v3006, 1.0
    %v3009 = vrcp.pop %v3007
    %v3010 = vmul.f32 1.0, %v3009
    %v3011 = vrcp.pop %v3008
    %v3012 = vmul.f32 1.0, %v3011
    %v3013 = vtanh.pop %v3000
    %v3015 = vrot.slane %v2935, 6
    %v3017 = vmul.f32 %v3010, %v3015
    %3019 = vrot.lane.b32.xlu0 %v3013, 64
    %v3020 = vpop.permute.xlu0 %3019
    %v3022 = vmul.f32 %v3010, %v3020
    %3024 = vrot.lane.b32.xlu0 %v3022, 64
    %v3025 = vpop.permute.xlu0 %3024
    %v3027 = vadd.f32 %v3017, %v3025
    %v3028 = vtanh.pop %v3027
    %3030 = vrot.lane.b32.xlu0 %v3028, 64
    %v3031 = vpop.permute.xlu0 %3030
    %v3033 = vmul.f32 %v3012, %v3031
    %v3034 = vpack.c.bf16 %v3033, %v3033
    %v3036 = vrot.slane %v3034, 1
    %v3038 = vsel %vm884, %v3036, 0
    %3040 = vmatprep.subr.bf16.mxu0 %v2854
    %3041 = vmatpush1.bf16.msra.mxu0 %v2853
    %3042 = vmatprep.subr.bf16.mxu0 %v2856
    %3043 = vmatpush1.bf16.msra.mxu0 %v2855
    %3044 = vmatprep.subr.bf16.mxu0 %v2858
    %3045 = vmatpush1.bf16.msra.mxu0 %v2857
    %3046 = vmatprep.subr.bf16.mxu0 %v2860
    %3047 = vmatpush1.bf16.msra.mxu0 %v2859
    %3048 = vmatprep.subr.bf16.mxu0 0
    %3049 = vmatpush1.bf16.msra.mxu0 0
    %3050 = vmatprep.subr.bf16.mxu0 0
    %3051 = vmatpush1.bf16.msra.mxu0 0
    %3052 = vmatprep.subr.bf16.mxu0 0
    %3053 = vmatpush1.bf16.msra.mxu0 0
    %3054 = vmatprep.subr.bf16.mxu0 0
    %3055 = vmatpush1.bf16.msra.mxu0 0
    %3056 = vmatprep.subr.bf16.mxu0 0
    %3057 = vmatpush1.bf16.msra.mxu0 0
    %3058 = vmatprep.subr.bf16.mxu0 0
    %3059 = vmatpush1.bf16.msra.mxu0 0
    %3060 = vmatprep.subr.bf16.mxu0 0
    %3061 = vmatpush1.bf16.msra.mxu0 0
    %3062 = vmatprep.subr.bf16.mxu0 0
    %3063 = vmatpush1.bf16.msra.mxu0 0
    %3064 = vmatprep.subr.bf16.mxu0 0
    %3065 = vmatpush1.bf16.msra.mxu0 0
    %3066 = vmatprep.subr.bf16.mxu0 0
    %3067 = vmatpush1.bf16.msra.mxu0 0
    %3068 = vmatprep.subr.bf16.mxu0 0
    %3069 = vmatpush1.bf16.msra.mxu0 0
    %3070 = vmatprep.subr.bf16.mxu0 0
    %3071 = vmatpush1.bf16.msra.mxu0 0
    %3072 = vmatprep.mubr.bf16.mxu0 0
    %3073 = vmatmul.mubr.bf16.gmra.mrb[0].mxu0 %v3038
    %v3074 = vpop.f32.mrb[0].mxu0
    %v3075 = vadd.f32 0.0, %v3074
    %v3076 = vpop.f32.mrb[0].mxu0
    %v3077 = vadd.f32 0.0, %v3076
    %v3078 = vpop.f32.mrb[0].mxu0
    %v3079 = vpop.f32.mrb[0].mxu0
    %3080 = vdwg.mxu0
    %v3083 = vrot.slane %v3075, 4
    %v3084 = vrot.slane %v3077, 4
    %v3087 = vadd.f32 %v2827, %v3083
    %v3088 = vadd.f32 %v2828, %v3084
    %v3089 = vxor.u32 %v3087, 2147483648
    %v3090 = vxor.u32 %v3088, 2147483648
    %v3091 = vmul.f32 %v3089, 1.442695
    %v3092 = vpow.pop %v3091
    %v3093 = vmul.f32 %v3090, 1.442695
    %v3094 = vpow.pop %v3093
    %v3095 = vadd.f32 %v3092, 1.0
    %v3096 = vadd.f32 %v3094, 1.0
    %v3097 = vrcp.pop %v3095
    %v3098 = vmul.f32 1.0, %v3097
    %v3099 = vrcp.pop %v3096
    %v3100 = vmul.f32 1.0, %v3099
    %v3101 = vtanh.pop %v3088
    %v3103 = vrot.slane %v3027, 6
    %v3105 = vmul.f32 %v3098, %v3103
    %3107 = vrot.lane.b32.xlu0 %v3101, 64
    %v3108 = vpop.permute.xlu0 %3107
    %v3110 = vmul.f32 %v3098, %v3108
    %3112 = vrot.lane.b32.xlu0 %v3110, 64
    %v3113 = vpop.permute.xlu0 %3112
    %v3115 = vadd.f32 %v3105, %v3113
    %v3116 = vtanh.pop %v3115
    %3118 = vrot.lane.b32.xlu0 %v3116, 64
    %v3119 = vpop.permute.xlu0 %3118
    %v3121 = vmul.f32 %v3100, %v3119
    %v3122 = vpack.c.bf16 %v3121, %v3121
    %v3124 = vrot.slane %v3122, 2
    %v3126 = vsel %vm884, %v3124, 0
    %3128 = vmatprep.subr.bf16.mxu0 %v2854
    %3129 = vmatpush1.bf16.msra.mxu0 %v2853
    %3130 = vmatprep.subr.bf16.mxu0 %v2856
    %3131 = vmatpush1.bf16.msra.mxu0 %v2855
    %3132 = vmatprep.subr.bf16.mxu0 %v2858
    %3133 = vmatpush1.bf16.msra.mxu0 %v2857
    %3134 = vmatprep.subr.bf16.mxu0 %v2860
    %3135 = vmatpush1.bf16.msra.mxu0 %v2859
    %3136 = vmatprep.subr.bf16.mxu0 0
    %3137 = vmatpush1.bf16.msra.mxu0 0
    %3138 = vmatprep.subr.bf16.mxu0 0
    %3139 = vmatpush1.bf16.msra.mxu0 0
    %3140 = vmatprep.subr.bf16.mxu0 0
    %3141 = vmatpush1.bf16.msra.mxu0 0
    %3142 = vmatprep.subr.bf16.mxu0 0
    %3143 = vmatpush1.bf16.msra.mxu0 0
    %3144 = vmatprep.subr.bf16.mxu0 0
    %3145 = vmatpush1.bf16.msra.mxu0 0
    %3146 = vmatprep.subr.bf16.mxu0 0
    %3147 = vmatpush1.bf16.msra.mxu0 0
    %3148 = vmatprep.subr.bf16.mxu0 0
    %3149 = vmatpush1.bf16.msra.mxu0 0
    %3150 = vmatprep.subr.bf16.mxu0 0
    %3151 = vmatpush1.bf16.msra.mxu0 0
    %3152 = vmatprep.subr.bf16.mxu0 0
    %3153 = vmatpush1.bf16.msra.mxu0 0
    %3154 = vmatprep.subr.bf16.mxu0 0
    %3155 = vmatpush1.bf16.msra.mxu0 0
    %3156 = vmatprep.subr.bf16.mxu0 0
    %3157 = vmatpush1.bf16.msra.mxu0 0
    %3158 = vmatprep.subr.bf16.mxu0 0
    %3159 = vmatpush1.bf16.msra.mxu0 0
    %3160 = vmatprep.mubr.bf16.mxu0 0
    %3161 = vmatmul.mubr.bf16.gmra.mrb[0].mxu0 %v3126
    %v3162 = vpop.f32.mrb[0].mxu0
    %v3163 = vadd.f32 0.0, %v3162
    %v3164 = vpop.f32.mrb[0].mxu0
    %v3165 = vadd.f32 0.0, %v3164
    %v3166 = vpop.f32.mrb[0].mxu0
    %v3167 = vpop.f32.mrb[0].mxu0
    %3168 = vdwg.mxu0
    %v3171 = vrot.slane %v3163, 2
    %v3172 = vrot.slane %v3165, 2
    %v3175 = vadd.f32 %v2946, %v3171
    %v3176 = vadd.f32 %v2947, %v3172
    %v3177 = vxor.u32 %v3175, 2147483648
    %v3178 = vxor.u32 %v3176, 2147483648
    %v3179 = vmul.f32 %v3177, 1.442695
    %v3180 = vpow.pop %v3179
    %v3181 = vmul.f32 %v3178, 1.442695
    %v3182 = vpow.pop %v3181
    %v3183 = vadd.f32 %v3180, 1.0
    %v3184 = vadd.f32 %v3182, 1.0
    %v3185 = vrcp.pop %v3183
    %v3186 = vmul.f32 1.0, %v3185
    %v3187 = vrcp.pop %v3184
    %v3188 = vmul.f32 1.0, %v3187
    %v3189 = vtanh.pop %v3176
    %v3191 = vrot.slane %v3115, 6
    %v3193 = vmul.f32 %v3186, %v3191
    %3195 = vrot.lane.b32.xlu0 %v3189, 64
    %v3196 = vpop.permute.xlu0 %3195
    %v3198 = vmul.f32 %v3186, %v3196
    %3200 = vrot.lane.b32.xlu0 %v3198, 64
    %v3201 = vpop.permute.xlu0 %3200
    %v3203 = vadd.f32 %v3193, %v3201
    %v3204 = vtanh.pop %v3203
    %3206 = vrot.lane.b32.xlu0 %v3204, 64
    %v3207 = vpop.permute.xlu0 %3206
    %v3209 = vmul.f32 %v3188, %v3207
    %v3212 = vrot.slane %v2804, 6
    %v3213 = vrot.slane %v2806, 6
    %v3216 = vsel %vm1905, %v2808, %v3212
    %v3217 = vsel %vm1906, %v2810, %v3213
    %v3218 = vpack.c.bf16 %v3209, %v3209
    %v3220 = vrot.slane %v3218, 3
    %v3222 = vsel %vm884, %v3220, 0
    %3224 = vmatprep.subr.bf16.mxu0 %v2854
    %3225 = vmatpush1.bf16.msra.mxu0 %v2853
    %3226 = vmatprep.subr.bf16.mxu0 %v2856
    %3227 = vmatpush1.bf16.msra.mxu0 %v2855
    %3228 = vmatprep.subr.bf16.mxu0 %v2858
    %3229 = vmatpush1.bf16.msra.mxu0 %v2857
    %3230 = vmatprep.subr.bf16.mxu0 %v2860
    %3231 = vmatpush1.bf16.msra.mxu0 %v2859
    %3232 = vmatprep.subr.bf16.mxu0 0
    %3233 = vmatpush1.bf16.msra.mxu0 0
    %3234 = vmatprep.subr.bf16.mxu0 0
    %3235 = vmatpush1.bf16.msra.mxu0 0
    %3236 = vmatprep.subr.bf16.mxu0 0
    %3237 = vmatpush1.bf16.msra.mxu0 0
    %3238 = vmatprep.subr.bf16.mxu0 0
    %3239 = vmatpush1.bf16.msra.mxu0 0
    %3240 = vmatprep.subr.bf16.mxu0 0
    %3241 = vmatpush1.bf16.msra.mxu0 0
    %3242 = vmatprep.subr.bf16.mxu0 0
    %3243 = vmatpush1.bf16.msra.mxu0 0
    %3244 = vmatprep.subr.bf16.mxu0 0
    %3245 = vmatpush1.bf16.msra.mxu0 0
    %3246 = vmatprep.subr.bf16.mxu0 0
    %3247 = vmatpush1.bf16.msra.mxu0 0
    %3248 = vmatprep.subr.bf16.mxu0 0
    %3249 = vmatpush1.bf16.msra.mxu0 0
    %3250 = vmatprep.subr.bf16.mxu0 0
    %3251 = vmatpush1.bf16.msra.mxu0 0
    %3252 = vmatprep.subr.bf16.mxu0 0
    %3253 = vmatpush1.bf16.msra.mxu0 0
    %3254 = vmatprep.subr.bf16.mxu0 0
    %3255 = vmatpush1.bf16.msra.mxu0 0
    %3256 = vmatprep.mubr.bf16.mxu0 0
    %3257 = vmatmul.mubr.bf16.gmra.mrb[0].mxu0 %v3222
    %v3258 = vpop.f32.mrb[0].mxu0
    %v3259 = vadd.f32 0.0, %v3258
    %v3260 = vpop.f32.mrb[0].mxu0
    %v3261 = vadd.f32 0.0, %v3260
    %v3262 = vpop.f32.mrb[0].mxu0
    %v3263 = vpop.f32.mrb[0].mxu0
    %3264 = vdwg.mxu0
    %v3265 = vadd.f32 %v3216, %v3259
    %v3266 = vadd.f32 %v3217, %v3261
    %v3267 = vxor.u32 %v3265, 2147483648
    %v3268 = vxor.u32 %v3266, 2147483648
    %v3269 = vmul.f32 %v3267, 1.442695
    %v3270 = vpow.pop %v3269
    %v3271 = vmul.f32 %v3268, 1.442695
    %v3272 = vpow.pop %v3271
    %v3273 = vadd.f32 %v3270, 1.0
    %v3274 = vadd.f32 %v3272, 1.0
    %v3275 = vrcp.pop %v3273
    %v3276 = vmul.f32 1.0, %v3275
    %v3277 = vrcp.pop %v3274
    %v3278 = vmul.f32 1.0, %v3277
    %v3279 = vtanh.pop %v3266
    %v3281 = vrot.slane %v3203, 6
    %v3283 = vmul.f32 %v3276, %v3281
    %3285 = vrot.lane.b32.xlu0 %v3279, 64
    %v3286 = vpop.permute.xlu0 %3285
    %v3288 = vmul.f32 %v3276, %v3286
    %3290 = vrot.lane.b32.xlu0 %v3288, 64
    %v3291 = vpop.permute.xlu0 %3290
    %v3293 = vadd.f32 %v3283, %v3291
    %v3294 = vtanh.pop %v3293
    %3296 = vrot.lane.b32.xlu0 %v3294, 64
    %v3297 = vpop.permute.xlu0 %3296
    %v3299 = vmul.f32 %v3278, %v3297
    %v3300 = vrot.slane %v2804, 2
    %v3301 = vrot.slane %v2806, 2
    %v3304 = vsel %vm1905, %v2808, %v3300
    %v3305 = vsel %vm1906, %v2810, %v3301
    %v3306 = vpack.c.bf16 %v3299, %v3299
    %v3308 = vsel %vm884, %v3306, 0
    %3310 = vmatprep.subr.bf16.mxu0 %v2854
    %3311 = vmatpush1.bf16.msra.mxu0 %v2853
    %3312 = vmatprep.subr.bf16.mxu0 %v2856
    %3313 = vmatpush1.bf16.msra.mxu0 %v2855
    %3314 = vmatprep.subr.bf16.mxu0 %v2858
    %3315 = vmatpush1.bf16.msra.mxu0 %v2857
    %3316 = vmatprep.subr.bf16.mxu0 %v2860
    %3317 = vmatpush1.bf16.msra.mxu0 %v2859
    %3318 = vmatprep.subr.bf16.mxu0 0
    %3319 = vmatpush1.bf16.msra.mxu0 0
    %3320 = vmatprep.subr.bf16.mxu0 0
    %3321 = vmatpush1.bf16.msra.mxu0 0
    %3322 = vmatprep.subr.bf16.mxu0 0
    %3323 = vmatpush1.bf16.msra.mxu0 0
    %3324 = vmatprep.subr.bf16.mxu0 0
    %3325 = vmatpush1.bf16.msra.mxu0 0
    %3326 = vmatprep.subr.bf16.mxu0 0
    %3327 = vmatpush1.bf16.msra.mxu0 0
    %3328 = vmatprep.subr.bf16.mxu0 0
    %3329 = vmatpush1.bf16.msra.mxu0 0
    %3330 = vmatprep.subr.bf16.mxu0 0
    %3331 = vmatpush1.bf16.msra.mxu0 0
    %3332 = vmatprep.subr.bf16.mxu0 0
    %3333 = vmatpush1.bf16.msra.mxu0 0
    %3334 = vmatprep.subr.bf16.mxu0 0
    %3335 = vmatpush1.bf16.msra.mxu0 0
    %3336 = vmatprep.subr.bf16.mxu0 0
    %3337 = vmatpush1.bf16.msra.mxu0 0
    %3338 = vmatprep.subr.bf16.mxu0 0
    %3339 = vmatpush1.bf16.msra.mxu0 0
    %3340 = vmatprep.subr.bf16.mxu0 0
    %3341 = vmatpush1.bf16.msra.mxu0 0
    %3342 = vmatprep.mubr.bf16.mxu0 0
    %3343 = vmatmul.mubr.bf16.gmra.mrb[0].mxu0 %v3308
    %v3344 = vpop.f32.mrb[0].mxu0
    %v3345 = vadd.f32 0.0, %v3344
    %v3346 = vpop.f32.mrb[0].mxu0
    %v3347 = vadd.f32 0.0, %v3346
    %v3348 = vpop.f32.mrb[0].mxu0
    %v3349 = vpop.f32.mrb[0].mxu0
    %3350 = vdwg.mxu0
    %v3353 = vrot.slane %v3345, 6
    %v3354 = vrot.slane %v3347, 6
    %v3357 = vadd.f32 %v3304, %v3353
    %v3358 = vadd.f32 %v3305, %v3354
    %v3359 = vxor.u32 %v3357, 2147483648
    %v3360 = vxor.u32 %v3358, 2147483648
    %v3361 = vmul.f32 %v3359, 1.442695
    %v3362 = vpow.pop %v3361
    %v3363 = vmul.f32 %v3360, 1.442695
    %v3364 = vpow.pop %v3363
    %v3365 = vadd.f32 %v3362, 1.0
    %v3366 = vadd.f32 %v3364, 1.0
    %v3367 = vrcp.pop %v3365
    %v3368 = vmul.f32 1.0, %v3367
    %v3369 = vrcp.pop %v3366
    %v3370 = vmul.f32 1.0, %v3369
    %v3371 = vtanh.pop %v3358
    %v3373 = vrot.slane %v3293, 6
    %v3375 = vmul.f32 %v3368, %v3373
    %3377 = vrot.lane.b32.xlu0 %v3371, 64
    %v3378 = vpop.permute.xlu0 %3377
    %v3380 = vmul.f32 %v3368, %v3378
    %3382 = vrot.lane.b32.xlu0 %v3380, 64
    %v3383 = vpop.permute.xlu0 %3382
    %v3385 = vadd.f32 %v3375, %v3383
    %v3386 = vtanh.pop %v3385
    %3388 = vrot.lane.b32.xlu0 %v3386, 64
    %v3389 = vpop.permute.xlu0 %3388
    %v3391 = vmul.f32 %v3370, %v3389
    %v3392 = vpack.c.bf16 %v3391, %v3391
    %v3394 = vrot.slane %v3392, 1
    %v3396 = vsel %vm884, %v3394, 0
    %3398 = vmatprep.subr.bf16.mxu0 %v2854
    %3399 = vmatpush1.bf16.msra.mxu0 %v2853
    %3400 = vmatprep.subr.bf16.mxu0 %v2856
    %3401 = vmatpush1.bf16.msra.mxu0 %v2855
    %3402 = vmatprep.subr.bf16.mxu0 %v2858
    %3403 = vmatpush1.bf16.msra.mxu0 %v2857
    %3404 = vmatprep.subr.bf16.mxu0 %v2860
    %3405 = vmatpush1.bf16.msra.mxu0 %v2859
    %3406 = vmatprep.subr.bf16.mxu0 0
    %3407 = vmatpush1.bf16.msra.mxu0 0
    %3408 = vmatprep.subr.bf16.mxu0 0
    %3409 = vmatpush1.bf16.msra.mxu0 0
    %3410 = vmatprep.subr.bf16.mxu0 0
    %3411 = vmatpush1.bf16.msra.mxu0 0
    %3412 = vmatprep.subr.bf16.mxu0 0
    %3413 = vmatpush1.bf16.msra.mxu0 0
    %3414 = vmatprep.subr.bf16.mxu0 0
    %3415 = vmatpush1.bf16.msra.mxu0 0
    %3416 = vmatprep.subr.bf16.mxu0 0
    %3417 = vmatpush1.bf16.msra.mxu0 0
    %3418 = vmatprep.subr.bf16.mxu0 0
    %3419 = vmatpush1.bf16.msra.mxu0 0
    %3420 = vmatprep.subr.bf16.mxu0 0
    %3421 = vmatpush1.bf16.msra.mxu0 0
    %3422 = vmatprep.subr.bf16.mxu0 0
    %3423 = vmatpush1.bf16.msra.mxu0 0
    %3424 = vmatprep.subr.bf16.mxu0 0
    %3425 = vmatpush1.bf16.msra.mxu0 0
    %3426 = vmatprep.subr.bf16.mxu0 0
    %3427 = vmatpush1.bf16.msra.mxu0 0
    %3428 = vmatprep.subr.bf16.mxu0 0
    %3429 = vmatpush1.bf16.msra.mxu0 0
    %3430 = vmatprep.mubr.bf16.mxu0 0
    %3431 = vmatmul.mubr.bf16.gmra.mrb[0].mxu0 %v3396
    %v3432 = vpop.f32.mrb[0].mxu0
    %v3433 = vadd.f32 0.0, %v3432
    %v3434 = vpop.f32.mrb[0].mxu0
    %v3435 = vadd.f32 0.0, %v3434
    %v3436 = vpop.f32.mrb[0].mxu0
    %v3437 = vpop.f32.mrb[0].mxu0
    %3438 = vdwg.mxu0
    %v3441 = vrot.slane %v3433, 4
    %v3442 = vrot.slane %v3435, 4
    %v3445 = vadd.f32 %v3216, %v3441
    %v3446 = vadd.f32 %v3217, %v3442
    %v3447 = vxor.u32 %v3445, 2147483648
    %v3448 = vxor.u32 %v3446, 2147483648
    %v3449 = vmul.f32 %v3447, 1.442695
    %v3450 = vpow.pop %v3449
    %v3451 = vmul.f32 %v3448, 1.442695
    %v3452 = vpow.pop %v3451
    %v3453 = vadd.f32 %v3450, 1.0
    %v3454 = vadd.f32 %v3452, 1.0
    %v3455 = vrcp.pop %v3453
    %v3456 = vmul.f32 1.0, %v3455
    %v3457 = vrcp.pop %v3454
    %v3458 = vmul.f32 1.0, %v3457
    %v3459 = vtanh.pop %v3446
    %v3461 = vrot.slane %v3385, 6
    %v3463 = vmul.f32 %v3456, %v3461
    %3465 = vrot.lane.b32.xlu0 %v3459, 64
    %v3466 = vpop.permute.xlu0 %3465
    %v3468 = vmul.f32 %v3456, %v3466
    %3470 = vrot.lane.b32.xlu0 %v3468, 64
    %v3471 = vpop.permute.xlu0 %3470
    %v3473 = vadd.f32 %v3463, %v3471
    %v3474 = vtanh.pop %v3473
    %3476 = vrot.lane.b32.xlu0 %v3474, 64
    %v3477 = vpop.permute.xlu0 %3476
    %v3479 = vmul.f32 %v3458, %v3477
    %v3480 = vpack.c.bf16 %v3479, %v3479
    %v3482 = vrot.slane %v3480, 2
    %v3484 = vsel %vm884, %v3482, 0
    %3486 = vmatprep.subr.bf16.mxu0 %v2854
    %3487 = vmatpush1.bf16.msra.mxu0 %v2853
    %3488 = vmatprep.subr.bf16.mxu0 %v2856
    %3489 = vmatpush1.bf16.msra.mxu0 %v2855
    %3490 = vmatprep.subr.bf16.mxu0 %v2858
    %3491 = vmatpush1.bf16.msra.mxu0 %v2857
    %3492 = vmatprep.subr.bf16.mxu0 %v2860
    %3493 = vmatpush1.bf16.msra.mxu0 %v2859
    %3494 = vmatprep.subr.bf16.mxu0 0
    %3495 = vmatpush1.bf16.msra.mxu0 0
    %3496 = vmatprep.subr.bf16.mxu0 0
    %3497 = vmatpush1.bf16.msra.mxu0 0
    %3498 = vmatprep.subr.bf16.mxu0 0
    %3499 = vmatpush1.bf16.msra.mxu0 0
    %3500 = vmatprep.subr.bf16.mxu0 0
    %3501 = vmatpush1.bf16.msra.mxu0 0
    %3502 = vmatprep.subr.bf16.mxu0 0
    %3503 = vmatpush1.bf16.msra.mxu0 0
    %3504 = vmatprep.subr.bf16.mxu0 0
    %3505 = vmatpush1.bf16.msra.mxu0 0
    %3506 = vmatprep.subr.bf16.mxu0 0
    %3507 = vmatpush1.bf16.msra.mxu0 0
    %3508 = vmatprep.subr.bf16.mxu0 0
    %3509 = vmatpush1.bf16.msra.mxu0 0
    %3510 = vmatprep.subr.bf16.mxu0 0
    %3511 = vmatpush1.bf16.msra.mxu0 0
    %3512 = vmatprep.subr.bf16.mxu0 0
    %3513 = vmatpush1.bf16.msra.mxu0 0
    %3514 = vmatprep.subr.bf16.mxu0 0
    %3515 = vmatpush1.bf16.msra.mxu0 0
    %3516 = vmatprep.subr.bf16.mxu0 0
    %3517 = vmatpush1.bf16.msra.mxu0 0
    %3518 = vmatprep.mubr.bf16.mxu0 0
    %3519 = vmatmul.mubr.bf16.gmra.mrb[0].mxu0 %v3484
    %v3520 = vpop.f32.mrb[0].mxu0
    %v3521 = vadd.f32 0.0, %v3520
    %v3522 = vpop.f32.mrb[0].mxu0
    %v3523 = vadd.f32 0.0, %v3522
    %v3524 = vpop.f32.mrb[0].mxu0
    %v3525 = vpop.f32.mrb[0].mxu0
    %3526 = vdwg.mxu0
    %v3529 = vrot.slane %v3521, 2
    %v3530 = vrot.slane %v3523, 2
    %v3533 = vadd.f32 %v3304, %v3529
    %v3534 = vadd.f32 %v3305, %v3530
    %v3535 = vxor.u32 %v3533, 2147483648
    %v3536 = vxor.u32 %v3534, 2147483648
    %v3537 = vmul.f32 %v3535, 1.442695
    %v3538 = vpow.pop %v3537
    %v3539 = vmul.f32 %v3536, 1.442695
    %v3540 = vpow.pop %v3539
    %v3541 = vadd.f32 %v3538, 1.0
    %v3542 = vadd.f32 %v3540, 1.0
    %v3543 = vrcp.pop %v3541
    %v3544 = vmul.f32 1.0, %v3543
    %v3545 = vrcp.pop %v3542
    %v3546 = vmul.f32 1.0, %v3545
    %v3547 = vtanh.pop %v3534
    %v3549 = vrot.slane %v3473, 6
    %v3551 = vmul.f32 %v3544, %v3549
    %3553 = vrot.lane.b32.xlu0 %v3547, 64
    %v3554 = vpop.permute.xlu0 %3553
    %v3556 = vmul.f32 %v3544, %v3554
    %3558 = vrot.lane.b32.xlu0 %v3556, 64
    %v3559 = vpop.permute.xlu0 %3558
    %v3561 = vadd.f32 %v3551, %v3559
    %v3562 = vtanh.pop %v3561
    %3564 = vrot.lane.b32.xlu0 %v3562, 64
    %v3565 = vpop.permute.xlu0 %3564
    %v3567 = vmul.f32 %v3546, %v3565
    %v3569 = vrot.slane %v3567, 6
    %v3571 = vsel %vm2662, %v2941, %v3569
    %v3573 = vrot.slane %v3479, 2
    %v3575 = vsel %vm2662, %v3033, %v3573
    %v3577 = vrot.slane %v3391, 6
    %v3579 = vsel %vm2662, %v3121, %v3577
    %v3581 = vrot.slane %v3299, 2
    %v3583 = vsel %vm2662, %v3209, %v3581
    %v3585 = vrot.slane %v3209, 6
    %v3587 = vsel %vm2662, %v3299, %v3585
    %v3589 = vrot.slane %v3121, 2
    %v3591 = vsel %vm2662, %v3391, %v3589
    %v3593 = vrot.slane %v3033, 6
    %v3595 = vsel %vm2662, %v3479, %v3593
    %v3597 = vrot.slane %v2941, 2
    %v3599 = vsel %vm2662, %v3567, %v3597
    %v3600 = vsel %vm2695, %v3571, %v3575
    %v3601 = vsel %vm2697, %v3600, %v3579
    %v3602 = vsel %vm2699, %v3601, %v3583
    %v3603 = vsel %vm2695, %v3587, %v3591
    %v3604 = vsel %vm2697, %v3603, %v3595
    %v3605 = vsel %vm2699, %v3604, %v3599
    %s3606 = scalar_lea.vmem %s20, 64
    %v3607 = vld [vmem:[%s3606] sm:$0xff]
    %v3608 = vld [vmem:[%s3606 + $0x8] sm:$0xff]
    %v3609 = vld [vmem:[%s3606 + $0x10] sm:$0xff]
    %v3610 = vld [vmem:[%s3606 + $0x18] sm:$0xff]
    %v3611 = vld [vmem:[%s3606 + $0x20] sm:$0xff]
    %v3612 = vld [vmem:[%s3606 + $0x28] sm:$0xff]
    %v3613 = vld [vmem:[%s3606 + $0x30] sm:$0xff]
    %v3614 = vld [vmem:[%s3606 + $0x38] sm:$0xff]
    %v3615 = vpack.c.bf16 %v3605, %v3602
    %s3616 = scalar_lea.vmem %s21, 4
    %v3617 = vld [vmem:[%s3616] sm:$0x3]
    %v3619 = vlaneseq
    %v3620 = vshrl.u32 %v3619, 7
    %v3621 = vsub.s32 0, %v3620
    %v3622 = vrot.slane %v3617, %v3621
    %v3623 = vlaneseq
    %v3624 = vshrl.u32 %v3623, 7
    %v3625 = vsub.s32 1, %v3624
    %v3626 = vrot.slane %v3617, %v3625
    %v3637 = vunpack.c.l.b16 %v3607
    %v3638 = vunpack.c.h.b16 %v3607
    %v3639 = vunpack.c.l.b16 %v3608
    %v3640 = vunpack.c.h.b16 %v3608
    %v3641 = vunpack.c.l.b16 %v3609
    %v3642 = vunpack.c.h.b16 %v3609
    %v3643 = vunpack.c.l.b16 %v3610
    %v3644 = vunpack.c.h.b16 %v3610
    %v3645 = vunpack.c.l.b16 %v3611
    %v3646 = vunpack.c.h.b16 %v3611
    %v3647 = vunpack.c.l.b16 %v3612
    %v3648 = vunpack.c.h.b16 %v3612
    %v3649 = vunpack.c.l.b16 %v3613
    %v3650 = vunpack.c.h.b16 %v3613
    %v3651 = vunpack.c.l.b16 %v3614
    %v3652 = vunpack.c.h.b16 %v3614
    %v3653 = vpack.c.b16 %v3639, %v3637
    %v3654 = vpack.c.b16 %v3640, %v3638
    %v3655 = vpack.c.b16 %v3643, %v3641
    %v3656 = vpack.c.b16 %v3644, %v3642
    %v3657 = vpack.c.b16 %v3647, %v3645
    %v3658 = vpack.c.b16 %v3648, %v3646
    %v3659 = vpack.c.b16 %v3651, %v3649
    %v3660 = vpack.c.b16 %v3652, %v3650
    %v3670 = vsel %vm884, %v3615, 0
    %3672 = vmatprep.subr.bf16.mxu0 %v3654
    %3673 = vmatpush1.bf16.msra.mxu0 %v3653
    %3674 = vmatprep.subr.bf16.mxu0 %v3656
    %3675 = vmatpush1.bf16.msra.mxu0 %v3655
    %3676 = vmatprep.subr.bf16.mxu0 %v3658
    %3677 = vmatpush1.bf16.msra.mxu0 %v3657
    %3678 = vmatprep.subr.bf16.mxu0 %v3660
    %3679 = vmatpush1.bf16.msra.mxu0 %v3659
    %3680 = vmatprep.subr.bf16.mxu0 0
    %3681 = vmatpush1.bf16.msra.mxu0 0
    %3682 = vmatprep.subr.bf16.mxu0 0
    %3683 = vmatpush1.bf16.msra.mxu0 0
    %3684 = vmatprep.subr.bf16.mxu0 0
    %3685 = vmatpush1.bf16.msra.mxu0 0
    %3686 = vmatprep.subr.bf16.mxu0 0
    %3687 = vmatpush1.bf16.msra.mxu0 0
    %3688 = vmatprep.subr.bf16.mxu0 0
    %3689 = vmatpush1.bf16.msra.mxu0 0
    %3690 = vmatprep.subr.bf16.mxu0 0
    %3691 = vmatpush1.bf16.msra.mxu0 0
    %3692 = vmatprep.subr.bf16.mxu0 0
    %3693 = vmatpush1.bf16.msra.mxu0 0
    %3694 = vmatprep.subr.bf16.mxu0 0
    %3695 = vmatpush1.bf16.msra.mxu0 0
    %3696 = vmatprep.subr.bf16.mxu0 0
    %3697 = vmatpush1.bf16.msra.mxu0 0
    %3698 = vmatprep.subr.bf16.mxu0 0
    %3699 = vmatpush1.bf16.msra.mxu0 0
    %3700 = vmatprep.subr.bf16.mxu0 0
    %3701 = vmatpush1.bf16.msra.mxu0 0
    %3702 = vmatprep.subr.bf16.mxu0 0
    %3703 = vmatpush1.bf16.msra.mxu0 0
    %3704 = vmatprep.mubr.bf16.mxu0 0
    %3705 = vmatmul.mubr.bf16.gmra.mrb[0].mxu0 %v3670
    %v3706 = vpop.f32.mrb[0].mxu0
    %v3707 = vadd.f32 %v3622, %v3706
    %v3708 = vpop.f32.mrb[0].mxu0
    %v3709 = vadd.f32 %v3626, %v3708
    %v3710 = vpop.f32.mrb[0].mxu0
    %v3711 = vadd.f32 %v3622, %v3710
    %v3712 = vpop.f32.mrb[0].mxu0
    %v3713 = vadd.f32 %v3626, %v3712
    %3714 = vdwg.mxu0
    %s3715 = scalar_lea.vmem %s22, 128
    %v3716 = vld [vmem:[%s3715] sm:$0xff]
    %v3717 = vld [vmem:[%s3715 + $0x8] sm:$0xff]
    %v3718 = vld [vmem:[%s3715 + $0x10] sm:$0xff]
    %v3719 = vld [vmem:[%s3715 + $0x18] sm:$0xff]
    %v3720 = vld [vmem:[%s3715 + $0x20] sm:$0xff]
    %v3721 = vld [vmem:[%s3715 + $0x28] sm:$0xff]
    %v3722 = vld [vmem:[%s3715 + $0x30] sm:$0xff]
    %v3723 = vld [vmem:[%s3715 + $0x38] sm:$0xff]
    %v3726 = vrot.slane %v3711, 6
    %v3727 = vrot.slane %v3713, 6
    %v3730 = vsel %vm1905, %v3707, %v3726
    %v3731 = vsel %vm1906, %v3709, %v3727
    %v3740 = vunpack.c.l.b16 %v3716
    %v3741 = vunpack.c.h.b16 %v3716
    %v3742 = vunpack.c.l.b16 %v3717
    %v3743 = vunpack.c.h.b16 %v3717
    %v3744 = vunpack.c.l.b16 %v3718
    %v3745 = vunpack.c.h.b16 %v3718
    %v3746 = vunpack.c.l.b16 %v3719
    %v3747 = vunpack.c.h.b16 %v3719
    %v3748 = vunpack.c.l.b16 %v3720
    %v3749 = vunpack.c.h.b16 %v3720
    %v3750 = vunpack.c.l.b16 %v3721
    %v3751 = vunpack.c.h.b16 %v3721
    %v3752 = vunpack.c.l.b16 %v3722
    %v3753 = vunpack.c.h.b16 %v3722
    %v3754 = vunpack.c.l.b16 %v3723
    %v3755 = vunpack.c.h.b16 %v3723
    %v3756 = vpack.c.b16 %v3742, %v3740
    %v3757 = vpack.c.b16 %v3743, %v3741
    %v3758 = vpack.c.b16 %v3746, %v3744
    %v3759 = vpack.c.b16 %v3747, %v3745
    %v3760 = vpack.c.b16 %v3750, %v3748
    %v3761 = vpack.c.b16 %v3751, %v3749
    %v3762 = vpack.c.b16 %v3754, %v3752
    %v3763 = vpack.c.b16 %v3755, %v3753
    %3772 = vmatprep.subr.bf16.mxu0 %v3757
    %3773 = vmatpush1.bf16.msra.mxu0 %v3756
    %3774 = vmatprep.subr.bf16.mxu0 %v3759
    %3775 = vmatpush1.bf16.msra.mxu0 %v3758
    %3776 = vmatprep.subr.bf16.mxu0 %v3761
    %3777 = vmatpush1.bf16.msra.mxu0 %v3760
    %3778 = vmatprep.subr.bf16.mxu0 %v3763
    %3779 = vmatpush1.bf16.msra.mxu0 %v3762
    %3780 = vmatprep.subr.bf16.mxu0 0
    %3781 = vmatpush1.bf16.msra.mxu0 0
    %3782 = vmatprep.subr.bf16.mxu0 0
    %3783 = vmatpush1.bf16.msra.mxu0 0
    %3784 = vmatprep.subr.bf16.mxu0 0
    %3785 = vmatpush1.bf16.msra.mxu0 0
    %3786 = vmatprep.subr.bf16.mxu0 0
    %3787 = vmatpush1.bf16.msra.mxu0 0
    %3788 = vmatprep.subr.bf16.mxu0 0
    %3789 = vmatpush1.bf16.msra.mxu0 0
    %3790 = vmatprep.subr.bf16.mxu0 0
    %3791 = vmatpush1.bf16.msra.mxu0 0
    %3792 = vmatprep.subr.bf16.mxu0 0
    %3793 = vmatpush1.bf16.msra.mxu0 0
    %3794 = vmatprep.subr.bf16.mxu0 0
    %3795 = vmatpush1.bf16.msra.mxu0 0
    %3796 = vmatprep.subr.bf16.mxu0 0
    %3797 = vmatpush1.bf16.msra.mxu0 0
    %3798 = vmatprep.subr.bf16.mxu0 0
    %3799 = vmatpush1.bf16.msra.mxu0 0
    %3800 = vmatprep.subr.bf16.mxu0 0
    %3801 = vmatpush1.bf16.msra.mxu0 0
    %3802 = vmatprep.subr.bf16.mxu0 0
    %3803 = vmatpush1.bf16.msra.mxu0 0
    %3804 = vmatprep.mubr.bf16.mxu0 0
    %3805 = vmatmul.mubr.bf16.gmra.mrb[0].mxu0 %v1956
    %v3806 = vpop.f32.mrb[0].mxu0
    %v3807 = vadd.f32 0.0, %v3806
    %v3808 = vpop.f32.mrb[0].mxu0
    %v3809 = vadd.f32 0.0, %v3808
    %v3810 = vpop.f32.mrb[0].mxu0
    %v3811 = vpop.f32.mrb[0].mxu0
    %3812 = vdwg.mxu0
    %v3813 = vadd.f32 %v3730, %v3807
    %v3814 = vadd.f32 %v3731, %v3809
    %v3815 = vxor.u32 %v3813, 2147483648
    %v3816 = vxor.u32 %v3814, 2147483648
    %v3817 = vmul.f32 %v3815, 1.442695
    %v3818 = vpow.pop %v3817
    %v3819 = vmul.f32 %v3816, 1.442695
    %v3820 = vpow.pop %v3819
    %v3821 = vadd.f32 %v3818, 1.0
    %v3822 = vadd.f32 %v3820, 1.0
    %v3823 = vrcp.pop %v3821
    %v3824 = vmul.f32 1.0, %v3823
    %v3825 = vrcp.pop %v3822
    %v3826 = vmul.f32 1.0, %v3825
    %v3827 = vtanh.pop %v3814
    %v3828 = vmul.f32 %v3824, 0.0
    %3830 = vrot.lane.b32.xlu0 %v3827, 64
    %v3831 = vpop.permute.xlu0 %3830
    %v3833 = vmul.f32 %v3824, %v3831
    %3835 = vrot.lane.b32.xlu0 %v3833, 64
    %v3836 = vpop.permute.xlu0 %3835
    %v3838 = vadd.f32 %v3828, %v3836
    %v3839 = vtanh.pop %v3838
    %3841 = vrot.lane.b32.xlu0 %v3839, 64
    %v3842 = vpop.permute.xlu0 %3841
    %v3844 = vmul.f32 %v3826, %v3842
    %v3845 = vrot.slane %v3711, 2
    %v3846 = vrot.slane %v3713, 2
    %v3849 = vsel %vm1905, %v3707, %v3845
    %v3850 = vsel %vm1906, %v3709, %v3846
    %v3851 = vpack.c.bf16 %v3844, %v3844
    %v3853 = vsel %vm884, %v3851, 0
    %3855 = vmatprep.subr.bf16.mxu0 %v3757
    %3856 = vmatpush1.bf16.msra.mxu0 %v3756
    %3857 = vmatprep.subr.bf16.mxu0 %v3759
    %3858 = vmatpush1.bf16.msra.mxu0 %v3758
    %3859 = vmatprep.subr.bf16.mxu0 %v3761
    %3860 = vmatpush1.bf16.msra.mxu0 %v3760
    %3861 = vmatprep.subr.bf16.mxu0 %v3763
    %3862 = vmatpush1.bf16.msra.mxu0 %v3762
    %3863 = vmatprep.subr.bf16.mxu0 0
    %3864 = vmatpush1.bf16.msra.mxu0 0
    %3865 = vmatprep.subr.bf16.mxu0 0
    %3866 = vmatpush1.bf16.msra.mxu0 0
    %3867 = vmatprep.subr.bf16.mxu0 0
    %3868 = vmatpush1.bf16.msra.mxu0 0
    %3869 = vmatprep.subr.bf16.mxu0 0
    %3870 = vmatpush1.bf16.msra.mxu0 0
    %3871 = vmatprep.subr.bf16.mxu0 0
    %3872 = vmatpush1.bf16.msra.mxu0 0
    %3873 = vmatprep.subr.bf16.mxu0 0
    %3874 = vmatpush1.bf16.msra.mxu0 0
    %3875 = vmatprep.subr.bf16.mxu0 0
    %3876 = vmatpush1.bf16.msra.mxu0 0
    %3877 = vmatprep.subr.bf16.mxu0 0
    %3878 = vmatpush1.bf16.msra.mxu0 0
    %3879 = vmatprep.subr.bf16.mxu0 0
    %3880 = vmatpush1.bf16.msra.mxu0 0
    %3881 = vmatprep.subr.bf16.mxu0 0
    %3882 = vmatpush1.bf16.msra.mxu0 0
    %3883 = vmatprep.subr.bf16.mxu0 0
    %3884 = vmatpush1.bf16.msra.mxu0 0
    %3885 = vmatprep.subr.bf16.mxu0 0
    %3886 = vmatpush1.bf16.msra.mxu0 0
    %3887 = vmatprep.mubr.bf16.mxu0 0
    %3888 = vmatmul.mubr.bf16.gmra.mrb[0].mxu0 %v3853
    %v3889 = vpop.f32.mrb[0].mxu0
    %v3890 = vadd.f32 0.0, %v3889
    %v3891 = vpop.f32.mrb[0].mxu0
    %v3892 = vadd.f32 0.0, %v3891
    %v3893 = vpop.f32.mrb[0].mxu0
    %v3894 = vpop.f32.mrb[0].mxu0
    %3895 = vdwg.mxu0
    %v3898 = vrot.slane %v3890, 6
    %v3899 = vrot.slane %v3892, 6
    %v3902 = vadd.f32 %v3849, %v3898
    %v3903 = vadd.f32 %v3850, %v3899
    %v3904 = vxor.u32 %v3902, 2147483648
    %v3905 = vxor.u32 %v3903, 2147483648
    %v3906 = vmul.f32 %v3904, 1.442695
    %v3907 = vpow.pop %v3906
    %v3908 = vmul.f32 %v3905, 1.442695
    %v3909 = vpow.pop %v3908
    %v3910 = vadd.f32 %v3907, 1.0
    %v3911 = vadd.f32 %v3909, 1.0
    %v3912 = vrcp.pop %v3910
    %v3913 = vmul.f32 1.0, %v3912
    %v3914 = vrcp.pop %v3911
    %v3915 = vmul.f32 1.0, %v3914
    %v3916 = vtanh.pop %v3903
    %v3918 = vrot.slane %v3838, 6
    %v3920 = vmul.f32 %v3913, %v3918
    %3922 = vrot.lane.b32.xlu0 %v3916, 64
    %v3923 = vpop.permute.xlu0 %3922
    %v3925 = vmul.f32 %v3913, %v3923
    %3927 = vrot.lane.b32.xlu0 %v3925, 64
    %v3928 = vpop.permute.xlu0 %3927
    %v3930 = vadd.f32 %v3920, %v3928
    %v3931 = vtanh.pop %v3930
    %3933 = vrot.lane.b32.xlu0 %v3931, 64
    %v3934 = vpop.permute.xlu0 %3933
    %v3936 = vmul.f32 %v3915, %v3934
    %v3937 = vpack.c.bf16 %v3936, %v3936
    %v3939 = vrot.slane %v3937, 1
    %v3941 = vsel %vm884, %v3939, 0
    %3943 = vmatprep.subr.bf16.mxu0 %v3757
    %3944 = vmatpush1.bf16.msra.mxu0 %v3756
    %3945 = vmatprep.subr.bf16.mxu0 %v3759
    %3946 = vmatpush1.bf16.msra.mxu0 %v3758
    %3947 = vmatprep.subr.bf16.mxu0 %v3761
    %3948 = vmatpush1.bf16.msra.mxu0 %v3760
    %3949 = vmatprep.subr.bf16.mxu0 %v3763
    %3950 = vmatpush1.bf16.msra.mxu0 %v3762
    %3951 = vmatprep.subr.bf16.mxu0 0
    %3952 = vmatpush1.bf16.msra.mxu0 0
    %3953 = vmatprep.subr.bf16.mxu0 0
    %3954 = vmatpush1.bf16.msra.mxu0 0
    %3955 = vmatprep.subr.bf16.mxu0 0
    %3956 = vmatpush1.bf16.msra.mxu0 0
    %3957 = vmatprep.subr.bf16.mxu0 0
    %3958 = vmatpush1.bf16.msra.mxu0 0
    %3959 = vmatprep.subr.bf16.mxu0 0
    %3960 = vmatpush1.bf16.msra.mxu0 0
    %3961 = vmatprep.subr.bf16.mxu0 0
    %3962 = vmatpush1.bf16.msra.mxu0 0
    %3963 = vmatprep.subr.bf16.mxu0 0
    %3964 = vmatpush1.bf16.msra.mxu0 0
    %3965 = vmatprep.subr.bf16.mxu0 0
    %3966 = vmatpush1.bf16.msra.mxu0 0
    %3967 = vmatprep.subr.bf16.mxu0 0
    %3968 = vmatpush1.bf16.msra.mxu0 0
    %3969 = vmatprep.subr.bf16.mxu0 0
    %3970 = vmatpush1.bf16.msra.mxu0 0
    %3971 = vmatprep.subr.bf16.mxu0 0
    %3972 = vmatpush1.bf16.msra.mxu0 0
    %3973 = vmatprep.subr.bf16.mxu0 0
    %3974 = vmatpush1.bf16.msra.mxu0 0
    %3975 = vmatprep.mubr.bf16.mxu0 0
    %3976 = vmatmul.mubr.bf16.gmra.mrb[0].mxu0 %v3941
    %v3977 = vpop.f32.mrb[0].mxu0
    %v3978 = vadd.f32 0.0, %v3977
    %v3979 = vpop.f32.mrb[0].mxu0
    %v3980 = vadd.f32 0.0, %v3979
    %v3981 = vpop.f32.mrb[0].mxu0
    %v3982 = vpop.f32.mrb[0].mxu0
    %3983 = vdwg.mxu0
    %v3986 = vrot.slane %v3978, 4
    %v3987 = vrot.slane %v3980, 4
    %v3990 = vadd.f32 %v3730, %v3986
    %v3991 = vadd.f32 %v3731, %v3987
    %v3992 = vxor.u32 %v3990, 2147483648
    %v3993 = vxor.u32 %v3991, 2147483648
    %v3994 = vmul.f32 %v3992, 1.442695
    %v3995 = vpow.pop %v3994
    %v3996 = vmul.f32 %v3993, 1.442695
    %v3997 = vpow.pop %v3996
    %v3998 = vadd.f32 %v3995, 1.0
    %v3999 = vadd.f32 %v3997, 1.0
    %v4000 = vrcp.pop %v3998
    %v4001 = vmul.f32 1.0, %v4000
    %v4002 = vrcp.pop %v3999
    %v4003 = vmul.f32 1.0, %v4002
    %v4004 = vtanh.pop %v3991
    %v4006 = vrot.slane %v3930, 6
    %v4008 = vmul.f32 %v4001, %v4006
    %4010 = vrot.lane.b32.xlu0 %v4004, 64
    %v4011 = vpop.permute.xlu0 %4010
    %v4013 = vmul.f32 %v4001, %v4011
    %4015 = vrot.lane.b32.xlu0 %v4013, 64
    %v4016 = vpop.permute.xlu0 %4015
    %v4018 = vadd.f32 %v4008, %v4016
    %v4019 = vtanh.pop %v4018
    %4021 = vrot.lane.b32.xlu0 %v4019, 64
    %v4022 = vpop.permute.xlu0 %4021
    %v4024 = vmul.f32 %v4003, %v4022
    %v4025 = vpack.c.bf16 %v4024, %v4024
    %v4027 = vrot.slane %v4025, 2
    %v4029 = vsel %vm884, %v4027, 0
    %4031 = vmatprep.subr.bf16.mxu0 %v3757
    %4032 = vmatpush1.bf16.msra.mxu0 %v3756
    %4033 = vmatprep.subr.bf16.mxu0 %v3759
    %4034 = vmatpush1.bf16.msra.mxu0 %v3758
    %4035 = vmatprep.subr.bf16.mxu0 %v3761
    %4036 = vmatpush1.bf16.msra.mxu0 %v3760
    %4037 = vmatprep.subr.bf16.mxu0 %v3763
    %4038 = vmatpush1.bf16.msra.mxu0 %v3762
    %4039 = vmatprep.subr.bf16.mxu0 0
    %4040 = vmatpush1.bf16.msra.mxu0 0
    %4041 = vmatprep.subr.bf16.mxu0 0
    %4042 = vmatpush1.bf16.msra.mxu0 0
    %4043 = vmatprep.subr.bf16.mxu0 0
    %4044 = vmatpush1.bf16.msra.mxu0 0
    %4045 = vmatprep.subr.bf16.mxu0 0
    %4046 = vmatpush1.bf16.msra.mxu0 0
    %4047 = vmatprep.subr.bf16.mxu0 0
    %4048 = vmatpush1.bf16.msra.mxu0 0
    %4049 = vmatprep.subr.bf16.mxu0 0
    %4050 = vmatpush1.bf16.msra.mxu0 0
    %4051 = vmatprep.subr.bf16.mxu0 0
    %4052 = vmatpush1.bf16.msra.mxu0 0
    %4053 = vmatprep.subr.bf16.mxu0 0
    %4054 = vmatpush1.bf16.msra.mxu0 0
    %4055 = vmatprep.subr.bf16.mxu0 0
    %4056 = vmatpush1.bf16.msra.mxu0 0
    %4057 = vmatprep.subr.bf16.mxu0 0
    %4058 = vmatpush1.bf16.msra.mxu0 0
    %4059 = vmatprep.subr.bf16.mxu0 0
    %4060 = vmatpush1.bf16.msra.mxu0 0
    %4061 = vmatprep.subr.bf16.mxu0 0
    %4062 = vmatpush1.bf16.msra.mxu0 0
    %4063 = vmatprep.mubr.bf16.mxu0 0
    %4064 = vmatmul.mubr.bf16.gmra.mrb[0].mxu0 %v4029
    %v4065 = vpop.f32.mrb[0].mxu0
    %v4066 = vadd.f32 0.0, %v4065
    %v4067 = vpop.f32.mrb[0].mxu0
    %v4068 = vadd.f32 0.0, %v4067
    %v4069 = vpop.f32.mrb[0].mxu0
    %v4070 = vpop.f32.mrb[0].mxu0
    %4071 = vdwg.mxu0
    %v4074 = vrot.slane %v4066, 2
    %v4075 = vrot.slane %v4068, 2
    %v4078 = vadd.f32 %v3849, %v4074
    %v4079 = vadd.f32 %v3850, %v4075
    %v4080 = vxor.u32 %v4078, 2147483648
    %v4081 = vxor.u32 %v4079, 2147483648
    %v4082 = vmul.f32 %v4080, 1.442695
    %v4083 = vpow.pop %v4082
    %v4084 = vmul.f32 %v4081, 1.442695
    %v4085 = vpow.pop %v4084
    %v4086 = vadd.f32 %v4083, 1.0
    %v4087 = vadd.f32 %v4085, 1.0
    %v4088 = vrcp.pop %v4086
    %v4089 = vmul.f32 1.0, %v4088
    %v4090 = vrcp.pop %v4087
    %v4091 = vmul.f32 1.0, %v4090
    %v4092 = vtanh.pop %v4079
    %v4094 = vrot.slane %v4018, 6
    %v4096 = vmul.f32 %v4089, %v4094
    %4098 = vrot.lane.b32.xlu0 %v4092, 64
    %v4099 = vpop.permute.xlu0 %4098
    %v4101 = vmul.f32 %v4089, %v4099
    %4103 = vrot.lane.b32.xlu0 %v4101, 64
    %v4104 = vpop.permute.xlu0 %4103
    %v4106 = vadd.f32 %v4096, %v4104
    %v4107 = vtanh.pop %v4106
    %4109 = vrot.lane.b32.xlu0 %v4107, 64
    %v4110 = vpop.permute.xlu0 %4109
    %v4112 = vmul.f32 %v4091, %v4110
    %v4115 = vrot.slane %v3707, 6
    %v4116 = vrot.slane %v3709, 6
    %v4119 = vsel %vm1905, %v3711, %v4115
    %v4120 = vsel %vm1906, %v3713, %v4116
    %v4121 = vpack.c.bf16 %v4112, %v4112
    %v4123 = vrot.slane %v4121, 3
    %v4125 = vsel %vm884, %v4123, 0
    %4127 = vmatprep.subr.bf16.mxu0 %v3757
    %4128 = vmatpush1.bf16.msra.mxu0 %v3756
    %4129 = vmatprep.subr.bf16.mxu0 %v3759
    %4130 = vmatpush1.bf16.msra.mxu0 %v3758
    %4131 = vmatprep.subr.bf16.mxu0 %v3761
    %4132 = vmatpush1.bf16.msra.mxu0 %v3760
    %4133 = vmatprep.subr.bf16.mxu0 %v3763
    %4134 = vmatpush1.bf16.msra.mxu0 %v3762
    %4135 = vmatprep.subr.bf16.mxu0 0
    %4136 = vmatpush1.bf16.msra.mxu0 0
    %4137 = vmatprep.subr.bf16.mxu0 0
    %4138 = vmatpush1.bf16.msra.mxu0 0
    %4139 = vmatprep.subr.bf16.mxu0 0
    %4140 = vmatpush1.bf16.msra.mxu0 0
    %4141 = vmatprep.subr.bf16.mxu0 0
    %4142 = vmatpush1.bf16.msra.mxu0 0
    %4143 = vmatprep.subr.bf16.mxu0 0
    %4144 = vmatpush1.bf16.msra.mxu0 0
    %4145 = vmatprep.subr.bf16.mxu0 0
    %4146 = vmatpush1.bf16.msra.mxu0 0
    %4147 = vmatprep.subr.bf16.mxu0 0
    %4148 = vmatpush1.bf16.msra.mxu0 0
    %4149 = vmatprep.subr.bf16.mxu0 0
    %4150 = vmatpush1.bf16.msra.mxu0 0
    %4151 = vmatprep.subr.bf16.mxu0 0
    %4152 = vmatpush1.bf16.msra.mxu0 0
    %4153 = vmatprep.subr.bf16.mxu0 0
    %4154 = vmatpush1.bf16.msra.mxu0 0
    %4155 = vmatprep.subr.bf16.mxu0 0
    %4156 = vmatpush1.bf16.msra.mxu0 0
    %4157 = vmatprep.subr.bf16.mxu0 0
    %4158 = vmatpush1.bf16.msra.mxu0 0
    %4159 = vmatprep.mubr.bf16.mxu0 0
    %4160 = vmatmul.mubr.bf16.gmra.mrb[0].mxu0 %v4125
    %v4161 = vpop.f32.mrb[0].mxu0
    %v4162 = vadd.f32 0.0, %v4161
    %v4163 = vpop.f32.mrb[0].mxu0
    %v4164 = vadd.f32 0.0, %v4163
    %v4165 = vpop.f32.mrb[0].mxu0
    %v4166 = vpop.f32.mrb[0].mxu0
    %4167 = vdwg.mxu0
    %v4168 = vadd.f32 %v4119, %v4162
    %v4169 = vadd.f32 %v4120, %v4164
    %v4170 = vxor.u32 %v4168, 2147483648
    %v4171 = vxor.u32 %v4169, 2147483648
    %v4172 = vmul.f32 %v4170, 1.442695
    %v4173 = vpow.pop %v4172
    %v4174 = vmul.f32 %v4171, 1.442695
    %v4175 = vpow.pop %v4174
    %v4176 = vadd.f32 %v4173, 1.0
    %v4177 = vadd.f32 %v4175, 1.0
    %v4178 = vrcp.pop %v4176
    %v4179 = vmul.f32 1.0, %v4178
    %v4180 = vrcp.pop %v4177
    %v4181 = vmul.f32 1.0, %v4180
    %v4182 = vtanh.pop %v4169
    %v4184 = vrot.slane %v4106, 6
    %v4186 = vmul.f32 %v4179, %v4184
    %4188 = vrot.lane.b32.xlu0 %v4182, 64
    %v4189 = vpop.permute.xlu0 %4188
    %v4191 = vmul.f32 %v4179, %v4189
    %4193 = vrot.lane.b32.xlu0 %v4191, 64
    %v4194 = vpop.permute.xlu0 %4193
    %v4196 = vadd.f32 %v4186, %v4194
    %v4197 = vtanh.pop %v4196
    %4199 = vrot.lane.b32.xlu0 %v4197, 64
    %v4200 = vpop.permute.xlu0 %4199
    %v4202 = vmul.f32 %v4181, %v4200
    %v4203 = vrot.slane %v3707, 2
    %v4204 = vrot.slane %v3709, 2
    %v4207 = vsel %vm1905, %v3711, %v4203
    %v4208 = vsel %vm1906, %v3713, %v4204
    %v4209 = vpack.c.bf16 %v4202, %v4202
    %v4211 = vsel %vm884, %v4209, 0
    %4213 = vmatprep.subr.bf16.mxu0 %v3757
    %4214 = vmatpush1.bf16.msra.mxu0 %v3756
    %4215 = vmatprep.subr.bf16.mxu0 %v3759
    %4216 = vmatpush1.bf16.msra.mxu0 %v3758
    %4217 = vmatprep.subr.bf16.mxu0 %v3761
    %4218 = vmatpush1.bf16.msra.mxu0 %v3760
    %4219 = vmatprep.subr.bf16.mxu0 %v3763
    %4220 = vmatpush1.bf16.msra.mxu0 %v3762
    %4221 = vmatprep.subr.bf16.mxu0 0
    %4222 = vmatpush1.bf16.msra.mxu0 0
    %4223 = vmatprep.subr.bf16.mxu0 0
    %4224 = vmatpush1.bf16.msra.mxu0 0
    %4225 = vmatprep.subr.bf16.mxu0 0
    %4226 = vmatpush1.bf16.msra.mxu0 0
    %4227 = vmatprep.subr.bf16.mxu0 0
    %4228 = vmatpush1.bf16.msra.mxu0 0
    %4229 = vmatprep.subr.bf16.mxu0 0
    %4230 = vmatpush1.bf16.msra.mxu0 0
    %4231 = vmatprep.subr.bf16.mxu0 0
    %4232 = vmatpush1.bf16.msra.mxu0 0
    %4233 = vmatprep.subr.bf16.mxu0 0
    %4234 = vmatpush1.bf16.msra.mxu0 0
    %4235 = vmatprep.subr.bf16.mxu0 0
    %4236 = vmatpush1.bf16.msra.mxu0 0
    %4237 = vmatprep.subr.bf16.mxu0 0
    %4238 = vmatpush1.bf16.msra.mxu0 0
    %4239 = vmatprep.subr.bf16.mxu0 0
    %4240 = vmatpush1.bf16.msra.mxu0 0
    %4241 = vmatprep.subr.bf16.mxu0 0
    %4242 = vmatpush1.bf16.msra.mxu0 0
    %4243 = vmatprep.subr.bf16.mxu0 0
    %4244 = vmatpush1.bf16.msra.mxu0 0
    %4245 = vmatprep.mubr.bf16.mxu0 0
    %4246 = vmatmul.mubr.bf16.gmra.mrb[0].mxu0 %v4211
    %v4247 = vpop.f32.mrb[0].mxu0
    %v4248 = vadd.f32 0.0, %v4247
    %v4249 = vpop.f32.mrb[0].mxu0
    %v4250 = vadd.f32 0.0, %v4249
    %v4251 = vpop.f32.mrb[0].mxu0
    %v4252 = vpop.f32.mrb[0].mxu0
    %4253 = vdwg.mxu0
    %v4256 = vrot.slane %v4248, 6
    %v4257 = vrot.slane %v4250, 6
    %v4260 = vadd.f32 %v4207, %v4256
    %v4261 = vadd.f32 %v4208, %v4257
    %v4262 = vxor.u32 %v4260, 2147483648
    %v4263 = vxor.u32 %v4261, 2147483648
    %v4264 = vmul.f32 %v4262, 1.442695
    %v4265 = vpow.pop %v4264
    %v4266 = vmul.f32 %v4263, 1.442695
    %v4267 = vpow.pop %v4266
    %v4268 = vadd.f32 %v4265, 1.0
    %v4269 = vadd.f32 %v4267, 1.0
    %v4270 = vrcp.pop %v4268
    %v4271 = vmul.f32 1.0, %v4270
    %v4272 = vrcp.pop %v4269
    %v4273 = vmul.f32 1.0, %v4272
    %v4274 = vtanh.pop %v4261
    %v4276 = vrot.slane %v4196, 6
    %v4278 = vmul.f32 %v4271, %v4276
    %4280 = vrot.lane.b32.xlu0 %v4274, 64
    %v4281 = vpop.permute.xlu0 %4280
    %v4283 = vmul.f32 %v4271, %v4281
    %4285 = vrot.lane.b32.xlu0 %v4283, 64
    %v4286 = vpop.permute.xlu0 %4285
    %v4288 = vadd.f32 %v4278, %v4286
    %v4289 = vtanh.pop %v4288
    %4291 = vrot.lane.b32.xlu0 %v4289, 64
    %v4292 = vpop.permute.xlu0 %4291
    %v4294 = vmul.f32 %v4273, %v4292
    %v4295 = vpack.c.bf16 %v4294, %v4294
    %v4297 = vrot.slane %v4295, 1
    %v4299 = vsel %vm884, %v4297, 0
    %4301 = vmatprep.subr.bf16.mxu0 %v3757
    %4302 = vmatpush1.bf16.msra.mxu0 %v3756
    %4303 = vmatprep.subr.bf16.mxu0 %v3759
    %4304 = vmatpush1.bf16.msra.mxu0 %v3758
    %4305 = vmatprep.subr.bf16.mxu0 %v3761
    %4306 = vmatpush1.bf16.msra.mxu0 %v3760
    %4307 = vmatprep.subr.bf16.mxu0 %v3763
    %4308 = vmatpush1.bf16.msra.mxu0 %v3762
    %4309 = vmatprep.subr.bf16.mxu0 0
    %4310 = vmatpush1.bf16.msra.mxu0 0
    %4311 = vmatprep.subr.bf16.mxu0 0
    %4312 = vmatpush1.bf16.msra.mxu0 0
    %4313 = vmatprep.subr.bf16.mxu0 0
    %4314 = vmatpush1.bf16.msra.mxu0 0
    %4315 = vmatprep.subr.bf16.mxu0 0
    %4316 = vmatpush1.bf16.msra.mxu0 0
    %4317 = vmatprep.subr.bf16.mxu0 0
    %4318 = vmatpush1.bf16.msra.mxu0 0
    %4319 = vmatprep.subr.bf16.mxu0 0
    %4320 = vmatpush1.bf16.msra.mxu0 0
    %4321 = vmatprep.subr.bf16.mxu0 0
    %4322 = vmatpush1.bf16.msra.mxu0 0
    %4323 = vmatprep.subr.bf16.mxu0 0
    %4324 = vmatpush1.bf16.msra.mxu0 0
    %4325 = vmatprep.subr.bf16.mxu0 0
    %4326 = vmatpush1.bf16.msra.mxu0 0
    %4327 = vmatprep.subr.bf16.mxu0 0
    %4328 = vmatpush1.bf16.msra.mxu0 0
    %4329 = vmatprep.subr.bf16.mxu0 0
    %4330 = vmatpush1.bf16.msra.mxu0 0
    %4331 = vmatprep.subr.bf16.mxu0 0
    %4332 = vmatpush1.bf16.msra.mxu0 0
    %4333 = vmatprep.mubr.bf16.mxu0 0
    %4334 = vmatmul.mubr.bf16.gmra.mrb[0].mxu0 %v4299
    %v4335 = vpop.f32.mrb[0].mxu0
    %v4336 = vadd.f32 0.0, %v4335
    %v4337 = vpop.f32.mrb[0].mxu0
    %v4338 = vadd.f32 0.0, %v4337
    %v4339 = vpop.f32.mrb[0].mxu0
    %v4340 = vpop.f32.mrb[0].mxu0
    %4341 = vdwg.mxu0
    %v4344 = vrot.slane %v4336, 4
    %v4345 = vrot.slane %v4338, 4
    %v4348 = vadd.f32 %v4119, %v4344
    %v4349 = vadd.f32 %v4120, %v4345
    %v4350 = vxor.u32 %v4348, 2147483648
    %v4351 = vxor.u32 %v4349, 2147483648
    %v4352 = vmul.f32 %v4350, 1.442695
    %v4353 = vpow.pop %v4352
    %v4354 = vmul.f32 %v4351, 1.442695
    %v4355 = vpow.pop %v4354
    %v4356 = vadd.f32 %v4353, 1.0
    %v4357 = vadd.f32 %v4355, 1.0
    %v4358 = vrcp.pop %v4356
    %v4359 = vmul.f32 1.0, %v4358
    %v4360 = vrcp.pop %v4357
    %v4361 = vmul.f32 1.0, %v4360
    %v4362 = vtanh.pop %v4349
    %v4364 = vrot.slane %v4288, 6
    %v4366 = vmul.f32 %v4359, %v4364
    %4368 = vrot.lane.b32.xlu0 %v4362, 64
    %v4369 = vpop.permute.xlu0 %4368
    %v4371 = vmul.f32 %v4359, %v4369
    %4373 = vrot.lane.b32.xlu0 %v4371, 64
    %v4374 = vpop.permute.xlu0 %4373
    %v4376 = vadd.f32 %v4366, %v4374
    %v4377 = vtanh.pop %v4376
    %4379 = vrot.lane.b32.xlu0 %v4377, 64
    %v4380 = vpop.permute.xlu0 %4379
    %v4382 = vmul.f32 %v4361, %v4380
    %v4383 = vpack.c.bf16 %v4382, %v4382
    %v4385 = vrot.slane %v4383, 2
    %v4387 = vsel %vm884, %v4385, 0
    %4389 = vmatprep.subr.bf16.mxu0 %v3757
    %4390 = vmatpush1.bf16.msra.mxu0 %v3756
    %4391 = vmatprep.subr.bf16.mxu0 %v3759
    %4392 = vmatpush1.bf16.msra.mxu0 %v3758
    %4393 = vmatprep.subr.bf16.mxu0 %v3761
    %4394 = vmatpush1.bf16.msra.mxu0 %v3760
    %4395 = vmatprep.subr.bf16.mxu0 %v3763
    %4396 = vmatpush1.bf16.msra.mxu0 %v3762
    %4397 = vmatprep.subr.bf16.mxu0 0
    %4398 = vmatpush1.bf16.msra.mxu0 0
    %4399 = vmatprep.subr.bf16.mxu0 0
    %4400 = vmatpush1.bf16.msra.mxu0 0
    %4401 = vmatprep.subr.bf16.mxu0 0
    %4402 = vmatpush1.bf16.msra.mxu0 0
    %4403 = vmatprep.subr.bf16.mxu0 0
    %4404 = vmatpush1.bf16.msra.mxu0 0
    %4405 = vmatprep.subr.bf16.mxu0 0
    %4406 = vmatpush1.bf16.msra.mxu0 0
    %4407 = vmatprep.subr.bf16.mxu0 0
    %4408 = vmatpush1.bf16.msra.mxu0 0
    %4409 = vmatprep.subr.bf16.mxu0 0
    %4410 = vmatpush1.bf16.msra.mxu0 0
    %4411 = vmatprep.subr.bf16.mxu0 0
    %4412 = vmatpush1.bf16.msra.mxu0 0
    %4413 = vmatprep.subr.bf16.mxu0 0
    %4414 = vmatpush1.bf16.msra.mxu0 0
    %4415 = vmatprep.subr.bf16.mxu0 0
    %4416 = vmatpush1.bf16.msra.mxu0 0
    %4417 = vmatprep.subr.bf16.mxu0 0
    %4418 = vmatpush1.bf16.msra.mxu0 0
    %4419 = vmatprep.subr.bf16.mxu0 0
    %4420 = vmatpush1.bf16.msra.mxu0 0
    %4421 = vmatprep.mubr.bf16.mxu0 0
    %4422 = vmatmul.mubr.bf16.gmra.mrb[0].mxu0 %v4387
    %v4423 = vpop.f32.mrb[0].mxu0
    %v4424 = vadd.f32 0.0, %v4423
    %v4425 = vpop.f32.mrb[0].mxu0
    %v4426 = vadd.f32 0.0, %v4425
    %v4427 = vpop.f32.mrb[0].mxu0
    %v4428 = vpop.f32.mrb[0].mxu0
    %4429 = vdwg.mxu0
    %v4432 = vrot.slane %v4424, 2
    %v4433 = vrot.slane %v4426, 2
    %v4436 = vadd.f32 %v4207, %v4432
    %v4437 = vadd.f32 %v4208, %v4433
    %v4438 = vxor.u32 %v4436, 2147483648
    %v4439 = vxor.u32 %v4437, 2147483648
    %v4440 = vmul.f32 %v4438, 1.442695
    %v4441 = vpow.pop %v4440
    %v4442 = vmul.f32 %v4439, 1.442695
    %v4443 = vpow.pop %v4442
    %v4444 = vadd.f32 %v4441, 1.0
    %v4445 = vadd.f32 %v4443, 1.0
    %v4446 = vrcp.pop %v4444
    %v4447 = vmul.f32 1.0, %v4446
    %v4448 = vrcp.pop %v4445
    %v4449 = vmul.f32 1.0, %v4448
    %v4450 = vtanh.pop %v4437
    %v4452 = vrot.slane %v4376, 6
    %v4454 = vmul.f32 %v4447, %v4452
    %4456 = vrot.lane.b32.xlu0 %v4450, 64
    %v4457 = vpop.permute.xlu0 %4456
    %v4459 = vmul.f32 %v4447, %v4457
    %4461 = vrot.lane.b32.xlu0 %v4459, 64
    %v4462 = vpop.permute.xlu0 %4461
    %v4464 = vadd.f32 %v4454, %v4462
    %v4465 = vtanh.pop %v4464
    %4467 = vrot.lane.b32.xlu0 %v4465, 64
    %v4468 = vpop.permute.xlu0 %4467
    %v4470 = vmul.f32 %v4449, %v4468
    %v4472 = vrot.slane %v4470, 6
    %v4474 = vsel %vm2662, %v3844, %v4472
    %v4476 = vrot.slane %v4382, 2
    %v4478 = vsel %vm2662, %v3936, %v4476
    %v4480 = vrot.slane %v4294, 6
    %v4482 = vsel %vm2662, %v4024, %v4480
    %v4484 = vrot.slane %v4202, 2
    %v4486 = vsel %vm2662, %v4112, %v4484
    %v4488 = vrot.slane %v4112, 6
    %v4490 = vsel %vm2662, %v4202, %v4488
    %v4492 = vrot.slane %v4024, 2
    %v4494 = vsel %vm2662, %v4294, %v4492
    %v4496 = vrot.slane %v3936, 6
    %v4498 = vsel %vm2662, %v4382, %v4496
    %v4500 = vrot.slane %v3844, 2
    %v4502 = vsel %vm2662, %v4470, %v4500
    %v4503 = vsel %vm2695, %v4474, %v4478
    %v4504 = vsel %vm2697, %v4503, %v4482
    %v4505 = vsel %vm2699, %v4504, %v4486
    %v4506 = vsel %vm2695, %v4490, %v4494
    %v4507 = vsel %vm2697, %v4506, %v4498
    %v4508 = vsel %vm2699, %v4507, %v4502
    %s4509 = scalar_lea.vmem %s20, 128
    %v4510 = vld [vmem:[%s4509] sm:$0xff]
    %v4511 = vld [vmem:[%s4509 + $0x8] sm:$0xff]
    %v4512 = vld [vmem:[%s4509 + $0x10] sm:$0xff]
    %v4513 = vld [vmem:[%s4509 + $0x18] sm:$0xff]
    %v4514 = vld [vmem:[%s4509 + $0x20] sm:$0xff]
    %v4515 = vld [vmem:[%s4509 + $0x28] sm:$0xff]
    %v4516 = vld [vmem:[%s4509 + $0x30] sm:$0xff]
    %v4517 = vld [vmem:[%s4509 + $0x38] sm:$0xff]
    %v4518 = vpack.c.bf16 %v4508, %v4505
    %s4519 = scalar_lea.vmem %s21, 6
    %v4520 = vld [vmem:[%s4519] sm:$0x3]
    %v4522 = vlaneseq
    %v4523 = vshrl.u32 %v4522, 7
    %v4524 = vsub.s32 0, %v4523
    %v4525 = vrot.slane %v4520, %v4524
    %v4526 = vlaneseq
    %v4527 = vshrl.u32 %v4526, 7
    %v4528 = vsub.s32 1, %v4527
    %v4529 = vrot.slane %v4520, %v4528
    %v4540 = vunpack.c.l.b16 %v4510
    %v4541 = vunpack.c.h.b16 %v4510
    %v4542 = vunpack.c.l.b16 %v4511
    %v4543 = vunpack.c.h.b16 %v4511
    %v4544 = vunpack.c.l.b16 %v4512
    %v4545 = vunpack.c.h.b16 %v4512
    %v4546 = vunpack.c.l.b16 %v4513
    %v4547 = vunpack.c.h.b16 %v4513
    %v4548 = vunpack.c.l.b16 %v4514
    %v4549 = vunpack.c.h.b16 %v4514
    %v4550 = vunpack.c.l.b16 %v4515
    %v4551 = vunpack.c.h.b16 %v4515
    %v4552 = vunpack.c.l.b16 %v4516
    %v4553 = vunpack.c.h.b16 %v4516
    %v4554 = vunpack.c.l.b16 %v4517
    %v4555 = vunpack.c.h.b16 %v4517
    %v4556 = vpack.c.b16 %v4542, %v4540
    %v4557 = vpack.c.b16 %v4543, %v4541
    %v4558 = vpack.c.b16 %v4546, %v4544
    %v4559 = vpack.c.b16 %v4547, %v4545
    %v4560 = vpack.c.b16 %v4550, %v4548
    %v4561 = vpack.c.b16 %v4551, %v4549
    %v4562 = vpack.c.b16 %v4554, %v4552
    %v4563 = vpack.c.b16 %v4555, %v4553
    %v4573 = vsel %vm884, %v4518, 0
    %4575 = vmatprep.subr.bf16.mxu0 %v4557
    %4576 = vmatpush1.bf16.msra.mxu0 %v4556
    %4577 = vmatprep.subr.bf16.mxu0 %v4559
    %4578 = vmatpush1.bf16.msra.mxu0 %v4558
    %4579 = vmatprep.subr.bf16.mxu0 %v4561
    %4580 = vmatpush1.bf16.msra.mxu0 %v4560
    %4581 = vmatprep.subr.bf16.mxu0 %v4563
    %4582 = vmatpush1.bf16.msra.mxu0 %v4562
    %4583 = vmatprep.subr.bf16.mxu0 0
    %4584 = vmatpush1.bf16.msra.mxu0 0
    %4585 = vmatprep.subr.bf16.mxu0 0
    %4586 = vmatpush1.bf16.msra.mxu0 0
    %4587 = vmatprep.subr.bf16.mxu0 0
    %4588 = vmatpush1.bf16.msra.mxu0 0
    %4589 = vmatprep.subr.bf16.mxu0 0
    %4590 = vmatpush1.bf16.msra.mxu0 0
    %4591 = vmatprep.subr.bf16.mxu0 0
    %4592 = vmatpush1.bf16.msra.mxu0 0
    %4593 = vmatprep.subr.bf16.mxu0 0
    %4594 = vmatpush1.bf16.msra.mxu0 0
    %4595 = vmatprep.subr.bf16.mxu0 0
    %4596 = vmatpush1.bf16.msra.mxu0 0
    %4597 = vmatprep.subr.bf16.mxu0 0
    %4598 = vmatpush1.bf16.msra.mxu0 0
    %4599 = vmatprep.subr.bf16.mxu0 0
    %4600 = vmatpush1.bf16.msra.mxu0 0
    %4601 = vmatprep.subr.bf16.mxu0 0
    %4602 = vmatpush1.bf16.msra.mxu0 0
    %4603 = vmatprep.subr.bf16.mxu0 0
    %4604 = vmatpush1.bf16.msra.mxu0 0
    %4605 = vmatprep.subr.bf16.mxu0 0
    %4606 = vmatpush1.bf16.msra.mxu0 0
    %4607 = vmatprep.mubr.bf16.mxu0 0
    %4608 = vmatmul.mubr.bf16.gmra.mrb[0].mxu0 %v4573
    %v4609 = vpop.f32.mrb[0].mxu0
    %v4610 = vadd.f32 %v4525, %v4609
    %v4611 = vpop.f32.mrb[0].mxu0
    %v4612 = vadd.f32 %v4529, %v4611
    %v4613 = vpop.f32.mrb[0].mxu0
    %v4614 = vadd.f32 %v4525, %v4613
    %v4615 = vpop.f32.mrb[0].mxu0
    %v4616 = vadd.f32 %v4529, %v4615
    %4617 = vdwg.mxu0
    %s4618 = scalar_lea.vmem %s22, 192
    %v4619 = vld [vmem:[%s4618] sm:$0xff]
    %v4620 = vld [vmem:[%s4618 + $0x8] sm:$0xff]
    %v4621 = vld [vmem:[%s4618 + $0x10] sm:$0xff]
    %v4622 = vld [vmem:[%s4618 + $0x18] sm:$0xff]
    %v4623 = vld [vmem:[%s4618 + $0x20] sm:$0xff]
    %v4624 = vld [vmem:[%s4618 + $0x28] sm:$0xff]
    %v4625 = vld [vmem:[%s4618 + $0x30] sm:$0xff]
    %v4626 = vld [vmem:[%s4618 + $0x38] sm:$0xff]
    %v4629 = vrot.slane %v4614, 6
    %v4630 = vrot.slane %v4616, 6
    %v4633 = vsel %vm1905, %v4610, %v4629
    %v4634 = vsel %vm1906, %v4612, %v4630
    %v4643 = vunpack.c.l.b16 %v4619
    %v4644 = vunpack.c.h.b16 %v4619
    %v4645 = vunpack.c.l.b16 %v4620
    %v4646 = vunpack.c.h.b16 %v4620
    %v4647 = vunpack.c.l.b16 %v4621
    %v4648 = vunpack.c.h.b16 %v4621
    %v4649 = vunpack.c.l.b16 %v4622
    %v4650 = vunpack.c.h.b16 %v4622
    %v4651 = vunpack.c.l.b16 %v4623
    %v4652 = vunpack.c.h.b16 %v4623
    %v4653 = vunpack.c.l.b16 %v4624
    %v4654 = vunpack.c.h.b16 %v4624
    %v4655 = vunpack.c.l.b16 %v4625
    %v4656 = vunpack.c.h.b16 %v4625
    %v4657 = vunpack.c.l.b16 %v4626
    %v4658 = vunpack.c.h.b16 %v4626
    %v4659 = vpack.c.b16 %v4645, %v4643
    %v4660 = vpack.c.b16 %v4646, %v4644
    %v4661 = vpack.c.b16 %v4649, %v4647
    %v4662 = vpack.c.b16 %v4650, %v4648
    %v4663 = vpack.c.b16 %v4653, %v4651
    %v4664 = vpack.c.b16 %v4654, %v4652
    %v4665 = vpack.c.b16 %v4657, %v4655
    %v4666 = vpack.c.b16 %v4658, %v4656
    %4675 = vmatprep.subr.bf16.mxu0 %v4660
    %4676 = vmatpush1.bf16.msra.mxu0 %v4659
    %4677 = vmatprep.subr.bf16.mxu0 %v4662
    %4678 = vmatpush1.bf16.msra.mxu0 %v4661
    %4679 = vmatprep.subr.bf16.mxu0 %v4664
    %4680 = vmatpush1.bf16.msra.mxu0 %v4663
    %4681 = vmatprep.subr.bf16.mxu0 %v4666
    %4682 = vmatpush1.bf16.msra.mxu0 %v4665
    %4683 = vmatprep.subr.bf16.mxu0 0
    %4684 = vmatpush1.bf16.msra.mxu0 0
    %4685 = vmatprep.subr.bf16.mxu0 0
    %4686 = vmatpush1.bf16.msra.mxu0 0
    %4687 = vmatprep.subr.bf16.mxu0 0
    %4688 = vmatpush1.bf16.msra.mxu0 0
    %4689 = vmatprep.subr.bf16.mxu0 0
    %4690 = vmatpush1.bf16.msra.mxu0 0
    %4691 = vmatprep.subr.bf16.mxu0 0
    %4692 = vmatpush1.bf16.msra.mxu0 0
    %4693 = vmatprep.subr.bf16.mxu0 0
    %4694 = vmatpush1.bf16.msra.mxu0 0
    %4695 = vmatprep.subr.bf16.mxu0 0
    %4696 = vmatpush1.bf16.msra.mxu0 0
    %4697 = vmatprep.subr.bf16.mxu0 0
    %4698 = vmatpush1.bf16.msra.mxu0 0
    %4699 = vmatprep.subr.bf16.mxu0 0
    %4700 = vmatpush1.bf16.msra.mxu0 0
    %4701 = vmatprep.subr.bf16.mxu0 0
    %4702 = vmatpush1.bf16.msra.mxu0 0
    %4703 = vmatprep.subr.bf16.mxu0 0
    %4704 = vmatpush1.bf16.msra.mxu0 0
    %4705 = vmatprep.subr.bf16.mxu0 0
    %4706 = vmatpush1.bf16.msra.mxu0 0
    %4707 = vmatprep.mubr.bf16.mxu0 0
    %4708 = vmatmul.mubr.bf16.gmra.mrb[0].mxu0 %v1956
    %v4709 = vpop.f32.mrb[0].mxu0
    %v4710 = vadd.f32 0.0, %v4709
    %v4711 = vpop.f32.mrb[0].mxu0
    %v4712 = vadd.f32 0.0, %v4711
    %v4713 = vpop.f32.mrb[0].mxu0
    %v4714 = vpop.f32.mrb[0].mxu0
    %4715 = vdwg.mxu0
    %v4716 = vadd.f32 %v4633, %v4710
    %v4717 = vadd.f32 %v4634, %v4712
    %v4718 = vxor.u32 %v4716, 2147483648
    %v4719 = vxor.u32 %v4717, 2147483648
    %v4720 = vmul.f32 %v4718, 1.442695
    %v4721 = vpow.pop %v4720
    %v4722 = vmul.f32 %v4719, 1.442695
    %v4723 = vpow.pop %v4722
    %v4724 = vadd.f32 %v4721, 1.0
    %v4725 = vadd.f32 %v4723, 1.0
    %v4726 = vrcp.pop %v4724
    %v4727 = vmul.f32 1.0, %v4726
    %v4728 = vrcp.pop %v4725
    %v4729 = vmul.f32 1.0, %v4728
    %v4730 = vtanh.pop %v4717
    %v4731 = vmul.f32 %v4727, 0.0
    %4733 = vrot.lane.b32.xlu0 %v4730, 64
    %v4734 = vpop.permute.xlu0 %4733
    %v4736 = vmul.f32 %v4727, %v4734
    %4738 = vrot.lane.b32.xlu0 %v4736, 64
    %v4739 = vpop.permute.xlu0 %4738
    %v4741 = vadd.f32 %v4731, %v4739
    %v4742 = vtanh.pop %v4741
    %4744 = vrot.lane.b32.xlu0 %v4742, 64
    %v4745 = vpop.permute.xlu0 %4744
    %v4747 = vmul.f32 %v4729, %v4745
    %v4748 = vrot.slane %v4614, 2
    %v4749 = vrot.slane %v4616, 2
    %v4752 = vsel %vm1905, %v4610, %v4748
    %v4753 = vsel %vm1906, %v4612, %v4749
    %v4754 = vpack.c.bf16 %v4747, %v4747
    %v4756 = vsel %vm884, %v4754, 0
    %4758 = vmatprep.subr.bf16.mxu0 %v4660
    %4759 = vmatpush1.bf16.msra.mxu0 %v4659
    %4760 = vmatprep.subr.bf16.mxu0 %v4662
    %4761 = vmatpush1.bf16.msra.mxu0 %v4661
    %4762 = vmatprep.subr.bf16.mxu0 %v4664
    %4763 = vmatpush1.bf16.msra.mxu0 %v4663
    %4764 = vmatprep.subr.bf16.mxu0 %v4666
    %4765 = vmatpush1.bf16.msra.mxu0 %v4665
    %4766 = vmatprep.subr.bf16.mxu0 0
    %4767 = vmatpush1.bf16.msra.mxu0 0
    %4768 = vmatprep.subr.bf16.mxu0 0
    %4769 = vmatpush1.bf16.msra.mxu0 0
    %4770 = vmatprep.subr.bf16.mxu0 0
    %4771 = vmatpush1.bf16.msra.mxu0 0
    %4772 = vmatprep.subr.bf16.mxu0 0
    %4773 = vmatpush1.bf16.msra.mxu0 0
    %4774 = vmatprep.subr.bf16.mxu0 0
    %4775 = vmatpush1.bf16.msra.mxu0 0
    %4776 = vmatprep.subr.bf16.mxu0 0
    %4777 = vmatpush1.bf16.msra.mxu0 0
    %4778 = vmatprep.subr.bf16.mxu0 0
    %4779 = vmatpush1.bf16.msra.mxu0 0
    %4780 = vmatprep.subr.bf16.mxu0 0
    %4781 = vmatpush1.bf16.msra.mxu0 0
    %4782 = vmatprep.subr.bf16.mxu0 0
    %4783 = vmatpush1.bf16.msra.mxu0 0
    %4784 = vmatprep.subr.bf16.mxu0 0
    %4785 = vmatpush1.bf16.msra.mxu0 0
    %4786 = vmatprep.subr.bf16.mxu0 0
    %4787 = vmatpush1.bf16.msra.mxu0 0
    %4788 = vmatprep.subr.bf16.mxu0 0
    %4789 = vmatpush1.bf16.msra.mxu0 0
    %4790 = vmatprep.mubr.bf16.mxu0 0
    %4791 = vmatmul.mubr.bf16.gmra.mrb[0].mxu0 %v4756
    %v4792 = vpop.f32.mrb[0].mxu0
    %v4793 = vadd.f32 0.0, %v4792
    %v4794 = vpop.f32.mrb[0].mxu0
    %v4795 = vadd.f32 0.0, %v4794
    %v4796 = vpop.f32.mrb[0].mxu0
    %v4797 = vpop.f32.mrb[0].mxu0
    %4798 = vdwg.mxu0
    %v4801 = vrot.slane %v4793, 6
    %v4802 = vrot.slane %v4795, 6
    %v4805 = vadd.f32 %v4752, %v4801
    %v4806 = vadd.f32 %v4753, %v4802
    %v4807 = vxor.u32 %v4805, 2147483648
    %v4808 = vxor.u32 %v4806, 2147483648
    %v4809 = vmul.f32 %v4807, 1.442695
    %v4810 = vpow.pop %v4809
    %v4811 = vmul.f32 %v4808, 1.442695
    %v4812 = vpow.pop %v4811
    %v4813 = vadd.f32 %v4810, 1.0
    %v4814 = vadd.f32 %v4812, 1.0
    %v4815 = vrcp.pop %v4813
    %v4816 = vmul.f32 1.0, %v4815
    %v4817 = vrcp.pop %v4814
    %v4818 = vmul.f32 1.0, %v4817
    %v4819 = vtanh.pop %v4806
    %v4821 = vrot.slane %v4741, 6
    %v4823 = vmul.f32 %v4816, %v4821
    %4825 = vrot.lane.b32.xlu0 %v4819, 64
    %v4826 = vpop.permute.xlu0 %4825
    %v4828 = vmul.f32 %v4816, %v4826
    %4830 = vrot.lane.b32.xlu0 %v4828, 64
    %v4831 = vpop.permute.xlu0 %4830
    %v4833 = vadd.f32 %v4823, %v4831
    %v4834 = vtanh.pop %v4833
    %4836 = vrot.lane.b32.xlu0 %v4834, 64
    %v4837 = vpop.permute.xlu0 %4836
    %v4839 = vmul.f32 %v4818, %v4837
    %v4840 = vpack.c.bf16 %v4839, %v4839
    %v4842 = vrot.slane %v4840, 1
    %v4844 = vsel %vm884, %v4842, 0
    %4846 = vmatprep.subr.bf16.mxu0 %v4660
    %4847 = vmatpush1.bf16.msra.mxu0 %v4659
    %4848 = vmatprep.subr.bf16.mxu0 %v4662
    %4849 = vmatpush1.bf16.msra.mxu0 %v4661
    %4850 = vmatprep.subr.bf16.mxu0 %v4664
    %4851 = vmatpush1.bf16.msra.mxu0 %v4663
    %4852 = vmatprep.subr.bf16.mxu0 %v4666
    %4853 = vmatpush1.bf16.msra.mxu0 %v4665
    %4854 = vmatprep.subr.bf16.mxu0 0
    %4855 = vmatpush1.bf16.msra.mxu0 0
    %4856 = vmatprep.subr.bf16.mxu0 0
    %4857 = vmatpush1.bf16.msra.mxu0 0
    %4858 = vmatprep.subr.bf16.mxu0 0
    %4859 = vmatpush1.bf16.msra.mxu0 0
    %4860 = vmatprep.subr.bf16.mxu0 0
    %4861 = vmatpush1.bf16.msra.mxu0 0
    %4862 = vmatprep.subr.bf16.mxu0 0
    %4863 = vmatpush1.bf16.msra.mxu0 0
    %4864 = vmatprep.subr.bf16.mxu0 0
    %4865 = vmatpush1.bf16.msra.mxu0 0
    %4866 = vmatprep.subr.bf16.mxu0 0
    %4867 = vmatpush1.bf16.msra.mxu0 0
    %4868 = vmatprep.subr.bf16.mxu0 0
    %4869 = vmatpush1.bf16.msra.mxu0 0
    %4870 = vmatprep.subr.bf16.mxu0 0
    %4871 = vmatpush1.bf16.msra.mxu0 0
    %4872 = vmatprep.subr.bf16.mxu0 0
    %4873 = vmatpush1.bf16.msra.mxu0 0
    %4874 = vmatprep.subr.bf16.mxu0 0
    %4875 = vmatpush1.bf16.msra.mxu0 0
    %4876 = vmatprep.subr.bf16.mxu0 0
    %4877 = vmatpush1.bf16.msra.mxu0 0
    %4878 = vmatprep.mubr.bf16.mxu0 0
    %4879 = vmatmul.mubr.bf16.gmra.mrb[0].mxu0 %v4844
    %v4880 = vpop.f32.mrb[0].mxu0
    %v4881 = vadd.f32 0.0, %v4880
    %v4882 = vpop.f32.mrb[0].mxu0
    %v4883 = vadd.f32 0.0, %v4882
    %v4884 = vpop.f32.mrb[0].mxu0
    %v4885 = vpop.f32.mrb[0].mxu0
    %4886 = vdwg.mxu0
    %v4889 = vrot.slane %v4881, 4
    %v4890 = vrot.slane %v4883, 4
    %v4893 = vadd.f32 %v4633, %v4889
    %v4894 = vadd.f32 %v4634, %v4890
    %v4895 = vxor.u32 %v4893, 2147483648
    %v4896 = vxor.u32 %v4894, 2147483648
    %v4897 = vmul.f32 %v4895, 1.442695
    %v4898 = vpow.pop %v4897
    %v4899 = vmul.f32 %v4896, 1.442695
    %v4900 = vpow.pop %v4899
    %v4901 = vadd.f32 %v4898, 1.0
    %v4902 = vadd.f32 %v4900, 1.0
    %v4903 = vrcp.pop %v4901
    %v4904 = vmul.f32 1.0, %v4903
    %v4905 = vrcp.pop %v4902
    %v4906 = vmul.f32 1.0, %v4905
    %v4907 = vtanh.pop %v4894
    %v4909 = vrot.slane %v4833, 6
    %v4911 = vmul.f32 %v4904, %v4909
    %4913 = vrot.lane.b32.xlu0 %v4907, 64
    %v4914 = vpop.permute.xlu0 %4913
    %v4916 = vmul.f32 %v4904, %v4914
    %4918 = vrot.lane.b32.xlu0 %v4916, 64
    %v4919 = vpop.permute.xlu0 %4918
    %v4921 = vadd.f32 %v4911, %v4919
    %v4922 = vtanh.pop %v4921
    %4924 = vrot.lane.b32.xlu0 %v4922, 64
    %v4925 = vpop.permute.xlu0 %4924
    %v4927 = vmul.f32 %v4906, %v4925
    %v4928 = vpack.c.bf16 %v4927, %v4927
    %v4930 = vrot.slane %v4928, 2
    %v4932 = vsel %vm884, %v4930, 0
    %4934 = vmatprep.subr.bf16.mxu0 %v4660
    %4935 = vmatpush1.bf16.msra.mxu0 %v4659
    %4936 = vmatprep.subr.bf16.mxu0 %v4662
    %4937 = vmatpush1.bf16.msra.mxu0 %v4661
    %4938 = vmatprep.subr.bf16.mxu0 %v4664
    %4939 = vmatpush1.bf16.msra.mxu0 %v4663
    %4940 = vmatprep.subr.bf16.mxu0 %v4666
    %4941 = vmatpush1.bf16.msra.mxu0 %v4665
    %4942 = vmatprep.subr.bf16.mxu0 0
    %4943 = vmatpush1.bf16.msra.mxu0 0
    %4944 = vmatprep.subr.bf16.mxu0 0
    %4945 = vmatpush1.bf16.msra.mxu0 0
    %4946 = vmatprep.subr.bf16.mxu0 0
    %4947 = vmatpush1.bf16.msra.mxu0 0
    %4948 = vmatprep.subr.bf16.mxu0 0
    %4949 = vmatpush1.bf16.msra.mxu0 0
    %4950 = vmatprep.subr.bf16.mxu0 0
    %4951 = vmatpush1.bf16.msra.mxu0 0
    %4952 = vmatprep.subr.bf16.mxu0 0
    %4953 = vmatpush1.bf16.msra.mxu0 0
    %4954 = vmatprep.subr.bf16.mxu0 0
    %4955 = vmatpush1.bf16.msra.mxu0 0
    %4956 = vmatprep.subr.bf16.mxu0 0
    %4957 = vmatpush1.bf16.msra.mxu0 0
    %4958 = vmatprep.subr.bf16.mxu0 0
    %4959 = vmatpush1.bf16.msra.mxu0 0
    %4960 = vmatprep.subr.bf16.mxu0 0
    %4961 = vmatpush1.bf16.msra.mxu0 0
    %4962 = vmatprep.subr.bf16.mxu0 0
    %4963 = vmatpush1.bf16.msra.mxu0 0
    %4964 = vmatprep.subr.bf16.mxu0 0
    %4965 = vmatpush1.bf16.msra.mxu0 0
    %4966 = vmatprep.mubr.bf16.mxu0 0
    %4967 = vmatmul.mubr.bf16.gmra.mrb[0].mxu0 %v4932
    %v4968 = vpop.f32.mrb[0].mxu0
    %v4969 = vadd.f32 0.0, %v4968
    %v4970 = vpop.f32.mrb[0].mxu0
    %v4971 = vadd.f32 0.0, %v4970
    %v4972 = vpop.f32.mrb[0].mxu0
    %v4973 = vpop.f32.mrb[0].mxu0
    %4974 = vdwg.mxu0
    %v4977 = vrot.slane %v4969, 2
    %v4978 = vrot.slane %v4971, 2
    %v4981 = vadd.f32 %v4752, %v4977
    %v4982 = vadd.f32 %v4753, %v4978
    %v4983 = vxor.u32 %v4981, 2147483648
    %v4984 = vxor.u32 %v4982, 2147483648
    %v4985 = vmul.f32 %v4983, 1.442695
    %v4986 = vpow.pop %v4985
    %v4987 = vmul.f32 %v4984, 1.442695
    %v4988 = vpow.pop %v4987
    %v4989 = vadd.f32 %v4986, 1.0
    %v4990 = vadd.f32 %v4988, 1.0
    %v4991 = vrcp.pop %v4989
    %v4992 = vmul.f32 1.0, %v4991
    %v4993 = vrcp.pop %v4990
    %v4994 = vmul.f32 1.0, %v4993
    %v4995 = vtanh.pop %v4982
    %v4997 = vrot.slane %v4921, 6
    %v4999 = vmul.f32 %v4992, %v4997
    %5001 = vrot.lane.b32.xlu0 %v4995, 64
    %v5002 = vpop.permute.xlu0 %5001
    %v5004 = vmul.f32 %v4992, %v5002
    %5006 = vrot.lane.b32.xlu0 %v5004, 64
    %v5007 = vpop.permute.xlu0 %5006
    %v5009 = vadd.f32 %v4999, %v5007
    %v5010 = vtanh.pop %v5009
    %5012 = vrot.lane.b32.xlu0 %v5010, 64
    %v5013 = vpop.permute.xlu0 %5012
    %v5015 = vmul.f32 %v4994, %v5013
    %v5018 = vrot.slane %v4610, 6
    %v5019 = vrot.slane %v4612, 6
    %v5022 = vsel %vm1905, %v4614, %v5018
    %v5023 = vsel %vm1906, %v4616, %v5019
    %v5024 = vpack.c.bf16 %v5015, %v5015
    %v5026 = vrot.slane %v5024, 3
    %v5028 = vsel %vm884, %v5026, 0
    %5030 = vmatprep.subr.bf16.mxu0 %v4660
    %5031 = vmatpush1.bf16.msra.mxu0 %v4659
    %5032 = vmatprep.subr.bf16.mxu0 %v4662
    %5033 = vmatpush1.bf16.msra.mxu0 %v4661
    %5034 = vmatprep.subr.bf16.mxu0 %v4664
    %5035 = vmatpush1.bf16.msra.mxu0 %v4663
    %5036 = vmatprep.subr.bf16.mxu0 %v4666
    %5037 = vmatpush1.bf16.msra.mxu0 %v4665
    %5038 = vmatprep.subr.bf16.mxu0 0
    %5039 = vmatpush1.bf16.msra.mxu0 0
    %5040 = vmatprep.subr.bf16.mxu0 0
    %5041 = vmatpush1.bf16.msra.mxu0 0
    %5042 = vmatprep.subr.bf16.mxu0 0
    %5043 = vmatpush1.bf16.msra.mxu0 0
    %5044 = vmatprep.subr.bf16.mxu0 0
    %5045 = vmatpush1.bf16.msra.mxu0 0
    %5046 = vmatprep.subr.bf16.mxu0 0
    %5047 = vmatpush1.bf16.msra.mxu0 0
    %5048 = vmatprep.subr.bf16.mxu0 0
    %5049 = vmatpush1.bf16.msra.mxu0 0
    %5050 = vmatprep.subr.bf16.mxu0 0
    %5051 = vmatpush1.bf16.msra.mxu0 0
    %5052 = vmatprep.subr.bf16.mxu0 0
    %5053 = vmatpush1.bf16.msra.mxu0 0
    %5054 = vmatprep.subr.bf16.mxu0 0
    %5055 = vmatpush1.bf16.msra.mxu0 0
    %5056 = vmatprep.subr.bf16.mxu0 0
    %5057 = vmatpush1.bf16.msra.mxu0 0
    %5058 = vmatprep.subr.bf16.mxu0 0
    %5059 = vmatpush1.bf16.msra.mxu0 0
    %5060 = vmatprep.subr.bf16.mxu0 0
    %5061 = vmatpush1.bf16.msra.mxu0 0
    %5062 = vmatprep.mubr.bf16.mxu0 0
    %5063 = vmatmul.mubr.bf16.gmra.mrb[0].mxu0 %v5028
    %v5064 = vpop.f32.mrb[0].mxu0
    %v5065 = vadd.f32 0.0, %v5064
    %v5066 = vpop.f32.mrb[0].mxu0
    %v5067 = vadd.f32 0.0, %v5066
    %v5068 = vpop.f32.mrb[0].mxu0
    %v5069 = vpop.f32.mrb[0].mxu0
    %5070 = vdwg.mxu0
    %v5071 = vadd.f32 %v5022, %v5065
    %v5072 = vadd.f32 %v5023, %v5067
    %v5073 = vxor.u32 %v5071, 2147483648
    %v5074 = vxor.u32 %v5072, 2147483648
    %v5075 = vmul.f32 %v5073, 1.442695
    %v5076 = vpow.pop %v5075
    %v5077 = vmul.f32 %v5074, 1.442695
    %v5078 = vpow.pop %v5077
    %v5079 = vadd.f32 %v5076, 1.0
    %v5080 = vadd.f32 %v5078, 1.0
    %v5081 = vrcp.pop %v5079
    %v5082 = vmul.f32 1.0, %v5081
    %v5083 = vrcp.pop %v5080
    %v5084 = vmul.f32 1.0, %v5083
    %v5085 = vtanh.pop %v5072
    %v5087 = vrot.slane %v5009, 6
    %v5089 = vmul.f32 %v5082, %v5087
    %5091 = vrot.lane.b32.xlu0 %v5085, 64
    %v5092 = vpop.permute.xlu0 %5091
    %v5094 = vmul.f32 %v5082, %v5092
    %5096 = vrot.lane.b32.xlu0 %v5094, 64
    %v5097 = vpop.permute.xlu0 %5096
    %v5099 = vadd.f32 %v5089, %v5097
    %v5100 = vtanh.pop %v5099
    %5102 = vrot.lane.b32.xlu0 %v5100, 64
    %v5103 = vpop.permute.xlu0 %5102
    %v5105 = vmul.f32 %v5084, %v5103
    %v5106 = vrot.slane %v4610, 2
    %v5107 = vrot.slane %v4612, 2
    %v5110 = vsel %vm1905, %v4614, %v5106
    %v5111 = vsel %vm1906, %v4616, %v5107
    %v5112 = vpack.c.bf16 %v5105, %v5105
    %v5114 = vsel %vm884, %v5112, 0
    %5116 = vmatprep.subr.bf16.mxu0 %v4660
    %5117 = vmatpush1.bf16.msra.mxu0 %v4659
    %5118 = vmatprep.subr.bf16.mxu0 %v4662
    %5119 = vmatpush1.bf16.msra.mxu0 %v4661
    %5120 = vmatprep.subr.bf16.mxu0 %v4664
    %5121 = vmatpush1.bf16.msra.mxu0 %v4663
    %5122 = vmatprep.subr.bf16.mxu0 %v4666
    %5123 = vmatpush1.bf16.msra.mxu0 %v4665
    %5124 = vmatprep.subr.bf16.mxu0 0
    %5125 = vmatpush1.bf16.msra.mxu0 0
    %5126 = vmatprep.subr.bf16.mxu0 0
    %5127 = vmatpush1.bf16.msra.mxu0 0
    %5128 = vmatprep.subr.bf16.mxu0 0
    %5129 = vmatpush1.bf16.msra.mxu0 0
    %5130 = vmatprep.subr.bf16.mxu0 0
    %5131 = vmatpush1.bf16.msra.mxu0 0
    %5132 = vmatprep.subr.bf16.mxu0 0
    %5133 = vmatpush1.bf16.msra.mxu0 0
    %5134 = vmatprep.subr.bf16.mxu0 0
    %5135 = vmatpush1.bf16.msra.mxu0 0
    %5136 = vmatprep.subr.bf16.mxu0 0
    %5137 = vmatpush1.bf16.msra.mxu0 0
    %5138 = vmatprep.subr.bf16.mxu0 0
    %5139 = vmatpush1.bf16.msra.mxu0 0
    %5140 = vmatprep.subr.bf16.mxu0 0
    %5141 = vmatpush1.bf16.msra.mxu0 0
    %5142 = vmatprep.subr.bf16.mxu0 0
    %5143 = vmatpush1.bf16.msra.mxu0 0
    %5144 = vmatprep.subr.bf16.mxu0 0
    %5145 = vmatpush1.bf16.msra.mxu0 0
    %5146 = vmatprep.subr.bf16.mxu0 0
    %5147 = vmatpush1.bf16.msra.mxu0 0
    %5148 = vmatprep.mubr.bf16.mxu0 0
    %5149 = vmatmul.mubr.bf16.gmra.mrb[0].mxu0 %v5114
    %v5150 = vpop.f32.mrb[0].mxu0
    %v5151 = vadd.f32 0.0, %v5150
    %v5152 = vpop.f32.mrb[0].mxu0
    %v5153 = vadd.f32 0.0, %v5152
    %v5154 = vpop.f32.mrb[0].mxu0
    %v5155 = vpop.f32.mrb[0].mxu0
    %5156 = vdwg.mxu0
    %v5159 = vrot.slane %v5151, 6
    %v5160 = vrot.slane %v5153, 6
    %v5163 = vadd.f32 %v5110, %v5159
    %v5164 = vadd.f32 %v5111, %v5160
    %v5165 = vxor.u32 %v5163, 2147483648
    %v5166 = vxor.u32 %v5164, 2147483648
    %v5167 = vmul.f32 %v5165, 1.442695
    %v5168 = vpow.pop %v5167
    %v5169 = vmul.f32 %v5166, 1.442695
    %v5170 = vpow.pop %v5169
    %v5171 = vadd.f32 %v5168, 1.0
    %v5172 = vadd.f32 %v5170, 1.0
    %v5173 = vrcp.pop %v5171
    %v5174 = vmul.f32 1.0, %v5173
    %v5175 = vrcp.pop %v5172
    %v5176 = vmul.f32 1.0, %v5175
    %v5177 = vtanh.pop %v5164
    %v5179 = vrot.slane %v5099, 6
    %v5181 = vmul.f32 %v5174, %v5179
    %5183 = vrot.lane.b32.xlu0 %v5177, 64
    %v5184 = vpop.permute.xlu0 %5183
    %v5186 = vmul.f32 %v5174, %v5184
    %5188 = vrot.lane.b32.xlu0 %v5186, 64
    %v5189 = vpop.permute.xlu0 %5188
    %v5191 = vadd.f32 %v5181, %v5189
    %v5192 = vtanh.pop %v5191
    %5194 = vrot.lane.b32.xlu0 %v5192, 64
    %v5195 = vpop.permute.xlu0 %5194
    %v5197 = vmul.f32 %v5176, %v5195
    %v5198 = vpack.c.bf16 %v5197, %v5197
    %v5200 = vrot.slane %v5198, 1
    %v5202 = vsel %vm884, %v5200, 0
    %5204 = vmatprep.subr.bf16.mxu0 %v4660
    %5205 = vmatpush1.bf16.msra.mxu0 %v4659
    %5206 = vmatprep.subr.bf16.mxu0 %v4662
    %5207 = vmatpush1.bf16.msra.mxu0 %v4661
    %5208 = vmatprep.subr.bf16.mxu0 %v4664
    %5209 = vmatpush1.bf16.msra.mxu0 %v4663
    %5210 = vmatprep.subr.bf16.mxu0 %v4666
    %5211 = vmatpush1.bf16.msra.mxu0 %v4665
    %5212 = vmatprep.subr.bf16.mxu0 0
    %5213 = vmatpush1.bf16.msra.mxu0 0
    %5214 = vmatprep.subr.bf16.mxu0 0
    %5215 = vmatpush1.bf16.msra.mxu0 0
    %5216 = vmatprep.subr.bf16.mxu0 0
    %5217 = vmatpush1.bf16.msra.mxu0 0
    %5218 = vmatprep.subr.bf16.mxu0 0
    %5219 = vmatpush1.bf16.msra.mxu0 0
    %5220 = vmatprep.subr.bf16.mxu0 0
    %5221 = vmatpush1.bf16.msra.mxu0 0
    %5222 = vmatprep.subr.bf16.mxu0 0
    %5223 = vmatpush1.bf16.msra.mxu0 0
    %5224 = vmatprep.subr.bf16.mxu0 0
    %5225 = vmatpush1.bf16.msra.mxu0 0
    %5226 = vmatprep.subr.bf16.mxu0 0
    %5227 = vmatpush1.bf16.msra.mxu0 0
    %5228 = vmatprep.subr.bf16.mxu0 0
    %5229 = vmatpush1.bf16.msra.mxu0 0
    %5230 = vmatprep.subr.bf16.mxu0 0
    %5231 = vmatpush1.bf16.msra.mxu0 0
    %5232 = vmatprep.subr.bf16.mxu0 0
    %5233 = vmatpush1.bf16.msra.mxu0 0
    %5234 = vmatprep.subr.bf16.mxu0 0
    %5235 = vmatpush1.bf16.msra.mxu0 0
    %5236 = vmatprep.mubr.bf16.mxu0 0
    %5237 = vmatmul.mubr.bf16.gmra.mrb[0].mxu0 %v5202
    %v5238 = vpop.f32.mrb[0].mxu0
    %v5239 = vadd.f32 0.0, %v5238
    %v5240 = vpop.f32.mrb[0].mxu0
    %v5241 = vadd.f32 0.0, %v5240
    %v5242 = vpop.f32.mrb[0].mxu0
    %v5243 = vpop.f32.mrb[0].mxu0
    %5244 = vdwg.mxu0
    %v5247 = vrot.slane %v5239, 4
    %v5248 = vrot.slane %v5241, 4
    %v5251 = vadd.f32 %v5022, %v5247
    %v5252 = vadd.f32 %v5023, %v5248
    %v5253 = vxor.u32 %v5251, 2147483648
    %v5254 = vxor.u32 %v5252, 2147483648
    %v5255 = vmul.f32 %v5253, 1.442695
    %v5256 = vpow.pop %v5255
    %v5257 = vmul.f32 %v5254, 1.442695
    %v5258 = vpow.pop %v5257
    %v5259 = vadd.f32 %v5256, 1.0
    %v5260 = vadd.f32 %v5258, 1.0
    %v5261 = vrcp.pop %v5259
    %v5262 = vmul.f32 1.0, %v5261
    %v5263 = vrcp.pop %v5260
    %v5264 = vmul.f32 1.0, %v5263
    %v5265 = vtanh.pop %v5252
    %v5267 = vrot.slane %v5191, 6
    %v5269 = vmul.f32 %v5262, %v5267
    %5271 = vrot.lane.b32.xlu0 %v5265, 64
    %v5272 = vpop.permute.xlu0 %5271
    %v5274 = vmul.f32 %v5262, %v5272
    %5276 = vrot.lane.b32.xlu0 %v5274, 64
    %v5277 = vpop.permute.xlu0 %5276
    %v5279 = vadd.f32 %v5269, %v5277
    %v5280 = vtanh.pop %v5279
    %5282 = vrot.lane.b32.xlu0 %v5280, 64
    %v5283 = vpop.permute.xlu0 %5282
    %v5285 = vmul.f32 %v5264, %v5283
    %v5286 = vpack.c.bf16 %v5285, %v5285
    %v5288 = vrot.slane %v5286, 2
    %v5290 = vsel %vm884, %v5288, 0
    %5292 = vmatprep.subr.bf16.mxu0 %v4660
    %5293 = vmatpush1.bf16.msra.mxu0 %v4659
    %5294 = vmatprep.subr.bf16.mxu0 %v4662
    %5295 = vmatpush1.bf16.msra.mxu0 %v4661
    %5296 = vmatprep.subr.bf16.mxu0 %v4664
    %5297 = vmatpush1.bf16.msra.mxu0 %v4663
    %5298 = vmatprep.subr.bf16.mxu0 %v4666
    %5299 = vmatpush1.bf16.msra.mxu0 %v4665
    %5300 = vmatprep.subr.bf16.mxu0 0
    %5301 = vmatpush1.bf16.msra.mxu0 0
    %5302 = vmatprep.subr.bf16.mxu0 0
    %5303 = vmatpush1.bf16.msra.mxu0 0
    %5304 = vmatprep.subr.bf16.mxu0 0
    %5305 = vmatpush1.bf16.msra.mxu0 0
    %5306 = vmatprep.subr.bf16.mxu0 0
    %5307 = vmatpush1.bf16.msra.mxu0 0
    %5308 = vmatprep.subr.bf16.mxu0 0
    %5309 = vmatpush1.bf16.msra.mxu0 0
    %5310 = vmatprep.subr.bf16.mxu0 0
    %5311 = vmatpush1.bf16.msra.mxu0 0
    %5312 = vmatprep.subr.bf16.mxu0 0
    %5313 = vmatpush1.bf16.msra.mxu0 0
    %5314 = vmatprep.subr.bf16.mxu0 0
    %5315 = vmatpush1.bf16.msra.mxu0 0
    %5316 = vmatprep.subr.bf16.mxu0 0
    %5317 = vmatpush1.bf16.msra.mxu0 0
    %5318 = vmatprep.subr.bf16.mxu0 0
    %5319 = vmatpush1.bf16.msra.mxu0 0
    %5320 = vmatprep.subr.bf16.mxu0 0
    %5321 = vmatpush1.bf16.msra.mxu0 0
    %5322 = vmatprep.subr.bf16.mxu0 0
    %5323 = vmatpush1.bf16.msra.mxu0 0
    %5324 = vmatprep.mubr.bf16.mxu0 0
    %5325 = vmatmul.mubr.bf16.gmra.mrb[0].mxu0 %v5290
    %v5326 = vpop.f32.mrb[0].mxu0
    %v5327 = vadd.f32 0.0, %v5326
    %v5328 = vpop.f32.mrb[0].mxu0
    %v5329 = vadd.f32 0.0, %v5328
    %v5330 = vpop.f32.mrb[0].mxu0
    %v5331 = vpop.f32.mrb[0].mxu0
    %5332 = vdwg.mxu0
    %v5335 = vrot.slane %v5327, 2
    %v5336 = vrot.slane %v5329, 2
    %v5339 = vadd.f32 %v5110, %v5335
    %v5340 = vadd.f32 %v5111, %v5336
    %v5341 = vxor.u32 %v5339, 2147483648
    %v5342 = vxor.u32 %v5340, 2147483648
    %v5343 = vmul.f32 %v5341, 1.442695
    %v5344 = vpow.pop %v5343
    %v5345 = vmul.f32 %v5342, 1.442695
    %v5346 = vpow.pop %v5345
    %v5347 = vadd.f32 %v5344, 1.0
    %v5348 = vadd.f32 %v5346, 1.0
    %v5349 = vrcp.pop %v5347
    %v5350 = vmul.f32 1.0, %v5349
    %v5351 = vrcp.pop %v5348
    %v5352 = vmul.f32 1.0, %v5351
    %v5353 = vtanh.pop %v5340
    %v5355 = vrot.slane %v5279, 6
    %v5357 = vmul.f32 %v5350, %v5355
    %5359 = vrot.lane.b32.xlu0 %v5353, 64
    %v5360 = vpop.permute.xlu0 %5359
    %v5362 = vmul.f32 %v5350, %v5360
    %5364 = vrot.lane.b32.xlu0 %v5362, 64
    %v5365 = vpop.permute.xlu0 %5364
    %v5367 = vadd.f32 %v5357, %v5365
    %v5368 = vtanh.pop %v5367
    %5370 = vrot.lane.b32.xlu0 %v5368, 64
    %v5371 = vpop.permute.xlu0 %5370
    %v5373 = vmul.f32 %v5352, %v5371
    %v5375 = vrot.slane %v5373, 6
    %v5377 = vsel %vm2662, %v4747, %v5375
    %v5379 = vrot.slane %v5285, 2
    %v5381 = vsel %vm2662, %v4839, %v5379
    %v5383 = vrot.slane %v5197, 6
    %v5385 = vsel %vm2662, %v4927, %v5383
    %v5387 = vrot.slane %v5105, 2
    %v5389 = vsel %vm2662, %v5015, %v5387
    %v5391 = vrot.slane %v5015, 6
    %v5393 = vsel %vm2662, %v5105, %v5391
    %v5395 = vrot.slane %v4927, 2
    %v5397 = vsel %vm2662, %v5197, %v5395
    %v5399 = vrot.slane %v4839, 6
    %v5401 = vsel %vm2662, %v5285, %v5399
    %v5403 = vrot.slane %v4747, 2
    %v5405 = vsel %vm2662, %v5373, %v5403
    %v5406 = vsel %vm2695, %v5377, %v5381
    %v5407 = vsel %vm2697, %v5406, %v5385
    %v5408 = vsel %vm2699, %v5407, %v5389
    %v5409 = vsel %vm2695, %v5393, %v5397
    %v5410 = vsel %vm2697, %v5409, %v5401
    %v5411 = vsel %vm2699, %v5410, %v5405
    %s5412 = scalar_lea.vmem %s20, 192
    %v5413 = vld [vmem:[%s5412] sm:$0xff]
    %v5414 = vld [vmem:[%s5412 + $0x8] sm:$0xff]
    %v5415 = vld [vmem:[%s5412 + $0x10] sm:$0xff]
    %v5416 = vld [vmem:[%s5412 + $0x18] sm:$0xff]
    %v5417 = vld [vmem:[%s5412 + $0x20] sm:$0xff]
    %v5418 = vld [vmem:[%s5412 + $0x28] sm:$0xff]
    %v5419 = vld [vmem:[%s5412 + $0x30] sm:$0xff]
    %v5420 = vld [vmem:[%s5412 + $0x38] sm:$0xff]
    %v5421 = vpack.c.bf16 %v5411, %v5408
    %s5422 = scalar_lea.vmem %s21, 8
    %v5423 = vld [vmem:[%s5422] sm:$0x3]
    %v5425 = vlaneseq
    %v5426 = vshrl.u32 %v5425, 7
    %v5427 = vsub.s32 0, %v5426
    %v5428 = vrot.slane %v5423, %v5427
    %v5429 = vlaneseq
    %v5430 = vshrl.u32 %v5429, 7
    %v5431 = vsub.s32 1, %v5430
    %v5432 = vrot.slane %v5423, %v5431
    %v5443 = vunpack.c.l.b16 %v5413
    %v5444 = vunpack.c.h.b16 %v5413
    %v5445 = vunpack.c.l.b16 %v5414
    %v5446 = vunpack.c.h.b16 %v5414
    %v5447 = vunpack.c.l.b16 %v5415
    %v5448 = vunpack.c.h.b16 %v5415
    %v5449 = vunpack.c.l.b16 %v5416
    %v5450 = vunpack.c.h.b16 %v5416
    %v5451 = vunpack.c.l.b16 %v5417
    %v5452 = vunpack.c.h.b16 %v5417
    %v5453 = vunpack.c.l.b16 %v5418
    %v5454 = vunpack.c.h.b16 %v5418
    %v5455 = vunpack.c.l.b16 %v5419
    %v5456 = vunpack.c.h.b16 %v5419
    %v5457 = vunpack.c.l.b16 %v5420
    %v5458 = vunpack.c.h.b16 %v5420
    %v5459 = vpack.c.b16 %v5445, %v5443
    %v5460 = vpack.c.b16 %v5446, %v5444
    %v5461 = vpack.c.b16 %v5449, %v5447
    %v5462 = vpack.c.b16 %v5450, %v5448
    %v5463 = vpack.c.b16 %v5453, %v5451
    %v5464 = vpack.c.b16 %v5454, %v5452
    %v5465 = vpack.c.b16 %v5457, %v5455
    %v5466 = vpack.c.b16 %v5458, %v5456
    %v5476 = vsel %vm884, %v5421, 0
    %5478 = vmatprep.subr.bf16.mxu0 %v5460
    %5479 = vmatpush1.bf16.msra.mxu0 %v5459
    %5480 = vmatprep.subr.bf16.mxu0 %v5462
    %5481 = vmatpush1.bf16.msra.mxu0 %v5461
    %5482 = vmatprep.subr.bf16.mxu0 %v5464
    %5483 = vmatpush1.bf16.msra.mxu0 %v5463
    %5484 = vmatprep.subr.bf16.mxu0 %v5466
    %5485 = vmatpush1.bf16.msra.mxu0 %v5465
    %5486 = vmatprep.subr.bf16.mxu0 0
    %5487 = vmatpush1.bf16.msra.mxu0 0
    %5488 = vmatprep.subr.bf16.mxu0 0
    %5489 = vmatpush1.bf16.msra.mxu0 0
    %5490 = vmatprep.subr.bf16.mxu0 0
    %5491 = vmatpush1.bf16.msra.mxu0 0
    %5492 = vmatprep.subr.bf16.mxu0 0
    %5493 = vmatpush1.bf16.msra.mxu0 0
    %5494 = vmatprep.subr.bf16.mxu0 0
    %5495 = vmatpush1.bf16.msra.mxu0 0
    %5496 = vmatprep.subr.bf16.mxu0 0
    %5497 = vmatpush1.bf16.msra.mxu0 0
    %5498 = vmatprep.subr.bf16.mxu0 0
    %5499 = vmatpush1.bf16.msra.mxu0 0
    %5500 = vmatprep.subr.bf16.mxu0 0
    %5501 = vmatpush1.bf16.msra.mxu0 0
    %5502 = vmatprep.subr.bf16.mxu0 0
    %5503 = vmatpush1.bf16.msra.mxu0 0
    %5504 = vmatprep.subr.bf16.mxu0 0
    %5505 = vmatpush1.bf16.msra.mxu0 0
    %5506 = vmatprep.subr.bf16.mxu0 0
    %5507 = vmatpush1.bf16.msra.mxu0 0
    %5508 = vmatprep.subr.bf16.mxu0 0
    %5509 = vmatpush1.bf16.msra.mxu0 0
    %5510 = vmatprep.mubr.bf16.mxu0 0
    %5511 = vmatmul.mubr.bf16.gmra.mrb[0].mxu0 %v5476
    %v5512 = vpop.f32.mrb[0].mxu0
    %v5513 = vadd.f32 %v5428, %v5512
    %v5514 = vpop.f32.mrb[0].mxu0
    %v5515 = vadd.f32 %v5432, %v5514
    %v5516 = vpop.f32.mrb[0].mxu0
    %v5517 = vadd.f32 %v5428, %v5516
    %v5518 = vpop.f32.mrb[0].mxu0
    %v5519 = vadd.f32 %v5432, %v5518
    %5520 = vdwg.mxu0
    %s5521 = scalar_lea.vmem %s22, 256
    %v5522 = vld [vmem:[%s5521] sm:$0xff]
    %v5523 = vld [vmem:[%s5521 + $0x8] sm:$0xff]
    %v5524 = vld [vmem:[%s5521 + $0x10] sm:$0xff]
    %v5525 = vld [vmem:[%s5521 + $0x18] sm:$0xff]
    %v5526 = vld [vmem:[%s5521 + $0x20] sm:$0xff]
    %v5527 = vld [vmem:[%s5521 + $0x28] sm:$0xff]
    %v5528 = vld [vmem:[%s5521 + $0x30] sm:$0xff]
    %v5529 = vld [vmem:[%s5521 + $0x38] sm:$0xff]
    %v5532 = vrot.slane %v5517, 6
    %v5533 = vrot.slane %v5519, 6
    %v5536 = vsel %vm1905, %v5513, %v5532
    %v5537 = vsel %vm1906, %v5515, %v5533
    %v5546 = vunpack.c.l.b16 %v5522
    %v5547 = vunpack.c.h.b16 %v5522
    %v5548 = vunpack.c.l.b16 %v5523
    %v5549 = vunpack.c.h.b16 %v5523
    %v5550 = vunpack.c.l.b16 %v5524
    %v5551 = vunpack.c.h.b16 %v5524
    %v5552 = vunpack.c.l.b16 %v5525
    %v5553 = vunpack.c.h.b16 %v5525
    %v5554 = vunpack.c.l.b16 %v5526
    %v5555 = vunpack.c.h.b16 %v5526
    %v5556 = vunpack.c.l.b16 %v5527
    %v5557 = vunpack.c.h.b16 %v5527
    %v5558 = vunpack.c.l.b16 %v5528
    %v5559 = vunpack.c.h.b16 %v5528
    %v5560 = vunpack.c.l.b16 %v5529
    %v5561 = vunpack.c.h.b16 %v5529
    %v5562 = vpack.c.b16 %v5548, %v5546
    %v5563 = vpack.c.b16 %v5549, %v5547
    %v5564 = vpack.c.b16 %v5552, %v5550
    %v5565 = vpack.c.b16 %v5553, %v5551
    %v5566 = vpack.c.b16 %v5556, %v5554
    %v5567 = vpack.c.b16 %v5557, %v5555
    %v5568 = vpack.c.b16 %v5560, %v5558
    %v5569 = vpack.c.b16 %v5561, %v5559
    %5578 = vmatprep.subr.bf16.mxu0 %v5563
    %5579 = vmatpush1.bf16.msra.mxu0 %v5562
    %5580 = vmatprep.subr.bf16.mxu0 %v5565
    %5581 = vmatpush1.bf16.msra.mxu0 %v5564
    %5582 = vmatprep.subr.bf16.mxu0 %v5567
    %5583 = vmatpush1.bf16.msra.mxu0 %v5566
    %5584 = vmatprep.subr.bf16.mxu0 %v5569
    %5585 = vmatpush1.bf16.msra.mxu0 %v5568
    %5586 = vmatprep.subr.bf16.mxu0 0
    %5587 = vmatpush1.bf16.msra.mxu0 0
    %5588 = vmatprep.subr.bf16.mxu0 0
    %5589 = vmatpush1.bf16.msra.mxu0 0
    %5590 = vmatprep.subr.bf16.mxu0 0
    %5591 = vmatpush1.bf16.msra.mxu0 0
    %5592 = vmatprep.subr.bf16.mxu0 0
    %5593 = vmatpush1.bf16.msra.mxu0 0
    %5594 = vmatprep.subr.bf16.mxu0 0
    %5595 = vmatpush1.bf16.msra.mxu0 0
    %5596 = vmatprep.subr.bf16.mxu0 0
    %5597 = vmatpush1.bf16.msra.mxu0 0
    %5598 = vmatprep.subr.bf16.mxu0 0
    %5599 = vmatpush1.bf16.msra.mxu0 0
    %5600 = vmatprep.subr.bf16.mxu0 0
    %5601 = vmatpush1.bf16.msra.mxu0 0
    %5602 = vmatprep.subr.bf16.mxu0 0
    %5603 = vmatpush1.bf16.msra.mxu0 0
    %5604 = vmatprep.subr.bf16.mxu0 0
    %5605 = vmatpush1.bf16.msra.mxu0 0
    %5606 = vmatprep.subr.bf16.mxu0 0
    %5607 = vmatpush1.bf16.msra.mxu0 0
    %5608 = vmatprep.subr.bf16.mxu0 0
    %5609 = vmatpush1.bf16.msra.mxu0 0
    %5610 = vmatprep.mubr.bf16.mxu0 0
    %5611 = vmatmul.mubr.bf16.gmra.mrb[0].mxu0 %v1956
    %v5612 = vpop.f32.mrb[0].mxu0
    %v5613 = vadd.f32 0.0, %v5612
    %v5614 = vpop.f32.mrb[0].mxu0
    %v5615 = vadd.f32 0.0, %v5614
    %v5616 = vpop.f32.mrb[0].mxu0
    %v5617 = vpop.f32.mrb[0].mxu0
    %5618 = vdwg.mxu0
    %v5619 = vadd.f32 %v5536, %v5613
    %v5620 = vadd.f32 %v5537, %v5615
    %v5621 = vxor.u32 %v5619, 2147483648
    %v5622 = vxor.u32 %v5620, 2147483648
    %v5623 = vmul.f32 %v5621, 1.442695
    %v5624 = vpow.pop %v5623
    %v5625 = vmul.f32 %v5622, 1.442695
    %v5626 = vpow.pop %v5625
    %v5627 = vadd.f32 %v5624, 1.0
    %v5628 = vadd.f32 %v5626, 1.0
    %v5629 = vrcp.pop %v5627
    %v5630 = vmul.f32 1.0, %v5629
    %v5631 = vrcp.pop %v5628
    %v5632 = vmul.f32 1.0, %v5631
    %v5633 = vtanh.pop %v5620
    %v5634 = vmul.f32 %v5630, 0.0
    %5636 = vrot.lane.b32.xlu0 %v5633, 64
    %v5637 = vpop.permute.xlu0 %5636
    %v5639 = vmul.f32 %v5630, %v5637
    %5641 = vrot.lane.b32.xlu0 %v5639, 64
    %v5642 = vpop.permute.xlu0 %5641
    %v5644 = vadd.f32 %v5634, %v5642
    %v5645 = vtanh.pop %v5644
    %5647 = vrot.lane.b32.xlu0 %v5645, 64
    %v5648 = vpop.permute.xlu0 %5647
    %v5650 = vmul.f32 %v5632, %v5648
    %v5651 = vrot.slane %v5517, 2
    %v5652 = vrot.slane %v5519, 2
    %v5655 = vsel %vm1905, %v5513, %v5651
    %v5656 = vsel %vm1906, %v5515, %v5652
    %v5657 = vpack.c.bf16 %v5650, %v5650
    %v5659 = vsel %vm884, %v5657, 0
    %5661 = vmatprep.subr.bf16.mxu0 %v5563
    %5662 = vmatpush1.bf16.msra.mxu0 %v5562
    %5663 = vmatprep.subr.bf16.mxu0 %v5565
    %5664 = vmatpush1.bf16.msra.mxu0 %v5564
    %5665 = vmatprep.subr.bf16.mxu0 %v5567
    %5666 = vmatpush1.bf16.msra.mxu0 %v5566
    %5667 = vmatprep.subr.bf16.mxu0 %v5569
    %5668 = vmatpush1.bf16.msra.mxu0 %v5568
    %5669 = vmatprep.subr.bf16.mxu0 0
    %5670 = vmatpush1.bf16.msra.mxu0 0
    %5671 = vmatprep.subr.bf16.mxu0 0
    %5672 = vmatpush1.bf16.msra.mxu0 0
    %5673 = vmatprep.subr.bf16.mxu0 0
    %5674 = vmatpush1.bf16.msra.mxu0 0
    %5675 = vmatprep.subr.bf16.mxu0 0
    %5676 = vmatpush1.bf16.msra.mxu0 0
    %5677 = vmatprep.subr.bf16.mxu0 0
    %5678 = vmatpush1.bf16.msra.mxu0 0
    %5679 = vmatprep.subr.bf16.mxu0 0
    %5680 = vmatpush1.bf16.msra.mxu0 0
    %5681 = vmatprep.subr.bf16.mxu0 0
    %5682 = vmatpush1.bf16.msra.mxu0 0
    %5683 = vmatprep.subr.bf16.mxu0 0
    %5684 = vmatpush1.bf16.msra.mxu0 0
    %5685 = vmatprep.subr.bf16.mxu0 0
    %5686 = vmatpush1.bf16.msra.mxu0 0
    %5687 = vmatprep.subr.bf16.mxu0 0
    %5688 = vmatpush1.bf16.msra.mxu0 0
    %5689 = vmatprep.subr.bf16.mxu0 0
    %5690 = vmatpush1.bf16.msra.mxu0 0
    %5691 = vmatprep.subr.bf16.mxu0 0
    %5692 = vmatpush1.bf16.msra.mxu0 0
    %5693 = vmatprep.mubr.bf16.mxu0 0
    %5694 = vmatmul.mubr.bf16.gmra.mrb[0].mxu0 %v5659
    %v5695 = vpop.f32.mrb[0].mxu0
    %v5696 = vadd.f32 0.0, %v5695
    %v5697 = vpop.f32.mrb[0].mxu0
    %v5698 = vadd.f32 0.0, %v5697
    %v5699 = vpop.f32.mrb[0].mxu0
    %v5700 = vpop.f32.mrb[0].mxu0
    %5701 = vdwg.mxu0
    %v5704 = vrot.slane %v5696, 6
    %v5705 = vrot.slane %v5698, 6
    %v5708 = vadd.f32 %v5655, %v5704
    %v5709 = vadd.f32 %v5656, %v5705
    %v5710 = vxor.u32 %v5708, 2147483648
    %v5711 = vxor.u32 %v5709, 2147483648
    %v5712 = vmul.f32 %v5710, 1.442695
    %v5713 = vpow.pop %v5712
    %v5714 = vmul.f32 %v5711, 1.442695
    %v5715 = vpow.pop %v5714
    %v5716 = vadd.f32 %v5713, 1.0
    %v5717 = vadd.f32 %v5715, 1.0
    %v5718 = vrcp.pop %v5716
    %v5719 = vmul.f32 1.0, %v5718
    %v5720 = vrcp.pop %v5717
    %v5721 = vmul.f32 1.0, %v5720
    %v5722 = vtanh.pop %v5709
    %v5724 = vrot.slane %v5644, 6
    %v5726 = vmul.f32 %v5719, %v5724
    %5728 = vrot.lane.b32.xlu0 %v5722, 64
    %v5729 = vpop.permute.xlu0 %5728
    %v5731 = vmul.f32 %v5719, %v5729
    %5733 = vrot.lane.b32.xlu0 %v5731, 64
    %v5734 = vpop.permute.xlu0 %5733
    %v5736 = vadd.f32 %v5726, %v5734
    %v5737 = vtanh.pop %v5736
    %5739 = vrot.lane.b32.xlu0 %v5737, 64
    %v5740 = vpop.permute.xlu0 %5739
    %v5742 = vmul.f32 %v5721, %v5740
    %v5743 = vpack.c.bf16 %v5742, %v5742
    %v5745 = vrot.slane %v5743, 1
    %v5747 = vsel %vm884, %v5745, 0
    %5749 = vmatprep.subr.bf16.mxu0 %v5563
    %5750 = vmatpush1.bf16.msra.mxu0 %v5562
    %5751 = vmatprep.subr.bf16.mxu0 %v5565
    %5752 = vmatpush1.bf16.msra.mxu0 %v5564
    %5753 = vmatprep.subr.bf16.mxu0 %v5567
    %5754 = vmatpush1.bf16.msra.mxu0 %v5566
    %5755 = vmatprep.subr.bf16.mxu0 %v5569
    %5756 = vmatpush1.bf16.msra.mxu0 %v5568
    %5757 = vmatprep.subr.bf16.mxu0 0
    %5758 = vmatpush1.bf16.msra.mxu0 0
    %5759 = vmatprep.subr.bf16.mxu0 0
    %5760 = vmatpush1.bf16.msra.mxu0 0
    %5761 = vmatprep.subr.bf16.mxu0 0
    %5762 = vmatpush1.bf16.msra.mxu0 0
    %5763 = vmatprep.subr.bf16.mxu0 0
    %5764 = vmatpush1.bf16.msra.mxu0 0
    %5765 = vmatprep.subr.bf16.mxu0 0
    %5766 = vmatpush1.bf16.msra.mxu0 0
    %5767 = vmatprep.subr.bf16.mxu0 0
    %5768 = vmatpush1.bf16.msra.mxu0 0
    %5769 = vmatprep.subr.bf16.mxu0 0
    %5770 = vmatpush1.bf16.msra.mxu0 0
    %5771 = vmatprep.subr.bf16.mxu0 0
    %5772 = vmatpush1.bf16.msra.mxu0 0
    %5773 = vmatprep.subr.bf16.mxu0 0
    %5774 = vmatpush1.bf16.msra.mxu0 0
    %5775 = vmatprep.subr.bf16.mxu0 0
    %5776 = vmatpush1.bf16.msra.mxu0 0
    %5777 = vmatprep.subr.bf16.mxu0 0
    %5778 = vmatpush1.bf16.msra.mxu0 0
    %5779 = vmatprep.subr.bf16.mxu0 0
    %5780 = vmatpush1.bf16.msra.mxu0 0
    %5781 = vmatprep.mubr.bf16.mxu0 0
    %5782 = vmatmul.mubr.bf16.gmra.mrb[0].mxu0 %v5747
    %v5783 = vpop.f32.mrb[0].mxu0
    %v5784 = vadd.f32 0.0, %v5783
    %v5785 = vpop.f32.mrb[0].mxu0
    %v5786 = vadd.f32 0.0, %v5785
    %v5787 = vpop.f32.mrb[0].mxu0
    %v5788 = vpop.f32.mrb[0].mxu0
    %5789 = vdwg.mxu0
    %v5792 = vrot.slane %v5784, 4
    %v5793 = vrot.slane %v5786, 4
    %v5796 = vadd.f32 %v5536, %v5792
    %v5797 = vadd.f32 %v5537, %v5793
    %v5798 = vxor.u32 %v5796, 2147483648
    %v5799 = vxor.u32 %v5797, 2147483648
    %v5800 = vmul.f32 %v5798, 1.442695
    %v5801 = vpow.pop %v5800
    %v5802 = vmul.f32 %v5799, 1.442695
    %v5803 = vpow.pop %v5802
    %v5804 = vadd.f32 %v5801, 1.0
    %v5805 = vadd.f32 %v5803, 1.0
    %v5806 = vrcp.pop %v5804
    %v5807 = vmul.f32 1.0, %v5806
    %v5808 = vrcp.pop %v5805
    %v5809 = vmul.f32 1.0, %v5808
    %v5810 = vtanh.pop %v5797
    %v5812 = vrot.slane %v5736, 6
    %v5814 = vmul.f32 %v5807, %v5812
    %5816 = vrot.lane.b32.xlu0 %v5810, 64
    %v5817 = vpop.permute.xlu0 %5816
    %v5819 = vmul.f32 %v5807, %v5817
    %5821 = vrot.lane.b32.xlu0 %v5819, 64
    %v5822 = vpop.permute.xlu0 %5821
    %v5824 = vadd.f32 %v5814, %v5822
    %v5825 = vtanh.pop %v5824
    %5827 = vrot.lane.b32.xlu0 %v5825, 64
    %v5828 = vpop.permute.xlu0 %5827
    %v5830 = vmul.f32 %v5809, %v5828
    %v5831 = vpack.c.bf16 %v5830, %v5830
    %v5833 = vrot.slane %v5831, 2
    %v5835 = vsel %vm884, %v5833, 0
    %5837 = vmatprep.subr.bf16.mxu0 %v5563
    %5838 = vmatpush1.bf16.msra.mxu0 %v5562
    %5839 = vmatprep.subr.bf16.mxu0 %v5565
    %5840 = vmatpush1.bf16.msra.mxu0 %v5564
    %5841 = vmatprep.subr.bf16.mxu0 %v5567
    %5842 = vmatpush1.bf16.msra.mxu0 %v5566
    %5843 = vmatprep.subr.bf16.mxu0 %v5569
    %5844 = vmatpush1.bf16.msra.mxu0 %v5568
    %5845 = vmatprep.subr.bf16.mxu0 0
    %5846 = vmatpush1.bf16.msra.mxu0 0
    %5847 = vmatprep.subr.bf16.mxu0 0
    %5848 = vmatpush1.bf16.msra.mxu0 0
    %5849 = vmatprep.subr.bf16.mxu0 0
    %5850 = vmatpush1.bf16.msra.mxu0 0
    %5851 = vmatprep.subr.bf16.mxu0 0
    %5852 = vmatpush1.bf16.msra.mxu0 0
    %5853 = vmatprep.subr.bf16.mxu0 0
    %5854 = vmatpush1.bf16.msra.mxu0 0
    %5855 = vmatprep.subr.bf16.mxu0 0
    %5856 = vmatpush1.bf16.msra.mxu0 0
    %5857 = vmatprep.subr.bf16.mxu0 0
    %5858 = vmatpush1.bf16.msra.mxu0 0
    %5859 = vmatprep.subr.bf16.mxu0 0
    %5860 = vmatpush1.bf16.msra.mxu0 0
    %5861 = vmatprep.subr.bf16.mxu0 0
    %5862 = vmatpush1.bf16.msra.mxu0 0
    %5863 = vmatprep.subr.bf16.mxu0 0
    %5864 = vmatpush1.bf16.msra.mxu0 0
    %5865 = vmatprep.subr.bf16.mxu0 0
    %5866 = vmatpush1.bf16.msra.mxu0 0
    %5867 = vmatprep.subr.bf16.mxu0 0
    %5868 = vmatpush1.bf16.msra.mxu0 0
    %5869 = vmatprep.mubr.bf16.mxu0 0
    %5870 = vmatmul.mubr.bf16.gmra.mrb[0].mxu0 %v5835
    %v5871 = vpop.f32.mrb[0].mxu0
    %v5872 = vadd.f32 0.0, %v5871
    %v5873 = vpop.f32.mrb[0].mxu0
    %v5874 = vadd.f32 0.0, %v5873
    %v5875 = vpop.f32.mrb[0].mxu0
    %v5876 = vpop.f32.mrb[0].mxu0
    %5877 = vdwg.mxu0
    %v5880 = vrot.slane %v5872, 2
    %v5881 = vrot.slane %v5874, 2
    %v5884 = vadd.f32 %v5655, %v5880
    %v5885 = vadd.f32 %v5656, %v5881
    %v5886 = vxor.u32 %v5884, 2147483648
    %v5887 = vxor.u32 %v5885, 2147483648
    %v5888 = vmul.f32 %v5886, 1.442695
    %v5889 = vpow.pop %v5888
    %v5890 = vmul.f32 %v5887, 1.442695
    %v5891 = vpow.pop %v5890
    %v5892 = vadd.f32 %v5889, 1.0
    %v5893 = vadd.f32 %v5891, 1.0
    %v5894 = vrcp.pop %v5892
    %v5895 = vmul.f32 1.0, %v5894
    %v5896 = vrcp.pop %v5893
    %v5897 = vmul.f32 1.0, %v5896
    %v5898 = vtanh.pop %v5885
    %v5900 = vrot.slane %v5824, 6
    %v5902 = vmul.f32 %v5895, %v5900
    %5904 = vrot.lane.b32.xlu0 %v5898, 64
    %v5905 = vpop.permute.xlu0 %5904
    %v5907 = vmul.f32 %v5895, %v5905
    %5909 = vrot.lane.b32.xlu0 %v5907, 64
    %v5910 = vpop.permute.xlu0 %5909
    %v5912 = vadd.f32 %v5902, %v5910
    %v5913 = vtanh.pop %v5912
    %5915 = vrot.lane.b32.xlu0 %v5913, 64
    %v5916 = vpop.permute.xlu0 %5915
    %v5918 = vmul.f32 %v5897, %v5916
    %v5921 = vrot.slane %v5513, 6
    %v5922 = vrot.slane %v5515, 6
    %v5925 = vsel %vm1905, %v5517, %v5921
    %v5926 = vsel %vm1906, %v5519, %v5922
    %v5927 = vpack.c.bf16 %v5918, %v5918
    %v5929 = vrot.slane %v5927, 3
    %v5931 = vsel %vm884, %v5929, 0
    %5933 = vmatprep.subr.bf16.mxu0 %v5563
    %5934 = vmatpush1.bf16.msra.mxu0 %v5562
    %5935 = vmatprep.subr.bf16.mxu0 %v5565
    %5936 = vmatpush1.bf16.msra.mxu0 %v5564
    %5937 = vmatprep.subr.bf16.mxu0 %v5567
    %5938 = vmatpush1.bf16.msra.mxu0 %v5566
    %5939 = vmatprep.subr.bf16.mxu0 %v5569
    %5940 = vmatpush1.bf16.msra.mxu0 %v5568
    %5941 = vmatprep.subr.bf16.mxu0 0
    %5942 = vmatpush1.bf16.msra.mxu0 0
    %5943 = vmatprep.subr.bf16.mxu0 0
    %5944 = vmatpush1.bf16.msra.mxu0 0
    %5945 = vmatprep.subr.bf16.mxu0 0
    %5946 = vmatpush1.bf16.msra.mxu0 0
    %5947 = vmatprep.subr.bf16.mxu0 0
    %5948 = vmatpush1.bf16.msra.mxu0 0
    %5949 = vmatprep.subr.bf16.mxu0 0
    %5950 = vmatpush1.bf16.msra.mxu0 0
    %5951 = vmatprep.subr.bf16.mxu0 0
    %5952 = vmatpush1.bf16.msra.mxu0 0
    %5953 = vmatprep.subr.bf16.mxu0 0
    %5954 = vmatpush1.bf16.msra.mxu0 0
    %5955 = vmatprep.subr.bf16.mxu0 0
    %5956 = vmatpush1.bf16.msra.mxu0 0
    %5957 = vmatprep.subr.bf16.mxu0 0
    %5958 = vmatpush1.bf16.msra.mxu0 0
    %5959 = vmatprep.subr.bf16.mxu0 0
    %5960 = vmatpush1.bf16.msra.mxu0 0
    %5961 = vmatprep.subr.bf16.mxu0 0
    %5962 = vmatpush1.bf16.msra.mxu0 0
    %5963 = vmatprep.subr.bf16.mxu0 0
    %5964 = vmatpush1.bf16.msra.mxu0 0
    %5965 = vmatprep.mubr.bf16.mxu0 0
    %5966 = vmatmul.mubr.bf16.gmra.mrb[0].mxu0 %v5931
    %v5967 = vpop.f32.mrb[0].mxu0
    %v5968 = vadd.f32 0.0, %v5967
    %v5969 = vpop.f32.mrb[0].mxu0
    %v5970 = vadd.f32 0.0, %v5969
    %v5971 = vpop.f32.mrb[0].mxu0
    %v5972 = vpop.f32.mrb[0].mxu0
    %5973 = vdwg.mxu0
    %v5974 = vadd.f32 %v5925, %v5968
    %v5975 = vadd.f32 %v5926, %v5970
    %v5976 = vxor.u32 %v5974, 2147483648
    %v5977 = vxor.u32 %v5975, 2147483648
    %v5978 = vmul.f32 %v5976, 1.442695
    %v5979 = vpow.pop %v5978
    %v5980 = vmul.f32 %v5977, 1.442695
    %v5981 = vpow.pop %v5980
    %v5982 = vadd.f32 %v5979, 1.0
    %v5983 = vadd.f32 %v5981, 1.0
    %v5984 = vrcp.pop %v5982
    %v5985 = vmul.f32 1.0, %v5984
    %v5986 = vrcp.pop %v5983
    %v5987 = vmul.f32 1.0, %v5986
    %v5988 = vtanh.pop %v5975
    %v5990 = vrot.slane %v5912, 6
    %v5992 = vmul.f32 %v5985, %v5990
    %5994 = vrot.lane.b32.xlu0 %v5988, 64
    %v5995 = vpop.permute.xlu0 %5994
    %v5997 = vmul.f32 %v5985, %v5995
    %5999 = vrot.lane.b32.xlu0 %v5997, 64
    %v6000 = vpop.permute.xlu0 %5999
    %v6002 = vadd.f32 %v5992, %v6000
    %v6003 = vtanh.pop %v6002
    %6005 = vrot.lane.b32.xlu0 %v6003, 64
    %v6006 = vpop.permute.xlu0 %6005
    %v6008 = vmul.f32 %v5987, %v6006
    %v6009 = vrot.slane %v5513, 2
    %v6010 = vrot.slane %v5515, 2
    %v6013 = vsel %vm1905, %v5517, %v6009
    %v6014 = vsel %vm1906, %v5519, %v6010
    %v6015 = vpack.c.bf16 %v6008, %v6008
    %v6017 = vsel %vm884, %v6015, 0
    %6019 = vmatprep.subr.bf16.mxu0 %v5563
    %6020 = vmatpush1.bf16.msra.mxu0 %v5562
    %6021 = vmatprep.subr.bf16.mxu0 %v5565
    %6022 = vmatpush1.bf16.msra.mxu0 %v5564
    %6023 = vmatprep.subr.bf16.mxu0 %v5567
    %6024 = vmatpush1.bf16.msra.mxu0 %v5566
    %6025 = vmatprep.subr.bf16.mxu0 %v5569
    %6026 = vmatpush1.bf16.msra.mxu0 %v5568
    %6027 = vmatprep.subr.bf16.mxu0 0
    %6028 = vmatpush1.bf16.msra.mxu0 0
    %6029 = vmatprep.subr.bf16.mxu0 0
    %6030 = vmatpush1.bf16.msra.mxu0 0
    %6031 = vmatprep.subr.bf16.mxu0 0
    %6032 = vmatpush1.bf16.msra.mxu0 0
    %6033 = vmatprep.subr.bf16.mxu0 0
    %6034 = vmatpush1.bf16.msra.mxu0 0
    %6035 = vmatprep.subr.bf16.mxu0 0
    %6036 = vmatpush1.bf16.msra.mxu0 0
    %6037 = vmatprep.subr.bf16.mxu0 0
    %6038 = vmatpush1.bf16.msra.mxu0 0
    %6039 = vmatprep.subr.bf16.mxu0 0
    %6040 = vmatpush1.bf16.msra.mxu0 0
    %6041 = vmatprep.subr.bf16.mxu0 0
    %6042 = vmatpush1.bf16.msra.mxu0 0
    %6043 = vmatprep.subr.bf16.mxu0 0
    %6044 = vmatpush1.bf16.msra.mxu0 0
    %6045 = vmatprep.subr.bf16.mxu0 0
    %6046 = vmatpush1.bf16.msra.mxu0 0
    %6047 = vmatprep.subr.bf16.mxu0 0
    %6048 = vmatpush1.bf16.msra.mxu0 0
    %6049 = vmatprep.subr.bf16.mxu0 0
    %6050 = vmatpush1.bf16.msra.mxu0 0
    %6051 = vmatprep.mubr.bf16.mxu0 0
    %6052 = vmatmul.mubr.bf16.gmra.mrb[0].mxu0 %v6017
    %v6053 = vpop.f32.mrb[0].mxu0
    %v6054 = vadd.f32 0.0, %v6053
    %v6055 = vpop.f32.mrb[0].mxu0
    %v6056 = vadd.f32 0.0, %v6055
    %v6057 = vpop.f32.mrb[0].mxu0
    %v6058 = vpop.f32.mrb[0].mxu0
    %6059 = vdwg.mxu0
    %v6062 = vrot.slane %v6054, 6
    %v6063 = vrot.slane %v6056, 6
    %v6066 = vadd.f32 %v6013, %v6062
    %v6067 = vadd.f32 %v6014, %v6063
    %v6068 = vxor.u32 %v6066, 2147483648
    %v6069 = vxor.u32 %v6067, 2147483648
    %v6070 = vmul.f32 %v6068, 1.442695
    %v6071 = vpow.pop %v6070
    %v6072 = vmul.f32 %v6069, 1.442695
    %v6073 = vpow.pop %v6072
    %v6074 = vadd.f32 %v6071, 1.0
    %v6075 = vadd.f32 %v6073, 1.0
    %v6076 = vrcp.pop %v6074
    %v6077 = vmul.f32 1.0, %v6076
    %v6078 = vrcp.pop %v6075
    %v6079 = vmul.f32 1.0, %v6078
    %v6080 = vtanh.pop %v6067
    %v6082 = vrot.slane %v6002, 6
    %v6084 = vmul.f32 %v6077, %v6082
    %6086 = vrot.lane.b32.xlu0 %v6080, 64
    %v6087 = vpop.permute.xlu0 %6086
    %v6089 = vmul.f32 %v6077, %v6087
    %6091 = vrot.lane.b32.xlu0 %v6089, 64
    %v6092 = vpop.permute.xlu0 %6091
    %v6094 = vadd.f32 %v6084, %v6092
    %v6095 = vtanh.pop %v6094
    %6097 = vrot.lane.b32.xlu0 %v6095, 64
    %v6098 = vpop.permute.xlu0 %6097
    %v6100 = vmul.f32 %v6079, %v6098
    %v6101 = vpack.c.bf16 %v6100, %v6100
    %v6103 = vrot.slane %v6101, 1
    %v6105 = vsel %vm884, %v6103, 0
    %6107 = vmatprep.subr.bf16.mxu0 %v5563
    %6108 = vmatpush1.bf16.msra.mxu0 %v5562
    %6109 = vmatprep.subr.bf16.mxu0 %v5565
    %6110 = vmatpush1.bf16.msra.mxu0 %v5564
    %6111 = vmatprep.subr.bf16.mxu0 %v5567
    %6112 = vmatpush1.bf16.msra.mxu0 %v5566
    %6113 = vmatprep.subr.bf16.mxu0 %v5569
    %6114 = vmatpush1.bf16.msra.mxu0 %v5568
    %6115 = vmatprep.subr.bf16.mxu0 0
    %6116 = vmatpush1.bf16.msra.mxu0 0
    %6117 = vmatprep.subr.bf16.mxu0 0
    %6118 = vmatpush1.bf16.msra.mxu0 0
    %6119 = vmatprep.subr.bf16.mxu0 0
    %6120 = vmatpush1.bf16.msra.mxu0 0
    %6121 = vmatprep.subr.bf16.mxu0 0
    %6122 = vmatpush1.bf16.msra.mxu0 0
    %6123 = vmatprep.subr.bf16.mxu0 0
    %6124 = vmatpush1.bf16.msra.mxu0 0
    %6125 = vmatprep.subr.bf16.mxu0 0
    %6126 = vmatpush1.bf16.msra.mxu0 0
    %6127 = vmatprep.subr.bf16.mxu0 0
    %6128 = vmatpush1.bf16.msra.mxu0 0
    %6129 = vmatprep.subr.bf16.mxu0 0
    %6130 = vmatpush1.bf16.msra.mxu0 0
    %6131 = vmatprep.subr.bf16.mxu0 0
    %6132 = vmatpush1.bf16.msra.mxu0 0
    %6133 = vmatprep.subr.bf16.mxu0 0
    %6134 = vmatpush1.bf16.msra.mxu0 0
    %6135 = vmatprep.subr.bf16.mxu0 0
    %6136 = vmatpush1.bf16.msra.mxu0 0
    %6137 = vmatprep.subr.bf16.mxu0 0
    %6138 = vmatpush1.bf16.msra.mxu0 0
    %6139 = vmatprep.mubr.bf16.mxu0 0
    %6140 = vmatmul.mubr.bf16.gmra.mrb[0].mxu0 %v6105
    %v6141 = vpop.f32.mrb[0].mxu0
    %v6142 = vadd.f32 0.0, %v6141
    %v6143 = vpop.f32.mrb[0].mxu0
    %v6144 = vadd.f32 0.0, %v6143
    %v6145 = vpop.f32.mrb[0].mxu0
    %v6146 = vpop.f32.mrb[0].mxu0
    %6147 = vdwg.mxu0
    %v6150 = vrot.slane %v6142, 4
    %v6151 = vrot.slane %v6144, 4
    %v6154 = vadd.f32 %v5925, %v6150
    %v6155 = vadd.f32 %v5926, %v6151
    %v6156 = vxor.u32 %v6154, 2147483648
    %v6157 = vxor.u32 %v6155, 2147483648
    %v6158 = vmul.f32 %v6156, 1.442695
    %v6159 = vpow.pop %v6158
    %v6160 = vmul.f32 %v6157, 1.442695
    %v6161 = vpow.pop %v6160
    %v6162 = vadd.f32 %v6159, 1.0
    %v6163 = vadd.f32 %v6161, 1.0
    %v6164 = vrcp.pop %v6162
    %v6165 = vmul.f32 1.0, %v6164
    %v6166 = vrcp.pop %v6163
    %v6167 = vmul.f32 1.0, %v6166
    %v6168 = vtanh.pop %v6155
    %v6170 = vrot.slane %v6094, 6
    %v6172 = vmul.f32 %v6165, %v6170
    %6174 = vrot.lane.b32.xlu0 %v6168, 64
    %v6175 = vpop.permute.xlu0 %6174
    %v6177 = vmul.f32 %v6165, %v6175
    %6179 = vrot.lane.b32.xlu0 %v6177, 64
    %v6180 = vpop.permute.xlu0 %6179
    %v6182 = vadd.f32 %v6172, %v6180
    %v6183 = vtanh.pop %v6182
    %6185 = vrot.lane.b32.xlu0 %v6183, 64
    %v6186 = vpop.permute.xlu0 %6185
    %v6188 = vmul.f32 %v6167, %v6186
    %v6189 = vpack.c.bf16 %v6188, %v6188
    %v6191 = vrot.slane %v6189, 2
    %v6193 = vsel %vm884, %v6191, 0
    %6195 = vmatprep.subr.bf16.mxu0 %v5563
    %6196 = vmatpush1.bf16.msra.mxu0 %v5562
    %6197 = vmatprep.subr.bf16.mxu0 %v5565
    %6198 = vmatpush1.bf16.msra.mxu0 %v5564
    %6199 = vmatprep.subr.bf16.mxu0 %v5567
    %6200 = vmatpush1.bf16.msra.mxu0 %v5566
    %6201 = vmatprep.subr.bf16.mxu0 %v5569
    %6202 = vmatpush1.bf16.msra.mxu0 %v5568
    %6203 = vmatprep.subr.bf16.mxu0 0
    %6204 = vmatpush1.bf16.msra.mxu0 0
    %6205 = vmatprep.subr.bf16.mxu0 0
    %6206 = vmatpush1.bf16.msra.mxu0 0
    %6207 = vmatprep.subr.bf16.mxu0 0
    %6208 = vmatpush1.bf16.msra.mxu0 0
    %6209 = vmatprep.subr.bf16.mxu0 0
    %6210 = vmatpush1.bf16.msra.mxu0 0
    %6211 = vmatprep.subr.bf16.mxu0 0
    %6212 = vmatpush1.bf16.msra.mxu0 0
    %6213 = vmatprep.subr.bf16.mxu0 0
    %6214 = vmatpush1.bf16.msra.mxu0 0
    %6215 = vmatprep.subr.bf16.mxu0 0
    %6216 = vmatpush1.bf16.msra.mxu0 0
    %6217 = vmatprep.subr.bf16.mxu0 0
    %6218 = vmatpush1.bf16.msra.mxu0 0
    %6219 = vmatprep.subr.bf16.mxu0 0
    %6220 = vmatpush1.bf16.msra.mxu0 0
    %6221 = vmatprep.subr.bf16.mxu0 0
    %6222 = vmatpush1.bf16.msra.mxu0 0
    %6223 = vmatprep.subr.bf16.mxu0 0
    %6224 = vmatpush1.bf16.msra.mxu0 0
    %6225 = vmatprep.subr.bf16.mxu0 0
    %6226 = vmatpush1.bf16.msra.mxu0 0
    %6227 = vmatprep.mubr.bf16.mxu0 0
    %6228 = vmatmul.mubr.bf16.gmra.mrb[0].mxu0 %v6193
    %v6229 = vpop.f32.mrb[0].mxu0
    %v6230 = vadd.f32 0.0, %v6229
    %v6231 = vpop.f32.mrb[0].mxu0
    %v6232 = vadd.f32 0.0, %v6231
    %v6233 = vpop.f32.mrb[0].mxu0
    %v6234 = vpop.f32.mrb[0].mxu0
    %6235 = vdwg.mxu0
    %v6238 = vrot.slane %v6230, 2
    %v6239 = vrot.slane %v6232, 2
    %v6242 = vadd.f32 %v6013, %v6238
    %v6243 = vadd.f32 %v6014, %v6239
    %v6244 = vxor.u32 %v6242, 2147483648
    %v6245 = vxor.u32 %v6243, 2147483648
    %v6246 = vmul.f32 %v6244, 1.442695
    %v6247 = vpow.pop %v6246
    %v6248 = vmul.f32 %v6245, 1.442695
    %v6249 = vpow.pop %v6248
    %v6250 = vadd.f32 %v6247, 1.0
    %v6251 = vadd.f32 %v6249, 1.0
    %v6252 = vrcp.pop %v6250
    %v6253 = vmul.f32 1.0, %v6252
    %v6254 = vrcp.pop %v6251
    %v6255 = vmul.f32 1.0, %v6254
    %v6256 = vtanh.pop %v6243
    %v6258 = vrot.slane %v6182, 6
    %v6260 = vmul.f32 %v6253, %v6258
    %6262 = vrot.lane.b32.xlu0 %v6256, 64
    %v6263 = vpop.permute.xlu0 %6262
    %v6265 = vmul.f32 %v6253, %v6263
    %6267 = vrot.lane.b32.xlu0 %v6265, 64
    %v6268 = vpop.permute.xlu0 %6267
    %v6270 = vadd.f32 %v6260, %v6268
    %v6271 = vtanh.pop %v6270
    %6273 = vrot.lane.b32.xlu0 %v6271, 64
    %v6274 = vpop.permute.xlu0 %6273
    %v6276 = vmul.f32 %v6255, %v6274
    %v6277 = vmax.f32 %v6276, 0.0
    %v6278 = vld [vmem:[%s23] sm:$0xff]
    %v6279 = vld [vmem:[%s23 + $0x8] sm:$0xff]
    %v6280 = vld [vmem:[%s23 + $0x10] sm:$0xff]
    %v6281 = vld [vmem:[%s23 + $0x18] sm:$0xff]
    %v6282 = vld [vmem:[%s23 + $0x20] sm:$0xff]
    %v6283 = vld [vmem:[%s23 + $0x28] sm:$0xff]
    %v6284 = vld [vmem:[%s23 + $0x30] sm:$0xff]
    %v6285 = vld [vmem:[%s23 + $0x38] sm:$0xff]
    %v6286 = vld [vmem:[%s24] sm:$0x1]
    %v6288 = vlaneseq
    %v6289 = vshrl.u32 %v6288, 7
    %v6290 = vsub.s32 0, %v6289
    %v6291 = vrot.slane %v6286, %v6290
    %v6294 = vrot.slane %v6277, 6
    %v6295 = vsel %vm884, %v6294, 0
    %6297 = vmatprep.subr.mxu0 0.0
    %6298 = vmatpush1.msra.mxu0 %v6278
    %6299 = vmatprep.subr.mxu0 0.0
    %6300 = vmatpush1.msra.mxu0 %v6279
    %6301 = vmatprep.subr.mxu0 0.0
    %6302 = vmatpush1.msra.mxu0 %v6280
    %6303 = vmatprep.subr.mxu0 0.0
    %6304 = vmatpush1.msra.mxu0 %v6281
    %6305 = vmatprep.subr.mxu0 0.0
    %6306 = vmatpush1.msra.mxu0 %v6282
    %6307 = vmatprep.subr.mxu0 0.0
    %6308 = vmatpush1.msra.mxu0 %v6283
    %6309 = vmatprep.subr.mxu0 0.0
    %6310 = vmatpush1.msra.mxu0 %v6284
    %6311 = vmatprep.subr.mxu0 0.0
    %6312 = vmatpush1.msra.mxu0 %v6285
    %6313 = vmatprep.subr.mxu0 0.0
    %6314 = vmatpush1.msra.mxu0 0.0
    %6315 = vmatprep.subr.mxu0 0.0
    %6316 = vmatpush1.msra.mxu0 0.0
    %6317 = vmatprep.subr.mxu0 0.0
    %6318 = vmatpush1.msra.mxu0 0.0
    %6319 = vmatprep.subr.mxu0 0.0
    %6320 = vmatpush1.msra.mxu0 0.0
    %6321 = vmatprep.subr.mxu0 0.0
    %6322 = vmatpush1.msra.mxu0 0.0
    %6323 = vmatprep.subr.mxu0 0.0
    %6324 = vmatpush1.msra.mxu0 0.0
    %6325 = vmatprep.subr.mxu0 0.0
    %6326 = vmatpush1.msra.mxu0 0.0
    %6327 = vmatprep.subr.mxu0 0.0
    %6328 = vmatpush1.msra.mxu0 0.0
    %6329 = vmatprep.subr.mxu0 0.0
    %6330 = vmatpush1.msra.mxu0 0.0
    %6331 = vmatprep.subr.mxu0 0.0
    %6332 = vmatpush1.msra.mxu0 0.0
    %6333 = vmatprep.subr.mxu0 0.0
    %6334 = vmatpush1.msra.mxu0 0.0
    %6335 = vmatprep.subr.mxu0 0.0
    %6336 = vmatpush1.msra.mxu0 0.0
    %6337 = vmatprep.subr.mxu0 0.0
    %6338 = vmatpush1.msra.mxu0 0.0
    %6339 = vmatprep.subr.mxu0 0.0
    %6340 = vmatpush1.msra.mxu0 0.0
    %6341 = vmatprep.subr.mxu0 0.0
    %6342 = vmatpush1.msra.mxu0 0.0
    %6343 = vmatprep.subr.mxu0 0.0
    %6344 = vmatpush1.msra.mxu0 0.0
    %6345 = vmatprep.subr.mxu0 0.0
    %6346 = vmatpush1.msra.mxu0 0.0
    %6347 = vmatprep.subr.mxu0 0.0
    %6348 = vmatpush1.msra.mxu0 0.0
    %6349 = vmatprep.subr.mxu0 0.0
    %6350 = vmatpush1.msra.mxu0 0.0
    %6351 = vmatprep.subr.mxu0 0.0
    %6352 = vmatpush1.msra.mxu0 0.0
    %6353 = vmatprep.subr.mxu0 0.0
    %6354 = vmatpush1.msra.mxu0 0.0
    %6355 = vmatprep.subr.mxu0 0.0
    %6356 = vmatpush1.msra.mxu0 0.0
    %6357 = vmatprep.subr.mxu0 0.0
    %6358 = vmatpush1.msra.mxu0 0.0
    %6359 = vmatprep.subr.mxu0 0.0
    %6360 = vmatpush1.msra.mxu0 0.0
    %6361 = vmatprep.mubr.f32.mxu0 0.0
    %6362 = vmatmul.mubr.f32.gmra.mrb[0].mxu0 %v6295
    %v6363 = vpop.f32.mrb[0].mxu0
    %v6364 = vadd.f32 %v6291, %v6363
    %v6365 = vpop.f32.mrb[0].mxu0
    %6366 = vdwg.mxu0
    %v6367 = vld [vmem:[%s25] sm:$0xff]
    %v6368 = vld [vmem:[%s25 + $0x8] sm:$0xff]
    %v6369 = vld [vmem:[%s26] sm:$0x1]
    %v6371 = vlaneseq
    %v6372 = vshrl.u32 %v6371, 7
    %v6373 = vsub.s32 0, %v6372
    %v6374 = vrot.slane %v6369, %v6373
    %v6377 = vsel %vm233, %v6364, 0
    %6379 = vmatprep.subr.mxu0 0.0
    %6380 = vmatpush1.msra.mxu0 %v6367
    %6381 = vmatprep.subr.mxu0 0.0
    %6382 = vmatpush1.msra.mxu0 %v6368
    %6383 = vmatprep.subr.mxu0 0.0
    %6384 = vmatpush1.msra.mxu0 0.0
    %6385 = vmatprep.subr.mxu0 0.0
    %6386 = vmatpush1.msra.mxu0 0.0
    %6387 = vmatprep.subr.mxu0 0.0
    %6388 = vmatpush1.msra.mxu0 0.0
    %6389 = vmatprep.subr.mxu0 0.0
    %6390 = vmatpush1.msra.mxu0 0.0
    %6391 = vmatprep.subr.mxu0 0.0
    %6392 = vmatpush1.msra.mxu0 0.0
    %6393 = vmatprep.subr.mxu0 0.0
    %6394 = vmatpush1.msra.mxu0 0.0
    %6395 = vmatprep.subr.mxu0 0.0
    %6396 = vmatpush1.msra.mxu0 0.0
    %6397 = vmatprep.subr.mxu0 0.0
    %6398 = vmatpush1.msra.mxu0 0.0
    %6399 = vmatprep.subr.mxu0 0.0
    %6400 = vmatpush1.msra.mxu0 0.0
    %6401 = vmatprep.subr.mxu0 0.0
    %6402 = vmatpush1.msra.mxu0 0.0
    %6403 = vmatprep.subr.mxu0 0.0
    %6404 = vmatpush1.msra.mxu0 0.0
    %6405 = vmatprep.subr.mxu0 0.0
    %6406 = vmatpush1.msra.mxu0 0.0
    %6407 = vmatprep.subr.mxu0 0.0
    %6408 = vmatpush1.msra.mxu0 0.0
    %6409 = vmatprep.subr.mxu0 0.0
    %6410 = vmatpush1.msra.mxu0 0.0
    %6411 = vmatprep.subr.mxu0 0.0
    %6412 = vmatpush1.msra.mxu0 0.0
    %6413 = vmatprep.subr.mxu0 0.0
    %6414 = vmatpush1.msra.mxu0 0.0
    %6415 = vmatprep.subr.mxu0 0.0
    %6416 = vmatpush1.msra.mxu0 0.0
    %6417 = vmatprep.subr.mxu0 0.0
    %6418 = vmatpush1.msra.mxu0 0.0
    %6419 = vmatprep.subr.mxu0 0.0
    %6420 = vmatpush1.msra.mxu0 0.0
    %6421 = vmatprep.subr.mxu0 0.0
    %6422 = vmatpush1.msra.mxu0 0.0
    %6423 = vmatprep.subr.mxu0 0.0
    %6424 = vmatpush1.msra.mxu0 0.0
    %6425 = vmatprep.subr.mxu0 0.0
    %6426 = vmatpush1.msra.mxu0 0.0
    %6427 = vmatprep.subr.mxu0 0.0
    %6428 = vmatpush1.msra.mxu0 0.0
    %6429 = vmatprep.subr.mxu0 0.0
    %6430 = vmatpush1.msra.mxu0 0.0
    %6431 = vmatprep.subr.mxu0 0.0
    %6432 = vmatpush1.msra.mxu0 0.0
    %6433 = vmatprep.subr.mxu0 0.0
    %6434 = vmatpush1.msra.mxu0 0.0
    %6435 = vmatprep.subr.mxu0 0.0
    %6436 = vmatpush1.msra.mxu0 0.0
    %6437 = vmatprep.subr.mxu0 0.0
    %6438 = vmatpush1.msra.mxu0 0.0
    %6439 = vmatprep.subr.mxu0 0.0
    %6440 = vmatpush1.msra.mxu0 0.0
    %6441 = vmatprep.subr.mxu0 0.0
    %6442 = vmatpush1.msra.mxu0 0.0
    %6443 = vmatprep.mubr.f32.mxu0 0.0
    %6444 = vmatmul.mubr.f32.gmra.mrb[0].mxu0 %v6377
    %v6445 = vpop.f32.mrb[0].mxu0
    %v6446 = vadd.f32 %v6374, %v6445
    %v6447 = vpop.f32.mrb[0].mxu0
    %6448 = vdwg.mxu0
    %vm6449 = vcmask 41984
    %6450 = vst.msk [vmem:[#allocation2] sm:$0x3] %vm6449, %v6446
    // Predicated region
    $region110: #{_lambda_.1} parent=1 // pred_check
      _
    $region111: #{_lambda_.1} parent=1 // pred_check_branch
      %6452 = sbr.rel (0) target = $region113
    $region112: #{_lambda_.1} parent=1 // pred_region
      %s6454 = ssub.s32 32, 32
      %6455 = vsyncadd [#allocation3], %s6454
      %s6457 = sshll.u32 [#allocation2], 4
      %s6458 = int_to_ptr.vmem [resolvable:$true] %s6457
      %6460 = dma.vmem_to_hbm [thread:$0]  %s6458, 32, %s27, [#allocation3]
    $region113: #{_lambda_.1} parent=1 // pred_fallthru
      _
    // Predicated region
    $region114: #{_lambda_.1} parent=1 // pred_check
      _
    $region115: #{_lambda_.1} parent=1 // pred_check_branch
      %6462 = sbr.rel (0) target = $region117
    $region116: #{_lambda_.1} parent=1 // pred_region
      %6463 = dma.done [#allocation3], 32
    $region117: #{_lambda_.1} parent=1 // pred_fallthru
      _
    %6464 = vsyncpa [#allocation3], 1

</llo_original>
